<compile_context>
chip_gen: v5e
topology: v5e:2x2
jax: 0.10.0
libtpu: 0.0.40
codegen_flags: <defaults>
</compile_context>

<pallas_src>
import functools

import numpy as np

import jax
import jax.numpy as jnp
from jax.experimental import pallas as pl
from jax.experimental.pallas import tpu as pltpu

_EPS = 1e-5  # torch BatchNorm2d default eps


# ---------------------------------------------------------------------------
# BlockSpec helpers
# ---------------------------------------------------------------------------
def _vmem():
    return pl.BlockSpec(memory_space=pltpu.MemorySpace.VMEM)


def _smem():
    return pl.BlockSpec(memory_space=pltpu.MemorySpace.SMEM)


def _anyspec():
    return pl.BlockSpec(memory_space=pl.ANY)


# ---------------------------------------------------------------------------
# Fully-fused decoder kernel
# ---------------------------------------------------------------------------
def _decoder_kernel(B, alpha_ref,
                    zt_ref, fcw_ref, fcb_ref,
                    w1_ref, g1g_ref, g1b_ref,
                    w2_ref, g2_ref, g2g_ref, g2b_ref,
                    w3_ref, g3_ref, g3g_ref, g3b_ref,
                    w4_ref, g4g_ref, g4b_ref,
                    g4_hbm_ref, up_hbm_ref,
                    o_ref,
                    g4_buf, up_buf, dma_sem):
    # Kick off the late-layer constant DMAs immediately so they overlap the
    # fc / ct1 / conv2 / conv3 compute (manual double-buffer style overlap).
    g4_cp = pltpu.make_async_copy(g4_hbm_ref, g4_buf, dma_sem.at[0])
    up_cp = pltpu.make_async_copy(up_hbm_ref, up_buf, dma_sem.at[1])
    g4_cp.start()
    up_cp.start()

    def bn_prelu(x, gamma_ref, beta_ref, alpha):
        # Training-mode BatchNorm (biased variance, centered two-pass stats) + PReLU.
        inv_n = 1.0 / x.shape[1]
        mean = jnp.sum(x, axis=1, keepdims=True) * inv_n
        d = x - mean
        var = jnp.sum(d * d, axis=1, keepdims=True) * inv_n
        y = d * jax.lax.rsqrt(var + _EPS)
        y = y * gamma_ref[...] + beta_ref[...]
        return jnp.where(y > 0.0, y, alpha * y)

    def conv3x3(x, w_ref, g, cout, n_in):
        # 3x3 stride-1 pad-1 conv (nearest-2x upsample folded into `g` where needed):
        #   one stacked weight matmul for the whole batch, then per-image a single
        #   gather matmul against the batch-shared 0/1 matrix `g`.
        w = w_ref[...].astype(jnp.float32)                               # (9*cout, Cin)
        h = jnp.dot(w, x, preferred_element_type=jnp.float32)           # (9*cout, B*n_in)
        taps = [h[t * cout:(t + 1) * cout, :] for t in range(9)]        # tap-major row blocks
        outs = []
        for b in range(B):
            hb = jnp.concatenate(
                [taps[t][:, b * n_in:(b + 1) * n_in] for t in range(9)],
                axis=1)                                                  # (cout, 9*n_in)
            outs.append(jnp.dot(hb, g, preferred_element_type=jnp.float32))
        return jnp.concatenate(outs, axis=1)                             # (cout, B*n_out)

    # ---- fc_in + PReLU ------------------------------------------------------
    x0 = jnp.dot(fcw_ref[...].astype(jnp.float32), zt_ref[...],
                 preferred_element_type=jnp.float32) + fcb_ref[...]      # (256, B)
    x0 = jnp.where(x0 > 0.0, x0, alpha_ref[0] * x0)

    # ---- ConvTranspose2d(256->128, k3, s1, p0) on the 1x1 map ----------------
    # One stacked matmul; per image the tap row-blocks become the 3x3 pixel
    # columns directly (no gather needed). Conv bias dropped: cancelled by BN.
    h1 = jnp.dot(w1_ref[...].astype(jnp.float32), x0,
                 preferred_element_type=jnp.float32)                     # (1152, B)
    x1 = jnp.concatenate(
        [jnp.concatenate([h1[t * 128:(t + 1) * 128, b:b + 1] for t in range(9)], axis=1)
         for b in range(B)], axis=1)                                     # (128, B*9)
    x1 = bn_prelu(x1, g1g_ref, g1b_ref, alpha_ref[1])

    # ---- conv2 (3x3 map) -----------------------------------------------------
    x2 = bn_prelu(conv3x3(x1, w2_ref, g2_ref[...].astype(jnp.float32), 64, 9),
                  g2g_ref, g2b_ref, alpha_ref[2])                        # (64, B*9)

    # ---- conv3 (nearest-2x upsample folded into g3; 3x3 -> 6x6) --------------
    x3 = bn_prelu(conv3x3(x2, w3_ref, g3_ref[...].astype(jnp.float32), 32, 9),
                  g3g_ref, g3b_ref, alpha_ref[3])                        # (32, B*36)

    # ---- conv4 (nearest-2x upsample folded into g4; 6x6 -> 12x12) ------------
    g4_cp.wait()
    x4 = bn_prelu(conv3x3(x3, w4_ref, g4_buf[...].astype(jnp.float32), 3, 36),
                  g4g_ref, g4b_ref, alpha_ref[4])                        # (3, B*144)

    # ---- final nearest-2x upsample (12x12 -> 24x24), fused in-kernel ---------
    up_cp.wait()
    up = up_buf[...].astype(jnp.float32)                                 # (144, 576)
    for b in range(B):
        y = jnp.dot(x4[:, b * 144:(b + 1) * 144], up,
                    preferred_element_type=jnp.float32)                  # (3, 576)
        o_ref[b, :, :] = y


# ---------------------------------------------------------------------------
# Host-side one-time preparation (weight layout + batch-shared gather matrices)
# ---------------------------------------------------------------------------
def _conv_gather_img(h_in, w_in, h_out, w_out, upsample):
    """Batch-shared 0/1 gather: rows (tap, input pixel), cols output pixel."""
    n_in = h_in * w_in
    g = np.zeros((9 * n_in, h_out * w_out), np.float32)
    for t in range(9):
        di, dj = divmod(t, 3)
        for h in range(h_out):
            for w in range(w_out):
                y, x = h + di - 1, w + dj - 1
                if 0 <= y < h_out and 0 <= x < w_out:
                    ys, xs = (y // 2, x // 2) if upsample else (y, x)
                    g[t * n_in + ys * w_in + xs, h * w_out + w] = 1.0
    return g


def _upsample2_matrix(h, w):
    """0/1 matrix for nearest-neighbour 2x upsample: (h*w, 2h*2w)."""
    m = np.zeros((h * w, 4 * h * w), np.float32)
    for hh in range(2 * h):
        for ww in range(2 * w):
            m[(hh // 2) * w + (ww // 2), hh * (2 * w) + ww] = 1.0
    return m


def prepare_params(p):
    """Convert torch-layout params into matmul-ready operands (one-time cost).

    Large constants are stored in bf16 (0/1 matrices are exact in bf16);
    all in-kernel accumulation stays f32. Gather matrices are batch-shared.
    """
    bf16 = jnp.bfloat16
    prep = {}
    prep["alphas"] = jnp.concatenate(
        [p["prelu_in"], p["prelu_1"], p["prelu_2"], p["prelu_3"], p["prelu_4"]]
    ).astype(jnp.float32)                                                       # (5,)
    # fc_in: torch Linear weight is (out, in) = (256, latent)
    prep["fc_w"] = p["fc_w"].astype(bf16)
    prep["fc_b"] = p["fc_b"].reshape(-1, 1).astype(jnp.float32)
    # ConvTranspose2d weight (Cin, Cout, 3, 3) -> tap-major stack (9*Cout, Cin).
    # NOTE: conv biases (ct1_b, c2_b, c3_b, c4_b) are intentionally unused —
    # they are exactly cancelled by the training-mode BatchNorm mean.
    prep["w1"] = jnp.transpose(p["ct1_w"], (2, 3, 1, 0)).reshape(9 * 128, 256).astype(bf16)
    prep["bn1_g"] = p["bn1_g"].reshape(-1, 1)
    prep["bn1_b"] = p["bn1_b"].reshape(-1, 1)
    # Conv2d weights (Cout, Cin, 3, 3) -> tap-major stack (9*Cout, Cin)
    prep["w2"] = jnp.transpose(p["c2_w"], (2, 3, 0, 1)).reshape(9 * 64, 128).astype(bf16)
    prep["g2"] = jnp.asarray(_conv_gather_img(3, 3, 3, 3, upsample=False), bf16)    # (81, 9)
    prep["bn2_g"] = p["bn2_g"].reshape(-1, 1)
    prep["bn2_b"] = p["bn2_b"].reshape(-1, 1)
    prep["w3"] = jnp.transpose(p["c3_w"], (2, 3, 0, 1)).reshape(9 * 32, 64).astype(bf16)
    prep["g3"] = jnp.asarray(_conv_gather_img(3, 3, 6, 6, upsample=True), bf16)     # (81, 36)
    prep["bn3_g"] = p["bn3_g"].reshape(-1, 1)
    prep["bn3_b"] = p["bn3_b"].reshape(-1, 1)
    prep["w4"] = jnp.transpose(p["c4_w"], (2, 3, 0, 1)).reshape(9 * 3, 32).astype(bf16)
    prep["g4"] = jnp.asarray(_conv_gather_img(6, 6, 12, 12, upsample=True), bf16)   # (324, 144)
    prep["bn4_g"] = p["bn4_g"].reshape(-1, 1)
    prep["bn4_b"] = p["bn4_b"].reshape(-1, 1)
    prep["up"] = jnp.asarray(_upsample2_matrix(12, 12), bf16)                       # (144, 576)
    return prep


# ---------------------------------------------------------------------------
# Parameters (deterministic synthetic init; torch-layout shapes)
# ---------------------------------------------------------------------------
def init_params(key, latent_dim=128):
    ks = jax.random.split(key, 20)
    n = lambda k, shape, s=0.05: s * jax.random.normal(k, shape, jnp.float32)
    p = {}
    p["fc_w"] = n(ks[0], (256, latent_dim))          # Linear (out, in)
    p["fc_b"] = n(ks[1], (256,))
    p["prelu_in"] = jnp.full((1,), 0.25, jnp.float32)
    p["ct1_w"] = n(ks[2], (256, 128, 3, 3))          # ConvTranspose2d (Cin, Cout, KH, KW)
    p["ct1_b"] = n(ks[3], (128,))                    # cancelled by BN in the kernel
    p["bn1_g"] = 1.0 + n(ks[4], (128,), 0.1)
    p["bn1_b"] = n(ks[5], (128,), 0.1)
    p["prelu_1"] = jnp.full((1,), 0.25, jnp.float32)
    p["c2_w"] = n(ks[6], (64, 128, 3, 3))            # Conv2d (Cout, Cin, KH, KW)
    p["c2_b"] = n(ks[7], (64,))
    p["bn2_g"] = 1.0 + n(ks[8], (64,), 0.1)
    p["bn2_b"] = n(ks[9], (64,), 0.1)
    p["prelu_2"] = jnp.full((1,), 0.25, jnp.float32)
    p["c3_w"] = n(ks[10], (32, 64, 3, 3))
    p["c3_b"] = n(ks[11], (32,))
    p["bn3_g"] = 1.0 + n(ks[12], (32,), 0.1)
    p["bn3_b"] = n(ks[13], (32,), 0.1)
    p["prelu_3"] = jnp.full((1,), 0.25, jnp.float32)
    p["c4_w"] = n(ks[14], (3, 32, 3, 3))
    p["c4_b"] = n(ks[15], (3,))
    p["bn4_g"] = 1.0 + n(ks[16], (3,), 0.1)
    p["bn4_b"] = n(ks[17], (3,), 0.1)
    p["prelu_4"] = jnp.full((1,), 0.25, jnp.float32)
    return p


# ---------------------------------------------------------------------------
# Forward pass (single fused pallas_call; host epilogue is a free reshape)
# ---------------------------------------------------------------------------
def decoder_forward(z, prep):
    B = z.shape[0]
    # Advisory cost estimate so XLA schedules neighbours around this tiny call.
    flops = 2 * B * (256 * 128                                   # fc
                     + 1152 * 256                                # ct1 stacked matmul
                     + 9 * (576 * 128 + 288 * 64) + 36 * 27 * 32 # conv weight matmuls
                     + 64 * 81 * 9 + 32 * 81 * 36 + 3 * 324 * 144  # gather matmuls
                     + 3 * 144 * 576)                            # final upsample
    bytes_accessed = int(
        sum(a.size * a.dtype.itemsize for a in jax.tree_util.tree_leaves(prep))
        + z.size * z.dtype.itemsize + B * 3 * 24 * 24 * 4)

    out = pl.pallas_call(
        functools.partial(_decoder_kernel, B),
        out_shape=jax.ShapeDtypeStruct((B, 3, 576), jnp.float32),
        in_specs=[_smem()] + [_vmem()] * 17 + [_anyspec(), _anyspec()],
        out_specs=_vmem(),
        scratch_shapes=[
            pltpu.VMEM((324, 144), jnp.bfloat16),   # g4 landing buffer (overlapped DMA)
            pltpu.VMEM((144, 576), jnp.bfloat16),   # final-upsample matrix landing buffer
            pltpu.SemaphoreType.DMA((2,)),
        ],
        cost_estimate=pl.CostEstimate(flops=flops, transcendentals=227,
                                      bytes_accessed=bytes_accessed),
    )(prep["alphas"],
      z.T, prep["fc_w"], prep["fc_b"],
      prep["w1"], prep["bn1_g"], prep["bn1_b"],
      prep["w2"], prep["g2"], prep["bn2_g"], prep["bn2_b"],
      prep["w3"], prep["g3"], prep["bn3_g"], prep["bn3_b"],
      prep["w4"], prep["bn4_g"], prep["bn4_b"],
      prep["g4"], prep["up"])

    # (B, 3, 576) -> (B, 3, 24, 24): layout-preserving reshape, no extra dispatch.
    return out.reshape(B, 3, 24, 24)


# ---------------------------------------------------------------------------
# Plain-JAX f32 reference (mirrors the PyTorch module) for validation
# ---------------------------------------------------------------------------
def _bn_train(x, gamma, beta):
    mean = jnp.mean(x, axis=(0, 2, 3), keepdims=True)
    var = jnp.mean((x - mean) ** 2, axis=(0, 2, 3), keepdims=True)
    y = (x - mean) * jax.lax.rsqrt(var + _EPS)
    return y * gamma[None, :, None, None] + beta[None, :, None, None]


def _prelu(x, a):
    return jnp.where(x > 0, x, a[0] * x)


def _conv3x3_ref(x, w, b):
    y = jax.lax.conv_general_dilated(x, w, (1, 1), ((1, 1), (1, 1)),
                                     dimension_numbers=("NCHW", "OIHW", "NCHW"))
    return y + b[None, :, None, None]


def _up2(x):
    return jnp.repeat(jnp.repeat(x, 2, axis=2), 2, axis=3)


def reference_forward(z, p):
    x = _prelu(z @ p["fc_w"].T + p["fc_b"], p["prelu_in"])
    x = jnp.einsum("bc,coij->boij", x, p["ct1_w"]) + p["ct1_b"][None, :, None, None]
    x = _prelu(_bn_train(x, p["bn1_g"], p["bn1_b"]), p["prelu_1"])
    x = _up2(_prelu(_bn_train(_conv3x3_ref(x, p["c2_w"], p["c2_b"]),
                              p["bn2_g"], p["bn2_b"]), p["prelu_2"]))
    x = _up2(_prelu(_bn_train(_conv3x3_ref(x, p["c3_w"], p["c3_b"]),
                              p["bn3_g"], p["bn3_b"]), p["prelu_3"]))
    x = _up2(_prelu(_bn_train(_conv3x3_ref(x, p["c4_w"], p["c4_b"]),
                              p["bn4_g"], p["bn4_b"]), p["prelu_4"]))
    return x


if __name__ == "__main__":
    key = jax.random.PRNGKey(0)
    k_z, k_p = jax.random.split(key)
    B, LATENT = 2, 128
    z = jax.random.normal(k_z, (B, LATENT), jnp.float32)
    params = init_params(k_p, LATENT)
    prep = prepare_params(params)

    fwd = jax.jit(decoder_forward)
    out = jax.block_until_ready(fwd(z, prep))

    assert out.shape == (B, 3, 24, 24), out.shape
    assert out.dtype == jnp.float32
    assert bool(jnp.all(jnp.isfinite(out)))

    # Validate against the plain-JAX f32 reference (kernel stores weights in
    # bf16 -> small relative error; any layout bug would be O(1)).
    ref = jax.block_until_ready(jax.jit(reference_forward)(z, params))
    np.testing.assert_allclose(np.asarray(out), np.asarray(ref), rtol=8e-2, atol=8e-2)

    print("KERNEL_OK")
</pallas_src>

<mosaic_0001>
module attributes {stable_mosaic.version = 11 : i64} {
  func.func @_decoder_kernel(%arg0: memref<5xf32, #tpu.memory_space<smem>>, %arg1: memref<128x2xf32, #tpu.memory_space<vmem>>, %arg2: memref<256x128xbf16, #tpu.memory_space<vmem>>, %arg3: memref<256x1xf32, #tpu.memory_space<vmem>>, %arg4: memref<1152x256xbf16, #tpu.memory_space<vmem>>, %arg5: memref<128x1xf32, #tpu.memory_space<vmem>>, %arg6: memref<128x1xf32, #tpu.memory_space<vmem>>, %arg7: memref<576x128xbf16, #tpu.memory_space<vmem>>, %arg8: memref<81x9xbf16, #tpu.memory_space<vmem>>, %arg9: memref<64x1xf32, #tpu.memory_space<vmem>>, %arg10: memref<64x1xf32, #tpu.memory_space<vmem>>, %arg11: memref<288x64xbf16, #tpu.memory_space<vmem>>, %arg12: memref<81x36xbf16, #tpu.memory_space<vmem>>, %arg13: memref<32x1xf32, #tpu.memory_space<vmem>>, %arg14: memref<32x1xf32, #tpu.memory_space<vmem>>, %arg15: memref<27x32xbf16, #tpu.memory_space<vmem>>, %arg16: memref<3x1xf32, #tpu.memory_space<vmem>>, %arg17: memref<3x1xf32, #tpu.memory_space<vmem>>, %arg18: memref<324x144xbf16, #tpu.memory_space<any>>, %arg19: memref<144x576xbf16, #tpu.memory_space<any>>, %arg20: memref<2x3x576xf32, #tpu.memory_space<vmem>>, %arg21: memref<324x144xbf16, #tpu.memory_space<vmem>>, %arg22: memref<144x576xbf16, #tpu.memory_space<vmem>>, %arg23: memref<2x!tpu.dma_semaphore, #tpu.memory_space<semaphore_mem>>) attributes {dimension_semantics = [], scalar_prefetch = 0 : i64, scratch_operands = 3 : i64, tpu.core_type = #tpu.core_type<tc>} {
    %c0_i32 = arith.constant 0 : i32
    %0 = tpu.memref_slice %arg23[%c0_i32] : memref<2x!tpu.dma_semaphore, #tpu.memory_space<semaphore_mem>> -> memref<1x!tpu.dma_semaphore, #tpu.memory_space<semaphore_mem>>
    %1 = tpu.memref_squeeze %0 : memref<1x!tpu.dma_semaphore, #tpu.memory_space<semaphore_mem>> -> memref<!tpu.dma_semaphore, #tpu.memory_space<semaphore_mem>>
    tpu.enqueue_dma source(%arg18 : memref<324x144xbf16, #tpu.memory_space<any>>) target(%arg21 : memref<324x144xbf16, #tpu.memory_space<vmem>>) target_semaphore(%1 : memref<!tpu.dma_semaphore, #tpu.memory_space<semaphore_mem>>)
    %c1_i32 = arith.constant 1 : i32
    %2 = tpu.memref_slice %arg23[%c1_i32] : memref<2x!tpu.dma_semaphore, #tpu.memory_space<semaphore_mem>> -> memref<1x!tpu.dma_semaphore, #tpu.memory_space<semaphore_mem>>
    %3 = tpu.memref_squeeze %2 : memref<1x!tpu.dma_semaphore, #tpu.memory_space<semaphore_mem>> -> memref<!tpu.dma_semaphore, #tpu.memory_space<semaphore_mem>>
    tpu.enqueue_dma source(%arg19 : memref<144x576xbf16, #tpu.memory_space<any>>) target(%arg22 : memref<144x576xbf16, #tpu.memory_space<vmem>>) target_semaphore(%3 : memref<!tpu.dma_semaphore, #tpu.memory_space<semaphore_mem>>)
    %c0 = arith.constant 0 : index
    %c0_0 = arith.constant 0 : index
    %4 = vector.load %arg2[%c0, %c0_0] : memref<256x128xbf16, #tpu.memory_space<vmem>>, vector<256x128xbf16>
    %5 = arith.extf %4 : vector<256x128xbf16> to vector<256x128xf32>
    %c0_1 = arith.constant 0 : index
    %c0_2 = arith.constant 0 : index
    %6 = vector.load %arg1[%c0_1, %c0_2] : memref<128x2xf32, #tpu.memory_space<vmem>>, vector<128x2xf32>
    %cst = arith.constant dense<0.000000e+00> : vector<256x2xf32>
    %7 = tpu.matmul %5, %6, %cst {dimension_numbers = #tpu.dot_dimension_numbers<[1], [0], [0], [1], [0, 0, 1, 1], [], []>} : vector<256x128xf32>, vector<128x2xf32>, vector<256x2xf32> -> vector<256x2xf32>
    %c0_3 = arith.constant 0 : index
    %c0_4 = arith.constant 0 : index
    %8 = vector.load %arg3[%c0_3, %c0_4] : memref<256x1xf32, #tpu.memory_space<vmem>>, vector<256x1xf32>
    %9 = vector.broadcast %8 : vector<256x1xf32> to vector<256x2xf32>
    %10 = arith.addf %7, %9 : vector<256x2xf32>
    %cst_5 = arith.constant 0.000000e+00 : f32
    %11 = vector.broadcast %cst_5 : f32 to vector<256x2xf32>
    %12 = arith.cmpf ogt, %10, %11 : vector<256x2xf32>
    %c0_6 = arith.constant 0 : index
    %13 = memref.load %arg0[%c0_6] : memref<5xf32, #tpu.memory_space<smem>>
    %14 = vector.broadcast %13 : f32 to vector<256x2xf32>
    %15 = arith.mulf %14, %10 : vector<256x2xf32>
    %16 = arith.select %12, %10, %15 : vector<256x2xi1>, vector<256x2xf32>
    %c0_7 = arith.constant 0 : index
    %c0_8 = arith.constant 0 : index
    %17 = vector.load %arg4[%c0_7, %c0_8] : memref<1152x256xbf16, #tpu.memory_space<vmem>>, vector<1152x256xbf16>
    %18 = arith.extf %17 : vector<1152x256xbf16> to vector<1152x256xf32>
    %cst_9 = arith.constant dense<0.000000e+00> : vector<1152x2xf32>
    %19 = tpu.matmul %18, %16, %cst_9 {dimension_numbers = #tpu.dot_dimension_numbers<[1], [0], [0], [1], [0, 0, 1, 1], [], []>} : vector<1152x256xf32>, vector<256x2xf32>, vector<1152x2xf32> -> vector<1152x2xf32>
    %20 = vector.extract_strided_slice %19 {offsets = [0, 0], sizes = [128, 1], strides = [1, 1]} : vector<1152x2xf32> to vector<128x1xf32>
    %21 = vector.extract_strided_slice %19 {offsets = [128, 0], sizes = [128, 1], strides = [1, 1]} : vector<1152x2xf32> to vector<128x1xf32>
    %22 = vector.extract_strided_slice %19 {offsets = [256, 0], sizes = [128, 1], strides = [1, 1]} : vector<1152x2xf32> to vector<128x1xf32>
    %23 = vector.extract_strided_slice %19 {offsets = [384, 0], sizes = [128, 1], strides = [1, 1]} : vector<1152x2xf32> to vector<128x1xf32>
    %24 = vector.extract_strided_slice %19 {offsets = [512, 0], sizes = [128, 1], strides = [1, 1]} : vector<1152x2xf32> to vector<128x1xf32>
    %25 = vector.extract_strided_slice %19 {offsets = [640, 0], sizes = [128, 1], strides = [1, 1]} : vector<1152x2xf32> to vector<128x1xf32>
    %26 = vector.extract_strided_slice %19 {offsets = [768, 0], sizes = [128, 1], strides = [1, 1]} : vector<1152x2xf32> to vector<128x1xf32>
    %27 = vector.extract_strided_slice %19 {offsets = [896, 0], sizes = [128, 1], strides = [1, 1]} : vector<1152x2xf32> to vector<128x1xf32>
    %28 = vector.extract_strided_slice %19 {offsets = [1024, 0], sizes = [128, 1], strides = [1, 1]} : vector<1152x2xf32> to vector<128x1xf32>
    %29 = tpu.concatenate %20, %21, %22, %23, %24, %25, %26, %27, %28 in 1 : vector<128x1xf32>, vector<128x1xf32>, vector<128x1xf32>, vector<128x1xf32>, vector<128x1xf32>, vector<128x1xf32>, vector<128x1xf32>, vector<128x1xf32>, vector<128x1xf32> -> vector<128x9xf32>
    %30 = vector.extract_strided_slice %19 {offsets = [0, 1], sizes = [128, 1], strides = [1, 1]} : vector<1152x2xf32> to vector<128x1xf32>
    %31 = vector.extract_strided_slice %19 {offsets = [128, 1], sizes = [128, 1], strides = [1, 1]} : vector<1152x2xf32> to vector<128x1xf32>
    %32 = vector.extract_strided_slice %19 {offsets = [256, 1], sizes = [128, 1], strides = [1, 1]} : vector<1152x2xf32> to vector<128x1xf32>
    %33 = vector.extract_strided_slice %19 {offsets = [384, 1], sizes = [128, 1], strides = [1, 1]} : vector<1152x2xf32> to vector<128x1xf32>
    %34 = vector.extract_strided_slice %19 {offsets = [512, 1], sizes = [128, 1], strides = [1, 1]} : vector<1152x2xf32> to vector<128x1xf32>
    %35 = vector.extract_strided_slice %19 {offsets = [640, 1], sizes = [128, 1], strides = [1, 1]} : vector<1152x2xf32> to vector<128x1xf32>
    %36 = vector.extract_strided_slice %19 {offsets = [768, 1], sizes = [128, 1], strides = [1, 1]} : vector<1152x2xf32> to vector<128x1xf32>
    %37 = vector.extract_strided_slice %19 {offsets = [896, 1], sizes = [128, 1], strides = [1, 1]} : vector<1152x2xf32> to vector<128x1xf32>
    %38 = vector.extract_strided_slice %19 {offsets = [1024, 1], sizes = [128, 1], strides = [1, 1]} : vector<1152x2xf32> to vector<128x1xf32>
    %39 = tpu.concatenate %30, %31, %32, %33, %34, %35, %36, %37, %38 in 1 : vector<128x1xf32>, vector<128x1xf32>, vector<128x1xf32>, vector<128x1xf32>, vector<128x1xf32>, vector<128x1xf32>, vector<128x1xf32>, vector<128x1xf32>, vector<128x1xf32> -> vector<128x9xf32>
    %40 = tpu.concatenate %29, %39 in 1 : vector<128x9xf32>, vector<128x9xf32> -> vector<128x18xf32>
    %c1 = arith.constant 1 : index
    %41 = memref.load %arg0[%c1] : memref<5xf32, #tpu.memory_space<smem>>
    %cst_10 = arith.constant dense<0.000000e+00> : vector<128xf32>
    %42 = vector.multi_reduction <add>, %40, %cst_10 [1] : vector<128x18xf32> to vector<128xf32>
    %43 = vector.shape_cast %42 : vector<128xf32> to vector<128x1xf32>
    %cst_11 = arith.constant 0.055555556 : f32
    %44 = vector.broadcast %cst_11 : f32 to vector<128x1xf32>
    %45 = arith.mulf %43, %44 : vector<128x1xf32>
    %46 = vector.broadcast %45 : vector<128x1xf32> to vector<128x18xf32>
    %47 = arith.subf %40, %46 : vector<128x18xf32>
    %48 = arith.mulf %47, %47 : vector<128x18xf32>
    %cst_12 = arith.constant dense<0.000000e+00> : vector<128xf32>
    %49 = vector.multi_reduction <add>, %48, %cst_12 [1] : vector<128x18xf32> to vector<128xf32>
    %50 = vector.shape_cast %49 : vector<128xf32> to vector<128x1xf32>
    %cst_13 = arith.constant 0.055555556 : f32
    %51 = vector.broadcast %cst_13 : f32 to vector<128x1xf32>
    %52 = arith.mulf %50, %51 : vector<128x1xf32>
    %cst_14 = arith.constant 9.99999974E-6 : f32
    %53 = vector.broadcast %cst_14 : f32 to vector<128x1xf32>
    %54 = arith.addf %52, %53 : vector<128x1xf32>
    %55 = math.rsqrt %54 : vector<128x1xf32>
    %56 = vector.broadcast %55 : vector<128x1xf32> to vector<128x18xf32>
    %57 = arith.mulf %47, %56 : vector<128x18xf32>
    %c0_15 = arith.constant 0 : index
    %c0_16 = arith.constant 0 : index
    %58 = vector.load %arg5[%c0_15, %c0_16] : memref<128x1xf32, #tpu.memory_space<vmem>>, vector<128x1xf32>
    %59 = vector.broadcast %58 : vector<128x1xf32> to vector<128x18xf32>
    %60 = arith.mulf %57, %59 : vector<128x18xf32>
    %c0_17 = arith.constant 0 : index
    %c0_18 = arith.constant 0 : index
    %61 = vector.load %arg6[%c0_17, %c0_18] : memref<128x1xf32, #tpu.memory_space<vmem>>, vector<128x1xf32>
    %62 = vector.broadcast %61 : vector<128x1xf32> to vector<128x18xf32>
    %63 = arith.addf %60, %62 : vector<128x18xf32>
    %cst_19 = arith.constant 0.000000e+00 : f32
    %64 = vector.broadcast %cst_19 : f32 to vector<128x18xf32>
    %65 = arith.cmpf ogt, %63, %64 : vector<128x18xf32>
    %66 = vector.broadcast %41 : f32 to vector<128x18xf32>
    %67 = arith.mulf %66, %63 : vector<128x18xf32>
    %68 = arith.select %65, %63, %67 : vector<128x18xi1>, vector<128x18xf32>
    %c0_20 = arith.constant 0 : index
    %c0_21 = arith.constant 0 : index
    %69 = vector.load %arg8[%c0_20, %c0_21] : memref<81x9xbf16, #tpu.memory_space<vmem>>, vector<81x9xbf16>
    %70 = arith.extf %69 : vector<81x9xbf16> to vector<81x9xf32>
    %c0_22 = arith.constant 0 : index
    %c0_23 = arith.constant 0 : index
    %71 = vector.load %arg7[%c0_22, %c0_23] : memref<576x128xbf16, #tpu.memory_space<vmem>>, vector<576x128xbf16>
    %72 = arith.extf %71 : vector<576x128xbf16> to vector<576x128xf32>
    %cst_24 = arith.constant dense<0.000000e+00> : vector<576x18xf32>
    %73 = tpu.matmul %72, %68, %cst_24 {dimension_numbers = #tpu.dot_dimension_numbers<[1], [0], [0], [1], [0, 0, 1, 1], [], []>} : vector<576x128xf32>, vector<128x18xf32>, vector<576x18xf32> -> vector<576x18xf32>
    %74 = vector.extract_strided_slice %73 {offsets = [0, 0], sizes = [64, 18], strides = [1, 1]} : vector<576x18xf32> to vector<64x18xf32>
    %75 = vector.extract_strided_slice %73 {offsets = [64, 0], sizes = [64, 18], strides = [1, 1]} : vector<576x18xf32> to vector<64x18xf32>
    %76 = vector.extract_strided_slice %73 {offsets = [128, 0], sizes = [64, 18], strides = [1, 1]} : vector<576x18xf32> to vector<64x18xf32>
    %77 = vector.extract_strided_slice %73 {offsets = [192, 0], sizes = [64, 18], strides = [1, 1]} : vector<576x18xf32> to vector<64x18xf32>
    %78 = vector.extract_strided_slice %73 {offsets = [256, 0], sizes = [64, 18], strides = [1, 1]} : vector<576x18xf32> to vector<64x18xf32>
    %79 = vector.extract_strided_slice %73 {offsets = [320, 0], sizes = [64, 18], strides = [1, 1]} : vector<576x18xf32> to vector<64x18xf32>
    %80 = vector.extract_strided_slice %73 {offsets = [384, 0], sizes = [64, 18], strides = [1, 1]} : vector<576x18xf32> to vector<64x18xf32>
    %81 = vector.extract_strided_slice %73 {offsets = [448, 0], sizes = [64, 18], strides = [1, 1]} : vector<576x18xf32> to vector<64x18xf32>
    %82 = vector.extract_strided_slice %73 {offsets = [512, 0], sizes = [64, 18], strides = [1, 1]} : vector<576x18xf32> to vector<64x18xf32>
    %83 = vector.extract_strided_slice %74 {offsets = [0, 0], sizes = [64, 9], strides = [1, 1]} : vector<64x18xf32> to vector<64x9xf32>
    %84 = vector.extract_strided_slice %75 {offsets = [0, 0], sizes = [64, 9], strides = [1, 1]} : vector<64x18xf32> to vector<64x9xf32>
    %85 = vector.extract_strided_slice %76 {offsets = [0, 0], sizes = [64, 9], strides = [1, 1]} : vector<64x18xf32> to vector<64x9xf32>
    %86 = vector.extract_strided_slice %77 {offsets = [0, 0], sizes = [64, 9], strides = [1, 1]} : vector<64x18xf32> to vector<64x9xf32>
    %87 = vector.extract_strided_slice %78 {offsets = [0, 0], sizes = [64, 9], strides = [1, 1]} : vector<64x18xf32> to vector<64x9xf32>
    %88 = vector.extract_strided_slice %79 {offsets = [0, 0], sizes = [64, 9], strides = [1, 1]} : vector<64x18xf32> to vector<64x9xf32>
    %89 = vector.extract_strided_slice %80 {offsets = [0, 0], sizes = [64, 9], strides = [1, 1]} : vector<64x18xf32> to vector<64x9xf32>
    %90 = vector.extract_strided_slice %81 {offsets = [0, 0], sizes = [64, 9], strides = [1, 1]} : vector<64x18xf32> to vector<64x9xf32>
    %91 = vector.extract_strided_slice %82 {offsets = [0, 0], sizes = [64, 9], strides = [1, 1]} : vector<64x18xf32> to vector<64x9xf32>
    %92 = tpu.concatenate %83, %84, %85, %86, %87, %88, %89, %90, %91 in 1 : vector<64x9xf32>, vector<64x9xf32>, vector<64x9xf32>, vector<64x9xf32>, vector<64x9xf32>, vector<64x9xf32>, vector<64x9xf32>, vector<64x9xf32>, vector<64x9xf32> -> vector<64x81xf32>
    %cst_25 = arith.constant dense<0.000000e+00> : vector<64x9xf32>
    %93 = tpu.matmul %92, %70, %cst_25 {dimension_numbers = #tpu.dot_dimension_numbers<[1], [0], [0], [1], [0, 0, 1, 1], [], []>} : vector<64x81xf32>, vector<81x9xf32>, vector<64x9xf32> -> vector<64x9xf32>
    %94 = vector.extract_strided_slice %74 {offsets = [0, 9], sizes = [64, 9], strides = [1, 1]} : vector<64x18xf32> to vector<64x9xf32>
    %95 = vector.extract_strided_slice %75 {offsets = [0, 9], sizes = [64, 9], strides = [1, 1]} : vector<64x18xf32> to vector<64x9xf32>
    %96 = vector.extract_strided_slice %76 {offsets = [0, 9], sizes = [64, 9], strides = [1, 1]} : vector<64x18xf32> to vector<64x9xf32>
    %97 = vector.extract_strided_slice %77 {offsets = [0, 9], sizes = [64, 9], strides = [1, 1]} : vector<64x18xf32> to vector<64x9xf32>
    %98 = vector.extract_strided_slice %78 {offsets = [0, 9], sizes = [64, 9], strides = [1, 1]} : vector<64x18xf32> to vector<64x9xf32>
    %99 = vector.extract_strided_slice %79 {offsets = [0, 9], sizes = [64, 9], strides = [1, 1]} : vector<64x18xf32> to vector<64x9xf32>
    %100 = vector.extract_strided_slice %80 {offsets = [0, 9], sizes = [64, 9], strides = [1, 1]} : vector<64x18xf32> to vector<64x9xf32>
    %101 = vector.extract_strided_slice %81 {offsets = [0, 9], sizes = [64, 9], strides = [1, 1]} : vector<64x18xf32> to vector<64x9xf32>
    %102 = vector.extract_strided_slice %82 {offsets = [0, 9], sizes = [64, 9], strides = [1, 1]} : vector<64x18xf32> to vector<64x9xf32>
    %103 = tpu.concatenate %94, %95, %96, %97, %98, %99, %100, %101, %102 in 1 : vector<64x9xf32>, vector<64x9xf32>, vector<64x9xf32>, vector<64x9xf32>, vector<64x9xf32>, vector<64x9xf32>, vector<64x9xf32>, vector<64x9xf32>, vector<64x9xf32> -> vector<64x81xf32>
    %cst_26 = arith.constant dense<0.000000e+00> : vector<64x9xf32>
    %104 = tpu.matmul %103, %70, %cst_26 {dimension_numbers = #tpu.dot_dimension_numbers<[1], [0], [0], [1], [0, 0, 1, 1], [], []>} : vector<64x81xf32>, vector<81x9xf32>, vector<64x9xf32> -> vector<64x9xf32>
    %105 = tpu.concatenate %93, %104 in 1 : vector<64x9xf32>, vector<64x9xf32> -> vector<64x18xf32>
    %c2 = arith.constant 2 : index
    %106 = memref.load %arg0[%c2] : memref<5xf32, #tpu.memory_space<smem>>
    %cst_27 = arith.constant dense<0.000000e+00> : vector<64xf32>
    %107 = vector.multi_reduction <add>, %105, %cst_27 [1] : vector<64x18xf32> to vector<64xf32>
    %108 = vector.shape_cast %107 : vector<64xf32> to vector<64x1xf32>
    %cst_28 = arith.constant 0.055555556 : f32
    %109 = vector.broadcast %cst_28 : f32 to vector<64x1xf32>
    %110 = arith.mulf %108, %109 : vector<64x1xf32>
    %111 = vector.broadcast %110 : vector<64x1xf32> to vector<64x18xf32>
    %112 = arith.subf %105, %111 : vector<64x18xf32>
    %113 = arith.mulf %112, %112 : vector<64x18xf32>
    %cst_29 = arith.constant dense<0.000000e+00> : vector<64xf32>
    %114 = vector.multi_reduction <add>, %113, %cst_29 [1] : vector<64x18xf32> to vector<64xf32>
    %115 = vector.shape_cast %114 : vector<64xf32> to vector<64x1xf32>
    %cst_30 = arith.constant 0.055555556 : f32
    %116 = vector.broadcast %cst_30 : f32 to vector<64x1xf32>
    %117 = arith.mulf %115, %116 : vector<64x1xf32>
    %cst_31 = arith.constant 9.99999974E-6 : f32
    %118 = vector.broadcast %cst_31 : f32 to vector<64x1xf32>
    %119 = arith.addf %117, %118 : vector<64x1xf32>
    %120 = math.rsqrt %119 : vector<64x1xf32>
    %121 = vector.broadcast %120 : vector<64x1xf32> to vector<64x18xf32>
    %122 = arith.mulf %112, %121 : vector<64x18xf32>
    %c0_32 = arith.constant 0 : index
    %c0_33 = arith.constant 0 : index
    %123 = vector.load %arg9[%c0_32, %c0_33] : memref<64x1xf32, #tpu.memory_space<vmem>>, vector<64x1xf32>
    %124 = vector.broadcast %123 : vector<64x1xf32> to vector<64x18xf32>
    %125 = arith.mulf %122, %124 : vector<64x18xf32>
    %c0_34 = arith.constant 0 : index
    %c0_35 = arith.constant 0 : index
    %126 = vector.load %arg10[%c0_34, %c0_35] : memref<64x1xf32, #tpu.memory_space<vmem>>, vector<64x1xf32>
    %127 = vector.broadcast %126 : vector<64x1xf32> to vector<64x18xf32>
    %128 = arith.addf %125, %127 : vector<64x18xf32>
    %cst_36 = arith.constant 0.000000e+00 : f32
    %129 = vector.broadcast %cst_36 : f32 to vector<64x18xf32>
    %130 = arith.cmpf ogt, %128, %129 : vector<64x18xf32>
    %131 = vector.broadcast %106 : f32 to vector<64x18xf32>
    %132 = arith.mulf %131, %128 : vector<64x18xf32>
    %133 = arith.select %130, %128, %132 : vector<64x18xi1>, vector<64x18xf32>
    %c0_37 = arith.constant 0 : index
    %c0_38 = arith.constant 0 : index
    %134 = vector.load %arg12[%c0_37, %c0_38] : memref<81x36xbf16, #tpu.memory_space<vmem>>, vector<81x36xbf16>
    %135 = arith.extf %134 : vector<81x36xbf16> to vector<81x36xf32>
    %c0_39 = arith.constant 0 : index
    %c0_40 = arith.constant 0 : index
    %136 = vector.load %arg11[%c0_39, %c0_40] : memref<288x64xbf16, #tpu.memory_space<vmem>>, vector<288x64xbf16>
    %137 = arith.extf %136 : vector<288x64xbf16> to vector<288x64xf32>
    %cst_41 = arith.constant dense<0.000000e+00> : vector<288x18xf32>
    %138 = tpu.matmul %137, %133, %cst_41 {dimension_numbers = #tpu.dot_dimension_numbers<[1], [0], [0], [1], [0, 0, 1, 1], [], []>} : vector<288x64xf32>, vector<64x18xf32>, vector<288x18xf32> -> vector<288x18xf32>
    %139 = vector.extract_strided_slice %138 {offsets = [0, 0], sizes = [32, 18], strides = [1, 1]} : vector<288x18xf32> to vector<32x18xf32>
    %140 = vector.extract_strided_slice %138 {offsets = [32, 0], sizes = [32, 18], strides = [1, 1]} : vector<288x18xf32> to vector<32x18xf32>
    %141 = vector.extract_strided_slice %138 {offsets = [64, 0], sizes = [32, 18], strides = [1, 1]} : vector<288x18xf32> to vector<32x18xf32>
    %142 = vector.extract_strided_slice %138 {offsets = [96, 0], sizes = [32, 18], strides = [1, 1]} : vector<288x18xf32> to vector<32x18xf32>
    %143 = vector.extract_strided_slice %138 {offsets = [128, 0], sizes = [32, 18], strides = [1, 1]} : vector<288x18xf32> to vector<32x18xf32>
    %144 = vector.extract_strided_slice %138 {offsets = [160, 0], sizes = [32, 18], strides = [1, 1]} : vector<288x18xf32> to vector<32x18xf32>
    %145 = vector.extract_strided_slice %138 {offsets = [192, 0], sizes = [32, 18], strides = [1, 1]} : vector<288x18xf32> to vector<32x18xf32>
    %146 = vector.extract_strided_slice %138 {offsets = [224, 0], sizes = [32, 18], strides = [1, 1]} : vector<288x18xf32> to vector<32x18xf32>
    %147 = vector.extract_strided_slice %138 {offsets = [256, 0], sizes = [32, 18], strides = [1, 1]} : vector<288x18xf32> to vector<32x18xf32>
    %148 = vector.extract_strided_slice %139 {offsets = [0, 0], sizes = [32, 9], strides = [1, 1]} : vector<32x18xf32> to vector<32x9xf32>
    %149 = vector.extract_strided_slice %140 {offsets = [0, 0], sizes = [32, 9], strides = [1, 1]} : vector<32x18xf32> to vector<32x9xf32>
    %150 = vector.extract_strided_slice %141 {offsets = [0, 0], sizes = [32, 9], strides = [1, 1]} : vector<32x18xf32> to vector<32x9xf32>
    %151 = vector.extract_strided_slice %142 {offsets = [0, 0], sizes = [32, 9], strides = [1, 1]} : vector<32x18xf32> to vector<32x9xf32>
    %152 = vector.extract_strided_slice %143 {offsets = [0, 0], sizes = [32, 9], strides = [1, 1]} : vector<32x18xf32> to vector<32x9xf32>
    %153 = vector.extract_strided_slice %144 {offsets = [0, 0], sizes = [32, 9], strides = [1, 1]} : vector<32x18xf32> to vector<32x9xf32>
    %154 = vector.extract_strided_slice %145 {offsets = [0, 0], sizes = [32, 9], strides = [1, 1]} : vector<32x18xf32> to vector<32x9xf32>
    %155 = vector.extract_strided_slice %146 {offsets = [0, 0], sizes = [32, 9], strides = [1, 1]} : vector<32x18xf32> to vector<32x9xf32>
    %156 = vector.extract_strided_slice %147 {offsets = [0, 0], sizes = [32, 9], strides = [1, 1]} : vector<32x18xf32> to vector<32x9xf32>
    %157 = tpu.concatenate %148, %149, %150, %151, %152, %153, %154, %155, %156 in 1 : vector<32x9xf32>, vector<32x9xf32>, vector<32x9xf32>, vector<32x9xf32>, vector<32x9xf32>, vector<32x9xf32>, vector<32x9xf32>, vector<32x9xf32>, vector<32x9xf32> -> vector<32x81xf32>
    %cst_42 = arith.constant dense<0.000000e+00> : vector<32x36xf32>
    %158 = tpu.matmul %157, %135, %cst_42 {dimension_numbers = #tpu.dot_dimension_numbers<[1], [0], [0], [1], [0, 0, 1, 1], [], []>} : vector<32x81xf32>, vector<81x36xf32>, vector<32x36xf32> -> vector<32x36xf32>
    %159 = vector.extract_strided_slice %139 {offsets = [0, 9], sizes = [32, 9], strides = [1, 1]} : vector<32x18xf32> to vector<32x9xf32>
    %160 = vector.extract_strided_slice %140 {offsets = [0, 9], sizes = [32, 9], strides = [1, 1]} : vector<32x18xf32> to vector<32x9xf32>
    %161 = vector.extract_strided_slice %141 {offsets = [0, 9], sizes = [32, 9], strides = [1, 1]} : vector<32x18xf32> to vector<32x9xf32>
    %162 = vector.extract_strided_slice %142 {offsets = [0, 9], sizes = [32, 9], strides = [1, 1]} : vector<32x18xf32> to vector<32x9xf32>
    %163 = vector.extract_strided_slice %143 {offsets = [0, 9], sizes = [32, 9], strides = [1, 1]} : vector<32x18xf32> to vector<32x9xf32>
    %164 = vector.extract_strided_slice %144 {offsets = [0, 9], sizes = [32, 9], strides = [1, 1]} : vector<32x18xf32> to vector<32x9xf32>
    %165 = vector.extract_strided_slice %145 {offsets = [0, 9], sizes = [32, 9], strides = [1, 1]} : vector<32x18xf32> to vector<32x9xf32>
    %166 = vector.extract_strided_slice %146 {offsets = [0, 9], sizes = [32, 9], strides = [1, 1]} : vector<32x18xf32> to vector<32x9xf32>
    %167 = vector.extract_strided_slice %147 {offsets = [0, 9], sizes = [32, 9], strides = [1, 1]} : vector<32x18xf32> to vector<32x9xf32>
    %168 = tpu.concatenate %159, %160, %161, %162, %163, %164, %165, %166, %167 in 1 : vector<32x9xf32>, vector<32x9xf32>, vector<32x9xf32>, vector<32x9xf32>, vector<32x9xf32>, vector<32x9xf32>, vector<32x9xf32>, vector<32x9xf32>, vector<32x9xf32> -> vector<32x81xf32>
    %cst_43 = arith.constant dense<0.000000e+00> : vector<32x36xf32>
    %169 = tpu.matmul %168, %135, %cst_43 {dimension_numbers = #tpu.dot_dimension_numbers<[1], [0], [0], [1], [0, 0, 1, 1], [], []>} : vector<32x81xf32>, vector<81x36xf32>, vector<32x36xf32> -> vector<32x36xf32>
    %170 = tpu.concatenate %158, %169 in 1 : vector<32x36xf32>, vector<32x36xf32> -> vector<32x72xf32>
    %c3 = arith.constant 3 : index
    %171 = memref.load %arg0[%c3] : memref<5xf32, #tpu.memory_space<smem>>
    %cst_44 = arith.constant dense<0.000000e+00> : vector<32xf32>
    %172 = vector.multi_reduction <add>, %170, %cst_44 [1] : vector<32x72xf32> to vector<32xf32>
    %173 = vector.shape_cast %172 : vector<32xf32> to vector<32x1xf32>
    %cst_45 = arith.constant 0.013888889 : f32
    %174 = vector.broadcast %cst_45 : f32 to vector<32x1xf32>
    %175 = arith.mulf %173, %174 : vector<32x1xf32>
    %176 = vector.broadcast %175 : vector<32x1xf32> to vector<32x72xf32>
    %177 = arith.subf %170, %176 : vector<32x72xf32>
    %178 = arith.mulf %177, %177 : vector<32x72xf32>
    %cst_46 = arith.constant dense<0.000000e+00> : vector<32xf32>
    %179 = vector.multi_reduction <add>, %178, %cst_46 [1] : vector<32x72xf32> to vector<32xf32>
    %180 = vector.shape_cast %179 : vector<32xf32> to vector<32x1xf32>
    %cst_47 = arith.constant 0.013888889 : f32
    %181 = vector.broadcast %cst_47 : f32 to vector<32x1xf32>
    %182 = arith.mulf %180, %181 : vector<32x1xf32>
    %cst_48 = arith.constant 9.99999974E-6 : f32
    %183 = vector.broadcast %cst_48 : f32 to vector<32x1xf32>
    %184 = arith.addf %182, %183 : vector<32x1xf32>
    %185 = math.rsqrt %184 : vector<32x1xf32>
    %186 = vector.broadcast %185 : vector<32x1xf32> to vector<32x72xf32>
    %187 = arith.mulf %177, %186 : vector<32x72xf32>
    %c0_49 = arith.constant 0 : index
    %c0_50 = arith.constant 0 : index
    %188 = vector.load %arg13[%c0_49, %c0_50] : memref<32x1xf32, #tpu.memory_space<vmem>>, vector<32x1xf32>
    %189 = vector.broadcast %188 : vector<32x1xf32> to vector<32x72xf32>
    %190 = arith.mulf %187, %189 : vector<32x72xf32>
    %c0_51 = arith.constant 0 : index
    %c0_52 = arith.constant 0 : index
    %191 = vector.load %arg14[%c0_51, %c0_52] : memref<32x1xf32, #tpu.memory_space<vmem>>, vector<32x1xf32>
    %192 = vector.broadcast %191 : vector<32x1xf32> to vector<32x72xf32>
    %193 = arith.addf %190, %192 : vector<32x72xf32>
    %cst_53 = arith.constant 0.000000e+00 : f32
    %194 = vector.broadcast %cst_53 : f32 to vector<32x72xf32>
    %195 = arith.cmpf ogt, %193, %194 : vector<32x72xf32>
    %196 = vector.broadcast %171 : f32 to vector<32x72xf32>
    %197 = arith.mulf %196, %193 : vector<32x72xf32>
    %198 = arith.select %195, %193, %197 : vector<32x72xi1>, vector<32x72xf32>
    %c0_i32_54 = arith.constant 0 : i32
    %199 = tpu.memref_slice %arg23[%c0_i32_54] : memref<2x!tpu.dma_semaphore, #tpu.memory_space<semaphore_mem>> -> memref<1x!tpu.dma_semaphore, #tpu.memory_space<semaphore_mem>>
    %200 = tpu.memref_squeeze %199 : memref<1x!tpu.dma_semaphore, #tpu.memory_space<semaphore_mem>> -> memref<!tpu.dma_semaphore, #tpu.memory_space<semaphore_mem>>
    tpu.wait_dma2 semaphore(%200 : memref<!tpu.dma_semaphore, #tpu.memory_space<semaphore_mem>>) src(%arg18 : memref<324x144xbf16, #tpu.memory_space<any>>) dst(%arg21 : memref<324x144xbf16, #tpu.memory_space<vmem>>)
    %c0_55 = arith.constant 0 : index
    %c0_56 = arith.constant 0 : index
    %201 = vector.load %arg21[%c0_55, %c0_56] : memref<324x144xbf16, #tpu.memory_space<vmem>>, vector<324x144xbf16>
    %202 = arith.extf %201 : vector<324x144xbf16> to vector<324x144xf32>
    %c0_57 = arith.constant 0 : index
    %c0_58 = arith.constant 0 : index
    %203 = vector.load %arg15[%c0_57, %c0_58] : memref<27x32xbf16, #tpu.memory_space<vmem>>, vector<27x32xbf16>
    %204 = arith.extf %203 : vector<27x32xbf16> to vector<27x32xf32>
    %cst_59 = arith.constant dense<0.000000e+00> : vector<27x72xf32>
    %205 = tpu.matmul %204, %198, %cst_59 {dimension_numbers = #tpu.dot_dimension_numbers<[1], [0], [0], [1], [0, 0, 1, 1], [], []>} : vector<27x32xf32>, vector<32x72xf32>, vector<27x72xf32> -> vector<27x72xf32>
    %206 = vector.extract_strided_slice %205 {offsets = [0, 0], sizes = [3, 72], strides = [1, 1]} : vector<27x72xf32> to vector<3x72xf32>
    %207 = vector.extract_strided_slice %205 {offsets = [3, 0], sizes = [3, 72], strides = [1, 1]} : vector<27x72xf32> to vector<3x72xf32>
    %208 = vector.extract_strided_slice %205 {offsets = [6, 0], sizes = [3, 72], strides = [1, 1]} : vector<27x72xf32> to vector<3x72xf32>
    %209 = vector.extract_strided_slice %205 {offsets = [9, 0], sizes = [3, 72], strides = [1, 1]} : vector<27x72xf32> to vector<3x72xf32>
    %210 = vector.extract_strided_slice %205 {offsets = [12, 0], sizes = [3, 72], strides = [1, 1]} : vector<27x72xf32> to vector<3x72xf32>
    %211 = vector.extract_strided_slice %205 {offsets = [15, 0], sizes = [3, 72], strides = [1, 1]} : vector<27x72xf32> to vector<3x72xf32>
    %212 = vector.extract_strided_slice %205 {offsets = [18, 0], sizes = [3, 72], strides = [1, 1]} : vector<27x72xf32> to vector<3x72xf32>
    %213 = vector.extract_strided_slice %205 {offsets = [21, 0], sizes = [3, 72], strides = [1, 1]} : vector<27x72xf32> to vector<3x72xf32>
    %214 = vector.extract_strided_slice %205 {offsets = [24, 0], sizes = [3, 72], strides = [1, 1]} : vector<27x72xf32> to vector<3x72xf32>
    %215 = vector.extract_strided_slice %206 {offsets = [0, 0], sizes = [3, 36], strides = [1, 1]} : vector<3x72xf32> to vector<3x36xf32>
    %216 = vector.extract_strided_slice %207 {offsets = [0, 0], sizes = [3, 36], strides = [1, 1]} : vector<3x72xf32> to vector<3x36xf32>
    %217 = vector.extract_strided_slice %208 {offsets = [0, 0], sizes = [3, 36], strides = [1, 1]} : vector<3x72xf32> to vector<3x36xf32>
    %218 = vector.extract_strided_slice %209 {offsets = [0, 0], sizes = [3, 36], strides = [1, 1]} : vector<3x72xf32> to vector<3x36xf32>
    %219 = vector.extract_strided_slice %210 {offsets = [0, 0], sizes = [3, 36], strides = [1, 1]} : vector<3x72xf32> to vector<3x36xf32>
    %220 = vector.extract_strided_slice %211 {offsets = [0, 0], sizes = [3, 36], strides = [1, 1]} : vector<3x72xf32> to vector<3x36xf32>
    %221 = vector.extract_strided_slice %212 {offsets = [0, 0], sizes = [3, 36], strides = [1, 1]} : vector<3x72xf32> to vector<3x36xf32>
    %222 = vector.extract_strided_slice %213 {offsets = [0, 0], sizes = [3, 36], strides = [1, 1]} : vector<3x72xf32> to vector<3x36xf32>
    %223 = vector.extract_strided_slice %214 {offsets = [0, 0], sizes = [3, 36], strides = [1, 1]} : vector<3x72xf32> to vector<3x36xf32>
    %224 = tpu.concatenate %215, %216, %217, %218, %219, %220, %221, %222, %223 in 1 : vector<3x36xf32>, vector<3x36xf32>, vector<3x36xf32>, vector<3x36xf32>, vector<3x36xf32>, vector<3x36xf32>, vector<3x36xf32>, vector<3x36xf32>, vector<3x36xf32> -> vector<3x324xf32>
    %cst_60 = arith.constant dense<0.000000e+00> : vector<3x144xf32>
    %225 = tpu.matmul %224, %202, %cst_60 {dimension_numbers = #tpu.dot_dimension_numbers<[1], [0], [0], [1], [0, 0, 1, 1], [], []>} : vector<3x324xf32>, vector<324x144xf32>, vector<3x144xf32> -> vector<3x144xf32>
    %226 = vector.extract_strided_slice %206 {offsets = [0, 36], sizes = [3, 36], strides = [1, 1]} : vector<3x72xf32> to vector<3x36xf32>
    %227 = vector.extract_strided_slice %207 {offsets = [0, 36], sizes = [3, 36], strides = [1, 1]} : vector<3x72xf32> to vector<3x36xf32>
    %228 = vector.extract_strided_slice %208 {offsets = [0, 36], sizes = [3, 36], strides = [1, 1]} : vector<3x72xf32> to vector<3x36xf32>
    %229 = vector.extract_strided_slice %209 {offsets = [0, 36], sizes = [3, 36], strides = [1, 1]} : vector<3x72xf32> to vector<3x36xf32>
    %230 = vector.extract_strided_slice %210 {offsets = [0, 36], sizes = [3, 36], strides = [1, 1]} : vector<3x72xf32> to vector<3x36xf32>
    %231 = vector.extract_strided_slice %211 {offsets = [0, 36], sizes = [3, 36], strides = [1, 1]} : vector<3x72xf32> to vector<3x36xf32>
    %232 = vector.extract_strided_slice %212 {offsets = [0, 36], sizes = [3, 36], strides = [1, 1]} : vector<3x72xf32> to vector<3x36xf32>
    %233 = vector.extract_strided_slice %213 {offsets = [0, 36], sizes = [3, 36], strides = [1, 1]} : vector<3x72xf32> to vector<3x36xf32>
    %234 = vector.extract_strided_slice %214 {offsets = [0, 36], sizes = [3, 36], strides = [1, 1]} : vector<3x72xf32> to vector<3x36xf32>
    %235 = tpu.concatenate %226, %227, %228, %229, %230, %231, %232, %233, %234 in 1 : vector<3x36xf32>, vector<3x36xf32>, vector<3x36xf32>, vector<3x36xf32>, vector<3x36xf32>, vector<3x36xf32>, vector<3x36xf32>, vector<3x36xf32>, vector<3x36xf32> -> vector<3x324xf32>
    %cst_61 = arith.constant dense<0.000000e+00> : vector<3x144xf32>
    %236 = tpu.matmul %235, %202, %cst_61 {dimension_numbers = #tpu.dot_dimension_numbers<[1], [0], [0], [1], [0, 0, 1, 1], [], []>} : vector<3x324xf32>, vector<324x144xf32>, vector<3x144xf32> -> vector<3x144xf32>
    %237 = tpu.concatenate %225, %236 in 1 : vector<3x144xf32>, vector<3x144xf32> -> vector<3x288xf32>
    %c4 = arith.constant 4 : index
    %238 = memref.load %arg0[%c4] : memref<5xf32, #tpu.memory_space<smem>>
    %cst_62 = arith.constant dense<0.000000e+00> : vector<3xf32>
    %239 = vector.multi_reduction <add>, %237, %cst_62 [1] : vector<3x288xf32> to vector<3xf32>
    %240 = vector.shape_cast %239 : vector<3xf32> to vector<3x1xf32>
    %cst_63 = arith.constant 0.00347222225 : f32
    %241 = vector.broadcast %cst_63 : f32 to vector<3x1xf32>
    %242 = arith.mulf %240, %241 : vector<3x1xf32>
    %243 = vector.broadcast %242 : vector<3x1xf32> to vector<3x288xf32>
    %244 = arith.subf %237, %243 : vector<3x288xf32>
    %245 = arith.mulf %244, %244 : vector<3x288xf32>
    %cst_64 = arith.constant dense<0.000000e+00> : vector<3xf32>
    %246 = vector.multi_reduction <add>, %245, %cst_64 [1] : vector<3x288xf32> to vector<3xf32>
    %247 = vector.shape_cast %246 : vector<3xf32> to vector<3x1xf32>
    %cst_65 = arith.constant 0.00347222225 : f32
    %248 = vector.broadcast %cst_65 : f32 to vector<3x1xf32>
    %249 = arith.mulf %247, %248 : vector<3x1xf32>
    %cst_66 = arith.constant 9.99999974E-6 : f32
    %250 = vector.broadcast %cst_66 : f32 to vector<3x1xf32>
    %251 = arith.addf %249, %250 : vector<3x1xf32>
    %252 = math.rsqrt %251 : vector<3x1xf32>
    %253 = vector.broadcast %252 : vector<3x1xf32> to vector<3x288xf32>
    %254 = arith.mulf %244, %253 : vector<3x288xf32>
    %c0_67 = arith.constant 0 : index
    %c0_68 = arith.constant 0 : index
    %255 = vector.load %arg16[%c0_67, %c0_68] : memref<3x1xf32, #tpu.memory_space<vmem>>, vector<3x1xf32>
    %256 = vector.broadcast %255 : vector<3x1xf32> to vector<3x288xf32>
    %257 = arith.mulf %254, %256 : vector<3x288xf32>
    %c0_69 = arith.constant 0 : index
    %c0_70 = arith.constant 0 : index
    %258 = vector.load %arg17[%c0_69, %c0_70] : memref<3x1xf32, #tpu.memory_space<vmem>>, vector<3x1xf32>
    %259 = vector.broadcast %258 : vector<3x1xf32> to vector<3x288xf32>
    %260 = arith.addf %257, %259 : vector<3x288xf32>
    %cst_71 = arith.constant 0.000000e+00 : f32
    %261 = vector.broadcast %cst_71 : f32 to vector<3x288xf32>
    %262 = arith.cmpf ogt, %260, %261 : vector<3x288xf32>
    %263 = vector.broadcast %238 : f32 to vector<3x288xf32>
    %264 = arith.mulf %263, %260 : vector<3x288xf32>
    %265 = arith.select %262, %260, %264 : vector<3x288xi1>, vector<3x288xf32>
    %c1_i32_72 = arith.constant 1 : i32
    %266 = tpu.memref_slice %arg23[%c1_i32_72] : memref<2x!tpu.dma_semaphore, #tpu.memory_space<semaphore_mem>> -> memref<1x!tpu.dma_semaphore, #tpu.memory_space<semaphore_mem>>
    %267 = tpu.memref_squeeze %266 : memref<1x!tpu.dma_semaphore, #tpu.memory_space<semaphore_mem>> -> memref<!tpu.dma_semaphore, #tpu.memory_space<semaphore_mem>>
    tpu.wait_dma2 semaphore(%267 : memref<!tpu.dma_semaphore, #tpu.memory_space<semaphore_mem>>) src(%arg19 : memref<144x576xbf16, #tpu.memory_space<any>>) dst(%arg22 : memref<144x576xbf16, #tpu.memory_space<vmem>>)
    %c0_73 = arith.constant 0 : index
    %c0_74 = arith.constant 0 : index
    %268 = vector.load %arg22[%c0_73, %c0_74] : memref<144x576xbf16, #tpu.memory_space<vmem>>, vector<144x576xbf16>
    %269 = arith.extf %268 : vector<144x576xbf16> to vector<144x576xf32>
    %270 = vector.extract_strided_slice %265 {offsets = [0, 0], sizes = [3, 144], strides = [1, 1]} : vector<3x288xf32> to vector<3x144xf32>
    %cst_75 = arith.constant dense<0.000000e+00> : vector<3x576xf32>
    %271 = tpu.matmul %270, %269, %cst_75 {dimension_numbers = #tpu.dot_dimension_numbers<[1], [0], [0], [1], [0, 0, 1, 1], [], []>} : vector<3x144xf32>, vector<144x576xf32>, vector<3x576xf32> -> vector<3x576xf32>
    %c0_76 = arith.constant 0 : index
    %c0_77 = arith.constant 0 : index
    %c0_78 = arith.constant 0 : index
    %272 = vector.load %arg20[%c0_76, %c0_77, %c0_78] : memref<2x3x576xf32, #tpu.memory_space<vmem>>, vector<1x3x576xf32>
    %273 = vector.shape_cast %272 : vector<1x3x576xf32> to vector<3x576xf32>
    %274 = vector.shape_cast %271 : vector<3x576xf32> to vector<1x3x576xf32>
    tpu.vector_store %arg20[%c0_76, %c0_77, %c0_78], %274 {strides = array<i32>} : memref<2x3x576xf32, #tpu.memory_space<vmem>>, vector<1x3x576xf32>,
    %275 = vector.extract_strided_slice %265 {offsets = [0, 144], sizes = [3, 144], strides = [1, 1]} : vector<3x288xf32> to vector<3x144xf32>
    %cst_79 = arith.constant dense<0.000000e+00> : vector<3x576xf32>
    %276 = tpu.matmul %275, %269, %cst_79 {dimension_numbers = #tpu.dot_dimension_numbers<[1], [0], [0], [1], [0, 0, 1, 1], [], []>} : vector<3x144xf32>, vector<144x576xf32>, vector<3x576xf32> -> vector<3x576xf32>
    %c1_80 = arith.constant 1 : index
    %c0_81 = arith.constant 0 : index
    %c0_82 = arith.constant 0 : index
    %277 = vector.load %arg20[%c1_80, %c0_81, %c0_82] : memref<2x3x576xf32, #tpu.memory_space<vmem>>, vector<1x3x576xf32>
    %278 = vector.shape_cast %277 : vector<1x3x576xf32> to vector<3x576xf32>
    %279 = vector.shape_cast %276 : vector<3x576xf32> to vector<1x3x576xf32>
    tpu.vector_store %arg20[%c1_80, %c0_81, %c0_82], %279 {strides = array<i32>} : memref<2x3x576xf32, #tpu.memory_space<vmem>>, vector<1x3x576xf32>,
    return
  }
}

</mosaic_0001>

<llo_original>
// kernel: decoder_forward.1
$region0: #{decoder_forward.1}
  #allocation0 [shape = 'u32[]', space=smem, size = 0x4, offset = 0x4, fixed_abs, tag = 'smem constant byte address 0x4 - core index']
  #allocation1 [shape = 'u32[72,128]{1,0:T(1,128)}', space=vmem, size = 0x9000, scoped, tag = 'internal scratch']
  #allocation2 [shape = 'bf16[324,144]{1,0:T(8,128)(2,1)}', space=vmem, size = 0x29000, scoped, tag = 'scratch operand']
  #allocation3 [shape = 'bf16[144,576]{1,0:T(8,128)(2,1)}', space=vmem, size = 0x2d000, scoped, tag = 'scratch operand']
  #allocation4 [shape = 's32[2]{0}', space=sflag, size = 0x8, scoped, tag = 'scratch operand']
  #allocation9 [shape = 's32[]', space=sflag, size = 0x4, offset = 0, fixed_abs, tag = 'sflag constant byte address 0x0 - dummy sync flag']
  #allocation10 [shape = 's32[]', space=sflag, size = 0x4, offset = 0, fixed_abs, tag = 'sflag constant byte address 0x0 - dummy sync flag']
  %s0 = inlined_call_operand.vmem [shape: f32[5], index: 0, kind: input, shape index: {}]
  %s1 = inlined_call_operand.vmem [shape: f32[128,2], index: 1, kind: input, shape index: {}]
  %s2 = inlined_call_operand.vmem [shape: bf16[256,128], index: 2, kind: input, shape index: {}]
  %s3 = inlined_call_operand.vmem [shape: f32[256,1], index: 3, kind: input, shape index: {}]
  %s4 = inlined_call_operand.vmem [shape: bf16[1152,256], index: 4, kind: input, shape index: {}]
  %s5 = inlined_call_operand.vmem [shape: f32[128,1], index: 5, kind: input, shape index: {}]
  %s6 = inlined_call_operand.vmem [shape: f32[128,1], index: 6, kind: input, shape index: {}]
  %s7 = inlined_call_operand.hbm [shape: bf16[576,128], index: 7, kind: input, shape index: {}]
  %s8 = inlined_call_operand.vmem [shape: bf16[81,9], index: 8, kind: input, shape index: {}]
  %s9 = inlined_call_operand.vmem [shape: f32[64,1], index: 9, kind: input, shape index: {}]
  %s10 = inlined_call_operand.vmem [shape: f32[64,1], index: 10, kind: input, shape index: {}]
  %s11 = inlined_call_operand.vmem [shape: bf16[288,64], index: 11, kind: input, shape index: {}]
  %s12 = inlined_call_operand.vmem [shape: bf16[81,36], index: 12, kind: input, shape index: {}]
  %s13 = inlined_call_operand.vmem [shape: f32[32,1], index: 13, kind: input, shape index: {}]
  %s14 = inlined_call_operand.vmem [shape: f32[32,1], index: 14, kind: input, shape index: {}]
  %s15 = inlined_call_operand.vmem [shape: bf16[27,32], index: 15, kind: input, shape index: {}]
  %s16 = inlined_call_operand.vmem [shape: f32[3,1], index: 16, kind: input, shape index: {}]
  %s17 = inlined_call_operand.vmem [shape: f32[3,1], index: 17, kind: input, shape index: {}]
  %s18 = inlined_call_operand.vmem [shape: bf16[324,144], index: 18, kind: input, shape index: {}]
  %s19 = inlined_call_operand.vmem [shape: bf16[144,576], index: 19, kind: input, shape index: {}]
  %s20 = inlined_call_operand.vmem [shape: f32[2,3,576], index: 20, kind: output, shape index: {}]
  %s21 = sld [smem:[#allocation0]]
  $region128: #{decoder_forward.1} parent=0
    _
  %s23 = ssub.s32 1, %s21
  %s24 = scalar_select 0, %s23, %s21
  $region1: #{decoder_forward.1} parent=0
    #allocation5 [shape = 'u8[512]{0}', space=smem, size = 0x200, scoped, tag = 'input window, operand 0, single buffered']
    #allocation6 [shape = 's32[1]{0}', space=sflag, size = 0x4, scoped, tag = 'scoped memory for decoder_forward.1']
    #allocation7 [shape = 's32[1]{0}', space=sflag, size = 0x4, scoped, tag = 'scoped memory for decoder_forward.1']
    #allocation8 [shape = 'u8[147456]{0}', space=vmem, size = 0x24000, scoped, tag = 'input window, operand 7, single buffered']
    %25 = vsyncpa [#allocation7], 0
    %26 = vsyncpa [#allocation6], 0
    // Predicated region
    $region2: #{decoder_forward.1} parent=1 // pred_check
      _
    $region3: #{decoder_forward.1} parent=1 // pred_check_branch
      %28 = sbr.rel (0) target = $region5
    $region4: #{decoder_forward.1} parent=1 // pred_region
      %30 = vsyncadd [#allocation7], 0
      %s32 = sshll.u32 %s0, 4
      %s33 = int_to_ptr.vmem [resolvable:$true] %s32
      %35 = dma.vmem_to_smem %s33, 16, [#allocation5], [#allocation7]
    $region5: #{decoder_forward.1} parent=1 // pred_fallthru
      _
    // Predicated region
    $region6: #{decoder_forward.1} parent=1 // pred_check
      _
    $region7: #{decoder_forward.1} parent=1 // pred_check_branch
      %37 = sbr.rel (0) target = $region9
    $region8: #{decoder_forward.1} parent=1 // pred_region
      _
    $region9: #{decoder_forward.1} parent=1 // pred_fallthru
      _
    // Predicated region
    $region10: #{decoder_forward.1} parent=1 // pred_check
      _
    $region11: #{decoder_forward.1} parent=1 // pred_check_branch
      %39 = sbr.rel (0) target = $region13
    $region12: #{decoder_forward.1} parent=1 // pred_region
      _
    $region13: #{decoder_forward.1} parent=1 // pred_fallthru
      _
    // Predicated region
    $region14: #{decoder_forward.1} parent=1 // pred_check
      _
    $region15: #{decoder_forward.1} parent=1 // pred_check_branch
      %41 = sbr.rel (0) target = $region17
    $region16: #{decoder_forward.1} parent=1 // pred_region
      _
    $region17: #{decoder_forward.1} parent=1 // pred_fallthru
      _
    // Predicated region
    $region18: #{decoder_forward.1} parent=1 // pred_check
      _
    $region19: #{decoder_forward.1} parent=1 // pred_check_branch
      %43 = sbr.rel (0) target = $region21
    $region20: #{decoder_forward.1} parent=1 // pred_region
      _
    $region21: #{decoder_forward.1} parent=1 // pred_fallthru
      _
    // Predicated region
    $region22: #{decoder_forward.1} parent=1 // pred_check
      _
    $region23: #{decoder_forward.1} parent=1 // pred_check_branch
      %45 = sbr.rel (0) target = $region25
    $region24: #{decoder_forward.1} parent=1 // pred_region
      _
    $region25: #{decoder_forward.1} parent=1 // pred_fallthru
      _
    // Predicated region
    $region26: #{decoder_forward.1} parent=1 // pred_check
      _
    $region27: #{decoder_forward.1} parent=1 // pred_check_branch
      %47 = sbr.rel (0) target = $region29
    $region28: #{decoder_forward.1} parent=1 // pred_region
      _
    $region29: #{decoder_forward.1} parent=1 // pred_fallthru
      _
    // Predicated region
    $region30: #{decoder_forward.1} parent=1 // pred_check
      _
    $region31: #{decoder_forward.1} parent=1 // pred_check_branch
      %49 = sbr.rel (0) target = $region33
    $region32: #{decoder_forward.1} parent=1 // pred_region
      %51 = vsyncadd [#allocation6], 0
      %s52 = sshll.u32 %s7, 4
      %s53 = int_to_ptr.hbm [resolvable:$true] %s52
      %s54 = sshll.u32 [#allocation8], 4
      %s55 = int_to_ptr.vmem [resolvable:$true] %s54
      %60 = dma.hbm_to_vmem [thread:$0]  %s53, 4608, %s55, [#allocation6], 64, 64, 4
    $region33: #{decoder_forward.1} parent=1 // pred_fallthru
      _
    // Predicated region
    $region34: #{decoder_forward.1} parent=1 // pred_check
      _
    $region35: #{decoder_forward.1} parent=1 // pred_check_branch
      %62 = sbr.rel (0) target = $region37
    $region36: #{decoder_forward.1} parent=1 // pred_region
      _
    $region37: #{decoder_forward.1} parent=1 // pred_fallthru
      _
    // Predicated region
    $region38: #{decoder_forward.1} parent=1 // pred_check
      _
    $region39: #{decoder_forward.1} parent=1 // pred_check_branch
      %64 = sbr.rel (0) target = $region41
    $region40: #{decoder_forward.1} parent=1 // pred_region
      _
    $region41: #{decoder_forward.1} parent=1 // pred_fallthru
      _
    // Predicated region
    $region42: #{decoder_forward.1} parent=1 // pred_check
      _
    $region43: #{decoder_forward.1} parent=1 // pred_check_branch
      %66 = sbr.rel (0) target = $region45
    $region44: #{decoder_forward.1} parent=1 // pred_region
      _
    $region45: #{decoder_forward.1} parent=1 // pred_fallthru
      _
    // Predicated region
    $region46: #{decoder_forward.1} parent=1 // pred_check
      _
    $region47: #{decoder_forward.1} parent=1 // pred_check_branch
      %68 = sbr.rel (0) target = $region49
    $region48: #{decoder_forward.1} parent=1 // pred_region
      _
    $region49: #{decoder_forward.1} parent=1 // pred_fallthru
      _
    // Predicated region
    $region50: #{decoder_forward.1} parent=1 // pred_check
      _
    $region51: #{decoder_forward.1} parent=1 // pred_check_branch
      %70 = sbr.rel (0) target = $region53
    $region52: #{decoder_forward.1} parent=1 // pred_region
      _
    $region53: #{decoder_forward.1} parent=1 // pred_fallthru
      _
    // Predicated region
    $region54: #{decoder_forward.1} parent=1 // pred_check
      _
    $region55: #{decoder_forward.1} parent=1 // pred_check_branch
      %72 = sbr.rel (0) target = $region57
    $region56: #{decoder_forward.1} parent=1 // pred_region
      _
    $region57: #{decoder_forward.1} parent=1 // pred_fallthru
      _
    // Predicated region
    $region58: #{decoder_forward.1} parent=1 // pred_check
      _
    $region59: #{decoder_forward.1} parent=1 // pred_check_branch
      %74 = sbr.rel (0) target = $region61
    $region60: #{decoder_forward.1} parent=1 // pred_region
      _
    $region61: #{decoder_forward.1} parent=1 // pred_fallthru
      _
    // Predicated region
    $region62: #{decoder_forward.1} parent=1 // pred_check
      _
    $region63: #{decoder_forward.1} parent=1 // pred_check_branch
      %76 = sbr.rel (0) target = $region65
    $region64: #{decoder_forward.1} parent=1 // pred_region
      _
    $region65: #{decoder_forward.1} parent=1 // pred_fallthru
      _
    // Predicated region
    $region66: #{decoder_forward.1} parent=1 // pred_check
      _
    $region67: #{decoder_forward.1} parent=1 // pred_check_branch
      %78 = sbr.rel (0) target = $region69
    $region68: #{decoder_forward.1} parent=1 // pred_region
      _
    $region69: #{decoder_forward.1} parent=1 // pred_fallthru
      _
    // Predicated region
    $region70: #{decoder_forward.1} parent=1 // pred_check
      _
    $region71: #{decoder_forward.1} parent=1 // pred_check_branch
      %80 = sbr.rel (0) target = $region73
    $region72: #{decoder_forward.1} parent=1 // pred_region
      _
    $region73: #{decoder_forward.1} parent=1 // pred_fallthru
      _
    // Predicated region
    $region74: #{decoder_forward.1} parent=1 // pred_check
      _
    $region75: #{decoder_forward.1} parent=1 // pred_check_branch
      %82 = sbr.rel (0) target = $region77
    $region76: #{decoder_forward.1} parent=1 // pred_region
      %84 = dma.done [#allocation7], 16
    $region77: #{decoder_forward.1} parent=1 // pred_fallthru
      _
    // Predicated region
    $region78: #{decoder_forward.1} parent=1 // pred_check
      _
    $region79: #{decoder_forward.1} parent=1 // pred_check_branch
      %86 = sbr.rel (0) target = $region81
    $region80: #{decoder_forward.1} parent=1 // pred_region
      %88 = dma.done [#allocation6], 4608
    $region81: #{decoder_forward.1} parent=1 // pred_fallthru
      _
    %89 = sfence
    // Predicated region
    $region82: #{decoder_forward.1} parent=1 // pred_check
      _
    $region83: #{decoder_forward.1} parent=1 // pred_check_branch
      %91 = sbr.rel (0) target = $region85
    $region84: #{decoder_forward.1} parent=1 // pred_region
      loop: start=0, step=1, limit=1
      $region86: #{decoder_forward.1} parent=84 // loop_pre_header
        _
      $region87: #{decoder_forward.1} parent=84 // loop_header
        %s93 = sphi 0, %s97
        %p94 = scmp.ge.s32.totalorder %s93, 1
        %s98 = sphi %s18, %s18
        %s99 = sphi [#allocation2], [#allocation2]
      $region88: #{decoder_forward.1} parent=84 // loop_header_branch
        %96 = sbr.rel (%p94) target = $region92
      $region89: #{decoder_forward.1} parent=84 // loop_body
        %v100 = vld [vmem:[%s98] sm:$0xff]
        %101 = vst [vmem:[%s99] sm:$0xff] %v100
        %v102 = vld [vmem:[%s98 + $0x8] sm:$0xff]
        %103 = vst [vmem:[%s99 + $0x8] sm:$0xff] %v102
        %v104 = vld [vmem:[%s98 + $0x10] sm:$0xff]
        %105 = vst [vmem:[%s99 + $0x10] sm:$0xff] %v104
        %v106 = vld [vmem:[%s98 + $0x18] sm:$0xff]
        %107 = vst [vmem:[%s99 + $0x18] sm:$0xff] %v106
        %v108 = vld [vmem:[%s98 + $0x20] sm:$0xff]
        %109 = vst [vmem:[%s99 + $0x20] sm:$0xff] %v108
        %v110 = vld [vmem:[%s98 + $0x28] sm:$0xff]
        %111 = vst [vmem:[%s99 + $0x28] sm:$0xff] %v110
        %v112 = vld [vmem:[%s98 + $0x30] sm:$0xff]
        %113 = vst [vmem:[%s99 + $0x30] sm:$0xff] %v112
        %v114 = vld [vmem:[%s98 + $0x38] sm:$0xff]
        %115 = vst [vmem:[%s99 + $0x38] sm:$0xff] %v114
        %v116 = vld [vmem:[%s98 + $0x40] sm:$0xff]
        %117 = vst [vmem:[%s99 + $0x40] sm:$0xff] %v116
        %v118 = vld [vmem:[%s98 + $0x48] sm:$0xff]
        %119 = vst [vmem:[%s99 + $0x48] sm:$0xff] %v118
        %v120 = vld [vmem:[%s98 + $0x50] sm:$0xff]
        %121 = vst [vmem:[%s99 + $0x50] sm:$0xff] %v120
        %v122 = vld [vmem:[%s98 + $0x58] sm:$0xff]
        %123 = vst [vmem:[%s99 + $0x58] sm:$0xff] %v122
        %v124 = vld [vmem:[%s98 + $0x60] sm:$0xff]
        %125 = vst [vmem:[%s99 + $0x60] sm:$0xff] %v124
        %v126 = vld [vmem:[%s98 + $0x68] sm:$0xff]
        %127 = vst [vmem:[%s99 + $0x68] sm:$0xff] %v126
        %v128 = vld [vmem:[%s98 + $0x70] sm:$0xff]
        %129 = vst [vmem:[%s99 + $0x70] sm:$0xff] %v128
        %v130 = vld [vmem:[%s98 + $0x78] sm:$0xff]
        %131 = vst [vmem:[%s99 + $0x78] sm:$0xff] %v130
        %v132 = vld [vmem:[%s98 + $0x80] sm:$0xff]
        %133 = vst [vmem:[%s99 + $0x80] sm:$0xff] %v132
        %v134 = vld [vmem:[%s98 + $0x88] sm:$0xff]
        %135 = vst [vmem:[%s99 + $0x88] sm:$0xff] %v134
        %v136 = vld [vmem:[%s98 + $0x90] sm:$0xff]
        %137 = vst [vmem:[%s99 + $0x90] sm:$0xff] %v136
        %v138 = vld [vmem:[%s98 + $0x98] sm:$0xff]
        %139 = vst [vmem:[%s99 + $0x98] sm:$0xff] %v138
        %v140 = vld [vmem:[%s98 + $0xa0] sm:$0xff]
        %141 = vst [vmem:[%s99 + $0xa0] sm:$0xff] %v140
        %v142 = vld [vmem:[%s98 + $0xa8] sm:$0xff]
        %143 = vst [vmem:[%s99 + $0xa8] sm:$0xff] %v142
        %v144 = vld [vmem:[%s98 + $0xb0] sm:$0xff]
        %145 = vst [vmem:[%s99 + $0xb0] sm:$0xff] %v144
        %v146 = vld [vmem:[%s98 + $0xb8] sm:$0xff]
        %147 = vst [vmem:[%s99 + $0xb8] sm:$0xff] %v146
        %v148 = vld [vmem:[%s98 + $0xc0] sm:$0xff]
        %149 = vst [vmem:[%s99 + $0xc0] sm:$0xff] %v148
        %v150 = vld [vmem:[%s98 + $0xc8] sm:$0xff]
        %151 = vst [vmem:[%s99 + $0xc8] sm:$0xff] %v150
        %v152 = vld [vmem:[%s98 + $0xd0] sm:$0xff]
        %153 = vst [vmem:[%s99 + $0xd0] sm:$0xff] %v152
        %v154 = vld [vmem:[%s98 + $0xd8] sm:$0xff]
        %155 = vst [vmem:[%s99 + $0xd8] sm:$0xff] %v154
        %v156 = vld [vmem:[%s98 + $0xe0] sm:$0xff]
        %157 = vst [vmem:[%s99 + $0xe0] sm:$0xff] %v156
        %v158 = vld [vmem:[%s98 + $0xe8] sm:$0xff]
        %159 = vst [vmem:[%s99 + $0xe8] sm:$0xff] %v158
        %v160 = vld [vmem:[%s98 + $0xf0] sm:$0xff]
        %161 = vst [vmem:[%s99 + $0xf0] sm:$0xff] %v160
        %v162 = vld [vmem:[%s98 + $0xf8] sm:$0xff]
        %163 = vst [vmem:[%s99 + $0xf8] sm:$0xff] %v162
        %v164 = vld [vmem:[%s98 + $0x100] sm:$0xff]
        %165 = vst [vmem:[%s99 + $0x100] sm:$0xff] %v164
        %v166 = vld [vmem:[%s98 + $0x108] sm:$0xff]
        %167 = vst [vmem:[%s99 + $0x108] sm:$0xff] %v166
        %v168 = vld [vmem:[%s98 + $0x110] sm:$0xff]
        %169 = vst [vmem:[%s99 + $0x110] sm:$0xff] %v168
        %v170 = vld [vmem:[%s98 + $0x118] sm:$0xff]
        %171 = vst [vmem:[%s99 + $0x118] sm:$0xff] %v170
        %v172 = vld [vmem:[%s98 + $0x120] sm:$0xff]
        %173 = vst [vmem:[%s99 + $0x120] sm:$0xff] %v172
        %v174 = vld [vmem:[%s98 + $0x128] sm:$0xff]
        %175 = vst [vmem:[%s99 + $0x128] sm:$0xff] %v174
        %v176 = vld [vmem:[%s98 + $0x130] sm:$0xff]
        %177 = vst [vmem:[%s99 + $0x130] sm:$0xff] %v176
        %v178 = vld [vmem:[%s98 + $0x138] sm:$0xff]
        %179 = vst [vmem:[%s99 + $0x138] sm:$0xff] %v178
        %v180 = vld [vmem:[%s98 + $0x140] sm:$0xff]
        %181 = vst [vmem:[%s99 + $0x140] sm:$0xff] %v180
      $region90: #{decoder_forward.1} parent=84 // loop_footer
        %s97 = sadd.s32 1, %s93
      $region91: #{decoder_forward.1} parent=84 // loop_footer_branch
        %92 = sbr.rel target = $region87
      $region92: #{decoder_forward.1} parent=84 // loop_exit
        _
    $region85: #{decoder_forward.1} parent=1 // pred_fallthru
      _
    // Predicated region
    $region93: #{decoder_forward.1} parent=1 // pred_check
      _
    $region94: #{decoder_forward.1} parent=1 // pred_check_branch
      %183 = sbr.rel target = $region96
    $region95: #{decoder_forward.1} parent=1 // pred_region
      _
    $region96: #{decoder_forward.1} parent=1 // pred_fallthru
      _
    // Predicated region
    $region97: #{decoder_forward.1} parent=1 // pred_check
      _
    $region98: #{decoder_forward.1} parent=1 // pred_check_branch
      %186 = sbr.rel (0) target = $region100
    $region99: #{decoder_forward.1} parent=1 // pred_region
      %187 = vsyncadd [#allocation4], 5248
    $region100: #{decoder_forward.1} parent=1 // pred_fallthru
      _
    %s188 = scalar_lea.sflag [#allocation4], 1
    // Predicated region
    $region101: #{decoder_forward.1} parent=1 // pred_check
      _
    $region102: #{decoder_forward.1} parent=1 // pred_check_branch
      %190 = sbr.rel (0) target = $region104
    $region103: #{decoder_forward.1} parent=1 // pred_region
      loop: start=0, step=1, limit=1
      $region105: #{decoder_forward.1} parent=103 // loop_pre_header
        _
      $region106: #{decoder_forward.1} parent=103 // loop_header
        %s192 = sphi 0, %s196
        %p193 = scmp.ge.s32.totalorder %s192, 1
        %s197 = sphi %s19, %s19
        %s198 = sphi [#allocation3], [#allocation3]
      $region107: #{decoder_forward.1} parent=103 // loop_header_branch
        %195 = sbr.rel (%p193) target = $region111
      $region108: #{decoder_forward.1} parent=103 // loop_body
        %v199 = vld [vmem:[%s197] sm:$0xff]
        %200 = vst [vmem:[%s198] sm:$0xff] %v199
        %v201 = vld [vmem:[%s197 + $0x8] sm:$0xff]
        %202 = vst [vmem:[%s198 + $0x8] sm:$0xff] %v201
        %v203 = vld [vmem:[%s197 + $0x10] sm:$0xff]
        %204 = vst [vmem:[%s198 + $0x10] sm:$0xff] %v203
        %v205 = vld [vmem:[%s197 + $0x18] sm:$0xff]
        %206 = vst [vmem:[%s198 + $0x18] sm:$0xff] %v205
        %v207 = vld [vmem:[%s197 + $0x20] sm:$0xff]
        %208 = vst [vmem:[%s198 + $0x20] sm:$0xff] %v207
        %v209 = vld [vmem:[%s197 + $0x28] sm:$0xff]
        %210 = vst [vmem:[%s198 + $0x28] sm:$0xff] %v209
        %v211 = vld [vmem:[%s197 + $0x30] sm:$0xff]
        %212 = vst [vmem:[%s198 + $0x30] sm:$0xff] %v211
        %v213 = vld [vmem:[%s197 + $0x38] sm:$0xff]
        %214 = vst [vmem:[%s198 + $0x38] sm:$0xff] %v213
        %v215 = vld [vmem:[%s197 + $0x40] sm:$0xff]
        %216 = vst [vmem:[%s198 + $0x40] sm:$0xff] %v215
        %v217 = vld [vmem:[%s197 + $0x48] sm:$0xff]
        %218 = vst [vmem:[%s198 + $0x48] sm:$0xff] %v217
        %v219 = vld [vmem:[%s197 + $0x50] sm:$0xff]
        %220 = vst [vmem:[%s198 + $0x50] sm:$0xff] %v219
        %v221 = vld [vmem:[%s197 + $0x58] sm:$0xff]
        %222 = vst [vmem:[%s198 + $0x58] sm:$0xff] %v221
        %v223 = vld [vmem:[%s197 + $0x60] sm:$0xff]
        %224 = vst [vmem:[%s198 + $0x60] sm:$0xff] %v223
        %v225 = vld [vmem:[%s197 + $0x68] sm:$0xff]
        %226 = vst [vmem:[%s198 + $0x68] sm:$0xff] %v225
        %v227 = vld [vmem:[%s197 + $0x70] sm:$0xff]
        %228 = vst [vmem:[%s198 + $0x70] sm:$0xff] %v227
        %v229 = vld [vmem:[%s197 + $0x78] sm:$0xff]
        %230 = vst [vmem:[%s198 + $0x78] sm:$0xff] %v229
        %v231 = vld [vmem:[%s197 + $0x80] sm:$0xff]
        %232 = vst [vmem:[%s198 + $0x80] sm:$0xff] %v231
        %v233 = vld [vmem:[%s197 + $0x88] sm:$0xff]
        %234 = vst [vmem:[%s198 + $0x88] sm:$0xff] %v233
        %v235 = vld [vmem:[%s197 + $0x90] sm:$0xff]
        %236 = vst [vmem:[%s198 + $0x90] sm:$0xff] %v235
        %v237 = vld [vmem:[%s197 + $0x98] sm:$0xff]
        %238 = vst [vmem:[%s198 + $0x98] sm:$0xff] %v237
        %v239 = vld [vmem:[%s197 + $0xa0] sm:$0xff]
        %240 = vst [vmem:[%s198 + $0xa0] sm:$0xff] %v239
        %v241 = vld [vmem:[%s197 + $0xa8] sm:$0xff]
        %242 = vst [vmem:[%s198 + $0xa8] sm:$0xff] %v241
        %v243 = vld [vmem:[%s197 + $0xb0] sm:$0xff]
        %244 = vst [vmem:[%s198 + $0xb0] sm:$0xff] %v243
        %v245 = vld [vmem:[%s197 + $0xb8] sm:$0xff]
        %246 = vst [vmem:[%s198 + $0xb8] sm:$0xff] %v245
        %v247 = vld [vmem:[%s197 + $0xc0] sm:$0xff]
        %248 = vst [vmem:[%s198 + $0xc0] sm:$0xff] %v247
        %v249 = vld [vmem:[%s197 + $0xc8] sm:$0xff]
        %250 = vst [vmem:[%s198 + $0xc8] sm:$0xff] %v249
        %v251 = vld [vmem:[%s197 + $0xd0] sm:$0xff]
        %252 = vst [vmem:[%s198 + $0xd0] sm:$0xff] %v251
        %v253 = vld [vmem:[%s197 + $0xd8] sm:$0xff]
        %254 = vst [vmem:[%s198 + $0xd8] sm:$0xff] %v253
        %v255 = vld [vmem:[%s197 + $0xe0] sm:$0xff]
        %256 = vst [vmem:[%s198 + $0xe0] sm:$0xff] %v255
        %v257 = vld [vmem:[%s197 + $0xe8] sm:$0xff]
        %258 = vst [vmem:[%s198 + $0xe8] sm:$0xff] %v257
        %v259 = vld [vmem:[%s197 + $0xf0] sm:$0xff]
        %260 = vst [vmem:[%s198 + $0xf0] sm:$0xff] %v259
        %v261 = vld [vmem:[%s197 + $0xf8] sm:$0xff]
        %262 = vst [vmem:[%s198 + $0xf8] sm:$0xff] %v261
        %v263 = vld [vmem:[%s197 + $0x100] sm:$0xff]
        %264 = vst [vmem:[%s198 + $0x100] sm:$0xff] %v263
        %v265 = vld [vmem:[%s197 + $0x108] sm:$0xff]
        %266 = vst [vmem:[%s198 + $0x108] sm:$0xff] %v265
        %v267 = vld [vmem:[%s197 + $0x110] sm:$0xff]
        %268 = vst [vmem:[%s198 + $0x110] sm:$0xff] %v267
        %v269 = vld [vmem:[%s197 + $0x118] sm:$0xff]
        %270 = vst [vmem:[%s198 + $0x118] sm:$0xff] %v269
        %v271 = vld [vmem:[%s197 + $0x120] sm:$0xff]
        %272 = vst [vmem:[%s198 + $0x120] sm:$0xff] %v271
        %v273 = vld [vmem:[%s197 + $0x128] sm:$0xff]
        %274 = vst [vmem:[%s198 + $0x128] sm:$0xff] %v273
        %v275 = vld [vmem:[%s197 + $0x130] sm:$0xff]
        %276 = vst [vmem:[%s198 + $0x130] sm:$0xff] %v275
        %v277 = vld [vmem:[%s197 + $0x138] sm:$0xff]
        %278 = vst [vmem:[%s198 + $0x138] sm:$0xff] %v277
        %v279 = vld [vmem:[%s197 + $0x140] sm:$0xff]
        %280 = vst [vmem:[%s198 + $0x140] sm:$0xff] %v279
        %v281 = vld [vmem:[%s197 + $0x148] sm:$0xff]
        %282 = vst [vmem:[%s198 + $0x148] sm:$0xff] %v281
        %v283 = vld [vmem:[%s197 + $0x150] sm:$0xff]
        %284 = vst [vmem:[%s198 + $0x150] sm:$0xff] %v283
        %v285 = vld [vmem:[%s197 + $0x158] sm:$0xff]
        %286 = vst [vmem:[%s198 + $0x158] sm:$0xff] %v285
        %v287 = vld [vmem:[%s197 + $0x160] sm:$0xff]
        %288 = vst [vmem:[%s198 + $0x160] sm:$0xff] %v287
      $region109: #{decoder_forward.1} parent=103 // loop_footer
        %s196 = sadd.s32 1, %s192
      $region110: #{decoder_forward.1} parent=103 // loop_footer_branch
        %191 = sbr.rel target = $region106
      $region111: #{decoder_forward.1} parent=103 // loop_exit
        _
    $region104: #{decoder_forward.1} parent=1 // pred_fallthru
      _
    // Predicated region
    $region112: #{decoder_forward.1} parent=1 // pred_check
      _
    $region113: #{decoder_forward.1} parent=1 // pred_check_branch
      %290 = sbr.rel target = $region115
    $region114: #{decoder_forward.1} parent=1 // pred_region
      _
    $region115: #{decoder_forward.1} parent=1 // pred_fallthru
      _
    // Predicated region
    $region116: #{decoder_forward.1} parent=1 // pred_check
      _
    $region117: #{decoder_forward.1} parent=1 // pred_check_branch
      %293 = sbr.rel (0) target = $region119
    $region118: #{decoder_forward.1} parent=1 // pred_region
      %294 = vsyncadd %s188, 5760
    $region119: #{decoder_forward.1} parent=1 // pred_fallthru
      _
    %v295 = vld [vmem:[%s2] sm:$0xf]
    %v296 = vld [vmem:[%s2 + $0x4] sm:$0xf]
    %v297 = vld [vmem:[%s2 + $0x8] sm:$0xf]
    %v298 = vld [vmem:[%s2 + $0xc] sm:$0xf]
    %v299 = vld [vmem:[%s2 + $0x10] sm:$0xf]
    %v300 = vld [vmem:[%s2 + $0x14] sm:$0xf]
    %v301 = vld [vmem:[%s2 + $0x18] sm:$0xf]
    %v302 = vld [vmem:[%s2 + $0x1c] sm:$0xf]
    %v303 = vld [vmem:[%s2 + $0x20] sm:$0xf]
    %v304 = vld [vmem:[%s2 + $0x24] sm:$0xf]
    %v305 = vld [vmem:[%s2 + $0x28] sm:$0xf]
    %v306 = vld [vmem:[%s2 + $0x2c] sm:$0xf]
    %v307 = vld [vmem:[%s2 + $0x30] sm:$0xf]
    %v308 = vld [vmem:[%s2 + $0x34] sm:$0xf]
    %v309 = vld [vmem:[%s2 + $0x38] sm:$0xf]
    %v310 = vld [vmem:[%s2 + $0x3c] sm:$0xf]
    %v311 = vld [vmem:[%s2 + $0x40] sm:$0xf]
    %v312 = vld [vmem:[%s2 + $0x44] sm:$0xf]
    %v313 = vld [vmem:[%s2 + $0x48] sm:$0xf]
    %v314 = vld [vmem:[%s2 + $0x4c] sm:$0xf]
    %v315 = vld [vmem:[%s2 + $0x50] sm:$0xf]
    %v316 = vld [vmem:[%s2 + $0x54] sm:$0xf]
    %v317 = vld [vmem:[%s2 + $0x58] sm:$0xf]
    %v318 = vld [vmem:[%s2 + $0x5c] sm:$0xf]
    %v319 = vld [vmem:[%s2 + $0x60] sm:$0xf]
    %v320 = vld [vmem:[%s2 + $0x64] sm:$0xf]
    %v321 = vld [vmem:[%s2 + $0x68] sm:$0xf]
    %v322 = vld [vmem:[%s2 + $0x6c] sm:$0xf]
    %v323 = vld [vmem:[%s2 + $0x70] sm:$0xf]
    %v324 = vld [vmem:[%s2 + $0x74] sm:$0xf]
    %v325 = vld [vmem:[%s2 + $0x78] sm:$0xf]
    %v326 = vld [vmem:[%s2 + $0x7c] sm:$0xf]
    %v327 = vunpack.c.l.bf16 %v295
    %v328 = vunpack.c.l.bf16 %v296
    %v329 = vunpack.c.l.bf16 %v297
    %v330 = vunpack.c.l.bf16 %v298
    %v331 = vunpack.c.l.bf16 %v299
    %v332 = vunpack.c.l.bf16 %v300
    %v333 = vunpack.c.l.bf16 %v301
    %v334 = vunpack.c.l.bf16 %v302
    %v335 = vunpack.c.l.bf16 %v303
    %v336 = vunpack.c.l.bf16 %v304
    %v337 = vunpack.c.l.bf16 %v305
    %v338 = vunpack.c.l.bf16 %v306
    %v339 = vunpack.c.l.bf16 %v307
    %v340 = vunpack.c.l.bf16 %v308
    %v341 = vunpack.c.l.bf16 %v309
    %v342 = vunpack.c.l.bf16 %v310
    %v343 = vunpack.c.l.bf16 %v311
    %v344 = vunpack.c.l.bf16 %v312
    %v345 = vunpack.c.l.bf16 %v313
    %v346 = vunpack.c.l.bf16 %v314
    %v347 = vunpack.c.l.bf16 %v315
    %v348 = vunpack.c.l.bf16 %v316
    %v349 = vunpack.c.l.bf16 %v317
    %v350 = vunpack.c.l.bf16 %v318
    %v351 = vunpack.c.l.bf16 %v319
    %v352 = vunpack.c.l.bf16 %v320
    %v353 = vunpack.c.l.bf16 %v321
    %v354 = vunpack.c.l.bf16 %v322
    %v355 = vunpack.c.l.bf16 %v323
    %v356 = vunpack.c.l.bf16 %v324
    %v357 = vunpack.c.l.bf16 %v325
    %v358 = vunpack.c.l.bf16 %v326
    %v359 = vld [vmem:[%s1] sm:$0xff]
    %v360 = vld [vmem:[%s1 + $0x8] sm:$0xff]
    %v361 = vld [vmem:[%s1 + $0x10] sm:$0xff]
    %v362 = vld [vmem:[%s1 + $0x18] sm:$0xff]
    %v363 = vld [vmem:[%s1 + $0x20] sm:$0xff]
    %v364 = vld [vmem:[%s1 + $0x28] sm:$0xff]
    %v365 = vld [vmem:[%s1 + $0x30] sm:$0xff]
    %v366 = vld [vmem:[%s1 + $0x38] sm:$0xff]
    %v367 = vld [vmem:[%s1 + $0x40] sm:$0xff]
    %v368 = vld [vmem:[%s1 + $0x48] sm:$0xff]
    %v369 = vld [vmem:[%s1 + $0x50] sm:$0xff]
    %v370 = vld [vmem:[%s1 + $0x58] sm:$0xff]
    %v371 = vld [vmem:[%s1 + $0x60] sm:$0xff]
    %v372 = vld [vmem:[%s1 + $0x68] sm:$0xff]
    %v373 = vld [vmem:[%s1 + $0x70] sm:$0xff]
    %v374 = vld [vmem:[%s1 + $0x78] sm:$0xff]
    %v375 = vld [vmem:[%s3] sm:$0xff]
    %v376 = vld [vmem:[%s3 + $0x8] sm:$0xff]
    %v377 = vld [vmem:[%s3 + $0x10] sm:$0xff]
    %v378 = vld [vmem:[%s3 + $0x18] sm:$0xff]
    %v379 = vld [vmem:[%s3 + $0x20] sm:$0xff]
    %v380 = vld [vmem:[%s3 + $0x28] sm:$0xff]
    %v381 = vld [vmem:[%s3 + $0x30] sm:$0xff]
    %v382 = vld [vmem:[%s3 + $0x38] sm:$0xff]
    %v383 = vld [vmem:[%s3 + $0x40] sm:$0xff]
    %v384 = vld [vmem:[%s3 + $0x48] sm:$0xff]
    %v385 = vld [vmem:[%s3 + $0x50] sm:$0xff]
    %v386 = vld [vmem:[%s3 + $0x58] sm:$0xff]
    %v387 = vld [vmem:[%s3 + $0x60] sm:$0xff]
    %v388 = vld [vmem:[%s3 + $0x68] sm:$0xff]
    %v389 = vld [vmem:[%s3 + $0x70] sm:$0xff]
    %v390 = vld [vmem:[%s3 + $0x78] sm:$0xff]
    %v391 = vld [vmem:[%s3 + $0x80] sm:$0xff]
    %v392 = vld [vmem:[%s3 + $0x88] sm:$0xff]
    %v393 = vld [vmem:[%s3 + $0x90] sm:$0xff]
    %v394 = vld [vmem:[%s3 + $0x98] sm:$0xff]
    %v395 = vld [vmem:[%s3 + $0xa0] sm:$0xff]
    %v396 = vld [vmem:[%s3 + $0xa8] sm:$0xff]
    %v397 = vld [vmem:[%s3 + $0xb0] sm:$0xff]
    %v398 = vld [vmem:[%s3 + $0xb8] sm:$0xff]
    %v399 = vld [vmem:[%s3 + $0xc0] sm:$0xff]
    %v400 = vld [vmem:[%s3 + $0xc8] sm:$0xff]
    %v401 = vld [vmem:[%s3 + $0xd0] sm:$0xff]
    %v402 = vld [vmem:[%s3 + $0xd8] sm:$0xff]
    %v403 = vld [vmem:[%s3 + $0xe0] sm:$0xff]
    %v404 = vld [vmem:[%s3 + $0xe8] sm:$0xff]
    %v405 = vld [vmem:[%s3 + $0xf0] sm:$0xff]
    %v406 = vld [vmem:[%s3 + $0xf8] sm:$0xff]
    %408 = vset.pattern.permute.xlu0 0
    %409 = vperm.xlu0 %408, %v375
    %v410 = vpop.permute.xlu0 %409
    %413 = vset.pattern.permute.xlu0 0
    %414 = vperm.xlu0 %413, %v376
    %v415 = vpop.permute.xlu0 %414
    %418 = vset.pattern.permute.xlu0 0
    %419 = vperm.xlu0 %418, %v377
    %v420 = vpop.permute.xlu0 %419
    %423 = vset.pattern.permute.xlu0 0
    %424 = vperm.xlu0 %423, %v378
    %v425 = vpop.permute.xlu0 %424
    %428 = vset.pattern.permute.xlu0 0
    %429 = vperm.xlu0 %428, %v379
    %v430 = vpop.permute.xlu0 %429
    %433 = vset.pattern.permute.xlu0 0
    %434 = vperm.xlu0 %433, %v380
    %v435 = vpop.permute.xlu0 %434
    %438 = vset.pattern.permute.xlu0 0
    %439 = vperm.xlu0 %438, %v381
    %v440 = vpop.permute.xlu0 %439
    %443 = vset.pattern.permute.xlu0 0
    %444 = vperm.xlu0 %443, %v382
    %v445 = vpop.permute.xlu0 %444
    %448 = vset.pattern.permute.xlu0 0
    %449 = vperm.xlu0 %448, %v383
    %v450 = vpop.permute.xlu0 %449
    %453 = vset.pattern.permute.xlu0 0
    %454 = vperm.xlu0 %453, %v384
    %v455 = vpop.permute.xlu0 %454
    %458 = vset.pattern.permute.xlu0 0
    %459 = vperm.xlu0 %458, %v385
    %v460 = vpop.permute.xlu0 %459
    %463 = vset.pattern.permute.xlu0 0
    %464 = vperm.xlu0 %463, %v386
    %v465 = vpop.permute.xlu0 %464
    %468 = vset.pattern.permute.xlu0 0
    %469 = vperm.xlu0 %468, %v387
    %v470 = vpop.permute.xlu0 %469
    %473 = vset.pattern.permute.xlu0 0
    %474 = vperm.xlu0 %473, %v388
    %v475 = vpop.permute.xlu0 %474
    %478 = vset.pattern.permute.xlu0 0
    %479 = vperm.xlu0 %478, %v389
    %v480 = vpop.permute.xlu0 %479
    %483 = vset.pattern.permute.xlu0 0
    %484 = vperm.xlu0 %483, %v390
    %v485 = vpop.permute.xlu0 %484
    %488 = vset.pattern.permute.xlu0 0
    %489 = vperm.xlu0 %488, %v391
    %v490 = vpop.permute.xlu0 %489
    %493 = vset.pattern.permute.xlu0 0
    %494 = vperm.xlu0 %493, %v392
    %v495 = vpop.permute.xlu0 %494
    %498 = vset.pattern.permute.xlu0 0
    %499 = vperm.xlu0 %498, %v393
    %v500 = vpop.permute.xlu0 %499
    %503 = vset.pattern.permute.xlu0 0
    %504 = vperm.xlu0 %503, %v394
    %v505 = vpop.permute.xlu0 %504
    %508 = vset.pattern.permute.xlu0 0
    %509 = vperm.xlu0 %508, %v395
    %v510 = vpop.permute.xlu0 %509
    %513 = vset.pattern.permute.xlu0 0
    %514 = vperm.xlu0 %513, %v396
    %v515 = vpop.permute.xlu0 %514
    %518 = vset.pattern.permute.xlu0 0
    %519 = vperm.xlu0 %518, %v397
    %v520 = vpop.permute.xlu0 %519
    %523 = vset.pattern.permute.xlu0 0
    %524 = vperm.xlu0 %523, %v398
    %v525 = vpop.permute.xlu0 %524
    %528 = vset.pattern.permute.xlu0 0
    %529 = vperm.xlu0 %528, %v399
    %v530 = vpop.permute.xlu0 %529
    %533 = vset.pattern.permute.xlu0 0
    %534 = vperm.xlu0 %533, %v400
    %v535 = vpop.permute.xlu0 %534
    %538 = vset.pattern.permute.xlu0 0
    %539 = vperm.xlu0 %538, %v401
    %v540 = vpop.permute.xlu0 %539
    %543 = vset.pattern.permute.xlu0 0
    %544 = vperm.xlu0 %543, %v402
    %v545 = vpop.permute.xlu0 %544
    %548 = vset.pattern.permute.xlu0 0
    %549 = vperm.xlu0 %548, %v403
    %v550 = vpop.permute.xlu0 %549
    %553 = vset.pattern.permute.xlu0 0
    %554 = vperm.xlu0 %553, %v404
    %v555 = vpop.permute.xlu0 %554
    %558 = vset.pattern.permute.xlu0 0
    %559 = vperm.xlu0 %558, %v405
    %v560 = vpop.permute.xlu0 %559
    %563 = vset.pattern.permute.xlu0 0
    %564 = vperm.xlu0 %563, %v406
    %v565 = vpop.permute.xlu0 %564
    %567 = vmatpush.msra.mxu0 %v374
    %568 = vmatpush.msra.mxu0 %v373
    %569 = vmatpush.msra.mxu0 %v372
    %570 = vmatpush.msra.mxu0 %v371
    %571 = vmatpush.msra.mxu0 %v370
    %572 = vmatpush.msra.mxu0 %v369
    %573 = vmatpush.msra.mxu0 %v368
    %574 = vmatpush.msra.mxu0 %v367
    %575 = vmatpush.msra.mxu0 %v366
    %576 = vmatpush.msra.mxu0 %v365
    %577 = vmatpush.msra.mxu0 %v364
    %578 = vmatpush.msra.mxu0 %v363
    %579 = vmatpush.msra.mxu0 %v362
    %580 = vmatpush.msra.mxu0 %v361
    %581 = vmatpush.msra.mxu0 %v360
    %582 = vmatpush.msra.mxu0 %v359
    %583 = vmatmul.f32.gmra.mxu0 %v327
    %v584 = vpop.f32.mrf.mxu0
    %v585 = vadd.f32 %v410, %v584
    %586 = vmatmul.f32.gmra.mxu0 %v328
    %v587 = vpop.f32.mrf.mxu0
    %v588 = vadd.f32 %v415, %v587
    %589 = vmatmul.f32.gmra.mxu0 %v329
    %v590 = vpop.f32.mrf.mxu0
    %v591 = vadd.f32 %v420, %v590
    %592 = vmatmul.f32.gmra.mxu0 %v330
    %v593 = vpop.f32.mrf.mxu0
    %v594 = vadd.f32 %v425, %v593
    %595 = vmatmul.f32.gmra.mxu0 %v331
    %v596 = vpop.f32.mrf.mxu0
    %v597 = vadd.f32 %v430, %v596
    %598 = vmatmul.f32.gmra.mxu0 %v332
    %v599 = vpop.f32.mrf.mxu0
    %v600 = vadd.f32 %v435, %v599
    %601 = vmatmul.f32.gmra.mxu0 %v333
    %v602 = vpop.f32.mrf.mxu0
    %v603 = vadd.f32 %v440, %v602
    %604 = vmatmul.f32.gmra.mxu0 %v334
    %v605 = vpop.f32.mrf.mxu0
    %v606 = vadd.f32 %v445, %v605
    %607 = vmatmul.f32.gmra.mxu0 %v335
    %v608 = vpop.f32.mrf.mxu0
    %v609 = vadd.f32 %v450, %v608
    %610 = vmatmul.f32.gmra.mxu0 %v336
    %v611 = vpop.f32.mrf.mxu0
    %v612 = vadd.f32 %v455, %v611
    %613 = vmatmul.f32.gmra.mxu0 %v337
    %v614 = vpop.f32.mrf.mxu0
    %v615 = vadd.f32 %v460, %v614
    %616 = vmatmul.f32.gmra.mxu0 %v338
    %v617 = vpop.f32.mrf.mxu0
    %v618 = vadd.f32 %v465, %v617
    %619 = vmatmul.f32.gmra.mxu0 %v339
    %v620 = vpop.f32.mrf.mxu0
    %v621 = vadd.f32 %v470, %v620
    %622 = vmatmul.f32.gmra.mxu0 %v340
    %v623 = vpop.f32.mrf.mxu0
    %v624 = vadd.f32 %v475, %v623
    %625 = vmatmul.f32.gmra.mxu0 %v341
    %v626 = vpop.f32.mrf.mxu0
    %v627 = vadd.f32 %v480, %v626
    %628 = vmatmul.f32.gmra.mxu0 %v342
    %v629 = vpop.f32.mrf.mxu0
    %v630 = vadd.f32 %v485, %v629
    %631 = vmatmul.f32.gmra.mxu0 %v343
    %v632 = vpop.f32.mrf.mxu0
    %v633 = vadd.f32 %v490, %v632
    %634 = vmatmul.f32.gmra.mxu0 %v344
    %v635 = vpop.f32.mrf.mxu0
    %v636 = vadd.f32 %v495, %v635
    %637 = vmatmul.f32.gmra.mxu0 %v345
    %v638 = vpop.f32.mrf.mxu0
    %v639 = vadd.f32 %v500, %v638
    %640 = vmatmul.f32.gmra.mxu0 %v346
    %v641 = vpop.f32.mrf.mxu0
    %v642 = vadd.f32 %v505, %v641
    %643 = vmatmul.f32.gmra.mxu0 %v347
    %v644 = vpop.f32.mrf.mxu0
    %v645 = vadd.f32 %v510, %v644
    %646 = vmatmul.f32.gmra.mxu0 %v348
    %v647 = vpop.f32.mrf.mxu0
    %v648 = vadd.f32 %v515, %v647
    %649 = vmatmul.f32.gmra.mxu0 %v349
    %v650 = vpop.f32.mrf.mxu0
    %v651 = vadd.f32 %v520, %v650
    %652 = vmatmul.f32.gmra.mxu0 %v350
    %v653 = vpop.f32.mrf.mxu0
    %v654 = vadd.f32 %v525, %v653
    %655 = vmatmul.f32.gmra.mxu0 %v351
    %v656 = vpop.f32.mrf.mxu0
    %v657 = vadd.f32 %v530, %v656
    %658 = vmatmul.f32.gmra.mxu0 %v352
    %v659 = vpop.f32.mrf.mxu0
    %v660 = vadd.f32 %v535, %v659
    %661 = vmatmul.f32.gmra.mxu0 %v353
    %v662 = vpop.f32.mrf.mxu0
    %v663 = vadd.f32 %v540, %v662
    %664 = vmatmul.f32.gmra.mxu0 %v354
    %v665 = vpop.f32.mrf.mxu0
    %v666 = vadd.f32 %v545, %v665
    %667 = vmatmul.f32.gmra.mxu0 %v355
    %v668 = vpop.f32.mrf.mxu0
    %v669 = vadd.f32 %v550, %v668
    %670 = vmatmul.f32.gmra.mxu0 %v356
    %v671 = vpop.f32.mrf.mxu0
    %v672 = vadd.f32 %v555, %v671
    %673 = vmatmul.f32.gmra.mxu0 %v357
    %v674 = vpop.f32.mrf.mxu0
    %v675 = vadd.f32 %v560, %v674
    %676 = vmatmul.f32.gmra.mxu0 %v358
    %v677 = vpop.f32.mrf.mxu0
    %v678 = vadd.f32 %v565, %v677
    %679 = vdwg.mxu0
    %vm680 = vcmp.gt.f32.partialorder %v585, 0.0
    %vm681 = vcmp.gt.f32.partialorder %v588, 0.0
    %vm682 = vcmp.gt.f32.partialorder %v591, 0.0
    %vm683 = vcmp.gt.f32.partialorder %v594, 0.0
    %vm684 = vcmp.gt.f32.partialorder %v597, 0.0
    %vm685 = vcmp.gt.f32.partialorder %v600, 0.0
    %vm686 = vcmp.gt.f32.partialorder %v603, 0.0
    %vm687 = vcmp.gt.f32.partialorder %v606, 0.0
    %vm688 = vcmp.gt.f32.partialorder %v609, 0.0
    %vm689 = vcmp.gt.f32.partialorder %v612, 0.0
    %vm690 = vcmp.gt.f32.partialorder %v615, 0.0
    %vm691 = vcmp.gt.f32.partialorder %v618, 0.0
    %vm692 = vcmp.gt.f32.partialorder %v621, 0.0
    %vm693 = vcmp.gt.f32.partialorder %v624, 0.0
    %vm694 = vcmp.gt.f32.partialorder %v627, 0.0
    %vm695 = vcmp.gt.f32.partialorder %v630, 0.0
    %vm696 = vcmp.gt.f32.partialorder %v633, 0.0
    %vm697 = vcmp.gt.f32.partialorder %v636, 0.0
    %vm698 = vcmp.gt.f32.partialorder %v639, 0.0
    %vm699 = vcmp.gt.f32.partialorder %v642, 0.0
    %vm700 = vcmp.gt.f32.partialorder %v645, 0.0
    %vm701 = vcmp.gt.f32.partialorder %v648, 0.0
    %vm702 = vcmp.gt.f32.partialorder %v651, 0.0
    %vm703 = vcmp.gt.f32.partialorder %v654, 0.0
    %vm704 = vcmp.gt.f32.partialorder %v657, 0.0
    %vm705 = vcmp.gt.f32.partialorder %v660, 0.0
    %vm706 = vcmp.gt.f32.partialorder %v663, 0.0
    %vm707 = vcmp.gt.f32.partialorder %v666, 0.0
    %vm708 = vcmp.gt.f32.partialorder %v669, 0.0
    %vm709 = vcmp.gt.f32.partialorder %v672, 0.0
    %vm710 = vcmp.gt.f32.partialorder %v675, 0.0
    %vm711 = vcmp.gt.f32.partialorder %v678, 0.0
    %s712 = sld [smem:[#allocation5]]
    %v713 = vstv %s712
    %v714 = vmul.f32 %v713, %v585
    %v715 = vmul.f32 %v713, %v588
    %v716 = vmul.f32 %v713, %v591
    %v717 = vmul.f32 %v713, %v594
    %v718 = vmul.f32 %v713, %v597
    %v719 = vmul.f32 %v713, %v600
    %v720 = vmul.f32 %v713, %v603
    %v721 = vmul.f32 %v713, %v606
    %v722 = vmul.f32 %v713, %v609
    %v723 = vmul.f32 %v713, %v612
    %v724 = vmul.f32 %v713, %v615
    %v725 = vmul.f32 %v713, %v618
    %v726 = vmul.f32 %v713, %v621
    %v727 = vmul.f32 %v713, %v624
    %v728 = vmul.f32 %v713, %v627
    %v729 = vmul.f32 %v713, %v630
    %v730 = vmul.f32 %v713, %v633
    %v731 = vmul.f32 %v713, %v636
    %v732 = vmul.f32 %v713, %v639
    %v733 = vmul.f32 %v713, %v642
    %v734 = vmul.f32 %v713, %v645
    %v735 = vmul.f32 %v713, %v648
    %v736 = vmul.f32 %v713, %v651
    %v737 = vmul.f32 %v713, %v654
    %v738 = vmul.f32 %v713, %v657
    %v739 = vmul.f32 %v713, %v660
    %v740 = vmul.f32 %v713, %v663
    %v741 = vmul.f32 %v713, %v666
    %v742 = vmul.f32 %v713, %v669
    %v743 = vmul.f32 %v713, %v672
    %v744 = vmul.f32 %v713, %v675
    %v745 = vmul.f32 %v713, %v678
    %v746 = vsel %vm680, %v585, %v714
    %v747 = vsel %vm681, %v588, %v715
    %v748 = vsel %vm682, %v591, %v716
    %v749 = vsel %vm683, %v594, %v717
    %v750 = vsel %vm684, %v597, %v718
    %v751 = vsel %vm685, %v600, %v719
    %v752 = vsel %vm686, %v603, %v720
    %v753 = vsel %vm687, %v606, %v721
    %v754 = vsel %vm688, %v609, %v722
    %v755 = vsel %vm689, %v612, %v723
    %v756 = vsel %vm690, %v615, %v724
    %v757 = vsel %vm691, %v618, %v725
    %v758 = vsel %vm692, %v621, %v726
    %v759 = vsel %vm693, %v624, %v727
    %v760 = vsel %vm694, %v627, %v728
    %v761 = vsel %vm695, %v630, %v729
    %v762 = vsel %vm696, %v633, %v730
    %v763 = vsel %vm697, %v636, %v731
    %v764 = vsel %vm698, %v639, %v732
    %v765 = vsel %vm699, %v642, %v733
    %v766 = vsel %vm700, %v645, %v734
    %v767 = vsel %vm701, %v648, %v735
    %v768 = vsel %vm702, %v651, %v736
    %v769 = vsel %vm703, %v654, %v737
    %v770 = vsel %vm704, %v657, %v738
    %v771 = vsel %vm705, %v660, %v739
    %v772 = vsel %vm706, %v663, %v740
    %v773 = vsel %vm707, %v666, %v741
    %v774 = vsel %vm708, %v669, %v742
    %v775 = vsel %vm709, %v672, %v743
    %v776 = vsel %vm710, %v675, %v744
    %v777 = vsel %vm711, %v678, %v745
    %v778 = vld [vmem:[%s4] sm:$0xff]
    %v779 = vld [vmem:[%s4 + $0x8] sm:$0xff]
    %v780 = vld [vmem:[%s4 + $0x10] sm:$0xff]
    %v781 = vld [vmem:[%s4 + $0x18] sm:$0xff]
    %v782 = vld [vmem:[%s4 + $0x20] sm:$0xff]
    %v783 = vld [vmem:[%s4 + $0x28] sm:$0xff]
    %v784 = vld [vmem:[%s4 + $0x30] sm:$0xff]
    %v785 = vld [vmem:[%s4 + $0x38] sm:$0xff]
    %v786 = vld [vmem:[%s4 + $0x40] sm:$0xff]
    %v787 = vld [vmem:[%s4 + $0x48] sm:$0xff]
    %v788 = vld [vmem:[%s4 + $0x50] sm:$0xff]
    %v789 = vld [vmem:[%s4 + $0x58] sm:$0xff]
    %v790 = vld [vmem:[%s4 + $0x60] sm:$0xff]
    %v791 = vld [vmem:[%s4 + $0x68] sm:$0xff]
    %v792 = vld [vmem:[%s4 + $0x70] sm:$0xff]
    %v793 = vld [vmem:[%s4 + $0x78] sm:$0xff]
    %v794 = vld [vmem:[%s4 + $0x80] sm:$0xff]
    %v795 = vld [vmem:[%s4 + $0x88] sm:$0xff]
    %v796 = vld [vmem:[%s4 + $0x90] sm:$0xff]
    %v797 = vld [vmem:[%s4 + $0x98] sm:$0xff]
    %v798 = vld [vmem:[%s4 + $0xa0] sm:$0xff]
    %v799 = vld [vmem:[%s4 + $0xa8] sm:$0xff]
    %v800 = vld [vmem:[%s4 + $0xb0] sm:$0xff]
    %v801 = vld [vmem:[%s4 + $0xb8] sm:$0xff]
    %v802 = vld [vmem:[%s4 + $0xc0] sm:$0xff]
    %v803 = vld [vmem:[%s4 + $0xc8] sm:$0xff]
    %v804 = vld [vmem:[%s4 + $0xd0] sm:$0xff]
    %v805 = vld [vmem:[%s4 + $0xd8] sm:$0xff]
    %v806 = vld [vmem:[%s4 + $0xe0] sm:$0xff]
    %v807 = vld [vmem:[%s4 + $0xe8] sm:$0xff]
    %v808 = vld [vmem:[%s4 + $0xf0] sm:$0xff]
    %v809 = vld [vmem:[%s4 + $0xf8] sm:$0xff]
    %v810 = vld [vmem:[%s4 + $0x100] sm:$0xff]
    %v811 = vld [vmem:[%s4 + $0x108] sm:$0xff]
    %v812 = vld [vmem:[%s4 + $0x110] sm:$0xff]
    %v813 = vld [vmem:[%s4 + $0x118] sm:$0xff]
    %v814 = vld [vmem:[%s4 + $0x120] sm:$0xff]
    %v815 = vld [vmem:[%s4 + $0x128] sm:$0xff]
    %v816 = vld [vmem:[%s4 + $0x130] sm:$0xff]
    %v817 = vld [vmem:[%s4 + $0x138] sm:$0xff]
    %v818 = vld [vmem:[%s4 + $0x140] sm:$0xff]
    %v819 = vld [vmem:[%s4 + $0x148] sm:$0xff]
    %v820 = vld [vmem:[%s4 + $0x150] sm:$0xff]
    %v821 = vld [vmem:[%s4 + $0x158] sm:$0xff]
    %v822 = vld [vmem:[%s4 + $0x160] sm:$0xff]
    %v823 = vld [vmem:[%s4 + $0x168] sm:$0xff]
    %v824 = vld [vmem:[%s4 + $0x170] sm:$0xff]
    %v825 = vld [vmem:[%s4 + $0x178] sm:$0xff]
    %v826 = vld [vmem:[%s4 + $0x180] sm:$0xff]
    %v827 = vld [vmem:[%s4 + $0x188] sm:$0xff]
    %v828 = vld [vmem:[%s4 + $0x190] sm:$0xff]
    %v829 = vld [vmem:[%s4 + $0x198] sm:$0xff]
    %v830 = vld [vmem:[%s4 + $0x1a0] sm:$0xff]
    %v831 = vld [vmem:[%s4 + $0x1a8] sm:$0xff]
    %v832 = vld [vmem:[%s4 + $0x1b0] sm:$0xff]
    %v833 = vld [vmem:[%s4 + $0x1b8] sm:$0xff]
    %v834 = vld [vmem:[%s4 + $0x1c0] sm:$0xff]
    %v835 = vld [vmem:[%s4 + $0x1c8] sm:$0xff]
    %v836 = vld [vmem:[%s4 + $0x1d0] sm:$0xff]
    %v837 = vld [vmem:[%s4 + $0x1d8] sm:$0xff]
    %v838 = vld [vmem:[%s4 + $0x1e0] sm:$0xff]
    %v839 = vld [vmem:[%s4 + $0x1e8] sm:$0xff]
    %v840 = vld [vmem:[%s4 + $0x1f0] sm:$0xff]
    %v841 = vld [vmem:[%s4 + $0x1f8] sm:$0xff]
    %v842 = vld [vmem:[%s4 + $0x200] sm:$0xff]
    %v843 = vld [vmem:[%s4 + $0x208] sm:$0xff]
    %v844 = vld [vmem:[%s4 + $0x210] sm:$0xff]
    %v845 = vld [vmem:[%s4 + $0x218] sm:$0xff]
    %v846 = vld [vmem:[%s4 + $0x220] sm:$0xff]
    %v847 = vld [vmem:[%s4 + $0x228] sm:$0xff]
    %v848 = vld [vmem:[%s4 + $0x230] sm:$0xff]
    %v849 = vld [vmem:[%s4 + $0x238] sm:$0xff]
    %v850 = vld [vmem:[%s4 + $0x240] sm:$0xff]
    %v851 = vld [vmem:[%s4 + $0x248] sm:$0xff]
    %v852 = vld [vmem:[%s4 + $0x250] sm:$0xff]
    %v853 = vld [vmem:[%s4 + $0x258] sm:$0xff]
    %v854 = vld [vmem:[%s4 + $0x260] sm:$0xff]
    %v855 = vld [vmem:[%s4 + $0x268] sm:$0xff]
    %v856 = vld [vmem:[%s4 + $0x270] sm:$0xff]
    %v857 = vld [vmem:[%s4 + $0x278] sm:$0xff]
    %v858 = vld [vmem:[%s4 + $0x280] sm:$0xff]
    %v859 = vld [vmem:[%s4 + $0x288] sm:$0xff]
    %v860 = vld [vmem:[%s4 + $0x290] sm:$0xff]
    %v861 = vld [vmem:[%s4 + $0x298] sm:$0xff]
    %v862 = vld [vmem:[%s4 + $0x2a0] sm:$0xff]
    %v863 = vld [vmem:[%s4 + $0x2a8] sm:$0xff]
    %v864 = vld [vmem:[%s4 + $0x2b0] sm:$0xff]
    %v865 = vld [vmem:[%s4 + $0x2b8] sm:$0xff]
    %v866 = vld [vmem:[%s4 + $0x2c0] sm:$0xff]
    %v867 = vld [vmem:[%s4 + $0x2c8] sm:$0xff]
    %v868 = vld [vmem:[%s4 + $0x2d0] sm:$0xff]
    %v869 = vld [vmem:[%s4 + $0x2d8] sm:$0xff]
    %v870 = vld [vmem:[%s4 + $0x2e0] sm:$0xff]
    %v871 = vld [vmem:[%s4 + $0x2e8] sm:$0xff]
    %v872 = vld [vmem:[%s4 + $0x2f0] sm:$0xff]
    %v873 = vld [vmem:[%s4 + $0x2f8] sm:$0xff]
    %v874 = vld [vmem:[%s4 + $0x300] sm:$0xff]
    %v875 = vld [vmem:[%s4 + $0x308] sm:$0xff]
    %v876 = vld [vmem:[%s4 + $0x310] sm:$0xff]
    %v877 = vld [vmem:[%s4 + $0x318] sm:$0xff]
    %v878 = vld [vmem:[%s4 + $0x320] sm:$0xff]
    %v879 = vld [vmem:[%s4 + $0x328] sm:$0xff]
    %v880 = vld [vmem:[%s4 + $0x330] sm:$0xff]
    %v881 = vld [vmem:[%s4 + $0x338] sm:$0xff]
    %v882 = vld [vmem:[%s4 + $0x340] sm:$0xff]
    %v883 = vld [vmem:[%s4 + $0x348] sm:$0xff]
    %v884 = vld [vmem:[%s4 + $0x350] sm:$0xff]
    %v885 = vld [vmem:[%s4 + $0x358] sm:$0xff]
    %v886 = vld [vmem:[%s4 + $0x360] sm:$0xff]
    %v887 = vld [vmem:[%s4 + $0x368] sm:$0xff]
    %v888 = vld [vmem:[%s4 + $0x370] sm:$0xff]
    %v889 = vld [vmem:[%s4 + $0x378] sm:$0xff]
    %v890 = vld [vmem:[%s4 + $0x380] sm:$0xff]
    %v891 = vld [vmem:[%s4 + $0x388] sm:$0xff]
    %v892 = vld [vmem:[%s4 + $0x390] sm:$0xff]
    %v893 = vld [vmem:[%s4 + $0x398] sm:$0xff]
    %v894 = vld [vmem:[%s4 + $0x3a0] sm:$0xff]
    %v895 = vld [vmem:[%s4 + $0x3a8] sm:$0xff]
    %v896 = vld [vmem:[%s4 + $0x3b0] sm:$0xff]
    %v897 = vld [vmem:[%s4 + $0x3b8] sm:$0xff]
    %v898 = vld [vmem:[%s4 + $0x3c0] sm:$0xff]
    %v899 = vld [vmem:[%s4 + $0x3c8] sm:$0xff]
    %v900 = vld [vmem:[%s4 + $0x3d0] sm:$0xff]
    %v901 = vld [vmem:[%s4 + $0x3d8] sm:$0xff]
    %v902 = vld [vmem:[%s4 + $0x3e0] sm:$0xff]
    %v903 = vld [vmem:[%s4 + $0x3e8] sm:$0xff]
    %v904 = vld [vmem:[%s4 + $0x3f0] sm:$0xff]
    %v905 = vld [vmem:[%s4 + $0x3f8] sm:$0xff]
    %v906 = vld [vmem:[%s4 + $0x400] sm:$0xff]
    %v907 = vld [vmem:[%s4 + $0x408] sm:$0xff]
    %v908 = vld [vmem:[%s4 + $0x410] sm:$0xff]
    %v909 = vld [vmem:[%s4 + $0x418] sm:$0xff]
    %v910 = vld [vmem:[%s4 + $0x420] sm:$0xff]
    %v911 = vld [vmem:[%s4 + $0x428] sm:$0xff]
    %v912 = vld [vmem:[%s4 + $0x430] sm:$0xff]
    %v913 = vld [vmem:[%s4 + $0x438] sm:$0xff]
    %v914 = vld [vmem:[%s4 + $0x440] sm:$0xff]
    %v915 = vld [vmem:[%s4 + $0x448] sm:$0xff]
    %v916 = vld [vmem:[%s4 + $0x450] sm:$0xff]
    %v917 = vld [vmem:[%s4 + $0x458] sm:$0xff]
    %v918 = vld [vmem:[%s4 + $0x460] sm:$0xff]
    %v919 = vld [vmem:[%s4 + $0x468] sm:$0xff]
    %v920 = vld [vmem:[%s4 + $0x470] sm:$0xff]
    %v921 = vld [vmem:[%s4 + $0x478] sm:$0xff]
    %v922 = vunpack.c.l.bf16 %v778
    %v923 = vunpack.c.h.bf16 %v778
    %v924 = vunpack.c.l.bf16 %v779
    %v925 = vunpack.c.h.bf16 %v779
    %v926 = vunpack.c.l.bf16 %v780
    %v927 = vunpack.c.h.bf16 %v780
    %v928 = vunpack.c.l.bf16 %v781
    %v929 = vunpack.c.h.bf16 %v781
    %v930 = vunpack.c.l.bf16 %v782
    %v931 = vunpack.c.h.bf16 %v782
    %v932 = vunpack.c.l.bf16 %v783
    %v933 = vunpack.c.h.bf16 %v783
    %v934 = vunpack.c.l.bf16 %v784
    %v935 = vunpack.c.h.bf16 %v784
    %v936 = vunpack.c.l.bf16 %v785
    %v937 = vunpack.c.h.bf16 %v785
    %v938 = vunpack.c.l.bf16 %v786
    %v939 = vunpack.c.h.bf16 %v786
    %v940 = vunpack.c.l.bf16 %v787
    %v941 = vunpack.c.h.bf16 %v787
    %v942 = vunpack.c.l.bf16 %v788
    %v943 = vunpack.c.h.bf16 %v788
    %v944 = vunpack.c.l.bf16 %v789
    %v945 = vunpack.c.h.bf16 %v789
    %v946 = vunpack.c.l.bf16 %v790
    %v947 = vunpack.c.h.bf16 %v790
    %v948 = vunpack.c.l.bf16 %v791
    %v949 = vunpack.c.h.bf16 %v791
    %v950 = vunpack.c.l.bf16 %v792
    %v951 = vunpack.c.h.bf16 %v792
    %v952 = vunpack.c.l.bf16 %v793
    %v953 = vunpack.c.h.bf16 %v793
    %v954 = vunpack.c.l.bf16 %v794
    %v955 = vunpack.c.h.bf16 %v794
    %v956 = vunpack.c.l.bf16 %v795
    %v957 = vunpack.c.h.bf16 %v795
    %v958 = vunpack.c.l.bf16 %v796
    %v959 = vunpack.c.h.bf16 %v796
    %v960 = vunpack.c.l.bf16 %v797
    %v961 = vunpack.c.h.bf16 %v797
    %v962 = vunpack.c.l.bf16 %v798
    %v963 = vunpack.c.h.bf16 %v798
    %v964 = vunpack.c.l.bf16 %v799
    %v965 = vunpack.c.h.bf16 %v799
    %v966 = vunpack.c.l.bf16 %v800
    %v967 = vunpack.c.h.bf16 %v800
    %v968 = vunpack.c.l.bf16 %v801
    %v969 = vunpack.c.h.bf16 %v801
    %v970 = vunpack.c.l.bf16 %v802
    %v971 = vunpack.c.h.bf16 %v802
    %v972 = vunpack.c.l.bf16 %v803
    %v973 = vunpack.c.h.bf16 %v803
    %v974 = vunpack.c.l.bf16 %v804
    %v975 = vunpack.c.h.bf16 %v804
    %v976 = vunpack.c.l.bf16 %v805
    %v977 = vunpack.c.h.bf16 %v805
    %v978 = vunpack.c.l.bf16 %v806
    %v979 = vunpack.c.h.bf16 %v806
    %v980 = vunpack.c.l.bf16 %v807
    %v981 = vunpack.c.h.bf16 %v807
    %v982 = vunpack.c.l.bf16 %v808
    %v983 = vunpack.c.h.bf16 %v808
    %v984 = vunpack.c.l.bf16 %v809
    %v985 = vunpack.c.h.bf16 %v809
    %v986 = vunpack.c.l.bf16 %v810
    %v987 = vunpack.c.h.bf16 %v810
    %v988 = vunpack.c.l.bf16 %v811
    %v989 = vunpack.c.h.bf16 %v811
    %v990 = vunpack.c.l.bf16 %v812
    %v991 = vunpack.c.h.bf16 %v812
    %v992 = vunpack.c.l.bf16 %v813
    %v993 = vunpack.c.h.bf16 %v813
    %v994 = vunpack.c.l.bf16 %v814
    %v995 = vunpack.c.h.bf16 %v814
    %v996 = vunpack.c.l.bf16 %v815
    %v997 = vunpack.c.h.bf16 %v815
    %v998 = vunpack.c.l.bf16 %v816
    %v999 = vunpack.c.h.bf16 %v816
    %v1000 = vunpack.c.l.bf16 %v817
    %v1001 = vunpack.c.h.bf16 %v817
    %v1002 = vunpack.c.l.bf16 %v818
    %v1003 = vunpack.c.h.bf16 %v818
    %v1004 = vunpack.c.l.bf16 %v819
    %v1005 = vunpack.c.h.bf16 %v819
    %v1006 = vunpack.c.l.bf16 %v820
    %v1007 = vunpack.c.h.bf16 %v820
    %v1008 = vunpack.c.l.bf16 %v821
    %v1009 = vunpack.c.h.bf16 %v821
    %v1010 = vunpack.c.l.bf16 %v822
    %v1011 = vunpack.c.h.bf16 %v822
    %v1012 = vunpack.c.l.bf16 %v823
    %v1013 = vunpack.c.h.bf16 %v823
    %v1014 = vunpack.c.l.bf16 %v824
    %v1015 = vunpack.c.h.bf16 %v824
    %v1016 = vunpack.c.l.bf16 %v825
    %v1017 = vunpack.c.h.bf16 %v825
    %v1018 = vunpack.c.l.bf16 %v826
    %v1019 = vunpack.c.h.bf16 %v826
    %v1020 = vunpack.c.l.bf16 %v827
    %v1021 = vunpack.c.h.bf16 %v827
    %v1022 = vunpack.c.l.bf16 %v828
    %v1023 = vunpack.c.h.bf16 %v828
    %v1024 = vunpack.c.l.bf16 %v829
    %v1025 = vunpack.c.h.bf16 %v829
    %v1026 = vunpack.c.l.bf16 %v830
    %v1027 = vunpack.c.h.bf16 %v830
    %v1028 = vunpack.c.l.bf16 %v831
    %v1029 = vunpack.c.h.bf16 %v831
    %v1030 = vunpack.c.l.bf16 %v832
    %v1031 = vunpack.c.h.bf16 %v832
    %v1032 = vunpack.c.l.bf16 %v833
    %v1033 = vunpack.c.h.bf16 %v833
    %v1034 = vunpack.c.l.bf16 %v834
    %v1035 = vunpack.c.h.bf16 %v834
    %v1036 = vunpack.c.l.bf16 %v835
    %v1037 = vunpack.c.h.bf16 %v835
    %v1038 = vunpack.c.l.bf16 %v836
    %v1039 = vunpack.c.h.bf16 %v836
    %v1040 = vunpack.c.l.bf16 %v837
    %v1041 = vunpack.c.h.bf16 %v837
    %v1042 = vunpack.c.l.bf16 %v838
    %v1043 = vunpack.c.h.bf16 %v838
    %v1044 = vunpack.c.l.bf16 %v839
    %v1045 = vunpack.c.h.bf16 %v839
    %v1046 = vunpack.c.l.bf16 %v840
    %v1047 = vunpack.c.h.bf16 %v840
    %v1048 = vunpack.c.l.bf16 %v841
    %v1049 = vunpack.c.h.bf16 %v841
    %v1050 = vunpack.c.l.bf16 %v842
    %v1051 = vunpack.c.h.bf16 %v842
    %v1052 = vunpack.c.l.bf16 %v843
    %v1053 = vunpack.c.h.bf16 %v843
    %v1054 = vunpack.c.l.bf16 %v844
    %v1055 = vunpack.c.h.bf16 %v844
    %v1056 = vunpack.c.l.bf16 %v845
    %v1057 = vunpack.c.h.bf16 %v845
    %v1058 = vunpack.c.l.bf16 %v846
    %v1059 = vunpack.c.h.bf16 %v846
    %v1060 = vunpack.c.l.bf16 %v847
    %v1061 = vunpack.c.h.bf16 %v847
    %v1062 = vunpack.c.l.bf16 %v848
    %v1063 = vunpack.c.h.bf16 %v848
    %v1064 = vunpack.c.l.bf16 %v849
    %v1065 = vunpack.c.h.bf16 %v849
    %v1066 = vunpack.c.l.bf16 %v850
    %v1067 = vunpack.c.h.bf16 %v850
    %v1068 = vunpack.c.l.bf16 %v851
    %v1069 = vunpack.c.h.bf16 %v851
    %v1070 = vunpack.c.l.bf16 %v852
    %v1071 = vunpack.c.h.bf16 %v852
    %v1072 = vunpack.c.l.bf16 %v853
    %v1073 = vunpack.c.h.bf16 %v853
    %v1074 = vunpack.c.l.bf16 %v854
    %v1075 = vunpack.c.h.bf16 %v854
    %v1076 = vunpack.c.l.bf16 %v855
    %v1077 = vunpack.c.h.bf16 %v855
    %v1078 = vunpack.c.l.bf16 %v856
    %v1079 = vunpack.c.h.bf16 %v856
    %v1080 = vunpack.c.l.bf16 %v857
    %v1081 = vunpack.c.h.bf16 %v857
    %v1082 = vunpack.c.l.bf16 %v858
    %v1083 = vunpack.c.h.bf16 %v858
    %v1084 = vunpack.c.l.bf16 %v859
    %v1085 = vunpack.c.h.bf16 %v859
    %v1086 = vunpack.c.l.bf16 %v860
    %v1087 = vunpack.c.h.bf16 %v860
    %v1088 = vunpack.c.l.bf16 %v861
    %v1089 = vunpack.c.h.bf16 %v861
    %v1090 = vunpack.c.l.bf16 %v862
    %v1091 = vunpack.c.h.bf16 %v862
    %v1092 = vunpack.c.l.bf16 %v863
    %v1093 = vunpack.c.h.bf16 %v863
    %v1094 = vunpack.c.l.bf16 %v864
    %v1095 = vunpack.c.h.bf16 %v864
    %v1096 = vunpack.c.l.bf16 %v865
    %v1097 = vunpack.c.h.bf16 %v865
    %v1098 = vunpack.c.l.bf16 %v866
    %v1099 = vunpack.c.h.bf16 %v866
    %v1100 = vunpack.c.l.bf16 %v867
    %v1101 = vunpack.c.h.bf16 %v867
    %v1102 = vunpack.c.l.bf16 %v868
    %v1103 = vunpack.c.h.bf16 %v868
    %v1104 = vunpack.c.l.bf16 %v869
    %v1105 = vunpack.c.h.bf16 %v869
    %v1106 = vunpack.c.l.bf16 %v870
    %v1107 = vunpack.c.h.bf16 %v870
    %v1108 = vunpack.c.l.bf16 %v871
    %v1109 = vunpack.c.h.bf16 %v871
    %v1110 = vunpack.c.l.bf16 %v872
    %v1111 = vunpack.c.h.bf16 %v872
    %v1112 = vunpack.c.l.bf16 %v873
    %v1113 = vunpack.c.h.bf16 %v873
    %v1114 = vunpack.c.l.bf16 %v874
    %v1115 = vunpack.c.h.bf16 %v874
    %v1116 = vunpack.c.l.bf16 %v875
    %v1117 = vunpack.c.h.bf16 %v875
    %v1118 = vunpack.c.l.bf16 %v876
    %v1119 = vunpack.c.h.bf16 %v876
    %v1120 = vunpack.c.l.bf16 %v877
    %v1121 = vunpack.c.h.bf16 %v877
    %v1122 = vunpack.c.l.bf16 %v878
    %v1123 = vunpack.c.h.bf16 %v878
    %v1124 = vunpack.c.l.bf16 %v879
    %v1125 = vunpack.c.h.bf16 %v879
    %v1126 = vunpack.c.l.bf16 %v880
    %v1127 = vunpack.c.h.bf16 %v880
    %v1128 = vunpack.c.l.bf16 %v881
    %v1129 = vunpack.c.h.bf16 %v881
    %v1130 = vunpack.c.l.bf16 %v882
    %v1131 = vunpack.c.h.bf16 %v882
    %v1132 = vunpack.c.l.bf16 %v883
    %v1133 = vunpack.c.h.bf16 %v883
    %v1134 = vunpack.c.l.bf16 %v884
    %v1135 = vunpack.c.h.bf16 %v884
    %v1136 = vunpack.c.l.bf16 %v885
    %v1137 = vunpack.c.h.bf16 %v885
    %v1138 = vunpack.c.l.bf16 %v886
    %v1139 = vunpack.c.h.bf16 %v886
    %v1140 = vunpack.c.l.bf16 %v887
    %v1141 = vunpack.c.h.bf16 %v887
    %v1142 = vunpack.c.l.bf16 %v888
    %v1143 = vunpack.c.h.bf16 %v888
    %v1144 = vunpack.c.l.bf16 %v889
    %v1145 = vunpack.c.h.bf16 %v889
    %v1146 = vunpack.c.l.bf16 %v890
    %v1147 = vunpack.c.h.bf16 %v890
    %v1148 = vunpack.c.l.bf16 %v891
    %v1149 = vunpack.c.h.bf16 %v891
    %v1150 = vunpack.c.l.bf16 %v892
    %v1151 = vunpack.c.h.bf16 %v892
    %v1152 = vunpack.c.l.bf16 %v893
    %v1153 = vunpack.c.h.bf16 %v893
    %v1154 = vunpack.c.l.bf16 %v894
    %v1155 = vunpack.c.h.bf16 %v894
    %v1156 = vunpack.c.l.bf16 %v895
    %v1157 = vunpack.c.h.bf16 %v895
    %v1158 = vunpack.c.l.bf16 %v896
    %v1159 = vunpack.c.h.bf16 %v896
    %v1160 = vunpack.c.l.bf16 %v897
    %v1161 = vunpack.c.h.bf16 %v897
    %v1162 = vunpack.c.l.bf16 %v898
    %v1163 = vunpack.c.h.bf16 %v898
    %v1164 = vunpack.c.l.bf16 %v899
    %v1165 = vunpack.c.h.bf16 %v899
    %v1166 = vunpack.c.l.bf16 %v900
    %v1167 = vunpack.c.h.bf16 %v900
    %v1168 = vunpack.c.l.bf16 %v901
    %v1169 = vunpack.c.h.bf16 %v901
    %v1170 = vunpack.c.l.bf16 %v902
    %v1171 = vunpack.c.h.bf16 %v902
    %v1172 = vunpack.c.l.bf16 %v903
    %v1173 = vunpack.c.h.bf16 %v903
    %v1174 = vunpack.c.l.bf16 %v904
    %v1175 = vunpack.c.h.bf16 %v904
    %v1176 = vunpack.c.l.bf16 %v905
    %v1177 = vunpack.c.h.bf16 %v905
    %v1178 = vunpack.c.l.bf16 %v906
    %v1179 = vunpack.c.h.bf16 %v906
    %v1180 = vunpack.c.l.bf16 %v907
    %v1181 = vunpack.c.h.bf16 %v907
    %v1182 = vunpack.c.l.bf16 %v908
    %v1183 = vunpack.c.h.bf16 %v908
    %v1184 = vunpack.c.l.bf16 %v909
    %v1185 = vunpack.c.h.bf16 %v909
    %v1186 = vunpack.c.l.bf16 %v910
    %v1187 = vunpack.c.h.bf16 %v910
    %v1188 = vunpack.c.l.bf16 %v911
    %v1189 = vunpack.c.h.bf16 %v911
    %v1190 = vunpack.c.l.bf16 %v912
    %v1191 = vunpack.c.h.bf16 %v912
    %v1192 = vunpack.c.l.bf16 %v913
    %v1193 = vunpack.c.h.bf16 %v913
    %v1194 = vunpack.c.l.bf16 %v914
    %v1195 = vunpack.c.h.bf16 %v914
    %v1196 = vunpack.c.l.bf16 %v915
    %v1197 = vunpack.c.h.bf16 %v915
    %v1198 = vunpack.c.l.bf16 %v916
    %v1199 = vunpack.c.h.bf16 %v916
    %v1200 = vunpack.c.l.bf16 %v917
    %v1201 = vunpack.c.h.bf16 %v917
    %v1202 = vunpack.c.l.bf16 %v918
    %v1203 = vunpack.c.h.bf16 %v918
    %v1204 = vunpack.c.l.bf16 %v919
    %v1205 = vunpack.c.h.bf16 %v919
    %v1206 = vunpack.c.l.bf16 %v920
    %v1207 = vunpack.c.h.bf16 %v920
    %v1208 = vunpack.c.l.bf16 %v921
    %v1209 = vunpack.c.h.bf16 %v921
    %1210 = vmatpush.msra.mxu0 %v761
    %1211 = vmatpush.msra.mxu0 %v760
    %1212 = vmatpush.msra.mxu0 %v759
    %1213 = vmatpush.msra.mxu0 %v758
    %1214 = vmatpush.msra.mxu0 %v757
    %1215 = vmatpush.msra.mxu0 %v756
    %1216 = vmatpush.msra.mxu0 %v755
    %1217 = vmatpush.msra.mxu0 %v754
    %1218 = vmatpush.msra.mxu0 %v753
    %1219 = vmatpush.msra.mxu0 %v752
    %1220 = vmatpush.msra.mxu0 %v751
    %1221 = vmatpush.msra.mxu0 %v750
    %1222 = vmatpush.msra.mxu0 %v749
    %1223 = vmatpush.msra.mxu0 %v748
    %1224 = vmatpush.msra.mxu0 %v747
    %1225 = vmatpush.msra.mxu0 %v746
    %1226 = vmatmul.f32.gmra.mxu0 %v922
    %v1227 = vpop.f32.mrf.mxu0
    %v1228 = vadd.f32 0.0, %v1227
    %1229 = vmatmul.f32.gmra.mxu0 %v924
    %v1230 = vpop.f32.mrf.mxu0
    %v1231 = vadd.f32 0.0, %v1230
    %1232 = vmatmul.f32.gmra.mxu0 %v926
    %v1233 = vpop.f32.mrf.mxu0
    %v1234 = vadd.f32 0.0, %v1233
    %1235 = vmatmul.f32.gmra.mxu0 %v928
    %v1236 = vpop.f32.mrf.mxu0
    %v1237 = vadd.f32 0.0, %v1236
    %1238 = vmatmul.f32.gmra.mxu0 %v930
    %v1239 = vpop.f32.mrf.mxu0
    %v1240 = vadd.f32 0.0, %v1239
    %1241 = vmatmul.f32.gmra.mxu0 %v932
    %v1242 = vpop.f32.mrf.mxu0
    %v1243 = vadd.f32 0.0, %v1242
    %1244 = vmatmul.f32.gmra.mxu0 %v934
    %v1245 = vpop.f32.mrf.mxu0
    %v1246 = vadd.f32 0.0, %v1245
    %1247 = vmatmul.f32.gmra.mxu0 %v936
    %v1248 = vpop.f32.mrf.mxu0
    %v1249 = vadd.f32 0.0, %v1248
    %1250 = vmatmul.f32.gmra.mxu0 %v938
    %v1251 = vpop.f32.mrf.mxu0
    %v1252 = vadd.f32 0.0, %v1251
    %1253 = vmatmul.f32.gmra.mxu0 %v940
    %v1254 = vpop.f32.mrf.mxu0
    %v1255 = vadd.f32 0.0, %v1254
    %1256 = vmatmul.f32.gmra.mxu0 %v942
    %v1257 = vpop.f32.mrf.mxu0
    %v1258 = vadd.f32 0.0, %v1257
    %1259 = vmatmul.f32.gmra.mxu0 %v944
    %v1260 = vpop.f32.mrf.mxu0
    %v1261 = vadd.f32 0.0, %v1260
    %1262 = vmatmul.f32.gmra.mxu0 %v946
    %v1263 = vpop.f32.mrf.mxu0
    %v1264 = vadd.f32 0.0, %v1263
    %1265 = vmatmul.f32.gmra.mxu0 %v948
    %v1266 = vpop.f32.mrf.mxu0
    %v1267 = vadd.f32 0.0, %v1266
    %1268 = vmatmul.f32.gmra.mxu0 %v950
    %v1269 = vpop.f32.mrf.mxu0
    %v1270 = vadd.f32 0.0, %v1269
    %1271 = vmatmul.f32.gmra.mxu0 %v952
    %v1272 = vpop.f32.mrf.mxu0
    %v1273 = vadd.f32 0.0, %v1272
    %1274 = vmatmul.f32.gmra.mxu0 %v954
    %v1275 = vpop.f32.mrf.mxu0
    %v1276 = vadd.f32 0.0, %v1275
    %1277 = vmatmul.f32.gmra.mxu0 %v956
    %v1278 = vpop.f32.mrf.mxu0
    %v1279 = vadd.f32 0.0, %v1278
    %1280 = vmatmul.f32.gmra.mxu0 %v958
    %v1281 = vpop.f32.mrf.mxu0
    %v1282 = vadd.f32 0.0, %v1281
    %1283 = vmatmul.f32.gmra.mxu0 %v960
    %v1284 = vpop.f32.mrf.mxu0
    %v1285 = vadd.f32 0.0, %v1284
    %1286 = vmatmul.f32.gmra.mxu0 %v962
    %v1287 = vpop.f32.mrf.mxu0
    %v1288 = vadd.f32 0.0, %v1287
    %1289 = vmatmul.f32.gmra.mxu0 %v964
    %v1290 = vpop.f32.mrf.mxu0
    %v1291 = vadd.f32 0.0, %v1290
    %1292 = vmatmul.f32.gmra.mxu0 %v966
    %v1293 = vpop.f32.mrf.mxu0
    %v1294 = vadd.f32 0.0, %v1293
    %1295 = vmatmul.f32.gmra.mxu0 %v968
    %v1296 = vpop.f32.mrf.mxu0
    %v1297 = vadd.f32 0.0, %v1296
    %1298 = vmatmul.f32.gmra.mxu0 %v970
    %v1299 = vpop.f32.mrf.mxu0
    %v1300 = vadd.f32 0.0, %v1299
    %1301 = vmatmul.f32.gmra.mxu0 %v972
    %v1302 = vpop.f32.mrf.mxu0
    %v1303 = vadd.f32 0.0, %v1302
    %1304 = vmatmul.f32.gmra.mxu0 %v974
    %v1305 = vpop.f32.mrf.mxu0
    %v1306 = vadd.f32 0.0, %v1305
    %1307 = vmatmul.f32.gmra.mxu0 %v976
    %v1308 = vpop.f32.mrf.mxu0
    %v1309 = vadd.f32 0.0, %v1308
    %1310 = vmatmul.f32.gmra.mxu0 %v978
    %v1311 = vpop.f32.mrf.mxu0
    %v1312 = vadd.f32 0.0, %v1311
    %1313 = vmatmul.f32.gmra.mxu0 %v980
    %v1314 = vpop.f32.mrf.mxu0
    %v1315 = vadd.f32 0.0, %v1314
    %1316 = vmatmul.f32.gmra.mxu0 %v982
    %v1317 = vpop.f32.mrf.mxu0
    %v1318 = vadd.f32 0.0, %v1317
    %1319 = vmatmul.f32.gmra.mxu0 %v984
    %v1320 = vpop.f32.mrf.mxu0
    %v1321 = vadd.f32 0.0, %v1320
    %1322 = vmatmul.f32.gmra.mxu0 %v986
    %v1323 = vpop.f32.mrf.mxu0
    %v1324 = vadd.f32 0.0, %v1323
    %1325 = vmatmul.f32.gmra.mxu0 %v988
    %v1326 = vpop.f32.mrf.mxu0
    %v1327 = vadd.f32 0.0, %v1326
    %1328 = vmatmul.f32.gmra.mxu0 %v990
    %v1329 = vpop.f32.mrf.mxu0
    %v1330 = vadd.f32 0.0, %v1329
    %1331 = vmatmul.f32.gmra.mxu0 %v992
    %v1332 = vpop.f32.mrf.mxu0
    %v1333 = vadd.f32 0.0, %v1332
    %1334 = vmatmul.f32.gmra.mxu0 %v994
    %v1335 = vpop.f32.mrf.mxu0
    %v1336 = vadd.f32 0.0, %v1335
    %1337 = vmatmul.f32.gmra.mxu0 %v996
    %v1338 = vpop.f32.mrf.mxu0
    %v1339 = vadd.f32 0.0, %v1338
    %1340 = vmatmul.f32.gmra.mxu0 %v998
    %v1341 = vpop.f32.mrf.mxu0
    %v1342 = vadd.f32 0.0, %v1341
    %1343 = vmatmul.f32.gmra.mxu0 %v1000
    %v1344 = vpop.f32.mrf.mxu0
    %v1345 = vadd.f32 0.0, %v1344
    %1346 = vmatmul.f32.gmra.mxu0 %v1002
    %v1347 = vpop.f32.mrf.mxu0
    %v1348 = vadd.f32 0.0, %v1347
    %1349 = vmatmul.f32.gmra.mxu0 %v1004
    %v1350 = vpop.f32.mrf.mxu0
    %v1351 = vadd.f32 0.0, %v1350
    %1352 = vmatmul.f32.gmra.mxu0 %v1006
    %v1353 = vpop.f32.mrf.mxu0
    %v1354 = vadd.f32 0.0, %v1353
    %1355 = vmatmul.f32.gmra.mxu0 %v1008
    %v1356 = vpop.f32.mrf.mxu0
    %v1357 = vadd.f32 0.0, %v1356
    %1358 = vmatmul.f32.gmra.mxu0 %v1010
    %v1359 = vpop.f32.mrf.mxu0
    %v1360 = vadd.f32 0.0, %v1359
    %1361 = vmatmul.f32.gmra.mxu0 %v1012
    %v1362 = vpop.f32.mrf.mxu0
    %v1363 = vadd.f32 0.0, %v1362
    %1364 = vmatmul.f32.gmra.mxu0 %v1014
    %v1365 = vpop.f32.mrf.mxu0
    %v1366 = vadd.f32 0.0, %v1365
    %1367 = vmatmul.f32.gmra.mxu0 %v1016
    %v1368 = vpop.f32.mrf.mxu0
    %v1369 = vadd.f32 0.0, %v1368
    %1370 = vmatmul.f32.gmra.mxu0 %v1018
    %v1371 = vpop.f32.mrf.mxu0
    %v1372 = vadd.f32 0.0, %v1371
    %1373 = vmatmul.f32.gmra.mxu0 %v1020
    %v1374 = vpop.f32.mrf.mxu0
    %v1375 = vadd.f32 0.0, %v1374
    %1376 = vmatmul.f32.gmra.mxu0 %v1022
    %v1377 = vpop.f32.mrf.mxu0
    %v1378 = vadd.f32 0.0, %v1377
    %1379 = vmatmul.f32.gmra.mxu0 %v1024
    %v1380 = vpop.f32.mrf.mxu0
    %v1381 = vadd.f32 0.0, %v1380
    %1382 = vmatmul.f32.gmra.mxu0 %v1026
    %v1383 = vpop.f32.mrf.mxu0
    %v1384 = vadd.f32 0.0, %v1383
    %1385 = vmatmul.f32.gmra.mxu0 %v1028
    %v1386 = vpop.f32.mrf.mxu0
    %v1387 = vadd.f32 0.0, %v1386
    %1388 = vmatmul.f32.gmra.mxu0 %v1030
    %v1389 = vpop.f32.mrf.mxu0
    %v1390 = vadd.f32 0.0, %v1389
    %1391 = vmatmul.f32.gmra.mxu0 %v1032
    %v1392 = vpop.f32.mrf.mxu0
    %v1393 = vadd.f32 0.0, %v1392
    %1394 = vmatmul.f32.gmra.mxu0 %v1034
    %v1395 = vpop.f32.mrf.mxu0
    %v1396 = vadd.f32 0.0, %v1395
    %1397 = vmatmul.f32.gmra.mxu0 %v1036
    %v1398 = vpop.f32.mrf.mxu0
    %v1399 = vadd.f32 0.0, %v1398
    %1400 = vmatmul.f32.gmra.mxu0 %v1038
    %v1401 = vpop.f32.mrf.mxu0
    %v1402 = vadd.f32 0.0, %v1401
    %1403 = vmatmul.f32.gmra.mxu0 %v1040
    %v1404 = vpop.f32.mrf.mxu0
    %v1405 = vadd.f32 0.0, %v1404
    %1406 = vmatmul.f32.gmra.mxu0 %v1042
    %v1407 = vpop.f32.mrf.mxu0
    %v1408 = vadd.f32 0.0, %v1407
    %1409 = vmatmul.f32.gmra.mxu0 %v1044
    %v1410 = vpop.f32.mrf.mxu0
    %v1411 = vadd.f32 0.0, %v1410
    %1412 = vmatmul.f32.gmra.mxu0 %v1046
    %v1413 = vpop.f32.mrf.mxu0
    %v1414 = vadd.f32 0.0, %v1413
    %1415 = vmatmul.f32.gmra.mxu0 %v1048
    %v1416 = vpop.f32.mrf.mxu0
    %v1417 = vadd.f32 0.0, %v1416
    %1418 = vmatmul.f32.gmra.mxu0 %v1050
    %v1419 = vpop.f32.mrf.mxu0
    %v1420 = vadd.f32 0.0, %v1419
    %1421 = vmatmul.f32.gmra.mxu0 %v1052
    %v1422 = vpop.f32.mrf.mxu0
    %v1423 = vadd.f32 0.0, %v1422
    %1424 = vmatmul.f32.gmra.mxu0 %v1054
    %v1425 = vpop.f32.mrf.mxu0
    %v1426 = vadd.f32 0.0, %v1425
    %1427 = vmatmul.f32.gmra.mxu0 %v1056
    %v1428 = vpop.f32.mrf.mxu0
    %v1429 = vadd.f32 0.0, %v1428
    %1430 = vmatmul.f32.gmra.mxu0 %v1058
    %v1431 = vpop.f32.mrf.mxu0
    %v1432 = vadd.f32 0.0, %v1431
    %1433 = vmatmul.f32.gmra.mxu0 %v1060
    %v1434 = vpop.f32.mrf.mxu0
    %v1435 = vadd.f32 0.0, %v1434
    %1436 = vmatmul.f32.gmra.mxu0 %v1062
    %v1437 = vpop.f32.mrf.mxu0
    %v1438 = vadd.f32 0.0, %v1437
    %1439 = vmatmul.f32.gmra.mxu0 %v1064
    %v1440 = vpop.f32.mrf.mxu0
    %v1441 = vadd.f32 0.0, %v1440
    %1442 = vmatmul.f32.gmra.mxu0 %v1066
    %v1443 = vpop.f32.mrf.mxu0
    %v1444 = vadd.f32 0.0, %v1443
    %1445 = vmatmul.f32.gmra.mxu0 %v1068
    %v1446 = vpop.f32.mrf.mxu0
    %v1447 = vadd.f32 0.0, %v1446
    %1448 = vmatmul.f32.gmra.mxu0 %v1070
    %v1449 = vpop.f32.mrf.mxu0
    %v1450 = vadd.f32 0.0, %v1449
    %1451 = vmatmul.f32.gmra.mxu0 %v1072
    %v1452 = vpop.f32.mrf.mxu0
    %v1453 = vadd.f32 0.0, %v1452
    %1454 = vmatmul.f32.gmra.mxu0 %v1074
    %v1455 = vpop.f32.mrf.mxu0
    %v1456 = vadd.f32 0.0, %v1455
    %1457 = vmatmul.f32.gmra.mxu0 %v1076
    %v1458 = vpop.f32.mrf.mxu0
    %v1459 = vadd.f32 0.0, %v1458
    %1460 = vmatmul.f32.gmra.mxu0 %v1078
    %v1461 = vpop.f32.mrf.mxu0
    %v1462 = vadd.f32 0.0, %v1461
    %1463 = vmatmul.f32.gmra.mxu0 %v1080
    %v1464 = vpop.f32.mrf.mxu0
    %v1465 = vadd.f32 0.0, %v1464
    %1466 = vmatmul.f32.gmra.mxu0 %v1082
    %v1467 = vpop.f32.mrf.mxu0
    %v1468 = vadd.f32 0.0, %v1467
    %1469 = vmatmul.f32.gmra.mxu0 %v1084
    %v1470 = vpop.f32.mrf.mxu0
    %v1471 = vadd.f32 0.0, %v1470
    %1472 = vmatmul.f32.gmra.mxu0 %v1086
    %v1473 = vpop.f32.mrf.mxu0
    %v1474 = vadd.f32 0.0, %v1473
    %1475 = vmatmul.f32.gmra.mxu0 %v1088
    %v1476 = vpop.f32.mrf.mxu0
    %v1477 = vadd.f32 0.0, %v1476
    %1478 = vmatmul.f32.gmra.mxu0 %v1090
    %v1479 = vpop.f32.mrf.mxu0
    %v1480 = vadd.f32 0.0, %v1479
    %1481 = vmatmul.f32.gmra.mxu0 %v1092
    %v1482 = vpop.f32.mrf.mxu0
    %v1483 = vadd.f32 0.0, %v1482
    %1484 = vmatmul.f32.gmra.mxu0 %v1094
    %v1485 = vpop.f32.mrf.mxu0
    %v1486 = vadd.f32 0.0, %v1485
    %1487 = vmatmul.f32.gmra.mxu0 %v1096
    %v1488 = vpop.f32.mrf.mxu0
    %v1489 = vadd.f32 0.0, %v1488
    %1490 = vmatmul.f32.gmra.mxu0 %v1098
    %v1491 = vpop.f32.mrf.mxu0
    %v1492 = vadd.f32 0.0, %v1491
    %1493 = vmatmul.f32.gmra.mxu0 %v1100
    %v1494 = vpop.f32.mrf.mxu0
    %v1495 = vadd.f32 0.0, %v1494
    %1496 = vmatmul.f32.gmra.mxu0 %v1102
    %v1497 = vpop.f32.mrf.mxu0
    %v1498 = vadd.f32 0.0, %v1497
    %1499 = vmatmul.f32.gmra.mxu0 %v1104
    %v1500 = vpop.f32.mrf.mxu0
    %v1501 = vadd.f32 0.0, %v1500
    %1502 = vmatmul.f32.gmra.mxu0 %v1106
    %v1503 = vpop.f32.mrf.mxu0
    %v1504 = vadd.f32 0.0, %v1503
    %1505 = vmatmul.f32.gmra.mxu0 %v1108
    %v1506 = vpop.f32.mrf.mxu0
    %v1507 = vadd.f32 0.0, %v1506
    %1508 = vmatmul.f32.gmra.mxu0 %v1110
    %v1509 = vpop.f32.mrf.mxu0
    %v1510 = vadd.f32 0.0, %v1509
    %1511 = vmatmul.f32.gmra.mxu0 %v1112
    %v1512 = vpop.f32.mrf.mxu0
    %v1513 = vadd.f32 0.0, %v1512
    %1514 = vmatmul.f32.gmra.mxu0 %v1114
    %v1515 = vpop.f32.mrf.mxu0
    %v1516 = vadd.f32 0.0, %v1515
    %1517 = vmatmul.f32.gmra.mxu0 %v1116
    %v1518 = vpop.f32.mrf.mxu0
    %v1519 = vadd.f32 0.0, %v1518
    %1520 = vmatmul.f32.gmra.mxu0 %v1118
    %v1521 = vpop.f32.mrf.mxu0
    %v1522 = vadd.f32 0.0, %v1521
    %1523 = vmatmul.f32.gmra.mxu0 %v1120
    %v1524 = vpop.f32.mrf.mxu0
    %v1525 = vadd.f32 0.0, %v1524
    %1526 = vmatmul.f32.gmra.mxu0 %v1122
    %v1527 = vpop.f32.mrf.mxu0
    %v1528 = vadd.f32 0.0, %v1527
    %1529 = vmatmul.f32.gmra.mxu0 %v1124
    %v1530 = vpop.f32.mrf.mxu0
    %v1531 = vadd.f32 0.0, %v1530
    %1532 = vmatmul.f32.gmra.mxu0 %v1126
    %v1533 = vpop.f32.mrf.mxu0
    %v1534 = vadd.f32 0.0, %v1533
    %1535 = vmatmul.f32.gmra.mxu0 %v1128
    %v1536 = vpop.f32.mrf.mxu0
    %v1537 = vadd.f32 0.0, %v1536
    %1538 = vmatmul.f32.gmra.mxu0 %v1130
    %v1539 = vpop.f32.mrf.mxu0
    %v1540 = vadd.f32 0.0, %v1539
    %1541 = vmatmul.f32.gmra.mxu0 %v1132
    %v1542 = vpop.f32.mrf.mxu0
    %v1543 = vadd.f32 0.0, %v1542
    %1544 = vmatmul.f32.gmra.mxu0 %v1134
    %v1545 = vpop.f32.mrf.mxu0
    %v1546 = vadd.f32 0.0, %v1545
    %1547 = vmatmul.f32.gmra.mxu0 %v1136
    %v1548 = vpop.f32.mrf.mxu0
    %v1549 = vadd.f32 0.0, %v1548
    %1550 = vmatmul.f32.gmra.mxu0 %v1138
    %v1551 = vpop.f32.mrf.mxu0
    %v1552 = vadd.f32 0.0, %v1551
    %1553 = vmatmul.f32.gmra.mxu0 %v1140
    %v1554 = vpop.f32.mrf.mxu0
    %v1555 = vadd.f32 0.0, %v1554
    %1556 = vmatmul.f32.gmra.mxu0 %v1142
    %v1557 = vpop.f32.mrf.mxu0
    %v1558 = vadd.f32 0.0, %v1557
    %1559 = vmatmul.f32.gmra.mxu0 %v1144
    %v1560 = vpop.f32.mrf.mxu0
    %v1561 = vadd.f32 0.0, %v1560
    %1562 = vmatmul.f32.gmra.mxu0 %v1146
    %v1563 = vpop.f32.mrf.mxu0
    %v1564 = vadd.f32 0.0, %v1563
    %1565 = vmatmul.f32.gmra.mxu0 %v1148
    %v1566 = vpop.f32.mrf.mxu0
    %v1567 = vadd.f32 0.0, %v1566
    %1568 = vmatmul.f32.gmra.mxu0 %v1150
    %v1569 = vpop.f32.mrf.mxu0
    %v1570 = vadd.f32 0.0, %v1569
    %1571 = vmatmul.f32.gmra.mxu0 %v1152
    %v1572 = vpop.f32.mrf.mxu0
    %v1573 = vadd.f32 0.0, %v1572
    %1574 = vmatmul.f32.gmra.mxu0 %v1154
    %v1575 = vpop.f32.mrf.mxu0
    %v1576 = vadd.f32 0.0, %v1575
    %1577 = vmatmul.f32.gmra.mxu0 %v1156
    %v1578 = vpop.f32.mrf.mxu0
    %v1579 = vadd.f32 0.0, %v1578
    %1580 = vmatmul.f32.gmra.mxu0 %v1158
    %v1581 = vpop.f32.mrf.mxu0
    %v1582 = vadd.f32 0.0, %v1581
    %1583 = vmatmul.f32.gmra.mxu0 %v1160
    %v1584 = vpop.f32.mrf.mxu0
    %v1585 = vadd.f32 0.0, %v1584
    %1586 = vmatmul.f32.gmra.mxu0 %v1162
    %v1587 = vpop.f32.mrf.mxu0
    %v1588 = vadd.f32 0.0, %v1587
    %1589 = vmatmul.f32.gmra.mxu0 %v1164
    %v1590 = vpop.f32.mrf.mxu0
    %v1591 = vadd.f32 0.0, %v1590
    %1592 = vmatmul.f32.gmra.mxu0 %v1166
    %v1593 = vpop.f32.mrf.mxu0
    %v1594 = vadd.f32 0.0, %v1593
    %1595 = vmatmul.f32.gmra.mxu0 %v1168
    %v1596 = vpop.f32.mrf.mxu0
    %v1597 = vadd.f32 0.0, %v1596
    %1598 = vmatmul.f32.gmra.mxu0 %v1170
    %v1599 = vpop.f32.mrf.mxu0
    %v1600 = vadd.f32 0.0, %v1599
    %1601 = vmatmul.f32.gmra.mxu0 %v1172
    %v1602 = vpop.f32.mrf.mxu0
    %v1603 = vadd.f32 0.0, %v1602
    %1604 = vmatmul.f32.gmra.mxu0 %v1174
    %v1605 = vpop.f32.mrf.mxu0
    %v1606 = vadd.f32 0.0, %v1605
    %1607 = vmatmul.f32.gmra.mxu0 %v1176
    %v1608 = vpop.f32.mrf.mxu0
    %v1609 = vadd.f32 0.0, %v1608
    %1610 = vmatmul.f32.gmra.mxu0 %v1178
    %v1611 = vpop.f32.mrf.mxu0
    %v1612 = vadd.f32 0.0, %v1611
    %1613 = vmatmul.f32.gmra.mxu0 %v1180
    %v1614 = vpop.f32.mrf.mxu0
    %v1615 = vadd.f32 0.0, %v1614
    %1616 = vmatmul.f32.gmra.mxu0 %v1182
    %v1617 = vpop.f32.mrf.mxu0
    %v1618 = vadd.f32 0.0, %v1617
    %1619 = vmatmul.f32.gmra.mxu0 %v1184
    %v1620 = vpop.f32.mrf.mxu0
    %v1621 = vadd.f32 0.0, %v1620
    %1622 = vmatmul.f32.gmra.mxu0 %v1186
    %v1623 = vpop.f32.mrf.mxu0
    %v1624 = vadd.f32 0.0, %v1623
    %1625 = vmatmul.f32.gmra.mxu0 %v1188
    %v1626 = vpop.f32.mrf.mxu0
    %v1627 = vadd.f32 0.0, %v1626
    %1628 = vmatmul.f32.gmra.mxu0 %v1190
    %v1629 = vpop.f32.mrf.mxu0
    %v1630 = vadd.f32 0.0, %v1629
    %1631 = vmatmul.f32.gmra.mxu0 %v1192
    %v1632 = vpop.f32.mrf.mxu0
    %v1633 = vadd.f32 0.0, %v1632
    %1634 = vmatmul.f32.gmra.mxu0 %v1194
    %v1635 = vpop.f32.mrf.mxu0
    %v1636 = vadd.f32 0.0, %v1635
    %1637 = vmatmul.f32.gmra.mxu0 %v1196
    %v1638 = vpop.f32.mrf.mxu0
    %v1639 = vadd.f32 0.0, %v1638
    %1640 = vmatmul.f32.gmra.mxu0 %v1198
    %v1641 = vpop.f32.mrf.mxu0
    %v1642 = vadd.f32 0.0, %v1641
    %1643 = vmatmul.f32.gmra.mxu0 %v1200
    %v1644 = vpop.f32.mrf.mxu0
    %v1645 = vadd.f32 0.0, %v1644
    %1646 = vmatmul.f32.gmra.mxu0 %v1202
    %v1647 = vpop.f32.mrf.mxu0
    %v1648 = vadd.f32 0.0, %v1647
    %1649 = vmatmul.f32.gmra.mxu0 %v1204
    %v1650 = vpop.f32.mrf.mxu0
    %v1651 = vadd.f32 0.0, %v1650
    %1652 = vmatmul.f32.gmra.mxu0 %v1206
    %v1653 = vpop.f32.mrf.mxu0
    %v1654 = vadd.f32 0.0, %v1653
    %1655 = vmatmul.f32.gmra.mxu0 %v1208
    %v1656 = vpop.f32.mrf.mxu0
    %v1657 = vadd.f32 0.0, %v1656
    %1658 = vdwg.mxu0
    %1659 = vmatpush.msra.mxu0 %v777
    %1660 = vmatpush.msra.mxu0 %v776
    %1661 = vmatpush.msra.mxu0 %v775
    %1662 = vmatpush.msra.mxu0 %v774
    %1663 = vmatpush.msra.mxu0 %v773
    %1664 = vmatpush.msra.mxu0 %v772
    %1665 = vmatpush.msra.mxu0 %v771
    %1666 = vmatpush.msra.mxu0 %v770
    %1667 = vmatpush.msra.mxu0 %v769
    %1668 = vmatpush.msra.mxu0 %v768
    %1669 = vmatpush.msra.mxu0 %v767
    %1670 = vmatpush.msra.mxu0 %v766
    %1671 = vmatpush.msra.mxu0 %v765
    %1672 = vmatpush.msra.mxu0 %v764
    %1673 = vmatpush.msra.mxu0 %v763
    %1674 = vmatpush.msra.mxu0 %v762
    %1675 = vmatmul.f32.gmra.mxu0 %v923
    %v1676 = vpop.f32.mrf.mxu0
    %v1677 = vadd.f32 %v1228, %v1676
    %1678 = vmatmul.f32.gmra.mxu0 %v925
    %v1679 = vpop.f32.mrf.mxu0
    %v1680 = vadd.f32 %v1231, %v1679
    %1681 = vmatmul.f32.gmra.mxu0 %v927
    %v1682 = vpop.f32.mrf.mxu0
    %v1683 = vadd.f32 %v1234, %v1682
    %1684 = vmatmul.f32.gmra.mxu0 %v929
    %v1685 = vpop.f32.mrf.mxu0
    %v1686 = vadd.f32 %v1237, %v1685
    %1687 = vmatmul.f32.gmra.mxu0 %v931
    %v1688 = vpop.f32.mrf.mxu0
    %v1689 = vadd.f32 %v1240, %v1688
    %1690 = vmatmul.f32.gmra.mxu0 %v933
    %v1691 = vpop.f32.mrf.mxu0
    %v1692 = vadd.f32 %v1243, %v1691
    %1693 = vmatmul.f32.gmra.mxu0 %v935
    %v1694 = vpop.f32.mrf.mxu0
    %v1695 = vadd.f32 %v1246, %v1694
    %1696 = vmatmul.f32.gmra.mxu0 %v937
    %v1697 = vpop.f32.mrf.mxu0
    %v1698 = vadd.f32 %v1249, %v1697
    %1699 = vmatmul.f32.gmra.mxu0 %v939
    %v1700 = vpop.f32.mrf.mxu0
    %v1701 = vadd.f32 %v1252, %v1700
    %1702 = vmatmul.f32.gmra.mxu0 %v941
    %v1703 = vpop.f32.mrf.mxu0
    %v1704 = vadd.f32 %v1255, %v1703
    %1705 = vmatmul.f32.gmra.mxu0 %v943
    %v1706 = vpop.f32.mrf.mxu0
    %v1707 = vadd.f32 %v1258, %v1706
    %1708 = vmatmul.f32.gmra.mxu0 %v945
    %v1709 = vpop.f32.mrf.mxu0
    %v1710 = vadd.f32 %v1261, %v1709
    %1711 = vmatmul.f32.gmra.mxu0 %v947
    %v1712 = vpop.f32.mrf.mxu0
    %v1713 = vadd.f32 %v1264, %v1712
    %1714 = vmatmul.f32.gmra.mxu0 %v949
    %v1715 = vpop.f32.mrf.mxu0
    %v1716 = vadd.f32 %v1267, %v1715
    %1717 = vmatmul.f32.gmra.mxu0 %v951
    %v1718 = vpop.f32.mrf.mxu0
    %v1719 = vadd.f32 %v1270, %v1718
    %1720 = vmatmul.f32.gmra.mxu0 %v953
    %v1721 = vpop.f32.mrf.mxu0
    %v1722 = vadd.f32 %v1273, %v1721
    %1723 = vmatmul.f32.gmra.mxu0 %v955
    %v1724 = vpop.f32.mrf.mxu0
    %v1725 = vadd.f32 %v1276, %v1724
    %1726 = vmatmul.f32.gmra.mxu0 %v957
    %v1727 = vpop.f32.mrf.mxu0
    %v1728 = vadd.f32 %v1279, %v1727
    %1729 = vmatmul.f32.gmra.mxu0 %v959
    %v1730 = vpop.f32.mrf.mxu0
    %v1731 = vadd.f32 %v1282, %v1730
    %1732 = vmatmul.f32.gmra.mxu0 %v961
    %v1733 = vpop.f32.mrf.mxu0
    %v1734 = vadd.f32 %v1285, %v1733
    %1735 = vmatmul.f32.gmra.mxu0 %v963
    %v1736 = vpop.f32.mrf.mxu0
    %v1737 = vadd.f32 %v1288, %v1736
    %1738 = vmatmul.f32.gmra.mxu0 %v965
    %v1739 = vpop.f32.mrf.mxu0
    %v1740 = vadd.f32 %v1291, %v1739
    %1741 = vmatmul.f32.gmra.mxu0 %v967
    %v1742 = vpop.f32.mrf.mxu0
    %v1743 = vadd.f32 %v1294, %v1742
    %1744 = vmatmul.f32.gmra.mxu0 %v969
    %v1745 = vpop.f32.mrf.mxu0
    %v1746 = vadd.f32 %v1297, %v1745
    %1747 = vmatmul.f32.gmra.mxu0 %v971
    %v1748 = vpop.f32.mrf.mxu0
    %v1749 = vadd.f32 %v1300, %v1748
    %1750 = vmatmul.f32.gmra.mxu0 %v973
    %v1751 = vpop.f32.mrf.mxu0
    %v1752 = vadd.f32 %v1303, %v1751
    %1753 = vmatmul.f32.gmra.mxu0 %v975
    %v1754 = vpop.f32.mrf.mxu0
    %v1755 = vadd.f32 %v1306, %v1754
    %1756 = vmatmul.f32.gmra.mxu0 %v977
    %v1757 = vpop.f32.mrf.mxu0
    %v1758 = vadd.f32 %v1309, %v1757
    %1759 = vmatmul.f32.gmra.mxu0 %v979
    %v1760 = vpop.f32.mrf.mxu0
    %v1761 = vadd.f32 %v1312, %v1760
    %1762 = vmatmul.f32.gmra.mxu0 %v981
    %v1763 = vpop.f32.mrf.mxu0
    %v1764 = vadd.f32 %v1315, %v1763
    %1765 = vmatmul.f32.gmra.mxu0 %v983
    %v1766 = vpop.f32.mrf.mxu0
    %v1767 = vadd.f32 %v1318, %v1766
    %1768 = vmatmul.f32.gmra.mxu0 %v985
    %v1769 = vpop.f32.mrf.mxu0
    %v1770 = vadd.f32 %v1321, %v1769
    %1771 = vmatmul.f32.gmra.mxu0 %v987
    %v1772 = vpop.f32.mrf.mxu0
    %v1773 = vadd.f32 %v1324, %v1772
    %1774 = vmatmul.f32.gmra.mxu0 %v989
    %v1775 = vpop.f32.mrf.mxu0
    %v1776 = vadd.f32 %v1327, %v1775
    %1777 = vmatmul.f32.gmra.mxu0 %v991
    %v1778 = vpop.f32.mrf.mxu0
    %v1779 = vadd.f32 %v1330, %v1778
    %1780 = vmatmul.f32.gmra.mxu0 %v993
    %v1781 = vpop.f32.mrf.mxu0
    %v1782 = vadd.f32 %v1333, %v1781
    %1783 = vmatmul.f32.gmra.mxu0 %v995
    %v1784 = vpop.f32.mrf.mxu0
    %v1785 = vadd.f32 %v1336, %v1784
    %1786 = vmatmul.f32.gmra.mxu0 %v997
    %v1787 = vpop.f32.mrf.mxu0
    %v1788 = vadd.f32 %v1339, %v1787
    %1789 = vmatmul.f32.gmra.mxu0 %v999
    %v1790 = vpop.f32.mrf.mxu0
    %v1791 = vadd.f32 %v1342, %v1790
    %1792 = vmatmul.f32.gmra.mxu0 %v1001
    %v1793 = vpop.f32.mrf.mxu0
    %v1794 = vadd.f32 %v1345, %v1793
    %1795 = vmatmul.f32.gmra.mxu0 %v1003
    %v1796 = vpop.f32.mrf.mxu0
    %v1797 = vadd.f32 %v1348, %v1796
    %1798 = vmatmul.f32.gmra.mxu0 %v1005
    %v1799 = vpop.f32.mrf.mxu0
    %v1800 = vadd.f32 %v1351, %v1799
    %1801 = vmatmul.f32.gmra.mxu0 %v1007
    %v1802 = vpop.f32.mrf.mxu0
    %v1803 = vadd.f32 %v1354, %v1802
    %1804 = vmatmul.f32.gmra.mxu0 %v1009
    %v1805 = vpop.f32.mrf.mxu0
    %v1806 = vadd.f32 %v1357, %v1805
    %1807 = vmatmul.f32.gmra.mxu0 %v1011
    %v1808 = vpop.f32.mrf.mxu0
    %v1809 = vadd.f32 %v1360, %v1808
    %1810 = vmatmul.f32.gmra.mxu0 %v1013
    %v1811 = vpop.f32.mrf.mxu0
    %v1812 = vadd.f32 %v1363, %v1811
    %1813 = vmatmul.f32.gmra.mxu0 %v1015
    %v1814 = vpop.f32.mrf.mxu0
    %v1815 = vadd.f32 %v1366, %v1814
    %1816 = vmatmul.f32.gmra.mxu0 %v1017
    %v1817 = vpop.f32.mrf.mxu0
    %v1818 = vadd.f32 %v1369, %v1817
    %1819 = vmatmul.f32.gmra.mxu0 %v1019
    %v1820 = vpop.f32.mrf.mxu0
    %v1821 = vadd.f32 %v1372, %v1820
    %1822 = vmatmul.f32.gmra.mxu0 %v1021
    %v1823 = vpop.f32.mrf.mxu0
    %v1824 = vadd.f32 %v1375, %v1823
    %1825 = vmatmul.f32.gmra.mxu0 %v1023
    %v1826 = vpop.f32.mrf.mxu0
    %v1827 = vadd.f32 %v1378, %v1826
    %1828 = vmatmul.f32.gmra.mxu0 %v1025
    %v1829 = vpop.f32.mrf.mxu0
    %v1830 = vadd.f32 %v1381, %v1829
    %1831 = vmatmul.f32.gmra.mxu0 %v1027
    %v1832 = vpop.f32.mrf.mxu0
    %v1833 = vadd.f32 %v1384, %v1832
    %1834 = vmatmul.f32.gmra.mxu0 %v1029
    %v1835 = vpop.f32.mrf.mxu0
    %v1836 = vadd.f32 %v1387, %v1835
    %1837 = vmatmul.f32.gmra.mxu0 %v1031
    %v1838 = vpop.f32.mrf.mxu0
    %v1839 = vadd.f32 %v1390, %v1838
    %1840 = vmatmul.f32.gmra.mxu0 %v1033
    %v1841 = vpop.f32.mrf.mxu0
    %v1842 = vadd.f32 %v1393, %v1841
    %1843 = vmatmul.f32.gmra.mxu0 %v1035
    %v1844 = vpop.f32.mrf.mxu0
    %v1845 = vadd.f32 %v1396, %v1844
    %1846 = vmatmul.f32.gmra.mxu0 %v1037
    %v1847 = vpop.f32.mrf.mxu0
    %v1848 = vadd.f32 %v1399, %v1847
    %1849 = vmatmul.f32.gmra.mxu0 %v1039
    %v1850 = vpop.f32.mrf.mxu0
    %v1851 = vadd.f32 %v1402, %v1850
    %1852 = vmatmul.f32.gmra.mxu0 %v1041
    %v1853 = vpop.f32.mrf.mxu0
    %v1854 = vadd.f32 %v1405, %v1853
    %1855 = vmatmul.f32.gmra.mxu0 %v1043
    %v1856 = vpop.f32.mrf.mxu0
    %v1857 = vadd.f32 %v1408, %v1856
    %1858 = vmatmul.f32.gmra.mxu0 %v1045
    %v1859 = vpop.f32.mrf.mxu0
    %v1860 = vadd.f32 %v1411, %v1859
    %1861 = vmatmul.f32.gmra.mxu0 %v1047
    %v1862 = vpop.f32.mrf.mxu0
    %v1863 = vadd.f32 %v1414, %v1862
    %1864 = vmatmul.f32.gmra.mxu0 %v1049
    %v1865 = vpop.f32.mrf.mxu0
    %v1866 = vadd.f32 %v1417, %v1865
    %1867 = vmatmul.f32.gmra.mxu0 %v1051
    %v1868 = vpop.f32.mrf.mxu0
    %v1869 = vadd.f32 %v1420, %v1868
    %1870 = vmatmul.f32.gmra.mxu0 %v1053
    %v1871 = vpop.f32.mrf.mxu0
    %v1872 = vadd.f32 %v1423, %v1871
    %1873 = vmatmul.f32.gmra.mxu0 %v1055
    %v1874 = vpop.f32.mrf.mxu0
    %v1875 = vadd.f32 %v1426, %v1874
    %1876 = vmatmul.f32.gmra.mxu0 %v1057
    %v1877 = vpop.f32.mrf.mxu0
    %v1878 = vadd.f32 %v1429, %v1877
    %1879 = vmatmul.f32.gmra.mxu0 %v1059
    %v1880 = vpop.f32.mrf.mxu0
    %v1881 = vadd.f32 %v1432, %v1880
    %1882 = vmatmul.f32.gmra.mxu0 %v1061
    %v1883 = vpop.f32.mrf.mxu0
    %v1884 = vadd.f32 %v1435, %v1883
    %1885 = vmatmul.f32.gmra.mxu0 %v1063
    %v1886 = vpop.f32.mrf.mxu0
    %v1887 = vadd.f32 %v1438, %v1886
    %1888 = vmatmul.f32.gmra.mxu0 %v1065
    %v1889 = vpop.f32.mrf.mxu0
    %v1890 = vadd.f32 %v1441, %v1889
    %1891 = vmatmul.f32.gmra.mxu0 %v1067
    %v1892 = vpop.f32.mrf.mxu0
    %v1893 = vadd.f32 %v1444, %v1892
    %1894 = vmatmul.f32.gmra.mxu0 %v1069
    %v1895 = vpop.f32.mrf.mxu0
    %v1896 = vadd.f32 %v1447, %v1895
    %1897 = vmatmul.f32.gmra.mxu0 %v1071
    %v1898 = vpop.f32.mrf.mxu0
    %v1899 = vadd.f32 %v1450, %v1898
    %1900 = vmatmul.f32.gmra.mxu0 %v1073
    %v1901 = vpop.f32.mrf.mxu0
    %v1902 = vadd.f32 %v1453, %v1901
    %1903 = vmatmul.f32.gmra.mxu0 %v1075
    %v1904 = vpop.f32.mrf.mxu0
    %v1905 = vadd.f32 %v1456, %v1904
    %1906 = vmatmul.f32.gmra.mxu0 %v1077
    %v1907 = vpop.f32.mrf.mxu0
    %v1908 = vadd.f32 %v1459, %v1907
    %1909 = vmatmul.f32.gmra.mxu0 %v1079
    %v1910 = vpop.f32.mrf.mxu0
    %v1911 = vadd.f32 %v1462, %v1910
    %1912 = vmatmul.f32.gmra.mxu0 %v1081
    %v1913 = vpop.f32.mrf.mxu0
    %v1914 = vadd.f32 %v1465, %v1913
    %1915 = vmatmul.f32.gmra.mxu0 %v1083
    %v1916 = vpop.f32.mrf.mxu0
    %v1917 = vadd.f32 %v1468, %v1916
    %1918 = vmatmul.f32.gmra.mxu0 %v1085
    %v1919 = vpop.f32.mrf.mxu0
    %v1920 = vadd.f32 %v1471, %v1919
    %1921 = vmatmul.f32.gmra.mxu0 %v1087
    %v1922 = vpop.f32.mrf.mxu0
    %v1923 = vadd.f32 %v1474, %v1922
    %1924 = vmatmul.f32.gmra.mxu0 %v1089
    %v1925 = vpop.f32.mrf.mxu0
    %v1926 = vadd.f32 %v1477, %v1925
    %1927 = vmatmul.f32.gmra.mxu0 %v1091
    %v1928 = vpop.f32.mrf.mxu0
    %v1929 = vadd.f32 %v1480, %v1928
    %1930 = vmatmul.f32.gmra.mxu0 %v1093
    %v1931 = vpop.f32.mrf.mxu0
    %v1932 = vadd.f32 %v1483, %v1931
    %1933 = vmatmul.f32.gmra.mxu0 %v1095
    %v1934 = vpop.f32.mrf.mxu0
    %v1935 = vadd.f32 %v1486, %v1934
    %1936 = vmatmul.f32.gmra.mxu0 %v1097
    %v1937 = vpop.f32.mrf.mxu0
    %v1938 = vadd.f32 %v1489, %v1937
    %1939 = vmatmul.f32.gmra.mxu0 %v1099
    %v1940 = vpop.f32.mrf.mxu0
    %v1941 = vadd.f32 %v1492, %v1940
    %1942 = vmatmul.f32.gmra.mxu0 %v1101
    %v1943 = vpop.f32.mrf.mxu0
    %v1944 = vadd.f32 %v1495, %v1943
    %1945 = vmatmul.f32.gmra.mxu0 %v1103
    %v1946 = vpop.f32.mrf.mxu0
    %v1947 = vadd.f32 %v1498, %v1946
    %1948 = vmatmul.f32.gmra.mxu0 %v1105
    %v1949 = vpop.f32.mrf.mxu0
    %v1950 = vadd.f32 %v1501, %v1949
    %1951 = vmatmul.f32.gmra.mxu0 %v1107
    %v1952 = vpop.f32.mrf.mxu0
    %v1953 = vadd.f32 %v1504, %v1952
    %1954 = vmatmul.f32.gmra.mxu0 %v1109
    %v1955 = vpop.f32.mrf.mxu0
    %v1956 = vadd.f32 %v1507, %v1955
    %1957 = vmatmul.f32.gmra.mxu0 %v1111
    %v1958 = vpop.f32.mrf.mxu0
    %v1959 = vadd.f32 %v1510, %v1958
    %1960 = vmatmul.f32.gmra.mxu0 %v1113
    %v1961 = vpop.f32.mrf.mxu0
    %v1962 = vadd.f32 %v1513, %v1961
    %1963 = vmatmul.f32.gmra.mxu0 %v1115
    %v1964 = vpop.f32.mrf.mxu0
    %v1965 = vadd.f32 %v1516, %v1964
    %1966 = vmatmul.f32.gmra.mxu0 %v1117
    %v1967 = vpop.f32.mrf.mxu0
    %v1968 = vadd.f32 %v1519, %v1967
    %1969 = vmatmul.f32.gmra.mxu0 %v1119
    %v1970 = vpop.f32.mrf.mxu0
    %v1971 = vadd.f32 %v1522, %v1970
    %1972 = vmatmul.f32.gmra.mxu0 %v1121
    %v1973 = vpop.f32.mrf.mxu0
    %v1974 = vadd.f32 %v1525, %v1973
    %1975 = vmatmul.f32.gmra.mxu0 %v1123
    %v1976 = vpop.f32.mrf.mxu0
    %v1977 = vadd.f32 %v1528, %v1976
    %1978 = vmatmul.f32.gmra.mxu0 %v1125
    %v1979 = vpop.f32.mrf.mxu0
    %v1980 = vadd.f32 %v1531, %v1979
    %1981 = vmatmul.f32.gmra.mxu0 %v1127
    %v1982 = vpop.f32.mrf.mxu0
    %v1983 = vadd.f32 %v1534, %v1982
    %1984 = vmatmul.f32.gmra.mxu0 %v1129
    %v1985 = vpop.f32.mrf.mxu0
    %v1986 = vadd.f32 %v1537, %v1985
    %1987 = vmatmul.f32.gmra.mxu0 %v1131
    %v1988 = vpop.f32.mrf.mxu0
    %v1989 = vadd.f32 %v1540, %v1988
    %1990 = vmatmul.f32.gmra.mxu0 %v1133
    %v1991 = vpop.f32.mrf.mxu0
    %v1992 = vadd.f32 %v1543, %v1991
    %1993 = vmatmul.f32.gmra.mxu0 %v1135
    %v1994 = vpop.f32.mrf.mxu0
    %v1995 = vadd.f32 %v1546, %v1994
    %1996 = vmatmul.f32.gmra.mxu0 %v1137
    %v1997 = vpop.f32.mrf.mxu0
    %v1998 = vadd.f32 %v1549, %v1997
    %1999 = vmatmul.f32.gmra.mxu0 %v1139
    %v2000 = vpop.f32.mrf.mxu0
    %v2001 = vadd.f32 %v1552, %v2000
    %2002 = vmatmul.f32.gmra.mxu0 %v1141
    %v2003 = vpop.f32.mrf.mxu0
    %v2004 = vadd.f32 %v1555, %v2003
    %2005 = vmatmul.f32.gmra.mxu0 %v1143
    %v2006 = vpop.f32.mrf.mxu0
    %v2007 = vadd.f32 %v1558, %v2006
    %2008 = vmatmul.f32.gmra.mxu0 %v1145
    %v2009 = vpop.f32.mrf.mxu0
    %v2010 = vadd.f32 %v1561, %v2009
    %2011 = vmatmul.f32.gmra.mxu0 %v1147
    %v2012 = vpop.f32.mrf.mxu0
    %v2013 = vadd.f32 %v1564, %v2012
    %2014 = vmatmul.f32.gmra.mxu0 %v1149
    %v2015 = vpop.f32.mrf.mxu0
    %v2016 = vadd.f32 %v1567, %v2015
    %2017 = vmatmul.f32.gmra.mxu0 %v1151
    %v2018 = vpop.f32.mrf.mxu0
    %v2019 = vadd.f32 %v1570, %v2018
    %2020 = vmatmul.f32.gmra.mxu0 %v1153
    %v2021 = vpop.f32.mrf.mxu0
    %v2022 = vadd.f32 %v1573, %v2021
    %2023 = vmatmul.f32.gmra.mxu0 %v1155
    %v2024 = vpop.f32.mrf.mxu0
    %v2025 = vadd.f32 %v1576, %v2024
    %2026 = vmatmul.f32.gmra.mxu0 %v1157
    %v2027 = vpop.f32.mrf.mxu0
    %v2028 = vadd.f32 %v1579, %v2027
    %2029 = vmatmul.f32.gmra.mxu0 %v1159
    %v2030 = vpop.f32.mrf.mxu0
    %v2031 = vadd.f32 %v1582, %v2030
    %2032 = vmatmul.f32.gmra.mxu0 %v1161
    %v2033 = vpop.f32.mrf.mxu0
    %v2034 = vadd.f32 %v1585, %v2033
    %2035 = vmatmul.f32.gmra.mxu0 %v1163
    %v2036 = vpop.f32.mrf.mxu0
    %v2037 = vadd.f32 %v1588, %v2036
    %2038 = vmatmul.f32.gmra.mxu0 %v1165
    %v2039 = vpop.f32.mrf.mxu0
    %v2040 = vadd.f32 %v1591, %v2039
    %2041 = vmatmul.f32.gmra.mxu0 %v1167
    %v2042 = vpop.f32.mrf.mxu0
    %v2043 = vadd.f32 %v1594, %v2042
    %2044 = vmatmul.f32.gmra.mxu0 %v1169
    %v2045 = vpop.f32.mrf.mxu0
    %v2046 = vadd.f32 %v1597, %v2045
    %2047 = vmatmul.f32.gmra.mxu0 %v1171
    %v2048 = vpop.f32.mrf.mxu0
    %v2049 = vadd.f32 %v1600, %v2048
    %2050 = vmatmul.f32.gmra.mxu0 %v1173
    %v2051 = vpop.f32.mrf.mxu0
    %v2052 = vadd.f32 %v1603, %v2051
    %2053 = vmatmul.f32.gmra.mxu0 %v1175
    %v2054 = vpop.f32.mrf.mxu0
    %v2055 = vadd.f32 %v1606, %v2054
    %2056 = vmatmul.f32.gmra.mxu0 %v1177
    %v2057 = vpop.f32.mrf.mxu0
    %v2058 = vadd.f32 %v1609, %v2057
    %2059 = vmatmul.f32.gmra.mxu0 %v1179
    %v2060 = vpop.f32.mrf.mxu0
    %v2061 = vadd.f32 %v1612, %v2060
    %2062 = vmatmul.f32.gmra.mxu0 %v1181
    %v2063 = vpop.f32.mrf.mxu0
    %v2064 = vadd.f32 %v1615, %v2063
    %2065 = vmatmul.f32.gmra.mxu0 %v1183
    %v2066 = vpop.f32.mrf.mxu0
    %v2067 = vadd.f32 %v1618, %v2066
    %2068 = vmatmul.f32.gmra.mxu0 %v1185
    %v2069 = vpop.f32.mrf.mxu0
    %v2070 = vadd.f32 %v1621, %v2069
    %2071 = vmatmul.f32.gmra.mxu0 %v1187
    %v2072 = vpop.f32.mrf.mxu0
    %v2073 = vadd.f32 %v1624, %v2072
    %2074 = vmatmul.f32.gmra.mxu0 %v1189
    %v2075 = vpop.f32.mrf.mxu0
    %v2076 = vadd.f32 %v1627, %v2075
    %2077 = vmatmul.f32.gmra.mxu0 %v1191
    %v2078 = vpop.f32.mrf.mxu0
    %v2079 = vadd.f32 %v1630, %v2078
    %2080 = vmatmul.f32.gmra.mxu0 %v1193
    %v2081 = vpop.f32.mrf.mxu0
    %v2082 = vadd.f32 %v1633, %v2081
    %2083 = vmatmul.f32.gmra.mxu0 %v1195
    %v2084 = vpop.f32.mrf.mxu0
    %v2085 = vadd.f32 %v1636, %v2084
    %2086 = vmatmul.f32.gmra.mxu0 %v1197
    %v2087 = vpop.f32.mrf.mxu0
    %v2088 = vadd.f32 %v1639, %v2087
    %2089 = vmatmul.f32.gmra.mxu0 %v1199
    %v2090 = vpop.f32.mrf.mxu0
    %v2091 = vadd.f32 %v1642, %v2090
    %2092 = vmatmul.f32.gmra.mxu0 %v1201
    %v2093 = vpop.f32.mrf.mxu0
    %v2094 = vadd.f32 %v1645, %v2093
    %2095 = vmatmul.f32.gmra.mxu0 %v1203
    %v2096 = vpop.f32.mrf.mxu0
    %v2097 = vadd.f32 %v1648, %v2096
    %2098 = vmatmul.f32.gmra.mxu0 %v1205
    %v2099 = vpop.f32.mrf.mxu0
    %v2100 = vadd.f32 %v1651, %v2099
    %2101 = vmatmul.f32.gmra.mxu0 %v1207
    %v2102 = vpop.f32.mrf.mxu0
    %v2103 = vadd.f32 %v1654, %v2102
    %2104 = vmatmul.f32.gmra.mxu0 %v1209
    %v2105 = vpop.f32.mrf.mxu0
    %v2106 = vadd.f32 %v1657, %v2105
    %2107 = vdwg.mxu0
    %2124 = vrot.lane.b32.xlu0 %v1725, 1
    %v2125 = vpop.permute.xlu0 %2124
    %2126 = vrot.lane.b32.xlu0 %v1728, 1
    %v2127 = vpop.permute.xlu0 %2126
    %2128 = vrot.lane.b32.xlu0 %v1731, 1
    %v2129 = vpop.permute.xlu0 %2128
    %2130 = vrot.lane.b32.xlu0 %v1734, 1
    %v2131 = vpop.permute.xlu0 %2130
    %2132 = vrot.lane.b32.xlu0 %v1737, 1
    %v2133 = vpop.permute.xlu0 %2132
    %2134 = vrot.lane.b32.xlu0 %v1740, 1
    %v2135 = vpop.permute.xlu0 %2134
    %2136 = vrot.lane.b32.xlu0 %v1743, 1
    %v2137 = vpop.permute.xlu0 %2136
    %2138 = vrot.lane.b32.xlu0 %v1746, 1
    %v2139 = vpop.permute.xlu0 %2138
    %2140 = vrot.lane.b32.xlu0 %v1749, 1
    %v2141 = vpop.permute.xlu0 %2140
    %2142 = vrot.lane.b32.xlu0 %v1752, 1
    %v2143 = vpop.permute.xlu0 %2142
    %2144 = vrot.lane.b32.xlu0 %v1755, 1
    %v2145 = vpop.permute.xlu0 %2144
    %2146 = vrot.lane.b32.xlu0 %v1758, 1
    %v2147 = vpop.permute.xlu0 %2146
    %2148 = vrot.lane.b32.xlu0 %v1761, 1
    %v2149 = vpop.permute.xlu0 %2148
    %2150 = vrot.lane.b32.xlu0 %v1764, 1
    %v2151 = vpop.permute.xlu0 %2150
    %2152 = vrot.lane.b32.xlu0 %v1767, 1
    %v2153 = vpop.permute.xlu0 %2152
    %2154 = vrot.lane.b32.xlu0 %v1770, 1
    %v2155 = vpop.permute.xlu0 %2154
    %2188 = vrot.lane.b32.xlu0 %v1773, 2
    %v2189 = vpop.permute.xlu0 %2188
    %2190 = vrot.lane.b32.xlu0 %v1776, 2
    %v2191 = vpop.permute.xlu0 %2190
    %2192 = vrot.lane.b32.xlu0 %v1779, 2
    %v2193 = vpop.permute.xlu0 %2192
    %2194 = vrot.lane.b32.xlu0 %v1782, 2
    %v2195 = vpop.permute.xlu0 %2194
    %2196 = vrot.lane.b32.xlu0 %v1785, 2
    %v2197 = vpop.permute.xlu0 %2196
    %2198 = vrot.lane.b32.xlu0 %v1788, 2
    %v2199 = vpop.permute.xlu0 %2198
    %2200 = vrot.lane.b32.xlu0 %v1791, 2
    %v2201 = vpop.permute.xlu0 %2200
    %2202 = vrot.lane.b32.xlu0 %v1794, 2
    %v2203 = vpop.permute.xlu0 %2202
    %2204 = vrot.lane.b32.xlu0 %v1797, 2
    %v2205 = vpop.permute.xlu0 %2204
    %2206 = vrot.lane.b32.xlu0 %v1800, 2
    %v2207 = vpop.permute.xlu0 %2206
    %2208 = vrot.lane.b32.xlu0 %v1803, 2
    %v2209 = vpop.permute.xlu0 %2208
    %2210 = vrot.lane.b32.xlu0 %v1806, 2
    %v2211 = vpop.permute.xlu0 %2210
    %2212 = vrot.lane.b32.xlu0 %v1809, 2
    %v2213 = vpop.permute.xlu0 %2212
    %2214 = vrot.lane.b32.xlu0 %v1812, 2
    %v2215 = vpop.permute.xlu0 %2214
    %2216 = vrot.lane.b32.xlu0 %v1815, 2
    %v2217 = vpop.permute.xlu0 %2216
    %2218 = vrot.lane.b32.xlu0 %v1818, 2
    %v2219 = vpop.permute.xlu0 %2218
    %2252 = vrot.lane.b32.xlu0 %v1821, 3
    %v2253 = vpop.permute.xlu0 %2252
    %2254 = vrot.lane.b32.xlu0 %v1824, 3
    %v2255 = vpop.permute.xlu0 %2254
    %2256 = vrot.lane.b32.xlu0 %v1827, 3
    %v2257 = vpop.permute.xlu0 %2256
    %2258 = vrot.lane.b32.xlu0 %v1830, 3
    %v2259 = vpop.permute.xlu0 %2258
    %2260 = vrot.lane.b32.xlu0 %v1833, 3
    %v2261 = vpop.permute.xlu0 %2260
    %2262 = vrot.lane.b32.xlu0 %v1836, 3
    %v2263 = vpop.permute.xlu0 %2262
    %2264 = vrot.lane.b32.xlu0 %v1839, 3
    %v2265 = vpop.permute.xlu0 %2264
    %2266 = vrot.lane.b32.xlu0 %v1842, 3
    %v2267 = vpop.permute.xlu0 %2266
    %2268 = vrot.lane.b32.xlu0 %v1845, 3
    %v2269 = vpop.permute.xlu0 %2268
    %2270 = vrot.lane.b32.xlu0 %v1848, 3
    %v2271 = vpop.permute.xlu0 %2270
    %2272 = vrot.lane.b32.xlu0 %v1851, 3
    %v2273 = vpop.permute.xlu0 %2272
    %2274 = vrot.lane.b32.xlu0 %v1854, 3
    %v2275 = vpop.permute.xlu0 %2274
    %2276 = vrot.lane.b32.xlu0 %v1857, 3
    %v2277 = vpop.permute.xlu0 %2276
    %2278 = vrot.lane.b32.xlu0 %v1860, 3
    %v2279 = vpop.permute.xlu0 %2278
    %2280 = vrot.lane.b32.xlu0 %v1863, 3
    %v2281 = vpop.permute.xlu0 %2280
    %2282 = vrot.lane.b32.xlu0 %v1866, 3
    %v2283 = vpop.permute.xlu0 %2282
    %2316 = vrot.lane.b32.xlu0 %v1869, 4
    %v2317 = vpop.permute.xlu0 %2316
    %2318 = vrot.lane.b32.xlu0 %v1872, 4
    %v2319 = vpop.permute.xlu0 %2318
    %2320 = vrot.lane.b32.xlu0 %v1875, 4
    %v2321 = vpop.permute.xlu0 %2320
    %2322 = vrot.lane.b32.xlu0 %v1878, 4
    %v2323 = vpop.permute.xlu0 %2322
    %2324 = vrot.lane.b32.xlu0 %v1881, 4
    %v2325 = vpop.permute.xlu0 %2324
    %2326 = vrot.lane.b32.xlu0 %v1884, 4
    %v2327 = vpop.permute.xlu0 %2326
    %2328 = vrot.lane.b32.xlu0 %v1887, 4
    %v2329 = vpop.permute.xlu0 %2328
    %2330 = vrot.lane.b32.xlu0 %v1890, 4
    %v2331 = vpop.permute.xlu0 %2330
    %2332 = vrot.lane.b32.xlu0 %v1893, 4
    %v2333 = vpop.permute.xlu0 %2332
    %2334 = vrot.lane.b32.xlu0 %v1896, 4
    %v2335 = vpop.permute.xlu0 %2334
    %2336 = vrot.lane.b32.xlu0 %v1899, 4
    %v2337 = vpop.permute.xlu0 %2336
    %2338 = vrot.lane.b32.xlu0 %v1902, 4
    %v2339 = vpop.permute.xlu0 %2338
    %2340 = vrot.lane.b32.xlu0 %v1905, 4
    %v2341 = vpop.permute.xlu0 %2340
    %2342 = vrot.lane.b32.xlu0 %v1908, 4
    %v2343 = vpop.permute.xlu0 %2342
    %2344 = vrot.lane.b32.xlu0 %v1911, 4
    %v2345 = vpop.permute.xlu0 %2344
    %2346 = vrot.lane.b32.xlu0 %v1914, 4
    %v2347 = vpop.permute.xlu0 %2346
    %2380 = vrot.lane.b32.xlu0 %v1917, 5
    %v2381 = vpop.permute.xlu0 %2380
    %2382 = vrot.lane.b32.xlu0 %v1920, 5
    %v2383 = vpop.permute.xlu0 %2382
    %2384 = vrot.lane.b32.xlu0 %v1923, 5
    %v2385 = vpop.permute.xlu0 %2384
    %2386 = vrot.lane.b32.xlu0 %v1926, 5
    %v2387 = vpop.permute.xlu0 %2386
    %2388 = vrot.lane.b32.xlu0 %v1929, 5
    %v2389 = vpop.permute.xlu0 %2388
    %2390 = vrot.lane.b32.xlu0 %v1932, 5
    %v2391 = vpop.permute.xlu0 %2390
    %2392 = vrot.lane.b32.xlu0 %v1935, 5
    %v2393 = vpop.permute.xlu0 %2392
    %2394 = vrot.lane.b32.xlu0 %v1938, 5
    %v2395 = vpop.permute.xlu0 %2394
    %2396 = vrot.lane.b32.xlu0 %v1941, 5
    %v2397 = vpop.permute.xlu0 %2396
    %2398 = vrot.lane.b32.xlu0 %v1944, 5
    %v2399 = vpop.permute.xlu0 %2398
    %2400 = vrot.lane.b32.xlu0 %v1947, 5
    %v2401 = vpop.permute.xlu0 %2400
    %2402 = vrot.lane.b32.xlu0 %v1950, 5
    %v2403 = vpop.permute.xlu0 %2402
    %2404 = vrot.lane.b32.xlu0 %v1953, 5
    %v2405 = vpop.permute.xlu0 %2404
    %2406 = vrot.lane.b32.xlu0 %v1956, 5
    %v2407 = vpop.permute.xlu0 %2406
    %2408 = vrot.lane.b32.xlu0 %v1959, 5
    %v2409 = vpop.permute.xlu0 %2408
    %2410 = vrot.lane.b32.xlu0 %v1962, 5
    %v2411 = vpop.permute.xlu0 %2410
    %2444 = vrot.lane.b32.xlu0 %v1965, 6
    %v2445 = vpop.permute.xlu0 %2444
    %2446 = vrot.lane.b32.xlu0 %v1968, 6
    %v2447 = vpop.permute.xlu0 %2446
    %2448 = vrot.lane.b32.xlu0 %v1971, 6
    %v2449 = vpop.permute.xlu0 %2448
    %2450 = vrot.lane.b32.xlu0 %v1974, 6
    %v2451 = vpop.permute.xlu0 %2450
    %2452 = vrot.lane.b32.xlu0 %v1977, 6
    %v2453 = vpop.permute.xlu0 %2452
    %2454 = vrot.lane.b32.xlu0 %v1980, 6
    %v2455 = vpop.permute.xlu0 %2454
    %2456 = vrot.lane.b32.xlu0 %v1983, 6
    %v2457 = vpop.permute.xlu0 %2456
    %2458 = vrot.lane.b32.xlu0 %v1986, 6
    %v2459 = vpop.permute.xlu0 %2458
    %2460 = vrot.lane.b32.xlu0 %v1989, 6
    %v2461 = vpop.permute.xlu0 %2460
    %2462 = vrot.lane.b32.xlu0 %v1992, 6
    %v2463 = vpop.permute.xlu0 %2462
    %2464 = vrot.lane.b32.xlu0 %v1995, 6
    %v2465 = vpop.permute.xlu0 %2464
    %2466 = vrot.lane.b32.xlu0 %v1998, 6
    %v2467 = vpop.permute.xlu0 %2466
    %2468 = vrot.lane.b32.xlu0 %v2001, 6
    %v2469 = vpop.permute.xlu0 %2468
    %2470 = vrot.lane.b32.xlu0 %v2004, 6
    %v2471 = vpop.permute.xlu0 %2470
    %2472 = vrot.lane.b32.xlu0 %v2007, 6
    %v2473 = vpop.permute.xlu0 %2472
    %2474 = vrot.lane.b32.xlu0 %v2010, 6
    %v2475 = vpop.permute.xlu0 %2474
    %2508 = vrot.lane.b32.xlu0 %v2013, 7
    %v2509 = vpop.permute.xlu0 %2508
    %2510 = vrot.lane.b32.xlu0 %v2016, 7
    %v2511 = vpop.permute.xlu0 %2510
    %2512 = vrot.lane.b32.xlu0 %v2019, 7
    %v2513 = vpop.permute.xlu0 %2512
    %2514 = vrot.lane.b32.xlu0 %v2022, 7
    %v2515 = vpop.permute.xlu0 %2514
    %2516 = vrot.lane.b32.xlu0 %v2025, 7
    %v2517 = vpop.permute.xlu0 %2516
    %2518 = vrot.lane.b32.xlu0 %v2028, 7
    %v2519 = vpop.permute.xlu0 %2518
    %2520 = vrot.lane.b32.xlu0 %v2031, 7
    %v2521 = vpop.permute.xlu0 %2520
    %2522 = vrot.lane.b32.xlu0 %v2034, 7
    %v2523 = vpop.permute.xlu0 %2522
    %2524 = vrot.lane.b32.xlu0 %v2037, 7
    %v2525 = vpop.permute.xlu0 %2524
    %2526 = vrot.lane.b32.xlu0 %v2040, 7
    %v2527 = vpop.permute.xlu0 %2526
    %2528 = vrot.lane.b32.xlu0 %v2043, 7
    %v2529 = vpop.permute.xlu0 %2528
    %2530 = vrot.lane.b32.xlu0 %v2046, 7
    %v2531 = vpop.permute.xlu0 %2530
    %2532 = vrot.lane.b32.xlu0 %v2049, 7
    %v2533 = vpop.permute.xlu0 %2532
    %2534 = vrot.lane.b32.xlu0 %v2052, 7
    %v2535 = vpop.permute.xlu0 %2534
    %2536 = vrot.lane.b32.xlu0 %v2055, 7
    %v2537 = vpop.permute.xlu0 %2536
    %2538 = vrot.lane.b32.xlu0 %v2058, 7
    %v2539 = vpop.permute.xlu0 %2538
    %2572 = vrot.lane.b32.xlu0 %v2061, 8
    %v2573 = vpop.permute.xlu0 %2572
    %2574 = vrot.lane.b32.xlu0 %v2064, 8
    %v2575 = vpop.permute.xlu0 %2574
    %2576 = vrot.lane.b32.xlu0 %v2067, 8
    %v2577 = vpop.permute.xlu0 %2576
    %2578 = vrot.lane.b32.xlu0 %v2070, 8
    %v2579 = vpop.permute.xlu0 %2578
    %2580 = vrot.lane.b32.xlu0 %v2073, 8
    %v2581 = vpop.permute.xlu0 %2580
    %2582 = vrot.lane.b32.xlu0 %v2076, 8
    %v2583 = vpop.permute.xlu0 %2582
    %2584 = vrot.lane.b32.xlu0 %v2079, 8
    %v2585 = vpop.permute.xlu0 %2584
    %2586 = vrot.lane.b32.xlu0 %v2082, 8
    %v2587 = vpop.permute.xlu0 %2586
    %2588 = vrot.lane.b32.xlu0 %v2085, 8
    %v2589 = vpop.permute.xlu0 %2588
    %2590 = vrot.lane.b32.xlu0 %v2088, 8
    %v2591 = vpop.permute.xlu0 %2590
    %2592 = vrot.lane.b32.xlu0 %v2091, 8
    %v2593 = vpop.permute.xlu0 %2592
    %2594 = vrot.lane.b32.xlu0 %v2094, 8
    %v2595 = vpop.permute.xlu0 %2594
    %2596 = vrot.lane.b32.xlu0 %v2097, 8
    %v2597 = vpop.permute.xlu0 %2596
    %2598 = vrot.lane.b32.xlu0 %v2100, 8
    %v2599 = vpop.permute.xlu0 %2598
    %2600 = vrot.lane.b32.xlu0 %v2103, 8
    %v2601 = vpop.permute.xlu0 %2600
    %2602 = vrot.lane.b32.xlu0 %v2106, 8
    %v2603 = vpop.permute.xlu0 %2602
    %vm2620 = vcmask 7168
    %v2621 = vsel %vm2620, %v1677, %v2125
    %v2622 = vsel %vm2620, %v1680, %v2127
    %v2623 = vsel %vm2620, %v1683, %v2129
    %v2624 = vsel %vm2620, %v1686, %v2131
    %v2625 = vsel %vm2620, %v1689, %v2133
    %v2626 = vsel %vm2620, %v1692, %v2135
    %v2627 = vsel %vm2620, %v1695, %v2137
    %v2628 = vsel %vm2620, %v1698, %v2139
    %v2629 = vsel %vm2620, %v1701, %v2141
    %v2630 = vsel %vm2620, %v1704, %v2143
    %v2631 = vsel %vm2620, %v1707, %v2145
    %v2632 = vsel %vm2620, %v1710, %v2147
    %v2633 = vsel %vm2620, %v1713, %v2149
    %v2634 = vsel %vm2620, %v1716, %v2151
    %v2635 = vsel %vm2620, %v1719, %v2153
    %v2636 = vsel %vm2620, %v1722, %v2155
    %vm2637 = vcmask 15360
    %v2638 = vsel %vm2637, %v2621, %v2189
    %v2639 = vsel %vm2637, %v2622, %v2191
    %v2640 = vsel %vm2637, %v2623, %v2193
    %v2641 = vsel %vm2637, %v2624, %v2195
    %v2642 = vsel %vm2637, %v2625, %v2197
    %v2643 = vsel %vm2637, %v2626, %v2199
    %v2644 = vsel %vm2637, %v2627, %v2201
    %v2645 = vsel %vm2637, %v2628, %v2203
    %v2646 = vsel %vm2637, %v2629, %v2205
    %v2647 = vsel %vm2637, %v2630, %v2207
    %v2648 = vsel %vm2637, %v2631, %v2209
    %v2649 = vsel %vm2637, %v2632, %v2211
    %v2650 = vsel %vm2637, %v2633, %v2213
    %v2651 = vsel %vm2637, %v2634, %v2215
    %v2652 = vsel %vm2637, %v2635, %v2217
    %v2653 = vsel %vm2637, %v2636, %v2219
    %vm2654 = vcmask 23552
    %v2655 = vsel %vm2654, %v2638, %v2253
    %v2656 = vsel %vm2654, %v2639, %v2255
    %v2657 = vsel %vm2654, %v2640, %v2257
    %v2658 = vsel %vm2654, %v2641, %v2259
    %v2659 = vsel %vm2654, %v2642, %v2261
    %v2660 = vsel %vm2654, %v2643, %v2263
    %v2661 = vsel %vm2654, %v2644, %v2265
    %v2662 = vsel %vm2654, %v2645, %v2267
    %v2663 = vsel %vm2654, %v2646, %v2269
    %v2664 = vsel %vm2654, %v2647, %v2271
    %v2665 = vsel %vm2654, %v2648, %v2273
    %v2666 = vsel %vm2654, %v2649, %v2275
    %v2667 = vsel %vm2654, %v2650, %v2277
    %v2668 = vsel %vm2654, %v2651, %v2279
    %v2669 = vsel %vm2654, %v2652, %v2281
    %v2670 = vsel %vm2654, %v2653, %v2283
    %vm2671 = vcmask 31744
    %v2672 = vsel %vm2671, %v2655, %v2317
    %v2673 = vsel %vm2671, %v2656, %v2319
    %v2674 = vsel %vm2671, %v2657, %v2321
    %v2675 = vsel %vm2671, %v2658, %v2323
    %v2676 = vsel %vm2671, %v2659, %v2325
    %v2677 = vsel %vm2671, %v2660, %v2327
    %v2678 = vsel %vm2671, %v2661, %v2329
    %v2679 = vsel %vm2671, %v2662, %v2331
    %v2680 = vsel %vm2671, %v2663, %v2333
    %v2681 = vsel %vm2671, %v2664, %v2335
    %v2682 = vsel %vm2671, %v2665, %v2337
    %v2683 = vsel %vm2671, %v2666, %v2339
    %v2684 = vsel %vm2671, %v2667, %v2341
    %v2685 = vsel %vm2671, %v2668, %v2343
    %v2686 = vsel %vm2671, %v2669, %v2345
    %v2687 = vsel %vm2671, %v2670, %v2347
    %vm2688 = vcmask 39936
    %v2689 = vsel %vm2688, %v2672, %v2381
    %v2690 = vsel %vm2688, %v2673, %v2383
    %v2691 = vsel %vm2688, %v2674, %v2385
    %v2692 = vsel %vm2688, %v2675, %v2387
    %v2693 = vsel %vm2688, %v2676, %v2389
    %v2694 = vsel %vm2688, %v2677, %v2391
    %v2695 = vsel %vm2688, %v2678, %v2393
    %v2696 = vsel %vm2688, %v2679, %v2395
    %v2697 = vsel %vm2688, %v2680, %v2397
    %v2698 = vsel %vm2688, %v2681, %v2399
    %v2699 = vsel %vm2688, %v2682, %v2401
    %v2700 = vsel %vm2688, %v2683, %v2403
    %v2701 = vsel %vm2688, %v2684, %v2405
    %v2702 = vsel %vm2688, %v2685, %v2407
    %v2703 = vsel %vm2688, %v2686, %v2409
    %v2704 = vsel %vm2688, %v2687, %v2411
    %vm2705 = vcmask 48128
    %v2706 = vsel %vm2705, %v2689, %v2445
    %v2707 = vsel %vm2705, %v2690, %v2447
    %v2708 = vsel %vm2705, %v2691, %v2449
    %v2709 = vsel %vm2705, %v2692, %v2451
    %v2710 = vsel %vm2705, %v2693, %v2453
    %v2711 = vsel %vm2705, %v2694, %v2455
    %v2712 = vsel %vm2705, %v2695, %v2457
    %v2713 = vsel %vm2705, %v2696, %v2459
    %v2714 = vsel %vm2705, %v2697, %v2461
    %v2715 = vsel %vm2705, %v2698, %v2463
    %v2716 = vsel %vm2705, %v2699, %v2465
    %v2717 = vsel %vm2705, %v2700, %v2467
    %v2718 = vsel %vm2705, %v2701, %v2469
    %v2719 = vsel %vm2705, %v2702, %v2471
    %v2720 = vsel %vm2705, %v2703, %v2473
    %v2721 = vsel %vm2705, %v2704, %v2475
    %vm2722 = vcmask 56320
    %v2723 = vsel %vm2722, %v2706, %v2509
    %v2724 = vsel %vm2722, %v2707, %v2511
    %v2725 = vsel %vm2722, %v2708, %v2513
    %v2726 = vsel %vm2722, %v2709, %v2515
    %v2727 = vsel %vm2722, %v2710, %v2517
    %v2728 = vsel %vm2722, %v2711, %v2519
    %v2729 = vsel %vm2722, %v2712, %v2521
    %v2730 = vsel %vm2722, %v2713, %v2523
    %v2731 = vsel %vm2722, %v2714, %v2525
    %v2732 = vsel %vm2722, %v2715, %v2527
    %v2733 = vsel %vm2722, %v2716, %v2529
    %v2734 = vsel %vm2722, %v2717, %v2531
    %v2735 = vsel %vm2722, %v2718, %v2533
    %v2736 = vsel %vm2722, %v2719, %v2535
    %v2737 = vsel %vm2722, %v2720, %v2537
    %v2738 = vsel %vm2722, %v2721, %v2539
    %vm2739 = vcmask 64512
    %v2740 = vsel %vm2739, %v2723, %v2573
    %v2741 = vsel %vm2739, %v2724, %v2575
    %v2742 = vsel %vm2739, %v2725, %v2577
    %v2743 = vsel %vm2739, %v2726, %v2579
    %v2744 = vsel %vm2739, %v2727, %v2581
    %v2745 = vsel %vm2739, %v2728, %v2583
    %v2746 = vsel %vm2739, %v2729, %v2585
    %v2747 = vsel %vm2739, %v2730, %v2587
    %v2748 = vsel %vm2739, %v2731, %v2589
    %v2749 = vsel %vm2739, %v2732, %v2591
    %v2750 = vsel %vm2739, %v2733, %v2593
    %v2751 = vsel %vm2739, %v2734, %v2595
    %v2752 = vsel %vm2739, %v2735, %v2597
    %v2753 = vsel %vm2739, %v2736, %v2599
    %v2754 = vsel %vm2739, %v2737, %v2601
    %v2755 = vsel %vm2739, %v2738, %v2603
    %2772 = vrot.lane.b32.xlu0 %v1677, 127
    %v2773 = vpop.permute.xlu0 %2772
    %2774 = vrot.lane.b32.xlu0 %v1680, 127
    %v2775 = vpop.permute.xlu0 %2774
    %2776 = vrot.lane.b32.xlu0 %v1683, 127
    %v2777 = vpop.permute.xlu0 %2776
    %2778 = vrot.lane.b32.xlu0 %v1686, 127
    %v2779 = vpop.permute.xlu0 %2778
    %2780 = vrot.lane.b32.xlu0 %v1689, 127
    %v2781 = vpop.permute.xlu0 %2780
    %2782 = vrot.lane.b32.xlu0 %v1692, 127
    %v2783 = vpop.permute.xlu0 %2782
    %2784 = vrot.lane.b32.xlu0 %v1695, 127
    %v2785 = vpop.permute.xlu0 %2784
    %2786 = vrot.lane.b32.xlu0 %v1698, 127
    %v2787 = vpop.permute.xlu0 %2786
    %2788 = vrot.lane.b32.xlu0 %v1701, 127
    %v2789 = vpop.permute.xlu0 %2788
    %2790 = vrot.lane.b32.xlu0 %v1704, 127
    %v2791 = vpop.permute.xlu0 %2790
    %2792 = vrot.lane.b32.xlu0 %v1707, 127
    %v2793 = vpop.permute.xlu0 %2792
    %2794 = vrot.lane.b32.xlu0 %v1710, 127
    %v2795 = vpop.permute.xlu0 %2794
    %2796 = vrot.lane.b32.xlu0 %v1713, 127
    %v2797 = vpop.permute.xlu0 %2796
    %2798 = vrot.lane.b32.xlu0 %v1716, 127
    %v2799 = vpop.permute.xlu0 %2798
    %2800 = vrot.lane.b32.xlu0 %v1719, 127
    %v2801 = vpop.permute.xlu0 %2800
    %2802 = vrot.lane.b32.xlu0 %v1722, 127
    %v2803 = vpop.permute.xlu0 %2802
    %2820 = vrot.lane.b32.xlu0 %v1773, 1
    %v2821 = vpop.permute.xlu0 %2820
    %2822 = vrot.lane.b32.xlu0 %v1776, 1
    %v2823 = vpop.permute.xlu0 %2822
    %2824 = vrot.lane.b32.xlu0 %v1779, 1
    %v2825 = vpop.permute.xlu0 %2824
    %2826 = vrot.lane.b32.xlu0 %v1782, 1
    %v2827 = vpop.permute.xlu0 %2826
    %2828 = vrot.lane.b32.xlu0 %v1785, 1
    %v2829 = vpop.permute.xlu0 %2828
    %2830 = vrot.lane.b32.xlu0 %v1788, 1
    %v2831 = vpop.permute.xlu0 %2830
    %2832 = vrot.lane.b32.xlu0 %v1791, 1
    %v2833 = vpop.permute.xlu0 %2832
    %2834 = vrot.lane.b32.xlu0 %v1794, 1
    %v2835 = vpop.permute.xlu0 %2834
    %2836 = vrot.lane.b32.xlu0 %v1797, 1
    %v2837 = vpop.permute.xlu0 %2836
    %2838 = vrot.lane.b32.xlu0 %v1800, 1
    %v2839 = vpop.permute.xlu0 %2838
    %2840 = vrot.lane.b32.xlu0 %v1803, 1
    %v2841 = vpop.permute.xlu0 %2840
    %2842 = vrot.lane.b32.xlu0 %v1806, 1
    %v2843 = vpop.permute.xlu0 %2842
    %2844 = vrot.lane.b32.xlu0 %v1809, 1
    %v2845 = vpop.permute.xlu0 %2844
    %2846 = vrot.lane.b32.xlu0 %v1812, 1
    %v2847 = vpop.permute.xlu0 %2846
    %2848 = vrot.lane.b32.xlu0 %v1815, 1
    %v2849 = vpop.permute.xlu0 %2848
    %2850 = vrot.lane.b32.xlu0 %v1818, 1
    %v2851 = vpop.permute.xlu0 %2850
    %2868 = vrot.lane.b32.xlu0 %v1821, 2
    %v2869 = vpop.permute.xlu0 %2868
    %2870 = vrot.lane.b32.xlu0 %v1824, 2
    %v2871 = vpop.permute.xlu0 %2870
    %2872 = vrot.lane.b32.xlu0 %v1827, 2
    %v2873 = vpop.permute.xlu0 %2872
    %2874 = vrot.lane.b32.xlu0 %v1830, 2
    %v2875 = vpop.permute.xlu0 %2874
    %2876 = vrot.lane.b32.xlu0 %v1833, 2
    %v2877 = vpop.permute.xlu0 %2876
    %2878 = vrot.lane.b32.xlu0 %v1836, 2
    %v2879 = vpop.permute.xlu0 %2878
    %2880 = vrot.lane.b32.xlu0 %v1839, 2
    %v2881 = vpop.permute.xlu0 %2880
    %2882 = vrot.lane.b32.xlu0 %v1842, 2
    %v2883 = vpop.permute.xlu0 %2882
    %2884 = vrot.lane.b32.xlu0 %v1845, 2
    %v2885 = vpop.permute.xlu0 %2884
    %2886 = vrot.lane.b32.xlu0 %v1848, 2
    %v2887 = vpop.permute.xlu0 %2886
    %2888 = vrot.lane.b32.xlu0 %v1851, 2
    %v2889 = vpop.permute.xlu0 %2888
    %2890 = vrot.lane.b32.xlu0 %v1854, 2
    %v2891 = vpop.permute.xlu0 %2890
    %2892 = vrot.lane.b32.xlu0 %v1857, 2
    %v2893 = vpop.permute.xlu0 %2892
    %2894 = vrot.lane.b32.xlu0 %v1860, 2
    %v2895 = vpop.permute.xlu0 %2894
    %2896 = vrot.lane.b32.xlu0 %v1863, 2
    %v2897 = vpop.permute.xlu0 %2896
    %2898 = vrot.lane.b32.xlu0 %v1866, 2
    %v2899 = vpop.permute.xlu0 %2898
    %2916 = vrot.lane.b32.xlu0 %v1869, 3
    %v2917 = vpop.permute.xlu0 %2916
    %2918 = vrot.lane.b32.xlu0 %v1872, 3
    %v2919 = vpop.permute.xlu0 %2918
    %2920 = vrot.lane.b32.xlu0 %v1875, 3
    %v2921 = vpop.permute.xlu0 %2920
    %2922 = vrot.lane.b32.xlu0 %v1878, 3
    %v2923 = vpop.permute.xlu0 %2922
    %2924 = vrot.lane.b32.xlu0 %v1881, 3
    %v2925 = vpop.permute.xlu0 %2924
    %2926 = vrot.lane.b32.xlu0 %v1884, 3
    %v2927 = vpop.permute.xlu0 %2926
    %2928 = vrot.lane.b32.xlu0 %v1887, 3
    %v2929 = vpop.permute.xlu0 %2928
    %2930 = vrot.lane.b32.xlu0 %v1890, 3
    %v2931 = vpop.permute.xlu0 %2930
    %2932 = vrot.lane.b32.xlu0 %v1893, 3
    %v2933 = vpop.permute.xlu0 %2932
    %2934 = vrot.lane.b32.xlu0 %v1896, 3
    %v2935 = vpop.permute.xlu0 %2934
    %2936 = vrot.lane.b32.xlu0 %v1899, 3
    %v2937 = vpop.permute.xlu0 %2936
    %2938 = vrot.lane.b32.xlu0 %v1902, 3
    %v2939 = vpop.permute.xlu0 %2938
    %2940 = vrot.lane.b32.xlu0 %v1905, 3
    %v2941 = vpop.permute.xlu0 %2940
    %2942 = vrot.lane.b32.xlu0 %v1908, 3
    %v2943 = vpop.permute.xlu0 %2942
    %2944 = vrot.lane.b32.xlu0 %v1911, 3
    %v2945 = vpop.permute.xlu0 %2944
    %2946 = vrot.lane.b32.xlu0 %v1914, 3
    %v2947 = vpop.permute.xlu0 %2946
    %2964 = vrot.lane.b32.xlu0 %v1917, 4
    %v2965 = vpop.permute.xlu0 %2964
    %2966 = vrot.lane.b32.xlu0 %v1920, 4
    %v2967 = vpop.permute.xlu0 %2966
    %2968 = vrot.lane.b32.xlu0 %v1923, 4
    %v2969 = vpop.permute.xlu0 %2968
    %2970 = vrot.lane.b32.xlu0 %v1926, 4
    %v2971 = vpop.permute.xlu0 %2970
    %2972 = vrot.lane.b32.xlu0 %v1929, 4
    %v2973 = vpop.permute.xlu0 %2972
    %2974 = vrot.lane.b32.xlu0 %v1932, 4
    %v2975 = vpop.permute.xlu0 %2974
    %2976 = vrot.lane.b32.xlu0 %v1935, 4
    %v2977 = vpop.permute.xlu0 %2976
    %2978 = vrot.lane.b32.xlu0 %v1938, 4
    %v2979 = vpop.permute.xlu0 %2978
    %2980 = vrot.lane.b32.xlu0 %v1941, 4
    %v2981 = vpop.permute.xlu0 %2980
    %2982 = vrot.lane.b32.xlu0 %v1944, 4
    %v2983 = vpop.permute.xlu0 %2982
    %2984 = vrot.lane.b32.xlu0 %v1947, 4
    %v2985 = vpop.permute.xlu0 %2984
    %2986 = vrot.lane.b32.xlu0 %v1950, 4
    %v2987 = vpop.permute.xlu0 %2986
    %2988 = vrot.lane.b32.xlu0 %v1953, 4
    %v2989 = vpop.permute.xlu0 %2988
    %2990 = vrot.lane.b32.xlu0 %v1956, 4
    %v2991 = vpop.permute.xlu0 %2990
    %2992 = vrot.lane.b32.xlu0 %v1959, 4
    %v2993 = vpop.permute.xlu0 %2992
    %2994 = vrot.lane.b32.xlu0 %v1962, 4
    %v2995 = vpop.permute.xlu0 %2994
    %3012 = vrot.lane.b32.xlu0 %v1965, 5
    %v3013 = vpop.permute.xlu0 %3012
    %3014 = vrot.lane.b32.xlu0 %v1968, 5
    %v3015 = vpop.permute.xlu0 %3014
    %3016 = vrot.lane.b32.xlu0 %v1971, 5
    %v3017 = vpop.permute.xlu0 %3016
    %3018 = vrot.lane.b32.xlu0 %v1974, 5
    %v3019 = vpop.permute.xlu0 %3018
    %3020 = vrot.lane.b32.xlu0 %v1977, 5
    %v3021 = vpop.permute.xlu0 %3020
    %3022 = vrot.lane.b32.xlu0 %v1980, 5
    %v3023 = vpop.permute.xlu0 %3022
    %3024 = vrot.lane.b32.xlu0 %v1983, 5
    %v3025 = vpop.permute.xlu0 %3024
    %3026 = vrot.lane.b32.xlu0 %v1986, 5
    %v3027 = vpop.permute.xlu0 %3026
    %3028 = vrot.lane.b32.xlu0 %v1989, 5
    %v3029 = vpop.permute.xlu0 %3028
    %3030 = vrot.lane.b32.xlu0 %v1992, 5
    %v3031 = vpop.permute.xlu0 %3030
    %3032 = vrot.lane.b32.xlu0 %v1995, 5
    %v3033 = vpop.permute.xlu0 %3032
    %3034 = vrot.lane.b32.xlu0 %v1998, 5
    %v3035 = vpop.permute.xlu0 %3034
    %3036 = vrot.lane.b32.xlu0 %v2001, 5
    %v3037 = vpop.permute.xlu0 %3036
    %3038 = vrot.lane.b32.xlu0 %v2004, 5
    %v3039 = vpop.permute.xlu0 %3038
    %3040 = vrot.lane.b32.xlu0 %v2007, 5
    %v3041 = vpop.permute.xlu0 %3040
    %3042 = vrot.lane.b32.xlu0 %v2010, 5
    %v3043 = vpop.permute.xlu0 %3042
    %3060 = vrot.lane.b32.xlu0 %v2013, 6
    %v3061 = vpop.permute.xlu0 %3060
    %3062 = vrot.lane.b32.xlu0 %v2016, 6
    %v3063 = vpop.permute.xlu0 %3062
    %3064 = vrot.lane.b32.xlu0 %v2019, 6
    %v3065 = vpop.permute.xlu0 %3064
    %3066 = vrot.lane.b32.xlu0 %v2022, 6
    %v3067 = vpop.permute.xlu0 %3066
    %3068 = vrot.lane.b32.xlu0 %v2025, 6
    %v3069 = vpop.permute.xlu0 %3068
    %3070 = vrot.lane.b32.xlu0 %v2028, 6
    %v3071 = vpop.permute.xlu0 %3070
    %3072 = vrot.lane.b32.xlu0 %v2031, 6
    %v3073 = vpop.permute.xlu0 %3072
    %3074 = vrot.lane.b32.xlu0 %v2034, 6
    %v3075 = vpop.permute.xlu0 %3074
    %3076 = vrot.lane.b32.xlu0 %v2037, 6
    %v3077 = vpop.permute.xlu0 %3076
    %3078 = vrot.lane.b32.xlu0 %v2040, 6
    %v3079 = vpop.permute.xlu0 %3078
    %3080 = vrot.lane.b32.xlu0 %v2043, 6
    %v3081 = vpop.permute.xlu0 %3080
    %3082 = vrot.lane.b32.xlu0 %v2046, 6
    %v3083 = vpop.permute.xlu0 %3082
    %3084 = vrot.lane.b32.xlu0 %v2049, 6
    %v3085 = vpop.permute.xlu0 %3084
    %3086 = vrot.lane.b32.xlu0 %v2052, 6
    %v3087 = vpop.permute.xlu0 %3086
    %3088 = vrot.lane.b32.xlu0 %v2055, 6
    %v3089 = vpop.permute.xlu0 %3088
    %3090 = vrot.lane.b32.xlu0 %v2058, 6
    %v3091 = vpop.permute.xlu0 %3090
    %3108 = vrot.lane.b32.xlu0 %v2061, 7
    %v3109 = vpop.permute.xlu0 %3108
    %3110 = vrot.lane.b32.xlu0 %v2064, 7
    %v3111 = vpop.permute.xlu0 %3110
    %3112 = vrot.lane.b32.xlu0 %v2067, 7
    %v3113 = vpop.permute.xlu0 %3112
    %3114 = vrot.lane.b32.xlu0 %v2070, 7
    %v3115 = vpop.permute.xlu0 %3114
    %3116 = vrot.lane.b32.xlu0 %v2073, 7
    %v3117 = vpop.permute.xlu0 %3116
    %3118 = vrot.lane.b32.xlu0 %v2076, 7
    %v3119 = vpop.permute.xlu0 %3118
    %3120 = vrot.lane.b32.xlu0 %v2079, 7
    %v3121 = vpop.permute.xlu0 %3120
    %3122 = vrot.lane.b32.xlu0 %v2082, 7
    %v3123 = vpop.permute.xlu0 %3122
    %3124 = vrot.lane.b32.xlu0 %v2085, 7
    %v3125 = vpop.permute.xlu0 %3124
    %3126 = vrot.lane.b32.xlu0 %v2088, 7
    %v3127 = vpop.permute.xlu0 %3126
    %3128 = vrot.lane.b32.xlu0 %v2091, 7
    %v3129 = vpop.permute.xlu0 %3128
    %3130 = vrot.lane.b32.xlu0 %v2094, 7
    %v3131 = vpop.permute.xlu0 %3130
    %3132 = vrot.lane.b32.xlu0 %v2097, 7
    %v3133 = vpop.permute.xlu0 %3132
    %3134 = vrot.lane.b32.xlu0 %v2100, 7
    %v3135 = vpop.permute.xlu0 %3134
    %3136 = vrot.lane.b32.xlu0 %v2103, 7
    %v3137 = vpop.permute.xlu0 %3136
    %3138 = vrot.lane.b32.xlu0 %v2106, 7
    %v3139 = vpop.permute.xlu0 %3138
    %v3156 = vsel %vm2620, %v2773, %v1725
    %v3157 = vsel %vm2620, %v2775, %v1728
    %v3158 = vsel %vm2620, %v2777, %v1731
    %v3159 = vsel %vm2620, %v2779, %v1734
    %v3160 = vsel %vm2620, %v2781, %v1737
    %v3161 = vsel %vm2620, %v2783, %v1740
    %v3162 = vsel %vm2620, %v2785, %v1743
    %v3163 = vsel %vm2620, %v2787, %v1746
    %v3164 = vsel %vm2620, %v2789, %v1749
    %v3165 = vsel %vm2620, %v2791, %v1752
    %v3166 = vsel %vm2620, %v2793, %v1755
    %v3167 = vsel %vm2620, %v2795, %v1758
    %v3168 = vsel %vm2620, %v2797, %v1761
    %v3169 = vsel %vm2620, %v2799, %v1764
    %v3170 = vsel %vm2620, %v2801, %v1767
    %v3171 = vsel %vm2620, %v2803, %v1770
    %v3172 = vsel %vm2637, %v3156, %v2821
    %v3173 = vsel %vm2637, %v3157, %v2823
    %v3174 = vsel %vm2637, %v3158, %v2825
    %v3175 = vsel %vm2637, %v3159, %v2827
    %v3176 = vsel %vm2637, %v3160, %v2829
    %v3177 = vsel %vm2637, %v3161, %v2831
    %v3178 = vsel %vm2637, %v3162, %v2833
    %v3179 = vsel %vm2637, %v3163, %v2835
    %v3180 = vsel %vm2637, %v3164, %v2837
    %v3181 = vsel %vm2637, %v3165, %v2839
    %v3182 = vsel %vm2637, %v3166, %v2841
    %v3183 = vsel %vm2637, %v3167, %v2843
    %v3184 = vsel %vm2637, %v3168, %v2845
    %v3185 = vsel %vm2637, %v3169, %v2847
    %v3186 = vsel %vm2637, %v3170, %v2849
    %v3187 = vsel %vm2637, %v3171, %v2851
    %v3188 = vsel %vm2654, %v3172, %v2869
    %v3189 = vsel %vm2654, %v3173, %v2871
    %v3190 = vsel %vm2654, %v3174, %v2873
    %v3191 = vsel %vm2654, %v3175, %v2875
    %v3192 = vsel %vm2654, %v3176, %v2877
    %v3193 = vsel %vm2654, %v3177, %v2879
    %v3194 = vsel %vm2654, %v3178, %v2881
    %v3195 = vsel %vm2654, %v3179, %v2883
    %v3196 = vsel %vm2654, %v3180, %v2885
    %v3197 = vsel %vm2654, %v3181, %v2887
    %v3198 = vsel %vm2654, %v3182, %v2889
    %v3199 = vsel %vm2654, %v3183, %v2891
    %v3200 = vsel %vm2654, %v3184, %v2893
    %v3201 = vsel %vm2654, %v3185, %v2895
    %v3202 = vsel %vm2654, %v3186, %v2897
    %v3203 = vsel %vm2654, %v3187, %v2899
    %v3204 = vsel %vm2671, %v3188, %v2917
    %v3205 = vsel %vm2671, %v3189, %v2919
    %v3206 = vsel %vm2671, %v3190, %v2921
    %v3207 = vsel %vm2671, %v3191, %v2923
    %v3208 = vsel %vm2671, %v3192, %v2925
    %v3209 = vsel %vm2671, %v3193, %v2927
    %v3210 = vsel %vm2671, %v3194, %v2929
    %v3211 = vsel %vm2671, %v3195, %v2931
    %v3212 = vsel %vm2671, %v3196, %v2933
    %v3213 = vsel %vm2671, %v3197, %v2935
    %v3214 = vsel %vm2671, %v3198, %v2937
    %v3215 = vsel %vm2671, %v3199, %v2939
    %v3216 = vsel %vm2671, %v3200, %v2941
    %v3217 = vsel %vm2671, %v3201, %v2943
    %v3218 = vsel %vm2671, %v3202, %v2945
    %v3219 = vsel %vm2671, %v3203, %v2947
    %v3220 = vsel %vm2688, %v3204, %v2965
    %v3221 = vsel %vm2688, %v3205, %v2967
    %v3222 = vsel %vm2688, %v3206, %v2969
    %v3223 = vsel %vm2688, %v3207, %v2971
    %v3224 = vsel %vm2688, %v3208, %v2973
    %v3225 = vsel %vm2688, %v3209, %v2975
    %v3226 = vsel %vm2688, %v3210, %v2977
    %v3227 = vsel %vm2688, %v3211, %v2979
    %v3228 = vsel %vm2688, %v3212, %v2981
    %v3229 = vsel %vm2688, %v3213, %v2983
    %v3230 = vsel %vm2688, %v3214, %v2985
    %v3231 = vsel %vm2688, %v3215, %v2987
    %v3232 = vsel %vm2688, %v3216, %v2989
    %v3233 = vsel %vm2688, %v3217, %v2991
    %v3234 = vsel %vm2688, %v3218, %v2993
    %v3235 = vsel %vm2688, %v3219, %v2995
    %v3236 = vsel %vm2705, %v3220, %v3013
    %v3237 = vsel %vm2705, %v3221, %v3015
    %v3238 = vsel %vm2705, %v3222, %v3017
    %v3239 = vsel %vm2705, %v3223, %v3019
    %v3240 = vsel %vm2705, %v3224, %v3021
    %v3241 = vsel %vm2705, %v3225, %v3023
    %v3242 = vsel %vm2705, %v3226, %v3025
    %v3243 = vsel %vm2705, %v3227, %v3027
    %v3244 = vsel %vm2705, %v3228, %v3029
    %v3245 = vsel %vm2705, %v3229, %v3031
    %v3246 = vsel %vm2705, %v3230, %v3033
    %v3247 = vsel %vm2705, %v3231, %v3035
    %v3248 = vsel %vm2705, %v3232, %v3037
    %v3249 = vsel %vm2705, %v3233, %v3039
    %v3250 = vsel %vm2705, %v3234, %v3041
    %v3251 = vsel %vm2705, %v3235, %v3043
    %v3252 = vsel %vm2722, %v3236, %v3061
    %v3253 = vsel %vm2722, %v3237, %v3063
    %v3254 = vsel %vm2722, %v3238, %v3065
    %v3255 = vsel %vm2722, %v3239, %v3067
    %v3256 = vsel %vm2722, %v3240, %v3069
    %v3257 = vsel %vm2722, %v3241, %v3071
    %v3258 = vsel %vm2722, %v3242, %v3073
    %v3259 = vsel %vm2722, %v3243, %v3075
    %v3260 = vsel %vm2722, %v3244, %v3077
    %v3261 = vsel %vm2722, %v3245, %v3079
    %v3262 = vsel %vm2722, %v3246, %v3081
    %v3263 = vsel %vm2722, %v3247, %v3083
    %v3264 = vsel %vm2722, %v3248, %v3085
    %v3265 = vsel %vm2722, %v3249, %v3087
    %v3266 = vsel %vm2722, %v3250, %v3089
    %v3267 = vsel %vm2722, %v3251, %v3091
    %v3268 = vsel %vm2739, %v3252, %v3109
    %v3269 = vsel %vm2739, %v3253, %v3111
    %v3270 = vsel %vm2739, %v3254, %v3113
    %v3271 = vsel %vm2739, %v3255, %v3115
    %v3272 = vsel %vm2739, %v3256, %v3117
    %v3273 = vsel %vm2739, %v3257, %v3119
    %v3274 = vsel %vm2739, %v3258, %v3121
    %v3275 = vsel %vm2739, %v3259, %v3123
    %v3276 = vsel %vm2739, %v3260, %v3125
    %v3277 = vsel %vm2739, %v3261, %v3127
    %v3278 = vsel %vm2739, %v3262, %v3129
    %v3279 = vsel %vm2739, %v3263, %v3131
    %v3280 = vsel %vm2739, %v3264, %v3133
    %v3281 = vsel %vm2739, %v3265, %v3135
    %v3282 = vsel %vm2739, %v3266, %v3137
    %v3283 = vsel %vm2739, %v3267, %v3139
    %3300 = vrot.lane.b32.xlu0 %v3268, 9
    %v3301 = vpop.permute.xlu0 %3300
    %3302 = vrot.lane.b32.xlu0 %v3269, 9
    %v3303 = vpop.permute.xlu0 %3302
    %3304 = vrot.lane.b32.xlu0 %v3270, 9
    %v3305 = vpop.permute.xlu0 %3304
    %3306 = vrot.lane.b32.xlu0 %v3271, 9
    %v3307 = vpop.permute.xlu0 %3306
    %3308 = vrot.lane.b32.xlu0 %v3272, 9
    %v3309 = vpop.permute.xlu0 %3308
    %3310 = vrot.lane.b32.xlu0 %v3273, 9
    %v3311 = vpop.permute.xlu0 %3310
    %3312 = vrot.lane.b32.xlu0 %v3274, 9
    %v3313 = vpop.permute.xlu0 %3312
    %3314 = vrot.lane.b32.xlu0 %v3275, 9
    %v3315 = vpop.permute.xlu0 %3314
    %3316 = vrot.lane.b32.xlu0 %v3276, 9
    %v3317 = vpop.permute.xlu0 %3316
    %3318 = vrot.lane.b32.xlu0 %v3277, 9
    %v3319 = vpop.permute.xlu0 %3318
    %3320 = vrot.lane.b32.xlu0 %v3278, 9
    %v3321 = vpop.permute.xlu0 %3320
    %3322 = vrot.lane.b32.xlu0 %v3279, 9
    %v3323 = vpop.permute.xlu0 %3322
    %3324 = vrot.lane.b32.xlu0 %v3280, 9
    %v3325 = vpop.permute.xlu0 %3324
    %3326 = vrot.lane.b32.xlu0 %v3281, 9
    %v3327 = vpop.permute.xlu0 %3326
    %3328 = vrot.lane.b32.xlu0 %v3282, 9
    %v3329 = vpop.permute.xlu0 %3328
    %3330 = vrot.lane.b32.xlu0 %v3283, 9
    %v3331 = vpop.permute.xlu0 %3330
    %vm3348 = vcmask 72704
    %v3349 = vsel %vm3348, %v2740, %v3301
    %v3350 = vsel %vm3348, %v2741, %v3303
    %v3351 = vsel %vm3348, %v2742, %v3305
    %v3352 = vsel %vm3348, %v2743, %v3307
    %v3353 = vsel %vm3348, %v2744, %v3309
    %v3354 = vsel %vm3348, %v2745, %v3311
    %v3355 = vsel %vm3348, %v2746, %v3313
    %v3356 = vsel %vm3348, %v2747, %v3315
    %v3357 = vsel %vm3348, %v2748, %v3317
    %v3358 = vsel %vm3348, %v2749, %v3319
    %v3359 = vsel %vm3348, %v2750, %v3321
    %v3360 = vsel %vm3348, %v2751, %v3323
    %v3361 = vsel %vm3348, %v2752, %v3325
    %v3362 = vsel %vm3348, %v2753, %v3327
    %v3363 = vsel %vm3348, %v2754, %v3329
    %v3364 = vsel %vm3348, %v2755, %v3331
    %s3365 = sld [smem:[#allocation5 + $0x1]]
    %vm3366 = vcmask 146432
    %v3367 = vsel %vm3366, %v3349, 0.0
    %3368 = vadd.xlane.f32.xlu0 %v3367
    %v3369 = vpop.xlane.xlu0 %3368
    %v3370 = vsel %vm3366, %v3350, 0.0
    %3371 = vadd.xlane.f32.xlu0 %v3370
    %v3372 = vpop.xlane.xlu0 %3371
    %v3373 = vsel %vm3366, %v3351, 0.0
    %3374 = vadd.xlane.f32.xlu0 %v3373
    %v3375 = vpop.xlane.xlu0 %3374
    %v3376 = vsel %vm3366, %v3352, 0.0
    %3377 = vadd.xlane.f32.xlu0 %v3376
    %v3378 = vpop.xlane.xlu0 %3377
    %v3379 = vsel %vm3366, %v3353, 0.0
    %3380 = vadd.xlane.f32.xlu0 %v3379
    %v3381 = vpop.xlane.xlu0 %3380
    %v3382 = vsel %vm3366, %v3354, 0.0
    %3383 = vadd.xlane.f32.xlu0 %v3382
    %v3384 = vpop.xlane.xlu0 %3383
    %v3385 = vsel %vm3366, %v3355, 0.0
    %3386 = vadd.xlane.f32.xlu0 %v3385
    %v3387 = vpop.xlane.xlu0 %3386
    %v3388 = vsel %vm3366, %v3356, 0.0
    %3389 = vadd.xlane.f32.xlu0 %v3388
    %v3390 = vpop.xlane.xlu0 %3389
    %v3391 = vsel %vm3366, %v3357, 0.0
    %3392 = vadd.xlane.f32.xlu0 %v3391
    %v3393 = vpop.xlane.xlu0 %3392
    %v3394 = vsel %vm3366, %v3358, 0.0
    %3395 = vadd.xlane.f32.xlu0 %v3394
    %v3396 = vpop.xlane.xlu0 %3395
    %v3397 = vsel %vm3366, %v3359, 0.0
    %3398 = vadd.xlane.f32.xlu0 %v3397
    %v3399 = vpop.xlane.xlu0 %3398
    %v3400 = vsel %vm3366, %v3360, 0.0
    %3401 = vadd.xlane.f32.xlu0 %v3400
    %v3402 = vpop.xlane.xlu0 %3401
    %v3403 = vsel %vm3366, %v3361, 0.0
    %3404 = vadd.xlane.f32.xlu0 %v3403
    %v3405 = vpop.xlane.xlu0 %3404
    %v3406 = vsel %vm3366, %v3362, 0.0
    %3407 = vadd.xlane.f32.xlu0 %v3406
    %v3408 = vpop.xlane.xlu0 %3407
    %v3409 = vsel %vm3366, %v3363, 0.0
    %3410 = vadd.xlane.f32.xlu0 %v3409
    %v3411 = vpop.xlane.xlu0 %3410
    %v3412 = vsel %vm3366, %v3364, 0.0
    %3413 = vadd.xlane.f32.xlu0 %v3412
    %v3414 = vpop.xlane.xlu0 %3413
    %v3415 = vmul.f32 %v3369, 0.055555556
    %v3416 = vmul.f32 %v3372, 0.055555556
    %v3417 = vmul.f32 %v3375, 0.055555556
    %v3418 = vmul.f32 %v3378, 0.055555556
    %v3419 = vmul.f32 %v3381, 0.055555556
    %v3420 = vmul.f32 %v3384, 0.055555556
    %v3421 = vmul.f32 %v3387, 0.055555556
    %v3422 = vmul.f32 %v3390, 0.055555556
    %v3423 = vmul.f32 %v3393, 0.055555556
    %v3424 = vmul.f32 %v3396, 0.055555556
    %v3425 = vmul.f32 %v3399, 0.055555556
    %v3426 = vmul.f32 %v3402, 0.055555556
    %v3427 = vmul.f32 %v3405, 0.055555556
    %v3428 = vmul.f32 %v3408, 0.055555556
    %v3429 = vmul.f32 %v3411, 0.055555556
    %v3430 = vmul.f32 %v3414, 0.055555556
    %v3431 = vsub.f32 %v3349, %v3415
    %v3432 = vsub.f32 %v3350, %v3416
    %v3433 = vsub.f32 %v3351, %v3417
    %v3434 = vsub.f32 %v3352, %v3418
    %v3435 = vsub.f32 %v3353, %v3419
    %v3436 = vsub.f32 %v3354, %v3420
    %v3437 = vsub.f32 %v3355, %v3421
    %v3438 = vsub.f32 %v3356, %v3422
    %v3439 = vsub.f32 %v3357, %v3423
    %v3440 = vsub.f32 %v3358, %v3424
    %v3441 = vsub.f32 %v3359, %v3425
    %v3442 = vsub.f32 %v3360, %v3426
    %v3443 = vsub.f32 %v3361, %v3427
    %v3444 = vsub.f32 %v3362, %v3428
    %v3445 = vsub.f32 %v3363, %v3429
    %v3446 = vsub.f32 %v3364, %v3430
    %v3447 = vmul.f32 %v3431, %v3431
    %v3448 = vmul.f32 %v3432, %v3432
    %v3449 = vmul.f32 %v3433, %v3433
    %v3450 = vmul.f32 %v3434, %v3434
    %v3451 = vmul.f32 %v3435, %v3435
    %v3452 = vmul.f32 %v3436, %v3436
    %v3453 = vmul.f32 %v3437, %v3437
    %v3454 = vmul.f32 %v3438, %v3438
    %v3455 = vmul.f32 %v3439, %v3439
    %v3456 = vmul.f32 %v3440, %v3440
    %v3457 = vmul.f32 %v3441, %v3441
    %v3458 = vmul.f32 %v3442, %v3442
    %v3459 = vmul.f32 %v3443, %v3443
    %v3460 = vmul.f32 %v3444, %v3444
    %v3461 = vmul.f32 %v3445, %v3445
    %v3462 = vmul.f32 %v3446, %v3446
    %v3463 = vsel %vm3366, %v3447, 0.0
    %3464 = vadd.xlane.f32.xlu0 %v3463
    %v3465 = vpop.xlane.xlu0 %3464
    %v3466 = vsel %vm3366, %v3448, 0.0
    %3467 = vadd.xlane.f32.xlu0 %v3466
    %v3468 = vpop.xlane.xlu0 %3467
    %v3469 = vsel %vm3366, %v3449, 0.0
    %3470 = vadd.xlane.f32.xlu0 %v3469
    %v3471 = vpop.xlane.xlu0 %3470
    %v3472 = vsel %vm3366, %v3450, 0.0
    %3473 = vadd.xlane.f32.xlu0 %v3472
    %v3474 = vpop.xlane.xlu0 %3473
    %v3475 = vsel %vm3366, %v3451, 0.0
    %3476 = vadd.xlane.f32.xlu0 %v3475
    %v3477 = vpop.xlane.xlu0 %3476
    %v3478 = vsel %vm3366, %v3452, 0.0
    %3479 = vadd.xlane.f32.xlu0 %v3478
    %v3480 = vpop.xlane.xlu0 %3479
    %v3481 = vsel %vm3366, %v3453, 0.0
    %3482 = vadd.xlane.f32.xlu0 %v3481
    %v3483 = vpop.xlane.xlu0 %3482
    %v3484 = vsel %vm3366, %v3454, 0.0
    %3485 = vadd.xlane.f32.xlu0 %v3484
    %v3486 = vpop.xlane.xlu0 %3485
    %v3487 = vsel %vm3366, %v3455, 0.0
    %3488 = vadd.xlane.f32.xlu0 %v3487
    %v3489 = vpop.xlane.xlu0 %3488
    %v3490 = vsel %vm3366, %v3456, 0.0
    %3491 = vadd.xlane.f32.xlu0 %v3490
    %v3492 = vpop.xlane.xlu0 %3491
    %v3493 = vsel %vm3366, %v3457, 0.0
    %3494 = vadd.xlane.f32.xlu0 %v3493
    %v3495 = vpop.xlane.xlu0 %3494
    %v3496 = vsel %vm3366, %v3458, 0.0
    %3497 = vadd.xlane.f32.xlu0 %v3496
    %v3498 = vpop.xlane.xlu0 %3497
    %v3499 = vsel %vm3366, %v3459, 0.0
    %3500 = vadd.xlane.f32.xlu0 %v3499
    %v3501 = vpop.xlane.xlu0 %3500
    %v3502 = vsel %vm3366, %v3460, 0.0
    %3503 = vadd.xlane.f32.xlu0 %v3502
    %v3504 = vpop.xlane.xlu0 %3503
    %v3505 = vsel %vm3366, %v3461, 0.0
    %3506 = vadd.xlane.f32.xlu0 %v3505
    %v3507 = vpop.xlane.xlu0 %3506
    %v3508 = vsel %vm3366, %v3462, 0.0
    %3509 = vadd.xlane.f32.xlu0 %v3508
    %v3510 = vpop.xlane.xlu0 %3509
    %v3511 = vmul.f32 %v3465, 0.055555556
    %v3512 = vmul.f32 %v3468, 0.055555556
    %v3513 = vmul.f32 %v3471, 0.055555556
    %v3514 = vmul.f32 %v3474, 0.055555556
    %v3515 = vmul.f32 %v3477, 0.055555556
    %v3516 = vmul.f32 %v3480, 0.055555556
    %v3517 = vmul.f32 %v3483, 0.055555556
    %v3518 = vmul.f32 %v3486, 0.055555556
    %v3519 = vmul.f32 %v3489, 0.055555556
    %v3520 = vmul.f32 %v3492, 0.055555556
    %v3521 = vmul.f32 %v3495, 0.055555556
    %v3522 = vmul.f32 %v3498, 0.055555556
    %v3523 = vmul.f32 %v3501, 0.055555556
    %v3524 = vmul.f32 %v3504, 0.055555556
    %v3525 = vmul.f32 %v3507, 0.055555556
    %v3526 = vmul.f32 %v3510, 0.055555556
    %v3527 = vadd.f32 %v3511, 1e-05
    %v3528 = vadd.f32 %v3512, 1e-05
    %v3529 = vadd.f32 %v3513, 1e-05
    %v3530 = vadd.f32 %v3514, 1e-05
    %v3531 = vadd.f32 %v3515, 1e-05
    %v3532 = vadd.f32 %v3516, 1e-05
    %v3533 = vadd.f32 %v3517, 1e-05
    %v3534 = vadd.f32 %v3518, 1e-05
    %v3535 = vadd.f32 %v3519, 1e-05
    %v3536 = vadd.f32 %v3520, 1e-05
    %v3537 = vadd.f32 %v3521, 1e-05
    %v3538 = vadd.f32 %v3522, 1e-05
    %v3539 = vadd.f32 %v3523, 1e-05
    %v3540 = vadd.f32 %v3524, 1e-05
    %v3541 = vadd.f32 %v3525, 1e-05
    %v3542 = vadd.f32 %v3526, 1e-05
    %v3543 = vrsqrt.pop %v3527
    %v3544 = vmul.f32 %v3543, %v3527
    %v3545 = vmul.f32 %v3544, %v3543
    %v3546 = vmul.f32 0.5, %v3545
    %v3547 = vsub.f32 1.5, %v3546
    %v3548 = vmul.f32 %v3543, %v3547
    %vm3549 = vweird.f32 %v3527
    %vm3550 = vweird.f32 %v3543
    %vm3551 = vmor %vm3549, %vm3550
    %v3552 = vsel %vm3551, %v3543, %v3548
    %v3553 = vrsqrt.pop %v3528
    %v3554 = vmul.f32 %v3553, %v3528
    %v3555 = vmul.f32 %v3554, %v3553
    %v3556 = vmul.f32 0.5, %v3555
    %v3557 = vsub.f32 1.5, %v3556
    %v3558 = vmul.f32 %v3553, %v3557
    %vm3559 = vweird.f32 %v3528
    %vm3560 = vweird.f32 %v3553
    %vm3561 = vmor %vm3559, %vm3560
    %v3562 = vsel %vm3561, %v3553, %v3558
    %v3563 = vrsqrt.pop %v3529
    %v3564 = vmul.f32 %v3563, %v3529
    %v3565 = vmul.f32 %v3564, %v3563
    %v3566 = vmul.f32 0.5, %v3565
    %v3567 = vsub.f32 1.5, %v3566
    %v3568 = vmul.f32 %v3563, %v3567
    %vm3569 = vweird.f32 %v3529
    %vm3570 = vweird.f32 %v3563
    %vm3571 = vmor %vm3569, %vm3570
    %v3572 = vsel %vm3571, %v3563, %v3568
    %v3573 = vrsqrt.pop %v3530
    %v3574 = vmul.f32 %v3573, %v3530
    %v3575 = vmul.f32 %v3574, %v3573
    %v3576 = vmul.f32 0.5, %v3575
    %v3577 = vsub.f32 1.5, %v3576
    %v3578 = vmul.f32 %v3573, %v3577
    %vm3579 = vweird.f32 %v3530
    %vm3580 = vweird.f32 %v3573
    %vm3581 = vmor %vm3579, %vm3580
    %v3582 = vsel %vm3581, %v3573, %v3578
    %v3583 = vrsqrt.pop %v3531
    %v3584 = vmul.f32 %v3583, %v3531
    %v3585 = vmul.f32 %v3584, %v3583
    %v3586 = vmul.f32 0.5, %v3585
    %v3587 = vsub.f32 1.5, %v3586
    %v3588 = vmul.f32 %v3583, %v3587
    %vm3589 = vweird.f32 %v3531
    %vm3590 = vweird.f32 %v3583
    %vm3591 = vmor %vm3589, %vm3590
    %v3592 = vsel %vm3591, %v3583, %v3588
    %v3593 = vrsqrt.pop %v3532
    %v3594 = vmul.f32 %v3593, %v3532
    %v3595 = vmul.f32 %v3594, %v3593
    %v3596 = vmul.f32 0.5, %v3595
    %v3597 = vsub.f32 1.5, %v3596
    %v3598 = vmul.f32 %v3593, %v3597
    %vm3599 = vweird.f32 %v3532
    %vm3600 = vweird.f32 %v3593
    %vm3601 = vmor %vm3599, %vm3600
    %v3602 = vsel %vm3601, %v3593, %v3598
    %v3603 = vrsqrt.pop %v3533
    %v3604 = vmul.f32 %v3603, %v3533
    %v3605 = vmul.f32 %v3604, %v3603
    %v3606 = vmul.f32 0.5, %v3605
    %v3607 = vsub.f32 1.5, %v3606
    %v3608 = vmul.f32 %v3603, %v3607
    %vm3609 = vweird.f32 %v3533
    %vm3610 = vweird.f32 %v3603
    %vm3611 = vmor %vm3609, %vm3610
    %v3612 = vsel %vm3611, %v3603, %v3608
    %v3613 = vrsqrt.pop %v3534
    %v3614 = vmul.f32 %v3613, %v3534
    %v3615 = vmul.f32 %v3614, %v3613
    %v3616 = vmul.f32 0.5, %v3615
    %v3617 = vsub.f32 1.5, %v3616
    %v3618 = vmul.f32 %v3613, %v3617
    %vm3619 = vweird.f32 %v3534
    %vm3620 = vweird.f32 %v3613
    %vm3621 = vmor %vm3619, %vm3620
    %v3622 = vsel %vm3621, %v3613, %v3618
    %v3623 = vrsqrt.pop %v3535
    %v3624 = vmul.f32 %v3623, %v3535
    %v3625 = vmul.f32 %v3624, %v3623
    %v3626 = vmul.f32 0.5, %v3625
    %v3627 = vsub.f32 1.5, %v3626
    %v3628 = vmul.f32 %v3623, %v3627
    %vm3629 = vweird.f32 %v3535
    %vm3630 = vweird.f32 %v3623
    %vm3631 = vmor %vm3629, %vm3630
    %v3632 = vsel %vm3631, %v3623, %v3628
    %v3633 = vrsqrt.pop %v3536
    %v3634 = vmul.f32 %v3633, %v3536
    %v3635 = vmul.f32 %v3634, %v3633
    %v3636 = vmul.f32 0.5, %v3635
    %v3637 = vsub.f32 1.5, %v3636
    %v3638 = vmul.f32 %v3633, %v3637
    %vm3639 = vweird.f32 %v3536
    %vm3640 = vweird.f32 %v3633
    %vm3641 = vmor %vm3639, %vm3640
    %v3642 = vsel %vm3641, %v3633, %v3638
    %v3643 = vrsqrt.pop %v3537
    %v3644 = vmul.f32 %v3643, %v3537
    %v3645 = vmul.f32 %v3644, %v3643
    %v3646 = vmul.f32 0.5, %v3645
    %v3647 = vsub.f32 1.5, %v3646
    %v3648 = vmul.f32 %v3643, %v3647
    %vm3649 = vweird.f32 %v3537
    %vm3650 = vweird.f32 %v3643
    %vm3651 = vmor %vm3649, %vm3650
    %v3652 = vsel %vm3651, %v3643, %v3648
    %v3653 = vrsqrt.pop %v3538
    %v3654 = vmul.f32 %v3653, %v3538
    %v3655 = vmul.f32 %v3654, %v3653
    %v3656 = vmul.f32 0.5, %v3655
    %v3657 = vsub.f32 1.5, %v3656
    %v3658 = vmul.f32 %v3653, %v3657
    %vm3659 = vweird.f32 %v3538
    %vm3660 = vweird.f32 %v3653
    %vm3661 = vmor %vm3659, %vm3660
    %v3662 = vsel %vm3661, %v3653, %v3658
    %v3663 = vrsqrt.pop %v3539
    %v3664 = vmul.f32 %v3663, %v3539
    %v3665 = vmul.f32 %v3664, %v3663
    %v3666 = vmul.f32 0.5, %v3665
    %v3667 = vsub.f32 1.5, %v3666
    %v3668 = vmul.f32 %v3663, %v3667
    %vm3669 = vweird.f32 %v3539
    %vm3670 = vweird.f32 %v3663
    %vm3671 = vmor %vm3669, %vm3670
    %v3672 = vsel %vm3671, %v3663, %v3668
    %v3673 = vrsqrt.pop %v3540
    %v3674 = vmul.f32 %v3673, %v3540
    %v3675 = vmul.f32 %v3674, %v3673
    %v3676 = vmul.f32 0.5, %v3675
    %v3677 = vsub.f32 1.5, %v3676
    %v3678 = vmul.f32 %v3673, %v3677
    %vm3679 = vweird.f32 %v3540
    %vm3680 = vweird.f32 %v3673
    %vm3681 = vmor %vm3679, %vm3680
    %v3682 = vsel %vm3681, %v3673, %v3678
    %v3683 = vrsqrt.pop %v3541
    %v3684 = vmul.f32 %v3683, %v3541
    %v3685 = vmul.f32 %v3684, %v3683
    %v3686 = vmul.f32 0.5, %v3685
    %v3687 = vsub.f32 1.5, %v3686
    %v3688 = vmul.f32 %v3683, %v3687
    %vm3689 = vweird.f32 %v3541
    %vm3690 = vweird.f32 %v3683
    %vm3691 = vmor %vm3689, %vm3690
    %v3692 = vsel %vm3691, %v3683, %v3688
    %v3693 = vrsqrt.pop %v3542
    %v3694 = vmul.f32 %v3693, %v3542
    %v3695 = vmul.f32 %v3694, %v3693
    %v3696 = vmul.f32 0.5, %v3695
    %v3697 = vsub.f32 1.5, %v3696
    %v3698 = vmul.f32 %v3693, %v3697
    %vm3699 = vweird.f32 %v3542
    %vm3700 = vweird.f32 %v3693
    %vm3701 = vmor %vm3699, %vm3700
    %v3702 = vsel %vm3701, %v3693, %v3698
    %v3703 = vmul.f32 %v3431, %v3552
    %v3704 = vmul.f32 %v3432, %v3562
    %v3705 = vmul.f32 %v3433, %v3572
    %v3706 = vmul.f32 %v3434, %v3582
    %v3707 = vmul.f32 %v3435, %v3592
    %v3708 = vmul.f32 %v3436, %v3602
    %v3709 = vmul.f32 %v3437, %v3612
    %v3710 = vmul.f32 %v3438, %v3622
    %v3711 = vmul.f32 %v3439, %v3632
    %v3712 = vmul.f32 %v3440, %v3642
    %v3713 = vmul.f32 %v3441, %v3652
    %v3714 = vmul.f32 %v3442, %v3662
    %v3715 = vmul.f32 %v3443, %v3672
    %v3716 = vmul.f32 %v3444, %v3682
    %v3717 = vmul.f32 %v3445, %v3692
    %v3718 = vmul.f32 %v3446, %v3702
    %v3719 = vld [vmem:[%s5] sm:$0xff]
    %v3720 = vld [vmem:[%s5 + $0x8] sm:$0xff]
    %v3721 = vld [vmem:[%s5 + $0x10] sm:$0xff]
    %v3722 = vld [vmem:[%s5 + $0x18] sm:$0xff]
    %v3723 = vld [vmem:[%s5 + $0x20] sm:$0xff]
    %v3724 = vld [vmem:[%s5 + $0x28] sm:$0xff]
    %v3725 = vld [vmem:[%s5 + $0x30] sm:$0xff]
    %v3726 = vld [vmem:[%s5 + $0x38] sm:$0xff]
    %v3727 = vld [vmem:[%s5 + $0x40] sm:$0xff]
    %v3728 = vld [vmem:[%s5 + $0x48] sm:$0xff]
    %v3729 = vld [vmem:[%s5 + $0x50] sm:$0xff]
    %v3730 = vld [vmem:[%s5 + $0x58] sm:$0xff]
    %v3731 = vld [vmem:[%s5 + $0x60] sm:$0xff]
    %v3732 = vld [vmem:[%s5 + $0x68] sm:$0xff]
    %v3733 = vld [vmem:[%s5 + $0x70] sm:$0xff]
    %v3734 = vld [vmem:[%s5 + $0x78] sm:$0xff]
    %3736 = vset.pattern.permute.xlu0 0
    %3737 = vperm.xlu0 %3736, %v3719
    %v3738 = vpop.permute.xlu0 %3737
    %3741 = vset.pattern.permute.xlu0 0
    %3742 = vperm.xlu0 %3741, %v3720
    %v3743 = vpop.permute.xlu0 %3742
    %3746 = vset.pattern.permute.xlu0 0
    %3747 = vperm.xlu0 %3746, %v3721
    %v3748 = vpop.permute.xlu0 %3747
    %3751 = vset.pattern.permute.xlu0 0
    %3752 = vperm.xlu0 %3751, %v3722
    %v3753 = vpop.permute.xlu0 %3752
    %3756 = vset.pattern.permute.xlu0 0
    %3757 = vperm.xlu0 %3756, %v3723
    %v3758 = vpop.permute.xlu0 %3757
    %3761 = vset.pattern.permute.xlu0 0
    %3762 = vperm.xlu0 %3761, %v3724
    %v3763 = vpop.permute.xlu0 %3762
    %3766 = vset.pattern.permute.xlu0 0
    %3767 = vperm.xlu0 %3766, %v3725
    %v3768 = vpop.permute.xlu0 %3767
    %3771 = vset.pattern.permute.xlu0 0
    %3772 = vperm.xlu0 %3771, %v3726
    %v3773 = vpop.permute.xlu0 %3772
    %3776 = vset.pattern.permute.xlu0 0
    %3777 = vperm.xlu0 %3776, %v3727
    %v3778 = vpop.permute.xlu0 %3777
    %3781 = vset.pattern.permute.xlu0 0
    %3782 = vperm.xlu0 %3781, %v3728
    %v3783 = vpop.permute.xlu0 %3782
    %3786 = vset.pattern.permute.xlu0 0
    %3787 = vperm.xlu0 %3786, %v3729
    %v3788 = vpop.permute.xlu0 %3787
    %3791 = vset.pattern.permute.xlu0 0
    %3792 = vperm.xlu0 %3791, %v3730
    %v3793 = vpop.permute.xlu0 %3792
    %3796 = vset.pattern.permute.xlu0 0
    %3797 = vperm.xlu0 %3796, %v3731
    %v3798 = vpop.permute.xlu0 %3797
    %3801 = vset.pattern.permute.xlu0 0
    %3802 = vperm.xlu0 %3801, %v3732
    %v3803 = vpop.permute.xlu0 %3802
    %3806 = vset.pattern.permute.xlu0 0
    %3807 = vperm.xlu0 %3806, %v3733
    %v3808 = vpop.permute.xlu0 %3807
    %3811 = vset.pattern.permute.xlu0 0
    %3812 = vperm.xlu0 %3811, %v3734
    %v3813 = vpop.permute.xlu0 %3812
    %v3815 = vmul.f32 %v3703, %v3738
    %v3816 = vmul.f32 %v3704, %v3743
    %v3817 = vmul.f32 %v3705, %v3748
    %v3818 = vmul.f32 %v3706, %v3753
    %v3819 = vmul.f32 %v3707, %v3758
    %v3820 = vmul.f32 %v3708, %v3763
    %v3821 = vmul.f32 %v3709, %v3768
    %v3822 = vmul.f32 %v3710, %v3773
    %v3823 = vmul.f32 %v3711, %v3778
    %v3824 = vmul.f32 %v3712, %v3783
    %v3825 = vmul.f32 %v3713, %v3788
    %v3826 = vmul.f32 %v3714, %v3793
    %v3827 = vmul.f32 %v3715, %v3798
    %v3828 = vmul.f32 %v3716, %v3803
    %v3829 = vmul.f32 %v3717, %v3808
    %v3830 = vmul.f32 %v3718, %v3813
    %v3831 = vld [vmem:[%s6] sm:$0xff]
    %v3832 = vld [vmem:[%s6 + $0x8] sm:$0xff]
    %v3833 = vld [vmem:[%s6 + $0x10] sm:$0xff]
    %v3834 = vld [vmem:[%s6 + $0x18] sm:$0xff]
    %v3835 = vld [vmem:[%s6 + $0x20] sm:$0xff]
    %v3836 = vld [vmem:[%s6 + $0x28] sm:$0xff]
    %v3837 = vld [vmem:[%s6 + $0x30] sm:$0xff]
    %v3838 = vld [vmem:[%s6 + $0x38] sm:$0xff]
    %v3839 = vld [vmem:[%s6 + $0x40] sm:$0xff]
    %v3840 = vld [vmem:[%s6 + $0x48] sm:$0xff]
    %v3841 = vld [vmem:[%s6 + $0x50] sm:$0xff]
    %v3842 = vld [vmem:[%s6 + $0x58] sm:$0xff]
    %v3843 = vld [vmem:[%s6 + $0x60] sm:$0xff]
    %v3844 = vld [vmem:[%s6 + $0x68] sm:$0xff]
    %v3845 = vld [vmem:[%s6 + $0x70] sm:$0xff]
    %v3846 = vld [vmem:[%s6 + $0x78] sm:$0xff]
    %3848 = vset.pattern.permute.xlu0 0
    %3849 = vperm.xlu0 %3848, %v3831
    %v3850 = vpop.permute.xlu0 %3849
    %3853 = vset.pattern.permute.xlu0 0
    %3854 = vperm.xlu0 %3853, %v3832
    %v3855 = vpop.permute.xlu0 %3854
    %3858 = vset.pattern.permute.xlu0 0
    %3859 = vperm.xlu0 %3858, %v3833
    %v3860 = vpop.permute.xlu0 %3859
    %3863 = vset.pattern.permute.xlu0 0
    %3864 = vperm.xlu0 %3863, %v3834
    %v3865 = vpop.permute.xlu0 %3864
    %3868 = vset.pattern.permute.xlu0 0
    %3869 = vperm.xlu0 %3868, %v3835
    %v3870 = vpop.permute.xlu0 %3869
    %3873 = vset.pattern.permute.xlu0 0
    %3874 = vperm.xlu0 %3873, %v3836
    %v3875 = vpop.permute.xlu0 %3874
    %3878 = vset.pattern.permute.xlu0 0
    %3879 = vperm.xlu0 %3878, %v3837
    %v3880 = vpop.permute.xlu0 %3879
    %3883 = vset.pattern.permute.xlu0 0
    %3884 = vperm.xlu0 %3883, %v3838
    %v3885 = vpop.permute.xlu0 %3884
    %3888 = vset.pattern.permute.xlu0 0
    %3889 = vperm.xlu0 %3888, %v3839
    %v3890 = vpop.permute.xlu0 %3889
    %3893 = vset.pattern.permute.xlu0 0
    %3894 = vperm.xlu0 %3893, %v3840
    %v3895 = vpop.permute.xlu0 %3894
    %3898 = vset.pattern.permute.xlu0 0
    %3899 = vperm.xlu0 %3898, %v3841
    %v3900 = vpop.permute.xlu0 %3899
    %3903 = vset.pattern.permute.xlu0 0
    %3904 = vperm.xlu0 %3903, %v3842
    %v3905 = vpop.permute.xlu0 %3904
    %3908 = vset.pattern.permute.xlu0 0
    %3909 = vperm.xlu0 %3908, %v3843
    %v3910 = vpop.permute.xlu0 %3909
    %3913 = vset.pattern.permute.xlu0 0
    %3914 = vperm.xlu0 %3913, %v3844
    %v3915 = vpop.permute.xlu0 %3914
    %3918 = vset.pattern.permute.xlu0 0
    %3919 = vperm.xlu0 %3918, %v3845
    %v3920 = vpop.permute.xlu0 %3919
    %3923 = vset.pattern.permute.xlu0 0
    %3924 = vperm.xlu0 %3923, %v3846
    %v3925 = vpop.permute.xlu0 %3924
    %v3927 = vadd.f32 %v3815, %v3850
    %v3928 = vadd.f32 %v3816, %v3855
    %v3929 = vadd.f32 %v3817, %v3860
    %v3930 = vadd.f32 %v3818, %v3865
    %v3931 = vadd.f32 %v3819, %v3870
    %v3932 = vadd.f32 %v3820, %v3875
    %v3933 = vadd.f32 %v3821, %v3880
    %v3934 = vadd.f32 %v3822, %v3885
    %v3935 = vadd.f32 %v3823, %v3890
    %v3936 = vadd.f32 %v3824, %v3895
    %v3937 = vadd.f32 %v3825, %v3900
    %v3938 = vadd.f32 %v3826, %v3905
    %v3939 = vadd.f32 %v3827, %v3910
    %v3940 = vadd.f32 %v3828, %v3915
    %v3941 = vadd.f32 %v3829, %v3920
    %v3942 = vadd.f32 %v3830, %v3925
    %vm3943 = vcmp.gt.f32.partialorder %v3927, 0.0
    %vm3944 = vcmp.gt.f32.partialorder %v3928, 0.0
    %vm3945 = vcmp.gt.f32.partialorder %v3929, 0.0
    %vm3946 = vcmp.gt.f32.partialorder %v3930, 0.0
    %vm3947 = vcmp.gt.f32.partialorder %v3931, 0.0
    %vm3948 = vcmp.gt.f32.partialorder %v3932, 0.0
    %vm3949 = vcmp.gt.f32.partialorder %v3933, 0.0
    %vm3950 = vcmp.gt.f32.partialorder %v3934, 0.0
    %vm3951 = vcmp.gt.f32.partialorder %v3935, 0.0
    %vm3952 = vcmp.gt.f32.partialorder %v3936, 0.0
    %vm3953 = vcmp.gt.f32.partialorder %v3937, 0.0
    %vm3954 = vcmp.gt.f32.partialorder %v3938, 0.0
    %vm3955 = vcmp.gt.f32.partialorder %v3939, 0.0
    %vm3956 = vcmp.gt.f32.partialorder %v3940, 0.0
    %vm3957 = vcmp.gt.f32.partialorder %v3941, 0.0
    %vm3958 = vcmp.gt.f32.partialorder %v3942, 0.0
    %v3959 = vstv %s3365
    %v3960 = vmul.f32 %v3959, %v3927
    %v3961 = vmul.f32 %v3959, %v3928
    %v3962 = vmul.f32 %v3959, %v3929
    %v3963 = vmul.f32 %v3959, %v3930
    %v3964 = vmul.f32 %v3959, %v3931
    %v3965 = vmul.f32 %v3959, %v3932
    %v3966 = vmul.f32 %v3959, %v3933
    %v3967 = vmul.f32 %v3959, %v3934
    %v3968 = vmul.f32 %v3959, %v3935
    %v3969 = vmul.f32 %v3959, %v3936
    %v3970 = vmul.f32 %v3959, %v3937
    %v3971 = vmul.f32 %v3959, %v3938
    %v3972 = vmul.f32 %v3959, %v3939
    %v3973 = vmul.f32 %v3959, %v3940
    %v3974 = vmul.f32 %v3959, %v3941
    %v3975 = vmul.f32 %v3959, %v3942
    %v3976 = vsel %vm3943, %v3927, %v3960
    %v3977 = vsel %vm3944, %v3928, %v3961
    %v3978 = vsel %vm3945, %v3929, %v3962
    %v3979 = vsel %vm3946, %v3930, %v3963
    %v3980 = vsel %vm3947, %v3931, %v3964
    %v3981 = vsel %vm3948, %v3932, %v3965
    %v3982 = vsel %vm3949, %v3933, %v3966
    %v3983 = vsel %vm3950, %v3934, %v3967
    %v3984 = vsel %vm3951, %v3935, %v3968
    %v3985 = vsel %vm3952, %v3936, %v3969
    %v3986 = vsel %vm3953, %v3937, %v3970
    %v3987 = vsel %vm3954, %v3938, %v3971
    %v3988 = vsel %vm3955, %v3939, %v3972
    %v3989 = vsel %vm3956, %v3940, %v3973
    %v3990 = vsel %vm3957, %v3941, %v3974
    %v3991 = vsel %vm3958, %v3942, %v3975
    %v3992 = vld [vmem:[%s8] sm:$0xf]
    %v3993 = vld [vmem:[%s8 + $0x4] sm:$0xf]
    %v3994 = vld [vmem:[%s8 + $0x8] sm:$0xf]
    %v3995 = vld [vmem:[%s8 + $0xc] sm:$0xf]
    %v3996 = vld [vmem:[%s8 + $0x10] sm:$0xf]
    %v3997 = vld [vmem:[%s8 + $0x14] sm:$0xf]
    %v3998 = vld [vmem:[%s8 + $0x18] sm:$0xf]
    %v3999 = vld [vmem:[%s8 + $0x1c] sm:$0xf]
    %v4000 = vld [vmem:[%s8 + $0x20] sm:$0xf]
    %v4001 = vld [vmem:[%s8 + $0x24] sm:$0xf]
    %v4002 = vld [vmem:[%s8 + $0x28] sm:$0x1]
    %v4003 = vunpack.c.l.bf16 %v3992
    %v4004 = vunpack.c.l.bf16 %v3993
    %v4005 = vunpack.c.l.bf16 %v3994
    %v4006 = vunpack.c.l.bf16 %v3995
    %v4007 = vunpack.c.l.bf16 %v3996
    %v4008 = vunpack.c.l.bf16 %v3997
    %v4009 = vunpack.c.l.bf16 %v3998
    %v4010 = vunpack.c.l.bf16 %v3999
    %v4011 = vunpack.c.l.bf16 %v4000
    %v4012 = vunpack.c.l.bf16 %v4001
    %v4013 = vunpack.c.l.bf16 %v4002
    %v4014 = vld [vmem:[#allocation8] sm:$0xf]
    %v4015 = vld [vmem:[#allocation8 + $0x4] sm:$0xf]
    %v4016 = vld [vmem:[#allocation8 + $0x8] sm:$0xf]
    %v4017 = vld [vmem:[#allocation8 + $0xc] sm:$0xf]
    %v4018 = vld [vmem:[#allocation8 + $0x10] sm:$0xf]
    %v4019 = vld [vmem:[#allocation8 + $0x14] sm:$0xf]
    %v4020 = vld [vmem:[#allocation8 + $0x18] sm:$0xf]
    %v4021 = vld [vmem:[#allocation8 + $0x1c] sm:$0xf]
    %v4022 = vld [vmem:[#allocation8 + $0x20] sm:$0xf]
    %v4023 = vld [vmem:[#allocation8 + $0x24] sm:$0xf]
    %v4024 = vld [vmem:[#allocation8 + $0x28] sm:$0xf]
    %v4025 = vld [vmem:[#allocation8 + $0x2c] sm:$0xf]
    %v4026 = vld [vmem:[#allocation8 + $0x30] sm:$0xf]
    %v4027 = vld [vmem:[#allocation8 + $0x34] sm:$0xf]
    %v4028 = vld [vmem:[#allocation8 + $0x38] sm:$0xf]
    %v4029 = vld [vmem:[#allocation8 + $0x3c] sm:$0xf]
    %v4030 = vld [vmem:[#allocation8 + $0x40] sm:$0xf]
    %v4031 = vld [vmem:[#allocation8 + $0x44] sm:$0xf]
    %v4032 = vld [vmem:[#allocation8 + $0x48] sm:$0xf]
    %v4033 = vld [vmem:[#allocation8 + $0x4c] sm:$0xf]
    %v4034 = vld [vmem:[#allocation8 + $0x50] sm:$0xf]
    %v4035 = vld [vmem:[#allocation8 + $0x54] sm:$0xf]
    %v4036 = vld [vmem:[#allocation8 + $0x58] sm:$0xf]
    %v4037 = vld [vmem:[#allocation8 + $0x5c] sm:$0xf]
    %v4038 = vld [vmem:[#allocation8 + $0x60] sm:$0xf]
    %v4039 = vld [vmem:[#allocation8 + $0x64] sm:$0xf]
    %v4040 = vld [vmem:[#allocation8 + $0x68] sm:$0xf]
    %v4041 = vld [vmem:[#allocation8 + $0x6c] sm:$0xf]
    %v4042 = vld [vmem:[#allocation8 + $0x70] sm:$0xf]
    %v4043 = vld [vmem:[#allocation8 + $0x74] sm:$0xf]
    %v4044 = vld [vmem:[#allocation8 + $0x78] sm:$0xf]
    %v4045 = vld [vmem:[#allocation8 + $0x7c] sm:$0xf]
    %v4046 = vld [vmem:[#allocation8 + $0x80] sm:$0xf]
    %v4047 = vld [vmem:[#allocation8 + $0x84] sm:$0xf]
    %v4048 = vld [vmem:[#allocation8 + $0x88] sm:$0xf]
    %v4049 = vld [vmem:[#allocation8 + $0x8c] sm:$0xf]
    %v4050 = vld [vmem:[#allocation8 + $0x90] sm:$0xf]
    %v4051 = vld [vmem:[#allocation8 + $0x94] sm:$0xf]
    %v4052 = vld [vmem:[#allocation8 + $0x98] sm:$0xf]
    %v4053 = vld [vmem:[#allocation8 + $0x9c] sm:$0xf]
    %v4054 = vld [vmem:[#allocation8 + $0xa0] sm:$0xf]
    %v4055 = vld [vmem:[#allocation8 + $0xa4] sm:$0xf]
    %v4056 = vld [vmem:[#allocation8 + $0xa8] sm:$0xf]
    %v4057 = vld [vmem:[#allocation8 + $0xac] sm:$0xf]
    %v4058 = vld [vmem:[#allocation8 + $0xb0] sm:$0xf]
    %v4059 = vld [vmem:[#allocation8 + $0xb4] sm:$0xf]
    %v4060 = vld [vmem:[#allocation8 + $0xb8] sm:$0xf]
    %v4061 = vld [vmem:[#allocation8 + $0xbc] sm:$0xf]
    %v4062 = vld [vmem:[#allocation8 + $0xc0] sm:$0xf]
    %v4063 = vld [vmem:[#allocation8 + $0xc4] sm:$0xf]
    %v4064 = vld [vmem:[#allocation8 + $0xc8] sm:$0xf]
    %v4065 = vld [vmem:[#allocation8 + $0xcc] sm:$0xf]
    %v4066 = vld [vmem:[#allocation8 + $0xd0] sm:$0xf]
    %v4067 = vld [vmem:[#allocation8 + $0xd4] sm:$0xf]
    %v4068 = vld [vmem:[#allocation8 + $0xd8] sm:$0xf]
    %v4069 = vld [vmem:[#allocation8 + $0xdc] sm:$0xf]
    %v4070 = vld [vmem:[#allocation8 + $0xe0] sm:$0xf]
    %v4071 = vld [vmem:[#allocation8 + $0xe4] sm:$0xf]
    %v4072 = vld [vmem:[#allocation8 + $0xe8] sm:$0xf]
    %v4073 = vld [vmem:[#allocation8 + $0xec] sm:$0xf]
    %v4074 = vld [vmem:[#allocation8 + $0xf0] sm:$0xf]
    %v4075 = vld [vmem:[#allocation8 + $0xf4] sm:$0xf]
    %v4076 = vld [vmem:[#allocation8 + $0xf8] sm:$0xf]
    %v4077 = vld [vmem:[#allocation8 + $0xfc] sm:$0xf]
    %v4078 = vld [vmem:[#allocation8 + $0x100] sm:$0xf]
    %v4079 = vld [vmem:[#allocation8 + $0x104] sm:$0xf]
    %v4080 = vld [vmem:[#allocation8 + $0x108] sm:$0xf]
    %v4081 = vld [vmem:[#allocation8 + $0x10c] sm:$0xf]
    %v4082 = vld [vmem:[#allocation8 + $0x110] sm:$0xf]
    %v4083 = vld [vmem:[#allocation8 + $0x114] sm:$0xf]
    %v4084 = vld [vmem:[#allocation8 + $0x118] sm:$0xf]
    %v4085 = vld [vmem:[#allocation8 + $0x11c] sm:$0xf]
    %v4086 = vunpack.c.l.bf16 %v4014
    %v4087 = vunpack.c.l.bf16 %v4015
    %v4088 = vunpack.c.l.bf16 %v4016
    %v4089 = vunpack.c.l.bf16 %v4017
    %v4090 = vunpack.c.l.bf16 %v4018
    %v4091 = vunpack.c.l.bf16 %v4019
    %v4092 = vunpack.c.l.bf16 %v4020
    %v4093 = vunpack.c.l.bf16 %v4021
    %v4094 = vunpack.c.l.bf16 %v4022
    %v4095 = vunpack.c.l.bf16 %v4023
    %v4096 = vunpack.c.l.bf16 %v4024
    %v4097 = vunpack.c.l.bf16 %v4025
    %v4098 = vunpack.c.l.bf16 %v4026
    %v4099 = vunpack.c.l.bf16 %v4027
    %v4100 = vunpack.c.l.bf16 %v4028
    %v4101 = vunpack.c.l.bf16 %v4029
    %v4102 = vunpack.c.l.bf16 %v4030
    %v4103 = vunpack.c.l.bf16 %v4031
    %v4104 = vunpack.c.l.bf16 %v4032
    %v4105 = vunpack.c.l.bf16 %v4033
    %v4106 = vunpack.c.l.bf16 %v4034
    %v4107 = vunpack.c.l.bf16 %v4035
    %v4108 = vunpack.c.l.bf16 %v4036
    %v4109 = vunpack.c.l.bf16 %v4037
    %v4110 = vunpack.c.l.bf16 %v4038
    %v4111 = vunpack.c.l.bf16 %v4039
    %v4112 = vunpack.c.l.bf16 %v4040
    %v4113 = vunpack.c.l.bf16 %v4041
    %v4114 = vunpack.c.l.bf16 %v4042
    %v4115 = vunpack.c.l.bf16 %v4043
    %v4116 = vunpack.c.l.bf16 %v4044
    %v4117 = vunpack.c.l.bf16 %v4045
    %v4118 = vunpack.c.l.bf16 %v4046
    %v4119 = vunpack.c.l.bf16 %v4047
    %v4120 = vunpack.c.l.bf16 %v4048
    %v4121 = vunpack.c.l.bf16 %v4049
    %v4122 = vunpack.c.l.bf16 %v4050
    %v4123 = vunpack.c.l.bf16 %v4051
    %v4124 = vunpack.c.l.bf16 %v4052
    %v4125 = vunpack.c.l.bf16 %v4053
    %v4126 = vunpack.c.l.bf16 %v4054
    %v4127 = vunpack.c.l.bf16 %v4055
    %v4128 = vunpack.c.l.bf16 %v4056
    %v4129 = vunpack.c.l.bf16 %v4057
    %v4130 = vunpack.c.l.bf16 %v4058
    %v4131 = vunpack.c.l.bf16 %v4059
    %v4132 = vunpack.c.l.bf16 %v4060
    %v4133 = vunpack.c.l.bf16 %v4061
    %v4134 = vunpack.c.l.bf16 %v4062
    %v4135 = vunpack.c.l.bf16 %v4063
    %v4136 = vunpack.c.l.bf16 %v4064
    %v4137 = vunpack.c.l.bf16 %v4065
    %v4138 = vunpack.c.l.bf16 %v4066
    %v4139 = vunpack.c.l.bf16 %v4067
    %v4140 = vunpack.c.l.bf16 %v4068
    %v4141 = vunpack.c.l.bf16 %v4069
    %v4142 = vunpack.c.l.bf16 %v4070
    %v4143 = vunpack.c.l.bf16 %v4071
    %v4144 = vunpack.c.l.bf16 %v4072
    %v4145 = vunpack.c.l.bf16 %v4073
    %v4146 = vunpack.c.l.bf16 %v4074
    %v4147 = vunpack.c.l.bf16 %v4075
    %v4148 = vunpack.c.l.bf16 %v4076
    %v4149 = vunpack.c.l.bf16 %v4077
    %v4150 = vunpack.c.l.bf16 %v4078
    %v4151 = vunpack.c.l.bf16 %v4079
    %v4152 = vunpack.c.l.bf16 %v4080
    %v4153 = vunpack.c.l.bf16 %v4081
    %v4154 = vunpack.c.l.bf16 %v4082
    %v4155 = vunpack.c.l.bf16 %v4083
    %v4156 = vunpack.c.l.bf16 %v4084
    %v4157 = vunpack.c.l.bf16 %v4085
    %4158 = vmatpush.msra.mxu0 %v3991
    %4159 = vmatpush.msra.mxu0 %v3990
    %4160 = vmatpush.msra.mxu0 %v3989
    %4161 = vmatpush.msra.mxu0 %v3988
    %4162 = vmatpush.msra.mxu0 %v3987
    %4163 = vmatpush.msra.mxu0 %v3986
    %4164 = vmatpush.msra.mxu0 %v3985
    %4165 = vmatpush.msra.mxu0 %v3984
    %4166 = vmatpush.msra.mxu0 %v3983
    %4167 = vmatpush.msra.mxu0 %v3982
    %4168 = vmatpush.msra.mxu0 %v3981
    %4169 = vmatpush.msra.mxu0 %v3980
    %4170 = vmatpush.msra.mxu0 %v3979
    %4171 = vmatpush.msra.mxu0 %v3978
    %4172 = vmatpush.msra.mxu0 %v3977
    %4173 = vmatpush.msra.mxu0 %v3976
    %4174 = vmatmul.f32.gmra.mxu0 %v4086
    %v4175 = vpop.f32.mrf.mxu0
    %v4176 = vadd.f32 0.0, %v4175
    %4177 = vmatmul.f32.gmra.mxu0 %v4087
    %v4178 = vpop.f32.mrf.mxu0
    %v4179 = vadd.f32 0.0, %v4178
    %4180 = vmatmul.f32.gmra.mxu0 %v4088
    %v4181 = vpop.f32.mrf.mxu0
    %v4182 = vadd.f32 0.0, %v4181
    %4183 = vmatmul.f32.gmra.mxu0 %v4089
    %v4184 = vpop.f32.mrf.mxu0
    %v4185 = vadd.f32 0.0, %v4184
    %4186 = vmatmul.f32.gmra.mxu0 %v4090
    %v4187 = vpop.f32.mrf.mxu0
    %v4188 = vadd.f32 0.0, %v4187
    %4189 = vmatmul.f32.gmra.mxu0 %v4091
    %v4190 = vpop.f32.mrf.mxu0
    %v4191 = vadd.f32 0.0, %v4190
    %4192 = vmatmul.f32.gmra.mxu0 %v4092
    %v4193 = vpop.f32.mrf.mxu0
    %v4194 = vadd.f32 0.0, %v4193
    %4195 = vmatmul.f32.gmra.mxu0 %v4093
    %v4196 = vpop.f32.mrf.mxu0
    %v4197 = vadd.f32 0.0, %v4196
    %4198 = vmatmul.f32.gmra.mxu0 %v4094
    %v4199 = vpop.f32.mrf.mxu0
    %v4200 = vadd.f32 0.0, %v4199
    %4201 = vmatmul.f32.gmra.mxu0 %v4095
    %v4202 = vpop.f32.mrf.mxu0
    %v4203 = vadd.f32 0.0, %v4202
    %4204 = vmatmul.f32.gmra.mxu0 %v4096
    %v4205 = vpop.f32.mrf.mxu0
    %v4206 = vadd.f32 0.0, %v4205
    %4207 = vmatmul.f32.gmra.mxu0 %v4097
    %v4208 = vpop.f32.mrf.mxu0
    %v4209 = vadd.f32 0.0, %v4208
    %4210 = vmatmul.f32.gmra.mxu0 %v4098
    %v4211 = vpop.f32.mrf.mxu0
    %v4212 = vadd.f32 0.0, %v4211
    %4213 = vmatmul.f32.gmra.mxu0 %v4099
    %v4214 = vpop.f32.mrf.mxu0
    %v4215 = vadd.f32 0.0, %v4214
    %4216 = vmatmul.f32.gmra.mxu0 %v4100
    %v4217 = vpop.f32.mrf.mxu0
    %v4218 = vadd.f32 0.0, %v4217
    %4219 = vmatmul.f32.gmra.mxu0 %v4101
    %v4220 = vpop.f32.mrf.mxu0
    %v4221 = vadd.f32 0.0, %v4220
    %4222 = vmatmul.f32.gmra.mxu0 %v4102
    %v4223 = vpop.f32.mrf.mxu0
    %v4224 = vadd.f32 0.0, %v4223
    %4225 = vmatmul.f32.gmra.mxu0 %v4103
    %v4226 = vpop.f32.mrf.mxu0
    %v4227 = vadd.f32 0.0, %v4226
    %4228 = vmatmul.f32.gmra.mxu0 %v4104
    %v4229 = vpop.f32.mrf.mxu0
    %v4230 = vadd.f32 0.0, %v4229
    %4231 = vmatmul.f32.gmra.mxu0 %v4105
    %v4232 = vpop.f32.mrf.mxu0
    %v4233 = vadd.f32 0.0, %v4232
    %4234 = vmatmul.f32.gmra.mxu0 %v4106
    %v4235 = vpop.f32.mrf.mxu0
    %v4236 = vadd.f32 0.0, %v4235
    %4237 = vmatmul.f32.gmra.mxu0 %v4107
    %v4238 = vpop.f32.mrf.mxu0
    %v4239 = vadd.f32 0.0, %v4238
    %4240 = vmatmul.f32.gmra.mxu0 %v4108
    %v4241 = vpop.f32.mrf.mxu0
    %v4242 = vadd.f32 0.0, %v4241
    %4243 = vmatmul.f32.gmra.mxu0 %v4109
    %v4244 = vpop.f32.mrf.mxu0
    %v4245 = vadd.f32 0.0, %v4244
    %4246 = vmatmul.f32.gmra.mxu0 %v4110
    %v4247 = vpop.f32.mrf.mxu0
    %v4248 = vadd.f32 0.0, %v4247
    %4249 = vmatmul.f32.gmra.mxu0 %v4111
    %v4250 = vpop.f32.mrf.mxu0
    %v4251 = vadd.f32 0.0, %v4250
    %4252 = vmatmul.f32.gmra.mxu0 %v4112
    %v4253 = vpop.f32.mrf.mxu0
    %v4254 = vadd.f32 0.0, %v4253
    %4255 = vmatmul.f32.gmra.mxu0 %v4113
    %v4256 = vpop.f32.mrf.mxu0
    %v4257 = vadd.f32 0.0, %v4256
    %4258 = vmatmul.f32.gmra.mxu0 %v4114
    %v4259 = vpop.f32.mrf.mxu0
    %v4260 = vadd.f32 0.0, %v4259
    %4261 = vmatmul.f32.gmra.mxu0 %v4115
    %v4262 = vpop.f32.mrf.mxu0
    %v4263 = vadd.f32 0.0, %v4262
    %4264 = vmatmul.f32.gmra.mxu0 %v4116
    %v4265 = vpop.f32.mrf.mxu0
    %v4266 = vadd.f32 0.0, %v4265
    %4267 = vmatmul.f32.gmra.mxu0 %v4117
    %v4268 = vpop.f32.mrf.mxu0
    %v4269 = vadd.f32 0.0, %v4268
    %4270 = vmatmul.f32.gmra.mxu0 %v4118
    %v4271 = vpop.f32.mrf.mxu0
    %v4272 = vadd.f32 0.0, %v4271
    %4273 = vmatmul.f32.gmra.mxu0 %v4119
    %v4274 = vpop.f32.mrf.mxu0
    %v4275 = vadd.f32 0.0, %v4274
    %4276 = vmatmul.f32.gmra.mxu0 %v4120
    %v4277 = vpop.f32.mrf.mxu0
    %v4278 = vadd.f32 0.0, %v4277
    %4279 = vmatmul.f32.gmra.mxu0 %v4121
    %v4280 = vpop.f32.mrf.mxu0
    %v4281 = vadd.f32 0.0, %v4280
    %4282 = vmatmul.f32.gmra.mxu0 %v4122
    %v4283 = vpop.f32.mrf.mxu0
    %v4284 = vadd.f32 0.0, %v4283
    %4285 = vmatmul.f32.gmra.mxu0 %v4123
    %v4286 = vpop.f32.mrf.mxu0
    %v4287 = vadd.f32 0.0, %v4286
    %4288 = vmatmul.f32.gmra.mxu0 %v4124
    %v4289 = vpop.f32.mrf.mxu0
    %v4290 = vadd.f32 0.0, %v4289
    %4291 = vmatmul.f32.gmra.mxu0 %v4125
    %v4292 = vpop.f32.mrf.mxu0
    %v4293 = vadd.f32 0.0, %v4292
    %4294 = vmatmul.f32.gmra.mxu0 %v4126
    %v4295 = vpop.f32.mrf.mxu0
    %v4296 = vadd.f32 0.0, %v4295
    %4297 = vmatmul.f32.gmra.mxu0 %v4127
    %v4298 = vpop.f32.mrf.mxu0
    %v4299 = vadd.f32 0.0, %v4298
    %4300 = vmatmul.f32.gmra.mxu0 %v4128
    %v4301 = vpop.f32.mrf.mxu0
    %v4302 = vadd.f32 0.0, %v4301
    %4303 = vmatmul.f32.gmra.mxu0 %v4129
    %v4304 = vpop.f32.mrf.mxu0
    %v4305 = vadd.f32 0.0, %v4304
    %4306 = vmatmul.f32.gmra.mxu0 %v4130
    %v4307 = vpop.f32.mrf.mxu0
    %v4308 = vadd.f32 0.0, %v4307
    %4309 = vmatmul.f32.gmra.mxu0 %v4131
    %v4310 = vpop.f32.mrf.mxu0
    %v4311 = vadd.f32 0.0, %v4310
    %4312 = vmatmul.f32.gmra.mxu0 %v4132
    %v4313 = vpop.f32.mrf.mxu0
    %v4314 = vadd.f32 0.0, %v4313
    %4315 = vmatmul.f32.gmra.mxu0 %v4133
    %v4316 = vpop.f32.mrf.mxu0
    %v4317 = vadd.f32 0.0, %v4316
    %4318 = vmatmul.f32.gmra.mxu0 %v4134
    %v4319 = vpop.f32.mrf.mxu0
    %v4320 = vadd.f32 0.0, %v4319
    %4321 = vmatmul.f32.gmra.mxu0 %v4135
    %v4322 = vpop.f32.mrf.mxu0
    %v4323 = vadd.f32 0.0, %v4322
    %4324 = vmatmul.f32.gmra.mxu0 %v4136
    %v4325 = vpop.f32.mrf.mxu0
    %v4326 = vadd.f32 0.0, %v4325
    %4327 = vmatmul.f32.gmra.mxu0 %v4137
    %v4328 = vpop.f32.mrf.mxu0
    %v4329 = vadd.f32 0.0, %v4328
    %4330 = vmatmul.f32.gmra.mxu0 %v4138
    %v4331 = vpop.f32.mrf.mxu0
    %v4332 = vadd.f32 0.0, %v4331
    %4333 = vmatmul.f32.gmra.mxu0 %v4139
    %v4334 = vpop.f32.mrf.mxu0
    %v4335 = vadd.f32 0.0, %v4334
    %4336 = vmatmul.f32.gmra.mxu0 %v4140
    %v4337 = vpop.f32.mrf.mxu0
    %v4338 = vadd.f32 0.0, %v4337
    %4339 = vmatmul.f32.gmra.mxu0 %v4141
    %v4340 = vpop.f32.mrf.mxu0
    %v4341 = vadd.f32 0.0, %v4340
    %4342 = vmatmul.f32.gmra.mxu0 %v4142
    %v4343 = vpop.f32.mrf.mxu0
    %v4344 = vadd.f32 0.0, %v4343
    %4345 = vmatmul.f32.gmra.mxu0 %v4143
    %v4346 = vpop.f32.mrf.mxu0
    %v4347 = vadd.f32 0.0, %v4346
    %4348 = vmatmul.f32.gmra.mxu0 %v4144
    %v4349 = vpop.f32.mrf.mxu0
    %v4350 = vadd.f32 0.0, %v4349
    %4351 = vmatmul.f32.gmra.mxu0 %v4145
    %v4352 = vpop.f32.mrf.mxu0
    %v4353 = vadd.f32 0.0, %v4352
    %4354 = vmatmul.f32.gmra.mxu0 %v4146
    %v4355 = vpop.f32.mrf.mxu0
    %v4356 = vadd.f32 0.0, %v4355
    %4357 = vmatmul.f32.gmra.mxu0 %v4147
    %v4358 = vpop.f32.mrf.mxu0
    %v4359 = vadd.f32 0.0, %v4358
    %4360 = vmatmul.f32.gmra.mxu0 %v4148
    %v4361 = vpop.f32.mrf.mxu0
    %v4362 = vadd.f32 0.0, %v4361
    %4363 = vmatmul.f32.gmra.mxu0 %v4149
    %v4364 = vpop.f32.mrf.mxu0
    %v4365 = vadd.f32 0.0, %v4364
    %4366 = vmatmul.f32.gmra.mxu0 %v4150
    %v4367 = vpop.f32.mrf.mxu0
    %v4368 = vadd.f32 0.0, %v4367
    %4369 = vmatmul.f32.gmra.mxu0 %v4151
    %v4370 = vpop.f32.mrf.mxu0
    %v4371 = vadd.f32 0.0, %v4370
    %4372 = vmatmul.f32.gmra.mxu0 %v4152
    %v4373 = vpop.f32.mrf.mxu0
    %v4374 = vadd.f32 0.0, %v4373
    %4375 = vmatmul.f32.gmra.mxu0 %v4153
    %v4376 = vpop.f32.mrf.mxu0
    %v4377 = vadd.f32 0.0, %v4376
    %4378 = vmatmul.f32.gmra.mxu0 %v4154
    %v4379 = vpop.f32.mrf.mxu0
    %v4380 = vadd.f32 0.0, %v4379
    %4381 = vmatmul.f32.gmra.mxu0 %v4155
    %v4382 = vpop.f32.mrf.mxu0
    %v4383 = vadd.f32 0.0, %v4382
    %4384 = vmatmul.f32.gmra.mxu0 %v4156
    %v4385 = vpop.f32.mrf.mxu0
    %v4386 = vadd.f32 0.0, %v4385
    %4387 = vmatmul.f32.gmra.mxu0 %v4157
    %v4388 = vpop.f32.mrf.mxu0
    %v4389 = vadd.f32 0.0, %v4388
    %4390 = vdwg.mxu0
    %4399 = vrot.lane.b32.xlu0 %v4200, 9
    %v4400 = vpop.permute.xlu0 %4399
    %4401 = vrot.lane.b32.xlu0 %v4203, 9
    %v4402 = vpop.permute.xlu0 %4401
    %4403 = vrot.lane.b32.xlu0 %v4206, 9
    %v4404 = vpop.permute.xlu0 %4403
    %4405 = vrot.lane.b32.xlu0 %v4209, 9
    %v4406 = vpop.permute.xlu0 %4405
    %4407 = vrot.lane.b32.xlu0 %v4212, 9
    %v4408 = vpop.permute.xlu0 %4407
    %4409 = vrot.lane.b32.xlu0 %v4215, 9
    %v4410 = vpop.permute.xlu0 %4409
    %4411 = vrot.lane.b32.xlu0 %v4218, 9
    %v4412 = vpop.permute.xlu0 %4411
    %4413 = vrot.lane.b32.xlu0 %v4221, 9
    %v4414 = vpop.permute.xlu0 %4413
    %4431 = vrot.lane.b32.xlu0 %v4224, 18
    %v4432 = vpop.permute.xlu0 %4431
    %4433 = vrot.lane.b32.xlu0 %v4227, 18
    %v4434 = vpop.permute.xlu0 %4433
    %4435 = vrot.lane.b32.xlu0 %v4230, 18
    %v4436 = vpop.permute.xlu0 %4435
    %4437 = vrot.lane.b32.xlu0 %v4233, 18
    %v4438 = vpop.permute.xlu0 %4437
    %4439 = vrot.lane.b32.xlu0 %v4236, 18
    %v4440 = vpop.permute.xlu0 %4439
    %4441 = vrot.lane.b32.xlu0 %v4239, 18
    %v4442 = vpop.permute.xlu0 %4441
    %4443 = vrot.lane.b32.xlu0 %v4242, 18
    %v4444 = vpop.permute.xlu0 %4443
    %4445 = vrot.lane.b32.xlu0 %v4245, 18
    %v4446 = vpop.permute.xlu0 %4445
    %4463 = vrot.lane.b32.xlu0 %v4248, 27
    %v4464 = vpop.permute.xlu0 %4463
    %4465 = vrot.lane.b32.xlu0 %v4251, 27
    %v4466 = vpop.permute.xlu0 %4465
    %4467 = vrot.lane.b32.xlu0 %v4254, 27
    %v4468 = vpop.permute.xlu0 %4467
    %4469 = vrot.lane.b32.xlu0 %v4257, 27
    %v4470 = vpop.permute.xlu0 %4469
    %4471 = vrot.lane.b32.xlu0 %v4260, 27
    %v4472 = vpop.permute.xlu0 %4471
    %4473 = vrot.lane.b32.xlu0 %v4263, 27
    %v4474 = vpop.permute.xlu0 %4473
    %4475 = vrot.lane.b32.xlu0 %v4266, 27
    %v4476 = vpop.permute.xlu0 %4475
    %4477 = vrot.lane.b32.xlu0 %v4269, 27
    %v4478 = vpop.permute.xlu0 %4477
    %4495 = vrot.lane.b32.xlu0 %v4272, 36
    %v4496 = vpop.permute.xlu0 %4495
    %4497 = vrot.lane.b32.xlu0 %v4275, 36
    %v4498 = vpop.permute.xlu0 %4497
    %4499 = vrot.lane.b32.xlu0 %v4278, 36
    %v4500 = vpop.permute.xlu0 %4499
    %4501 = vrot.lane.b32.xlu0 %v4281, 36
    %v4502 = vpop.permute.xlu0 %4501
    %4503 = vrot.lane.b32.xlu0 %v4284, 36
    %v4504 = vpop.permute.xlu0 %4503
    %4505 = vrot.lane.b32.xlu0 %v4287, 36
    %v4506 = vpop.permute.xlu0 %4505
    %4507 = vrot.lane.b32.xlu0 %v4290, 36
    %v4508 = vpop.permute.xlu0 %4507
    %4509 = vrot.lane.b32.xlu0 %v4293, 36
    %v4510 = vpop.permute.xlu0 %4509
    %4527 = vrot.lane.b32.xlu0 %v4296, 45
    %v4528 = vpop.permute.xlu0 %4527
    %4529 = vrot.lane.b32.xlu0 %v4299, 45
    %v4530 = vpop.permute.xlu0 %4529
    %4531 = vrot.lane.b32.xlu0 %v4302, 45
    %v4532 = vpop.permute.xlu0 %4531
    %4533 = vrot.lane.b32.xlu0 %v4305, 45
    %v4534 = vpop.permute.xlu0 %4533
    %4535 = vrot.lane.b32.xlu0 %v4308, 45
    %v4536 = vpop.permute.xlu0 %4535
    %4537 = vrot.lane.b32.xlu0 %v4311, 45
    %v4538 = vpop.permute.xlu0 %4537
    %4539 = vrot.lane.b32.xlu0 %v4314, 45
    %v4540 = vpop.permute.xlu0 %4539
    %4541 = vrot.lane.b32.xlu0 %v4317, 45
    %v4542 = vpop.permute.xlu0 %4541
    %4559 = vrot.lane.b32.xlu0 %v4320, 54
    %v4560 = vpop.permute.xlu0 %4559
    %4561 = vrot.lane.b32.xlu0 %v4323, 54
    %v4562 = vpop.permute.xlu0 %4561
    %4563 = vrot.lane.b32.xlu0 %v4326, 54
    %v4564 = vpop.permute.xlu0 %4563
    %4565 = vrot.lane.b32.xlu0 %v4329, 54
    %v4566 = vpop.permute.xlu0 %4565
    %4567 = vrot.lane.b32.xlu0 %v4332, 54
    %v4568 = vpop.permute.xlu0 %4567
    %4569 = vrot.lane.b32.xlu0 %v4335, 54
    %v4570 = vpop.permute.xlu0 %4569
    %4571 = vrot.lane.b32.xlu0 %v4338, 54
    %v4572 = vpop.permute.xlu0 %4571
    %4573 = vrot.lane.b32.xlu0 %v4341, 54
    %v4574 = vpop.permute.xlu0 %4573
    %4591 = vrot.lane.b32.xlu0 %v4344, 63
    %v4592 = vpop.permute.xlu0 %4591
    %4593 = vrot.lane.b32.xlu0 %v4347, 63
    %v4594 = vpop.permute.xlu0 %4593
    %4595 = vrot.lane.b32.xlu0 %v4350, 63
    %v4596 = vpop.permute.xlu0 %4595
    %4597 = vrot.lane.b32.xlu0 %v4353, 63
    %v4598 = vpop.permute.xlu0 %4597
    %4599 = vrot.lane.b32.xlu0 %v4356, 63
    %v4600 = vpop.permute.xlu0 %4599
    %4601 = vrot.lane.b32.xlu0 %v4359, 63
    %v4602 = vpop.permute.xlu0 %4601
    %4603 = vrot.lane.b32.xlu0 %v4362, 63
    %v4604 = vpop.permute.xlu0 %4603
    %4605 = vrot.lane.b32.xlu0 %v4365, 63
    %v4606 = vpop.permute.xlu0 %4605
    %4623 = vrot.lane.b32.xlu0 %v4368, 72
    %v4624 = vpop.permute.xlu0 %4623
    %4625 = vrot.lane.b32.xlu0 %v4371, 72
    %v4626 = vpop.permute.xlu0 %4625
    %4627 = vrot.lane.b32.xlu0 %v4374, 72
    %v4628 = vpop.permute.xlu0 %4627
    %4629 = vrot.lane.b32.xlu0 %v4377, 72
    %v4630 = vpop.permute.xlu0 %4629
    %4631 = vrot.lane.b32.xlu0 %v4380, 72
    %v4632 = vpop.permute.xlu0 %4631
    %4633 = vrot.lane.b32.xlu0 %v4383, 72
    %v4634 = vpop.permute.xlu0 %4633
    %4635 = vrot.lane.b32.xlu0 %v4386, 72
    %v4636 = vpop.permute.xlu0 %4635
    %4637 = vrot.lane.b32.xlu0 %v4389, 72
    %v4638 = vpop.permute.xlu0 %4637
    %v4647 = vsel %vm3348, %v4176, %v4400
    %v4648 = vsel %vm3348, %v4179, %v4402
    %v4649 = vsel %vm3348, %v4182, %v4404
    %v4650 = vsel %vm3348, %v4185, %v4406
    %v4651 = vsel %vm3348, %v4188, %v4408
    %v4652 = vsel %vm3348, %v4191, %v4410
    %v4653 = vsel %vm3348, %v4194, %v4412
    %v4654 = vsel %vm3348, %v4197, %v4414
    %v4655 = vsel %vm3366, %v4647, %v4432
    %v4656 = vsel %vm3366, %v4648, %v4434
    %v4657 = vsel %vm3366, %v4649, %v4436
    %v4658 = vsel %vm3366, %v4650, %v4438
    %v4659 = vsel %vm3366, %v4651, %v4440
    %v4660 = vsel %vm3366, %v4652, %v4442
    %v4661 = vsel %vm3366, %v4653, %v4444
    %v4662 = vsel %vm3366, %v4654, %v4446
    %vm4663 = vcmask 220160
    %v4664 = vsel %vm4663, %v4655, %v4464
    %v4665 = vsel %vm4663, %v4656, %v4466
    %v4666 = vsel %vm4663, %v4657, %v4468
    %v4667 = vsel %vm4663, %v4658, %v4470
    %v4668 = vsel %vm4663, %v4659, %v4472
    %v4669 = vsel %vm4663, %v4660, %v4474
    %v4670 = vsel %vm4663, %v4661, %v4476
    %v4671 = vsel %vm4663, %v4662, %v4478
    %vm4672 = vcmask 293888
    %v4673 = vsel %vm4672, %v4664, %v4496
    %v4674 = vsel %vm4672, %v4665, %v4498
    %v4675 = vsel %vm4672, %v4666, %v4500
    %v4676 = vsel %vm4672, %v4667, %v4502
    %v4677 = vsel %vm4672, %v4668, %v4504
    %v4678 = vsel %vm4672, %v4669, %v4506
    %v4679 = vsel %vm4672, %v4670, %v4508
    %v4680 = vsel %vm4672, %v4671, %v4510
    %vm4681 = vcmask 367616
    %v4682 = vsel %vm4681, %v4673, %v4528
    %v4683 = vsel %vm4681, %v4674, %v4530
    %v4684 = vsel %vm4681, %v4675, %v4532
    %v4685 = vsel %vm4681, %v4676, %v4534
    %v4686 = vsel %vm4681, %v4677, %v4536
    %v4687 = vsel %vm4681, %v4678, %v4538
    %v4688 = vsel %vm4681, %v4679, %v4540
    %v4689 = vsel %vm4681, %v4680, %v4542
    %vm4690 = vcmask 441344
    %v4691 = vsel %vm4690, %v4682, %v4560
    %v4692 = vsel %vm4690, %v4683, %v4562
    %v4693 = vsel %vm4690, %v4684, %v4564
    %v4694 = vsel %vm4690, %v4685, %v4566
    %v4695 = vsel %vm4690, %v4686, %v4568
    %v4696 = vsel %vm4690, %v4687, %v4570
    %v4697 = vsel %vm4690, %v4688, %v4572
    %v4698 = vsel %vm4690, %v4689, %v4574
    %vm4699 = vcmask 515072
    %v4700 = vsel %vm4699, %v4691, %v4592
    %v4701 = vsel %vm4699, %v4692, %v4594
    %v4702 = vsel %vm4699, %v4693, %v4596
    %v4703 = vsel %vm4699, %v4694, %v4598
    %v4704 = vsel %vm4699, %v4695, %v4600
    %v4705 = vsel %vm4699, %v4696, %v4602
    %v4706 = vsel %vm4699, %v4697, %v4604
    %v4707 = vsel %vm4699, %v4698, %v4606
    %vm4708 = vcmask 588800
    %v4709 = vsel %vm4708, %v4700, %v4624
    %v4710 = vsel %vm4708, %v4701, %v4626
    %v4711 = vsel %vm4708, %v4702, %v4628
    %v4712 = vsel %vm4708, %v4703, %v4630
    %v4713 = vsel %vm4708, %v4704, %v4632
    %v4714 = vsel %vm4708, %v4705, %v4634
    %v4715 = vsel %vm4708, %v4706, %v4636
    %v4716 = vsel %vm4708, %v4707, %v4638
    %vm4717 = vcmask 662528
    %v4719 = vsel %vm4717, %v4709, 0
    %v4722 = vsel %vm4717, %v4710, 0
    %v4725 = vsel %vm4717, %v4711, 0
    %v4728 = vsel %vm4717, %v4712, 0
    %v4731 = vsel %vm4717, %v4713, 0
    %v4734 = vsel %vm4717, %v4714, 0
    %v4737 = vsel %vm4717, %v4715, 0
    %v4740 = vsel %vm4717, %v4716, 0
    %vm4742 = vcmask 1040384
    %v4744 = vsel %vm4742, %v4013, 0
    %4746 = vmatpush.msra.mxu0 0.0
    %4747 = vmatpush.msra.mxu0 0.0
    %4748 = vmatpush.msra.mxu0 0.0
    %4749 = vmatpush.msra.mxu0 0.0
    %4750 = vmatpush.msra.mxu0 0.0
    %4751 = vmatpush.msra.mxu0 %v4744
    %4752 = vmatpush.msra.mxu0 %v4012
    %4753 = vmatpush.msra.mxu0 %v4011
    %4754 = vmatpush.msra.mxu0 %v4010
    %4755 = vmatpush.msra.mxu0 %v4009
    %4756 = vmatpush.msra.mxu0 %v4008
    %4757 = vmatpush.msra.mxu0 %v4007
    %4758 = vmatpush.msra.mxu0 %v4006
    %4759 = vmatpush.msra.mxu0 %v4005
    %4760 = vmatpush.msra.mxu0 %v4004
    %4761 = vmatpush.msra.mxu0 %v4003
    %4762 = vmatmul.f32.gmra.mxu0 %v4719
    %v4763 = vpop.f32.mrf.mxu0
    %v4764 = vadd.f32 0.0, %v4763
    %4765 = vmatmul.f32.gmra.mxu0 %v4722
    %v4766 = vpop.f32.mrf.mxu0
    %v4767 = vadd.f32 0.0, %v4766
    %4768 = vmatmul.f32.gmra.mxu0 %v4725
    %v4769 = vpop.f32.mrf.mxu0
    %v4770 = vadd.f32 0.0, %v4769
    %4771 = vmatmul.f32.gmra.mxu0 %v4728
    %v4772 = vpop.f32.mrf.mxu0
    %v4773 = vadd.f32 0.0, %v4772
    %4774 = vmatmul.f32.gmra.mxu0 %v4731
    %v4775 = vpop.f32.mrf.mxu0
    %v4776 = vadd.f32 0.0, %v4775
    %4777 = vmatmul.f32.gmra.mxu0 %v4734
    %v4778 = vpop.f32.mrf.mxu0
    %v4779 = vadd.f32 0.0, %v4778
    %4780 = vmatmul.f32.gmra.mxu0 %v4737
    %v4781 = vpop.f32.mrf.mxu0
    %v4782 = vadd.f32 0.0, %v4781
    %4783 = vmatmul.f32.gmra.mxu0 %v4740
    %v4784 = vpop.f32.mrf.mxu0
    %v4785 = vadd.f32 0.0, %v4784
    %4786 = vdwg.mxu0
    %4795 = vrot.lane.b32.xlu0 %v4176, 119
    %v4796 = vpop.permute.xlu0 %4795
    %4797 = vrot.lane.b32.xlu0 %v4179, 119
    %v4798 = vpop.permute.xlu0 %4797
    %4799 = vrot.lane.b32.xlu0 %v4182, 119
    %v4800 = vpop.permute.xlu0 %4799
    %4801 = vrot.lane.b32.xlu0 %v4185, 119
    %v4802 = vpop.permute.xlu0 %4801
    %4803 = vrot.lane.b32.xlu0 %v4188, 119
    %v4804 = vpop.permute.xlu0 %4803
    %4805 = vrot.lane.b32.xlu0 %v4191, 119
    %v4806 = vpop.permute.xlu0 %4805
    %4807 = vrot.lane.b32.xlu0 %v4194, 119
    %v4808 = vpop.permute.xlu0 %4807
    %4809 = vrot.lane.b32.xlu0 %v4197, 119
    %v4810 = vpop.permute.xlu0 %4809
    %4819 = vrot.lane.b32.xlu0 %v4224, 9
    %v4820 = vpop.permute.xlu0 %4819
    %4821 = vrot.lane.b32.xlu0 %v4227, 9
    %v4822 = vpop.permute.xlu0 %4821
    %4823 = vrot.lane.b32.xlu0 %v4230, 9
    %v4824 = vpop.permute.xlu0 %4823
    %4825 = vrot.lane.b32.xlu0 %v4233, 9
    %v4826 = vpop.permute.xlu0 %4825
    %4827 = vrot.lane.b32.xlu0 %v4236, 9
    %v4828 = vpop.permute.xlu0 %4827
    %4829 = vrot.lane.b32.xlu0 %v4239, 9
    %v4830 = vpop.permute.xlu0 %4829
    %4831 = vrot.lane.b32.xlu0 %v4242, 9
    %v4832 = vpop.permute.xlu0 %4831
    %4833 = vrot.lane.b32.xlu0 %v4245, 9
    %v4834 = vpop.permute.xlu0 %4833
    %4843 = vrot.lane.b32.xlu0 %v4248, 18
    %v4844 = vpop.permute.xlu0 %4843
    %4845 = vrot.lane.b32.xlu0 %v4251, 18
    %v4846 = vpop.permute.xlu0 %4845
    %4847 = vrot.lane.b32.xlu0 %v4254, 18
    %v4848 = vpop.permute.xlu0 %4847
    %4849 = vrot.lane.b32.xlu0 %v4257, 18
    %v4850 = vpop.permute.xlu0 %4849
    %4851 = vrot.lane.b32.xlu0 %v4260, 18
    %v4852 = vpop.permute.xlu0 %4851
    %4853 = vrot.lane.b32.xlu0 %v4263, 18
    %v4854 = vpop.permute.xlu0 %4853
    %4855 = vrot.lane.b32.xlu0 %v4266, 18
    %v4856 = vpop.permute.xlu0 %4855
    %4857 = vrot.lane.b32.xlu0 %v4269, 18
    %v4858 = vpop.permute.xlu0 %4857
    %4867 = vrot.lane.b32.xlu0 %v4272, 27
    %v4868 = vpop.permute.xlu0 %4867
    %4869 = vrot.lane.b32.xlu0 %v4275, 27
    %v4870 = vpop.permute.xlu0 %4869
    %4871 = vrot.lane.b32.xlu0 %v4278, 27
    %v4872 = vpop.permute.xlu0 %4871
    %4873 = vrot.lane.b32.xlu0 %v4281, 27
    %v4874 = vpop.permute.xlu0 %4873
    %4875 = vrot.lane.b32.xlu0 %v4284, 27
    %v4876 = vpop.permute.xlu0 %4875
    %4877 = vrot.lane.b32.xlu0 %v4287, 27
    %v4878 = vpop.permute.xlu0 %4877
    %4879 = vrot.lane.b32.xlu0 %v4290, 27
    %v4880 = vpop.permute.xlu0 %4879
    %4881 = vrot.lane.b32.xlu0 %v4293, 27
    %v4882 = vpop.permute.xlu0 %4881
    %4891 = vrot.lane.b32.xlu0 %v4296, 36
    %v4892 = vpop.permute.xlu0 %4891
    %4893 = vrot.lane.b32.xlu0 %v4299, 36
    %v4894 = vpop.permute.xlu0 %4893
    %4895 = vrot.lane.b32.xlu0 %v4302, 36
    %v4896 = vpop.permute.xlu0 %4895
    %4897 = vrot.lane.b32.xlu0 %v4305, 36
    %v4898 = vpop.permute.xlu0 %4897
    %4899 = vrot.lane.b32.xlu0 %v4308, 36
    %v4900 = vpop.permute.xlu0 %4899
    %4901 = vrot.lane.b32.xlu0 %v4311, 36
    %v4902 = vpop.permute.xlu0 %4901
    %4903 = vrot.lane.b32.xlu0 %v4314, 36
    %v4904 = vpop.permute.xlu0 %4903
    %4905 = vrot.lane.b32.xlu0 %v4317, 36
    %v4906 = vpop.permute.xlu0 %4905
    %4915 = vrot.lane.b32.xlu0 %v4320, 45
    %v4916 = vpop.permute.xlu0 %4915
    %4917 = vrot.lane.b32.xlu0 %v4323, 45
    %v4918 = vpop.permute.xlu0 %4917
    %4919 = vrot.lane.b32.xlu0 %v4326, 45
    %v4920 = vpop.permute.xlu0 %4919
    %4921 = vrot.lane.b32.xlu0 %v4329, 45
    %v4922 = vpop.permute.xlu0 %4921
    %4923 = vrot.lane.b32.xlu0 %v4332, 45
    %v4924 = vpop.permute.xlu0 %4923
    %4925 = vrot.lane.b32.xlu0 %v4335, 45
    %v4926 = vpop.permute.xlu0 %4925
    %4927 = vrot.lane.b32.xlu0 %v4338, 45
    %v4928 = vpop.permute.xlu0 %4927
    %4929 = vrot.lane.b32.xlu0 %v4341, 45
    %v4930 = vpop.permute.xlu0 %4929
    %4939 = vrot.lane.b32.xlu0 %v4344, 54
    %v4940 = vpop.permute.xlu0 %4939
    %4941 = vrot.lane.b32.xlu0 %v4347, 54
    %v4942 = vpop.permute.xlu0 %4941
    %4943 = vrot.lane.b32.xlu0 %v4350, 54
    %v4944 = vpop.permute.xlu0 %4943
    %4945 = vrot.lane.b32.xlu0 %v4353, 54
    %v4946 = vpop.permute.xlu0 %4945
    %4947 = vrot.lane.b32.xlu0 %v4356, 54
    %v4948 = vpop.permute.xlu0 %4947
    %4949 = vrot.lane.b32.xlu0 %v4359, 54
    %v4950 = vpop.permute.xlu0 %4949
    %4951 = vrot.lane.b32.xlu0 %v4362, 54
    %v4952 = vpop.permute.xlu0 %4951
    %4953 = vrot.lane.b32.xlu0 %v4365, 54
    %v4954 = vpop.permute.xlu0 %4953
    %4963 = vrot.lane.b32.xlu0 %v4368, 63
    %v4964 = vpop.permute.xlu0 %4963
    %4965 = vrot.lane.b32.xlu0 %v4371, 63
    %v4966 = vpop.permute.xlu0 %4965
    %4967 = vrot.lane.b32.xlu0 %v4374, 63
    %v4968 = vpop.permute.xlu0 %4967
    %4969 = vrot.lane.b32.xlu0 %v4377, 63
    %v4970 = vpop.permute.xlu0 %4969
    %4971 = vrot.lane.b32.xlu0 %v4380, 63
    %v4972 = vpop.permute.xlu0 %4971
    %4973 = vrot.lane.b32.xlu0 %v4383, 63
    %v4974 = vpop.permute.xlu0 %4973
    %4975 = vrot.lane.b32.xlu0 %v4386, 63
    %v4976 = vpop.permute.xlu0 %4975
    %4977 = vrot.lane.b32.xlu0 %v4389, 63
    %v4978 = vpop.permute.xlu0 %4977
    %v4987 = vsel %vm3348, %v4796, %v4200
    %v4988 = vsel %vm3348, %v4798, %v4203
    %v4989 = vsel %vm3348, %v4800, %v4206
    %v4990 = vsel %vm3348, %v4802, %v4209
    %v4991 = vsel %vm3348, %v4804, %v4212
    %v4992 = vsel %vm3348, %v4806, %v4215
    %v4993 = vsel %vm3348, %v4808, %v4218
    %v4994 = vsel %vm3348, %v4810, %v4221
    %v4995 = vsel %vm3366, %v4987, %v4820
    %v4996 = vsel %vm3366, %v4988, %v4822
    %v4997 = vsel %vm3366, %v4989, %v4824
    %v4998 = vsel %vm3366, %v4990, %v4826
    %v4999 = vsel %vm3366, %v4991, %v4828
    %v5000 = vsel %vm3366, %v4992, %v4830
    %v5001 = vsel %vm3366, %v4993, %v4832
    %v5002 = vsel %vm3366, %v4994, %v4834
    %v5003 = vsel %vm4663, %v4995, %v4844
    %v5004 = vsel %vm4663, %v4996, %v4846
    %v5005 = vsel %vm4663, %v4997, %v4848
    %v5006 = vsel %vm4663, %v4998, %v4850
    %v5007 = vsel %vm4663, %v4999, %v4852
    %v5008 = vsel %vm4663, %v5000, %v4854
    %v5009 = vsel %vm4663, %v5001, %v4856
    %v5010 = vsel %vm4663, %v5002, %v4858
    %v5011 = vsel %vm4672, %v5003, %v4868
    %v5012 = vsel %vm4672, %v5004, %v4870
    %v5013 = vsel %vm4672, %v5005, %v4872
    %v5014 = vsel %vm4672, %v5006, %v4874
    %v5015 = vsel %vm4672, %v5007, %v4876
    %v5016 = vsel %vm4672, %v5008, %v4878
    %v5017 = vsel %vm4672, %v5009, %v4880
    %v5018 = vsel %vm4672, %v5010, %v4882
    %v5019 = vsel %vm4681, %v5011, %v4892
    %v5020 = vsel %vm4681, %v5012, %v4894
    %v5021 = vsel %vm4681, %v5013, %v4896
    %v5022 = vsel %vm4681, %v5014, %v4898
    %v5023 = vsel %vm4681, %v5015, %v4900
    %v5024 = vsel %vm4681, %v5016, %v4902
    %v5025 = vsel %vm4681, %v5017, %v4904
    %v5026 = vsel %vm4681, %v5018, %v4906
    %v5027 = vsel %vm4690, %v5019, %v4916
    %v5028 = vsel %vm4690, %v5020, %v4918
    %v5029 = vsel %vm4690, %v5021, %v4920
    %v5030 = vsel %vm4690, %v5022, %v4922
    %v5031 = vsel %vm4690, %v5023, %v4924
    %v5032 = vsel %vm4690, %v5024, %v4926
    %v5033 = vsel %vm4690, %v5025, %v4928
    %v5034 = vsel %vm4690, %v5026, %v4930
    %v5035 = vsel %vm4699, %v5027, %v4940
    %v5036 = vsel %vm4699, %v5028, %v4942
    %v5037 = vsel %vm4699, %v5029, %v4944
    %v5038 = vsel %vm4699, %v5030, %v4946
    %v5039 = vsel %vm4699, %v5031, %v4948
    %v5040 = vsel %vm4699, %v5032, %v4950
    %v5041 = vsel %vm4699, %v5033, %v4952
    %v5042 = vsel %vm4699, %v5034, %v4954
    %v5043 = vsel %vm4708, %v5035, %v4964
    %v5044 = vsel %vm4708, %v5036, %v4966
    %v5045 = vsel %vm4708, %v5037, %v4968
    %v5046 = vsel %vm4708, %v5038, %v4970
    %v5047 = vsel %vm4708, %v5039, %v4972
    %v5048 = vsel %vm4708, %v5040, %v4974
    %v5049 = vsel %vm4708, %v5041, %v4976
    %v5050 = vsel %vm4708, %v5042, %v4978
    %v5052 = vsel %vm4717, %v5043, 0
    %v5055 = vsel %vm4717, %v5044, 0
    %v5058 = vsel %vm4717, %v5045, 0
    %v5061 = vsel %vm4717, %v5046, 0
    %v5064 = vsel %vm4717, %v5047, 0
    %v5067 = vsel %vm4717, %v5048, 0
    %v5070 = vsel %vm4717, %v5049, 0
    %v5073 = vsel %vm4717, %v5050, 0
    %5075 = vmatpush.msra.mxu0 0.0
    %5076 = vmatpush.msra.mxu0 0.0
    %5077 = vmatpush.msra.mxu0 0.0
    %5078 = vmatpush.msra.mxu0 0.0
    %5079 = vmatpush.msra.mxu0 0.0
    %5080 = vmatpush.msra.mxu0 %v4744
    %5081 = vmatpush.msra.mxu0 %v4012
    %5082 = vmatpush.msra.mxu0 %v4011
    %5083 = vmatpush.msra.mxu0 %v4010
    %5084 = vmatpush.msra.mxu0 %v4009
    %5085 = vmatpush.msra.mxu0 %v4008
    %5086 = vmatpush.msra.mxu0 %v4007
    %5087 = vmatpush.msra.mxu0 %v4006
    %5088 = vmatpush.msra.mxu0 %v4005
    %5089 = vmatpush.msra.mxu0 %v4004
    %5090 = vmatpush.msra.mxu0 %v4003
    %5091 = vmatmul.f32.gmra.mxu0 %v5052
    %v5092 = vpop.f32.mrf.mxu0
    %v5093 = vadd.f32 0.0, %v5092
    %5094 = vmatmul.f32.gmra.mxu0 %v5055
    %v5095 = vpop.f32.mrf.mxu0
    %v5096 = vadd.f32 0.0, %v5095
    %5097 = vmatmul.f32.gmra.mxu0 %v5058
    %v5098 = vpop.f32.mrf.mxu0
    %v5099 = vadd.f32 0.0, %v5098
    %5100 = vmatmul.f32.gmra.mxu0 %v5061
    %v5101 = vpop.f32.mrf.mxu0
    %v5102 = vadd.f32 0.0, %v5101
    %5103 = vmatmul.f32.gmra.mxu0 %v5064
    %v5104 = vpop.f32.mrf.mxu0
    %v5105 = vadd.f32 0.0, %v5104
    %5106 = vmatmul.f32.gmra.mxu0 %v5067
    %v5107 = vpop.f32.mrf.mxu0
    %v5108 = vadd.f32 0.0, %v5107
    %5109 = vmatmul.f32.gmra.mxu0 %v5070
    %v5110 = vpop.f32.mrf.mxu0
    %v5111 = vadd.f32 0.0, %v5110
    %5112 = vmatmul.f32.gmra.mxu0 %v5073
    %v5113 = vpop.f32.mrf.mxu0
    %v5114 = vadd.f32 0.0, %v5113
    %5115 = vdwg.mxu0
    %5124 = vrot.lane.b32.xlu0 %v5093, 9
    %v5125 = vpop.permute.xlu0 %5124
    %5126 = vrot.lane.b32.xlu0 %v5096, 9
    %v5127 = vpop.permute.xlu0 %5126
    %5128 = vrot.lane.b32.xlu0 %v5099, 9
    %v5129 = vpop.permute.xlu0 %5128
    %5130 = vrot.lane.b32.xlu0 %v5102, 9
    %v5131 = vpop.permute.xlu0 %5130
    %5132 = vrot.lane.b32.xlu0 %v5105, 9
    %v5133 = vpop.permute.xlu0 %5132
    %5134 = vrot.lane.b32.xlu0 %v5108, 9
    %v5135 = vpop.permute.xlu0 %5134
    %5136 = vrot.lane.b32.xlu0 %v5111, 9
    %v5137 = vpop.permute.xlu0 %5136
    %5138 = vrot.lane.b32.xlu0 %v5114, 9
    %v5139 = vpop.permute.xlu0 %5138
    %v5148 = vsel %vm3348, %v4764, %v5125
    %v5149 = vsel %vm3348, %v4767, %v5127
    %v5150 = vsel %vm3348, %v4770, %v5129
    %v5151 = vsel %vm3348, %v4773, %v5131
    %v5152 = vsel %vm3348, %v4776, %v5133
    %v5153 = vsel %vm3348, %v4779, %v5135
    %v5154 = vsel %vm3348, %v4782, %v5137
    %v5155 = vsel %vm3348, %v4785, %v5139
    %s5156 = sld [smem:[#allocation5 + $0x2]]
    %v5157 = vsel %vm3366, %v5148, 0.0
    %5158 = vadd.xlane.f32.xlu0 %v5157
    %v5159 = vpop.xlane.xlu0 %5158
    %v5160 = vsel %vm3366, %v5149, 0.0
    %5161 = vadd.xlane.f32.xlu0 %v5160
    %v5162 = vpop.xlane.xlu0 %5161
    %v5163 = vsel %vm3366, %v5150, 0.0
    %5164 = vadd.xlane.f32.xlu0 %v5163
    %v5165 = vpop.xlane.xlu0 %5164
    %v5166 = vsel %vm3366, %v5151, 0.0
    %5167 = vadd.xlane.f32.xlu0 %v5166
    %v5168 = vpop.xlane.xlu0 %5167
    %v5169 = vsel %vm3366, %v5152, 0.0
    %5170 = vadd.xlane.f32.xlu0 %v5169
    %v5171 = vpop.xlane.xlu0 %5170
    %v5172 = vsel %vm3366, %v5153, 0.0
    %5173 = vadd.xlane.f32.xlu0 %v5172
    %v5174 = vpop.xlane.xlu0 %5173
    %v5175 = vsel %vm3366, %v5154, 0.0
    %5176 = vadd.xlane.f32.xlu0 %v5175
    %v5177 = vpop.xlane.xlu0 %5176
    %v5178 = vsel %vm3366, %v5155, 0.0
    %5179 = vadd.xlane.f32.xlu0 %v5178
    %v5180 = vpop.xlane.xlu0 %5179
    %v5181 = vmul.f32 %v5159, 0.055555556
    %v5182 = vmul.f32 %v5162, 0.055555556
    %v5183 = vmul.f32 %v5165, 0.055555556
    %v5184 = vmul.f32 %v5168, 0.055555556
    %v5185 = vmul.f32 %v5171, 0.055555556
    %v5186 = vmul.f32 %v5174, 0.055555556
    %v5187 = vmul.f32 %v5177, 0.055555556
    %v5188 = vmul.f32 %v5180, 0.055555556
    %v5189 = vsub.f32 %v5148, %v5181
    %v5190 = vsub.f32 %v5149, %v5182
    %v5191 = vsub.f32 %v5150, %v5183
    %v5192 = vsub.f32 %v5151, %v5184
    %v5193 = vsub.f32 %v5152, %v5185
    %v5194 = vsub.f32 %v5153, %v5186
    %v5195 = vsub.f32 %v5154, %v5187
    %v5196 = vsub.f32 %v5155, %v5188
    %v5197 = vmul.f32 %v5189, %v5189
    %v5198 = vmul.f32 %v5190, %v5190
    %v5199 = vmul.f32 %v5191, %v5191
    %v5200 = vmul.f32 %v5192, %v5192
    %v5201 = vmul.f32 %v5193, %v5193
    %v5202 = vmul.f32 %v5194, %v5194
    %v5203 = vmul.f32 %v5195, %v5195
    %v5204 = vmul.f32 %v5196, %v5196
    %v5205 = vsel %vm3366, %v5197, 0.0
    %5206 = vadd.xlane.f32.xlu0 %v5205
    %v5207 = vpop.xlane.xlu0 %5206
    %v5208 = vsel %vm3366, %v5198, 0.0
    %5209 = vadd.xlane.f32.xlu0 %v5208
    %v5210 = vpop.xlane.xlu0 %5209
    %v5211 = vsel %vm3366, %v5199, 0.0
    %5212 = vadd.xlane.f32.xlu0 %v5211
    %v5213 = vpop.xlane.xlu0 %5212
    %v5214 = vsel %vm3366, %v5200, 0.0
    %5215 = vadd.xlane.f32.xlu0 %v5214
    %v5216 = vpop.xlane.xlu0 %5215
    %v5217 = vsel %vm3366, %v5201, 0.0
    %5218 = vadd.xlane.f32.xlu0 %v5217
    %v5219 = vpop.xlane.xlu0 %5218
    %v5220 = vsel %vm3366, %v5202, 0.0
    %5221 = vadd.xlane.f32.xlu0 %v5220
    %v5222 = vpop.xlane.xlu0 %5221
    %v5223 = vsel %vm3366, %v5203, 0.0
    %5224 = vadd.xlane.f32.xlu0 %v5223
    %v5225 = vpop.xlane.xlu0 %5224
    %v5226 = vsel %vm3366, %v5204, 0.0
    %5227 = vadd.xlane.f32.xlu0 %v5226
    %v5228 = vpop.xlane.xlu0 %5227
    %v5229 = vmul.f32 %v5207, 0.055555556
    %v5230 = vmul.f32 %v5210, 0.055555556
    %v5231 = vmul.f32 %v5213, 0.055555556
    %v5232 = vmul.f32 %v5216, 0.055555556
    %v5233 = vmul.f32 %v5219, 0.055555556
    %v5234 = vmul.f32 %v5222, 0.055555556
    %v5235 = vmul.f32 %v5225, 0.055555556
    %v5236 = vmul.f32 %v5228, 0.055555556
    %v5237 = vadd.f32 %v5229, 1e-05
    %v5238 = vadd.f32 %v5230, 1e-05
    %v5239 = vadd.f32 %v5231, 1e-05
    %v5240 = vadd.f32 %v5232, 1e-05
    %v5241 = vadd.f32 %v5233, 1e-05
    %v5242 = vadd.f32 %v5234, 1e-05
    %v5243 = vadd.f32 %v5235, 1e-05
    %v5244 = vadd.f32 %v5236, 1e-05
    %v5245 = vrsqrt.pop %v5237
    %v5246 = vmul.f32 %v5245, %v5237
    %v5247 = vmul.f32 %v5246, %v5245
    %v5248 = vmul.f32 0.5, %v5247
    %v5249 = vsub.f32 1.5, %v5248
    %v5250 = vmul.f32 %v5245, %v5249
    %vm5251 = vweird.f32 %v5237
    %vm5252 = vweird.f32 %v5245
    %vm5253 = vmor %vm5251, %vm5252
    %v5254 = vsel %vm5253, %v5245, %v5250
    %v5255 = vrsqrt.pop %v5238
    %v5256 = vmul.f32 %v5255, %v5238
    %v5257 = vmul.f32 %v5256, %v5255
    %v5258 = vmul.f32 0.5, %v5257
    %v5259 = vsub.f32 1.5, %v5258
    %v5260 = vmul.f32 %v5255, %v5259
    %vm5261 = vweird.f32 %v5238
    %vm5262 = vweird.f32 %v5255
    %vm5263 = vmor %vm5261, %vm5262
    %v5264 = vsel %vm5263, %v5255, %v5260
    %v5265 = vrsqrt.pop %v5239
    %v5266 = vmul.f32 %v5265, %v5239
    %v5267 = vmul.f32 %v5266, %v5265
    %v5268 = vmul.f32 0.5, %v5267
    %v5269 = vsub.f32 1.5, %v5268
    %v5270 = vmul.f32 %v5265, %v5269
    %vm5271 = vweird.f32 %v5239
    %vm5272 = vweird.f32 %v5265
    %vm5273 = vmor %vm5271, %vm5272
    %v5274 = vsel %vm5273, %v5265, %v5270
    %v5275 = vrsqrt.pop %v5240
    %v5276 = vmul.f32 %v5275, %v5240
    %v5277 = vmul.f32 %v5276, %v5275
    %v5278 = vmul.f32 0.5, %v5277
    %v5279 = vsub.f32 1.5, %v5278
    %v5280 = vmul.f32 %v5275, %v5279
    %vm5281 = vweird.f32 %v5240
    %vm5282 = vweird.f32 %v5275
    %vm5283 = vmor %vm5281, %vm5282
    %v5284 = vsel %vm5283, %v5275, %v5280
    %v5285 = vrsqrt.pop %v5241
    %v5286 = vmul.f32 %v5285, %v5241
    %v5287 = vmul.f32 %v5286, %v5285
    %v5288 = vmul.f32 0.5, %v5287
    %v5289 = vsub.f32 1.5, %v5288
    %v5290 = vmul.f32 %v5285, %v5289
    %vm5291 = vweird.f32 %v5241
    %vm5292 = vweird.f32 %v5285
    %vm5293 = vmor %vm5291, %vm5292
    %v5294 = vsel %vm5293, %v5285, %v5290
    %v5295 = vrsqrt.pop %v5242
    %v5296 = vmul.f32 %v5295, %v5242
    %v5297 = vmul.f32 %v5296, %v5295
    %v5298 = vmul.f32 0.5, %v5297
    %v5299 = vsub.f32 1.5, %v5298
    %v5300 = vmul.f32 %v5295, %v5299
    %vm5301 = vweird.f32 %v5242
    %vm5302 = vweird.f32 %v5295
    %vm5303 = vmor %vm5301, %vm5302
    %v5304 = vsel %vm5303, %v5295, %v5300
    %v5305 = vrsqrt.pop %v5243
    %v5306 = vmul.f32 %v5305, %v5243
    %v5307 = vmul.f32 %v5306, %v5305
    %v5308 = vmul.f32 0.5, %v5307
    %v5309 = vsub.f32 1.5, %v5308
    %v5310 = vmul.f32 %v5305, %v5309
    %vm5311 = vweird.f32 %v5243
    %vm5312 = vweird.f32 %v5305
    %vm5313 = vmor %vm5311, %vm5312
    %v5314 = vsel %vm5313, %v5305, %v5310
    %v5315 = vrsqrt.pop %v5244
    %v5316 = vmul.f32 %v5315, %v5244
    %v5317 = vmul.f32 %v5316, %v5315
    %v5318 = vmul.f32 0.5, %v5317
    %v5319 = vsub.f32 1.5, %v5318
    %v5320 = vmul.f32 %v5315, %v5319
    %vm5321 = vweird.f32 %v5244
    %vm5322 = vweird.f32 %v5315
    %vm5323 = vmor %vm5321, %vm5322
    %v5324 = vsel %vm5323, %v5315, %v5320
    %v5325 = vmul.f32 %v5189, %v5254
    %v5326 = vmul.f32 %v5190, %v5264
    %v5327 = vmul.f32 %v5191, %v5274
    %v5328 = vmul.f32 %v5192, %v5284
    %v5329 = vmul.f32 %v5193, %v5294
    %v5330 = vmul.f32 %v5194, %v5304
    %v5331 = vmul.f32 %v5195, %v5314
    %v5332 = vmul.f32 %v5196, %v5324
    %v5333 = vld [vmem:[%s9] sm:$0xff]
    %v5334 = vld [vmem:[%s9 + $0x8] sm:$0xff]
    %v5335 = vld [vmem:[%s9 + $0x10] sm:$0xff]
    %v5336 = vld [vmem:[%s9 + $0x18] sm:$0xff]
    %v5337 = vld [vmem:[%s9 + $0x20] sm:$0xff]
    %v5338 = vld [vmem:[%s9 + $0x28] sm:$0xff]
    %v5339 = vld [vmem:[%s9 + $0x30] sm:$0xff]
    %v5340 = vld [vmem:[%s9 + $0x38] sm:$0xff]
    %5342 = vset.pattern.permute.xlu0 0
    %5343 = vperm.xlu0 %5342, %v5333
    %v5344 = vpop.permute.xlu0 %5343
    %5347 = vset.pattern.permute.xlu0 0
    %5348 = vperm.xlu0 %5347, %v5334
    %v5349 = vpop.permute.xlu0 %5348
    %5352 = vset.pattern.permute.xlu0 0
    %5353 = vperm.xlu0 %5352, %v5335
    %v5354 = vpop.permute.xlu0 %5353
    %5357 = vset.pattern.permute.xlu0 0
    %5358 = vperm.xlu0 %5357, %v5336
    %v5359 = vpop.permute.xlu0 %5358
    %5362 = vset.pattern.permute.xlu0 0
    %5363 = vperm.xlu0 %5362, %v5337
    %v5364 = vpop.permute.xlu0 %5363
    %5367 = vset.pattern.permute.xlu0 0
    %5368 = vperm.xlu0 %5367, %v5338
    %v5369 = vpop.permute.xlu0 %5368
    %5372 = vset.pattern.permute.xlu0 0
    %5373 = vperm.xlu0 %5372, %v5339
    %v5374 = vpop.permute.xlu0 %5373
    %5377 = vset.pattern.permute.xlu0 0
    %5378 = vperm.xlu0 %5377, %v5340
    %v5379 = vpop.permute.xlu0 %5378
    %v5381 = vmul.f32 %v5325, %v5344
    %v5382 = vmul.f32 %v5326, %v5349
    %v5383 = vmul.f32 %v5327, %v5354
    %v5384 = vmul.f32 %v5328, %v5359
    %v5385 = vmul.f32 %v5329, %v5364
    %v5386 = vmul.f32 %v5330, %v5369
    %v5387 = vmul.f32 %v5331, %v5374
    %v5388 = vmul.f32 %v5332, %v5379
    %v5389 = vld [vmem:[%s10] sm:$0xff]
    %v5390 = vld [vmem:[%s10 + $0x8] sm:$0xff]
    %v5391 = vld [vmem:[%s10 + $0x10] sm:$0xff]
    %v5392 = vld [vmem:[%s10 + $0x18] sm:$0xff]
    %v5393 = vld [vmem:[%s10 + $0x20] sm:$0xff]
    %v5394 = vld [vmem:[%s10 + $0x28] sm:$0xff]
    %v5395 = vld [vmem:[%s10 + $0x30] sm:$0xff]
    %v5396 = vld [vmem:[%s10 + $0x38] sm:$0xff]
    %5398 = vset.pattern.permute.xlu0 0
    %5399 = vperm.xlu0 %5398, %v5389
    %v5400 = vpop.permute.xlu0 %5399
    %5403 = vset.pattern.permute.xlu0 0
    %5404 = vperm.xlu0 %5403, %v5390
    %v5405 = vpop.permute.xlu0 %5404
    %5408 = vset.pattern.permute.xlu0 0
    %5409 = vperm.xlu0 %5408, %v5391
    %v5410 = vpop.permute.xlu0 %5409
    %5413 = vset.pattern.permute.xlu0 0
    %5414 = vperm.xlu0 %5413, %v5392
    %v5415 = vpop.permute.xlu0 %5414
    %5418 = vset.pattern.permute.xlu0 0
    %5419 = vperm.xlu0 %5418, %v5393
    %v5420 = vpop.permute.xlu0 %5419
    %5423 = vset.pattern.permute.xlu0 0
    %5424 = vperm.xlu0 %5423, %v5394
    %v5425 = vpop.permute.xlu0 %5424
    %5428 = vset.pattern.permute.xlu0 0
    %5429 = vperm.xlu0 %5428, %v5395
    %v5430 = vpop.permute.xlu0 %5429
    %5433 = vset.pattern.permute.xlu0 0
    %5434 = vperm.xlu0 %5433, %v5396
    %v5435 = vpop.permute.xlu0 %5434
    %v5437 = vadd.f32 %v5381, %v5400
    %v5438 = vadd.f32 %v5382, %v5405
    %v5439 = vadd.f32 %v5383, %v5410
    %v5440 = vadd.f32 %v5384, %v5415
    %v5441 = vadd.f32 %v5385, %v5420
    %v5442 = vadd.f32 %v5386, %v5425
    %v5443 = vadd.f32 %v5387, %v5430
    %v5444 = vadd.f32 %v5388, %v5435
    %vm5445 = vcmp.gt.f32.partialorder %v5437, 0.0
    %vm5446 = vcmp.gt.f32.partialorder %v5438, 0.0
    %vm5447 = vcmp.gt.f32.partialorder %v5439, 0.0
    %vm5448 = vcmp.gt.f32.partialorder %v5440, 0.0
    %vm5449 = vcmp.gt.f32.partialorder %v5441, 0.0
    %vm5450 = vcmp.gt.f32.partialorder %v5442, 0.0
    %vm5451 = vcmp.gt.f32.partialorder %v5443, 0.0
    %vm5452 = vcmp.gt.f32.partialorder %v5444, 0.0
    %v5453 = vstv %s5156
    %v5454 = vmul.f32 %v5453, %v5437
    %v5455 = vmul.f32 %v5453, %v5438
    %v5456 = vmul.f32 %v5453, %v5439
    %v5457 = vmul.f32 %v5453, %v5440
    %v5458 = vmul.f32 %v5453, %v5441
    %v5459 = vmul.f32 %v5453, %v5442
    %v5460 = vmul.f32 %v5453, %v5443
    %v5461 = vmul.f32 %v5453, %v5444
    %v5462 = vsel %vm5445, %v5437, %v5454
    %v5463 = vsel %vm5446, %v5438, %v5455
    %v5464 = vsel %vm5447, %v5439, %v5456
    %v5465 = vsel %vm5448, %v5440, %v5457
    %v5466 = vsel %vm5449, %v5441, %v5458
    %v5467 = vsel %vm5450, %v5442, %v5459
    %v5468 = vsel %vm5451, %v5443, %v5460
    %v5469 = vsel %vm5452, %v5444, %v5461
    %v5470 = vld [vmem:[%s12] sm:$0xf]
    %v5471 = vld [vmem:[%s12 + $0x4] sm:$0xf]
    %v5472 = vld [vmem:[%s12 + $0x8] sm:$0xf]
    %v5473 = vld [vmem:[%s12 + $0xc] sm:$0xf]
    %v5474 = vld [vmem:[%s12 + $0x10] sm:$0xf]
    %v5475 = vld [vmem:[%s12 + $0x14] sm:$0xf]
    %v5476 = vld [vmem:[%s12 + $0x18] sm:$0xf]
    %v5477 = vld [vmem:[%s12 + $0x1c] sm:$0xf]
    %v5478 = vld [vmem:[%s12 + $0x20] sm:$0xf]
    %v5479 = vld [vmem:[%s12 + $0x24] sm:$0xf]
    %v5480 = vld [vmem:[%s12 + $0x28] sm:$0x1]
    %v5481 = vunpack.c.l.bf16 %v5470
    %v5482 = vunpack.c.l.bf16 %v5471
    %v5483 = vunpack.c.l.bf16 %v5472
    %v5484 = vunpack.c.l.bf16 %v5473
    %v5485 = vunpack.c.l.bf16 %v5474
    %v5486 = vunpack.c.l.bf16 %v5475
    %v5487 = vunpack.c.l.bf16 %v5476
    %v5488 = vunpack.c.l.bf16 %v5477
    %v5489 = vunpack.c.l.bf16 %v5478
    %v5490 = vunpack.c.l.bf16 %v5479
    %v5491 = vunpack.c.l.bf16 %v5480
    %v5492 = vld [vmem:[%s11] sm:$0xf]
    %v5493 = vld [vmem:[%s11 + $0x4] sm:$0xf]
    %v5494 = vld [vmem:[%s11 + $0x8] sm:$0xf]
    %v5495 = vld [vmem:[%s11 + $0xc] sm:$0xf]
    %v5496 = vld [vmem:[%s11 + $0x10] sm:$0xf]
    %v5497 = vld [vmem:[%s11 + $0x14] sm:$0xf]
    %v5498 = vld [vmem:[%s11 + $0x18] sm:$0xf]
    %v5499 = vld [vmem:[%s11 + $0x1c] sm:$0xf]
    %v5500 = vld [vmem:[%s11 + $0x20] sm:$0xf]
    %v5501 = vld [vmem:[%s11 + $0x24] sm:$0xf]
    %v5502 = vld [vmem:[%s11 + $0x28] sm:$0xf]
    %v5503 = vld [vmem:[%s11 + $0x2c] sm:$0xf]
    %v5504 = vld [vmem:[%s11 + $0x30] sm:$0xf]
    %v5505 = vld [vmem:[%s11 + $0x34] sm:$0xf]
    %v5506 = vld [vmem:[%s11 + $0x38] sm:$0xf]
    %v5507 = vld [vmem:[%s11 + $0x3c] sm:$0xf]
    %v5508 = vld [vmem:[%s11 + $0x40] sm:$0xf]
    %v5509 = vld [vmem:[%s11 + $0x44] sm:$0xf]
    %v5510 = vld [vmem:[%s11 + $0x48] sm:$0xf]
    %v5511 = vld [vmem:[%s11 + $0x4c] sm:$0xf]
    %v5512 = vld [vmem:[%s11 + $0x50] sm:$0xf]
    %v5513 = vld [vmem:[%s11 + $0x54] sm:$0xf]
    %v5514 = vld [vmem:[%s11 + $0x58] sm:$0xf]
    %v5515 = vld [vmem:[%s11 + $0x5c] sm:$0xf]
    %v5516 = vld [vmem:[%s11 + $0x60] sm:$0xf]
    %v5517 = vld [vmem:[%s11 + $0x64] sm:$0xf]
    %v5518 = vld [vmem:[%s11 + $0x68] sm:$0xf]
    %v5519 = vld [vmem:[%s11 + $0x6c] sm:$0xf]
    %v5520 = vld [vmem:[%s11 + $0x70] sm:$0xf]
    %v5521 = vld [vmem:[%s11 + $0x74] sm:$0xf]
    %v5522 = vld [vmem:[%s11 + $0x78] sm:$0xf]
    %v5523 = vld [vmem:[%s11 + $0x7c] sm:$0xf]
    %v5524 = vld [vmem:[%s11 + $0x80] sm:$0xf]
    %v5525 = vld [vmem:[%s11 + $0x84] sm:$0xf]
    %v5526 = vld [vmem:[%s11 + $0x88] sm:$0xf]
    %v5527 = vld [vmem:[%s11 + $0x8c] sm:$0xf]
    %v5528 = vunpack.c.l.bf16 %v5492
    %v5529 = vunpack.c.l.bf16 %v5493
    %v5530 = vunpack.c.l.bf16 %v5494
    %v5531 = vunpack.c.l.bf16 %v5495
    %v5532 = vunpack.c.l.bf16 %v5496
    %v5533 = vunpack.c.l.bf16 %v5497
    %v5534 = vunpack.c.l.bf16 %v5498
    %v5535 = vunpack.c.l.bf16 %v5499
    %v5536 = vunpack.c.l.bf16 %v5500
    %v5537 = vunpack.c.l.bf16 %v5501
    %v5538 = vunpack.c.l.bf16 %v5502
    %v5539 = vunpack.c.l.bf16 %v5503
    %v5540 = vunpack.c.l.bf16 %v5504
    %v5541 = vunpack.c.l.bf16 %v5505
    %v5542 = vunpack.c.l.bf16 %v5506
    %v5543 = vunpack.c.l.bf16 %v5507
    %v5544 = vunpack.c.l.bf16 %v5508
    %v5545 = vunpack.c.l.bf16 %v5509
    %v5546 = vunpack.c.l.bf16 %v5510
    %v5547 = vunpack.c.l.bf16 %v5511
    %v5548 = vunpack.c.l.bf16 %v5512
    %v5549 = vunpack.c.l.bf16 %v5513
    %v5550 = vunpack.c.l.bf16 %v5514
    %v5551 = vunpack.c.l.bf16 %v5515
    %v5552 = vunpack.c.l.bf16 %v5516
    %v5553 = vunpack.c.l.bf16 %v5517
    %v5554 = vunpack.c.l.bf16 %v5518
    %v5555 = vunpack.c.l.bf16 %v5519
    %v5556 = vunpack.c.l.bf16 %v5520
    %v5557 = vunpack.c.l.bf16 %v5521
    %v5558 = vunpack.c.l.bf16 %v5522
    %v5559 = vunpack.c.l.bf16 %v5523
    %v5560 = vunpack.c.l.bf16 %v5524
    %v5561 = vunpack.c.l.bf16 %v5525
    %v5562 = vunpack.c.l.bf16 %v5526
    %v5563 = vunpack.c.l.bf16 %v5527
    %vm5564 = vcmask 523264
    %v5566 = vsel %vm5564, %v5528, 0
    %v5569 = vsel %vm5564, %v5529, 0
    %v5572 = vsel %vm5564, %v5530, 0
    %v5575 = vsel %vm5564, %v5531, 0
    %v5578 = vsel %vm5564, %v5532, 0
    %v5581 = vsel %vm5564, %v5533, 0
    %v5584 = vsel %vm5564, %v5534, 0
    %v5587 = vsel %vm5564, %v5535, 0
    %v5590 = vsel %vm5564, %v5536, 0
    %v5593 = vsel %vm5564, %v5537, 0
    %v5596 = vsel %vm5564, %v5538, 0
    %v5599 = vsel %vm5564, %v5539, 0
    %v5602 = vsel %vm5564, %v5540, 0
    %v5605 = vsel %vm5564, %v5541, 0
    %v5608 = vsel %vm5564, %v5542, 0
    %v5611 = vsel %vm5564, %v5543, 0
    %v5614 = vsel %vm5564, %v5544, 0
    %v5617 = vsel %vm5564, %v5545, 0
    %v5620 = vsel %vm5564, %v5546, 0
    %v5623 = vsel %vm5564, %v5547, 0
    %v5626 = vsel %vm5564, %v5548, 0
    %v5629 = vsel %vm5564, %v5549, 0
    %v5632 = vsel %vm5564, %v5550, 0
    %v5635 = vsel %vm5564, %v5551, 0
    %v5638 = vsel %vm5564, %v5552, 0
    %v5641 = vsel %vm5564, %v5553, 0
    %v5644 = vsel %vm5564, %v5554, 0
    %v5647 = vsel %vm5564, %v5555, 0
    %v5650 = vsel %vm5564, %v5556, 0
    %v5653 = vsel %vm5564, %v5557, 0
    %v5656 = vsel %vm5564, %v5558, 0
    %v5659 = vsel %vm5564, %v5559, 0
    %v5662 = vsel %vm5564, %v5560, 0
    %v5665 = vsel %vm5564, %v5561, 0
    %v5668 = vsel %vm5564, %v5562, 0
    %v5671 = vsel %vm5564, %v5563, 0
    %5673 = vmatpush.msra.mxu0 0.0
    %5674 = vmatpush.msra.mxu0 0.0
    %5675 = vmatpush.msra.mxu0 0.0
    %5676 = vmatpush.msra.mxu0 0.0
    %5677 = vmatpush.msra.mxu0 0.0
    %5678 = vmatpush.msra.mxu0 0.0
    %5679 = vmatpush.msra.mxu0 0.0
    %5680 = vmatpush.msra.mxu0 0.0
    %5681 = vmatpush.msra.mxu0 %v5469
    %5682 = vmatpush.msra.mxu0 %v5468
    %5683 = vmatpush.msra.mxu0 %v5467
    %5684 = vmatpush.msra.mxu0 %v5466
    %5685 = vmatpush.msra.mxu0 %v5465
    %5686 = vmatpush.msra.mxu0 %v5464
    %5687 = vmatpush.msra.mxu0 %v5463
    %5688 = vmatpush.msra.mxu0 %v5462
    %5689 = vmatmul.f32.gmra.mxu0 %v5566
    %v5690 = vpop.f32.mrf.mxu0
    %v5691 = vadd.f32 0.0, %v5690
    %5692 = vmatmul.f32.gmra.mxu0 %v5569
    %v5693 = vpop.f32.mrf.mxu0
    %v5694 = vadd.f32 0.0, %v5693
    %5695 = vmatmul.f32.gmra.mxu0 %v5572
    %v5696 = vpop.f32.mrf.mxu0
    %v5697 = vadd.f32 0.0, %v5696
    %5698 = vmatmul.f32.gmra.mxu0 %v5575
    %v5699 = vpop.f32.mrf.mxu0
    %v5700 = vadd.f32 0.0, %v5699
    %5701 = vmatmul.f32.gmra.mxu0 %v5578
    %v5702 = vpop.f32.mrf.mxu0
    %v5703 = vadd.f32 0.0, %v5702
    %5704 = vmatmul.f32.gmra.mxu0 %v5581
    %v5705 = vpop.f32.mrf.mxu0
    %v5706 = vadd.f32 0.0, %v5705
    %5707 = vmatmul.f32.gmra.mxu0 %v5584
    %v5708 = vpop.f32.mrf.mxu0
    %v5709 = vadd.f32 0.0, %v5708
    %5710 = vmatmul.f32.gmra.mxu0 %v5587
    %v5711 = vpop.f32.mrf.mxu0
    %v5712 = vadd.f32 0.0, %v5711
    %5713 = vmatmul.f32.gmra.mxu0 %v5590
    %v5714 = vpop.f32.mrf.mxu0
    %v5715 = vadd.f32 0.0, %v5714
    %5716 = vmatmul.f32.gmra.mxu0 %v5593
    %v5717 = vpop.f32.mrf.mxu0
    %v5718 = vadd.f32 0.0, %v5717
    %5719 = vmatmul.f32.gmra.mxu0 %v5596
    %v5720 = vpop.f32.mrf.mxu0
    %v5721 = vadd.f32 0.0, %v5720
    %5722 = vmatmul.f32.gmra.mxu0 %v5599
    %v5723 = vpop.f32.mrf.mxu0
    %v5724 = vadd.f32 0.0, %v5723
    %5725 = vmatmul.f32.gmra.mxu0 %v5602
    %v5726 = vpop.f32.mrf.mxu0
    %v5727 = vadd.f32 0.0, %v5726
    %5728 = vmatmul.f32.gmra.mxu0 %v5605
    %v5729 = vpop.f32.mrf.mxu0
    %v5730 = vadd.f32 0.0, %v5729
    %5731 = vmatmul.f32.gmra.mxu0 %v5608
    %v5732 = vpop.f32.mrf.mxu0
    %v5733 = vadd.f32 0.0, %v5732
    %5734 = vmatmul.f32.gmra.mxu0 %v5611
    %v5735 = vpop.f32.mrf.mxu0
    %v5736 = vadd.f32 0.0, %v5735
    %5737 = vmatmul.f32.gmra.mxu0 %v5614
    %v5738 = vpop.f32.mrf.mxu0
    %v5739 = vadd.f32 0.0, %v5738
    %5740 = vmatmul.f32.gmra.mxu0 %v5617
    %v5741 = vpop.f32.mrf.mxu0
    %v5742 = vadd.f32 0.0, %v5741
    %5743 = vmatmul.f32.gmra.mxu0 %v5620
    %v5744 = vpop.f32.mrf.mxu0
    %v5745 = vadd.f32 0.0, %v5744
    %5746 = vmatmul.f32.gmra.mxu0 %v5623
    %v5747 = vpop.f32.mrf.mxu0
    %v5748 = vadd.f32 0.0, %v5747
    %5749 = vmatmul.f32.gmra.mxu0 %v5626
    %v5750 = vpop.f32.mrf.mxu0
    %v5751 = vadd.f32 0.0, %v5750
    %5752 = vmatmul.f32.gmra.mxu0 %v5629
    %v5753 = vpop.f32.mrf.mxu0
    %v5754 = vadd.f32 0.0, %v5753
    %5755 = vmatmul.f32.gmra.mxu0 %v5632
    %v5756 = vpop.f32.mrf.mxu0
    %v5757 = vadd.f32 0.0, %v5756
    %5758 = vmatmul.f32.gmra.mxu0 %v5635
    %v5759 = vpop.f32.mrf.mxu0
    %v5760 = vadd.f32 0.0, %v5759
    %5761 = vmatmul.f32.gmra.mxu0 %v5638
    %v5762 = vpop.f32.mrf.mxu0
    %v5763 = vadd.f32 0.0, %v5762
    %5764 = vmatmul.f32.gmra.mxu0 %v5641
    %v5765 = vpop.f32.mrf.mxu0
    %v5766 = vadd.f32 0.0, %v5765
    %5767 = vmatmul.f32.gmra.mxu0 %v5644
    %v5768 = vpop.f32.mrf.mxu0
    %v5769 = vadd.f32 0.0, %v5768
    %5770 = vmatmul.f32.gmra.mxu0 %v5647
    %v5771 = vpop.f32.mrf.mxu0
    %v5772 = vadd.f32 0.0, %v5771
    %5773 = vmatmul.f32.gmra.mxu0 %v5650
    %v5774 = vpop.f32.mrf.mxu0
    %v5775 = vadd.f32 0.0, %v5774
    %5776 = vmatmul.f32.gmra.mxu0 %v5653
    %v5777 = vpop.f32.mrf.mxu0
    %v5778 = vadd.f32 0.0, %v5777
    %5779 = vmatmul.f32.gmra.mxu0 %v5656
    %v5780 = vpop.f32.mrf.mxu0
    %v5781 = vadd.f32 0.0, %v5780
    %5782 = vmatmul.f32.gmra.mxu0 %v5659
    %v5783 = vpop.f32.mrf.mxu0
    %v5784 = vadd.f32 0.0, %v5783
    %5785 = vmatmul.f32.gmra.mxu0 %v5662
    %v5786 = vpop.f32.mrf.mxu0
    %v5787 = vadd.f32 0.0, %v5786
    %5788 = vmatmul.f32.gmra.mxu0 %v5665
    %v5789 = vpop.f32.mrf.mxu0
    %v5790 = vadd.f32 0.0, %v5789
    %5791 = vmatmul.f32.gmra.mxu0 %v5668
    %v5792 = vpop.f32.mrf.mxu0
    %v5793 = vadd.f32 0.0, %v5792
    %5794 = vmatmul.f32.gmra.mxu0 %v5671
    %v5795 = vpop.f32.mrf.mxu0
    %v5796 = vadd.f32 0.0, %v5795
    %5797 = vdwg.mxu0
    %5802 = vrot.lane.b32.xlu0 %v5703, 9
    %v5803 = vpop.permute.xlu0 %5802
    %5804 = vrot.lane.b32.xlu0 %v5706, 9
    %v5805 = vpop.permute.xlu0 %5804
    %5806 = vrot.lane.b32.xlu0 %v5709, 9
    %v5807 = vpop.permute.xlu0 %5806
    %5808 = vrot.lane.b32.xlu0 %v5712, 9
    %v5809 = vpop.permute.xlu0 %5808
    %5818 = vrot.lane.b32.xlu0 %v5715, 18
    %v5819 = vpop.permute.xlu0 %5818
    %5820 = vrot.lane.b32.xlu0 %v5718, 18
    %v5821 = vpop.permute.xlu0 %5820
    %5822 = vrot.lane.b32.xlu0 %v5721, 18
    %v5823 = vpop.permute.xlu0 %5822
    %5824 = vrot.lane.b32.xlu0 %v5724, 18
    %v5825 = vpop.permute.xlu0 %5824
    %5834 = vrot.lane.b32.xlu0 %v5727, 27
    %v5835 = vpop.permute.xlu0 %5834
    %5836 = vrot.lane.b32.xlu0 %v5730, 27
    %v5837 = vpop.permute.xlu0 %5836
    %5838 = vrot.lane.b32.xlu0 %v5733, 27
    %v5839 = vpop.permute.xlu0 %5838
    %5840 = vrot.lane.b32.xlu0 %v5736, 27
    %v5841 = vpop.permute.xlu0 %5840
    %5850 = vrot.lane.b32.xlu0 %v5739, 36
    %v5851 = vpop.permute.xlu0 %5850
    %5852 = vrot.lane.b32.xlu0 %v5742, 36
    %v5853 = vpop.permute.xlu0 %5852
    %5854 = vrot.lane.b32.xlu0 %v5745, 36
    %v5855 = vpop.permute.xlu0 %5854
    %5856 = vrot.lane.b32.xlu0 %v5748, 36
    %v5857 = vpop.permute.xlu0 %5856
    %5866 = vrot.lane.b32.xlu0 %v5751, 45
    %v5867 = vpop.permute.xlu0 %5866
    %5868 = vrot.lane.b32.xlu0 %v5754, 45
    %v5869 = vpop.permute.xlu0 %5868
    %5870 = vrot.lane.b32.xlu0 %v5757, 45
    %v5871 = vpop.permute.xlu0 %5870
    %5872 = vrot.lane.b32.xlu0 %v5760, 45
    %v5873 = vpop.permute.xlu0 %5872
    %5882 = vrot.lane.b32.xlu0 %v5763, 54
    %v5883 = vpop.permute.xlu0 %5882
    %5884 = vrot.lane.b32.xlu0 %v5766, 54
    %v5885 = vpop.permute.xlu0 %5884
    %5886 = vrot.lane.b32.xlu0 %v5769, 54
    %v5887 = vpop.permute.xlu0 %5886
    %5888 = vrot.lane.b32.xlu0 %v5772, 54
    %v5889 = vpop.permute.xlu0 %5888
    %5898 = vrot.lane.b32.xlu0 %v5775, 63
    %v5899 = vpop.permute.xlu0 %5898
    %5900 = vrot.lane.b32.xlu0 %v5778, 63
    %v5901 = vpop.permute.xlu0 %5900
    %5902 = vrot.lane.b32.xlu0 %v5781, 63
    %v5903 = vpop.permute.xlu0 %5902
    %5904 = vrot.lane.b32.xlu0 %v5784, 63
    %v5905 = vpop.permute.xlu0 %5904
    %5914 = vrot.lane.b32.xlu0 %v5787, 72
    %v5915 = vpop.permute.xlu0 %5914
    %5916 = vrot.lane.b32.xlu0 %v5790, 72
    %v5917 = vpop.permute.xlu0 %5916
    %5918 = vrot.lane.b32.xlu0 %v5793, 72
    %v5919 = vpop.permute.xlu0 %5918
    %5920 = vrot.lane.b32.xlu0 %v5796, 72
    %v5921 = vpop.permute.xlu0 %5920
    %v5926 = vsel %vm3348, %v5691, %v5803
    %v5927 = vsel %vm3348, %v5694, %v5805
    %v5928 = vsel %vm3348, %v5697, %v5807
    %v5929 = vsel %vm3348, %v5700, %v5809
    %v5930 = vsel %vm3366, %v5926, %v5819
    %v5931 = vsel %vm3366, %v5927, %v5821
    %v5932 = vsel %vm3366, %v5928, %v5823
    %v5933 = vsel %vm3366, %v5929, %v5825
    %v5934 = vsel %vm4663, %v5930, %v5835
    %v5935 = vsel %vm4663, %v5931, %v5837
    %v5936 = vsel %vm4663, %v5932, %v5839
    %v5937 = vsel %vm4663, %v5933, %v5841
    %v5938 = vsel %vm4672, %v5934, %v5851
    %v5939 = vsel %vm4672, %v5935, %v5853
    %v5940 = vsel %vm4672, %v5936, %v5855
    %v5941 = vsel %vm4672, %v5937, %v5857
    %v5942 = vsel %vm4681, %v5938, %v5867
    %v5943 = vsel %vm4681, %v5939, %v5869
    %v5944 = vsel %vm4681, %v5940, %v5871
    %v5945 = vsel %vm4681, %v5941, %v5873
    %v5946 = vsel %vm4690, %v5942, %v5883
    %v5947 = vsel %vm4690, %v5943, %v5885
    %v5948 = vsel %vm4690, %v5944, %v5887
    %v5949 = vsel %vm4690, %v5945, %v5889
    %v5950 = vsel %vm4699, %v5946, %v5899
    %v5951 = vsel %vm4699, %v5947, %v5901
    %v5952 = vsel %vm4699, %v5948, %v5903
    %v5953 = vsel %vm4699, %v5949, %v5905
    %v5954 = vsel %vm4708, %v5950, %v5915
    %v5955 = vsel %vm4708, %v5951, %v5917
    %v5956 = vsel %vm4708, %v5952, %v5919
    %v5957 = vsel %vm4708, %v5953, %v5921
    %v5959 = vsel %vm4717, %v5954, 0
    %v5962 = vsel %vm4717, %v5955, 0
    %v5965 = vsel %vm4717, %v5956, 0
    %v5968 = vsel %vm4717, %v5957, 0
    %v5971 = vsel %vm4742, %v5491, 0
    %5973 = vmatpush.msra.mxu0 0.0
    %5974 = vmatpush.msra.mxu0 0.0
    %5975 = vmatpush.msra.mxu0 0.0
    %5976 = vmatpush.msra.mxu0 0.0
    %5977 = vmatpush.msra.mxu0 0.0
    %5978 = vmatpush.msra.mxu0 %v5971
    %5979 = vmatpush.msra.mxu0 %v5490
    %5980 = vmatpush.msra.mxu0 %v5489
    %5981 = vmatpush.msra.mxu0 %v5488
    %5982 = vmatpush.msra.mxu0 %v5487
    %5983 = vmatpush.msra.mxu0 %v5486
    %5984 = vmatpush.msra.mxu0 %v5485
    %5985 = vmatpush.msra.mxu0 %v5484
    %5986 = vmatpush.msra.mxu0 %v5483
    %5987 = vmatpush.msra.mxu0 %v5482
    %5988 = vmatpush.msra.mxu0 %v5481
    %5989 = vmatmul.f32.gmra.mxu0 %v5959
    %v5990 = vpop.f32.mrf.mxu0
    %v5991 = vadd.f32 0.0, %v5990
    %5992 = vmatmul.f32.gmra.mxu0 %v5962
    %v5993 = vpop.f32.mrf.mxu0
    %v5994 = vadd.f32 0.0, %v5993
    %5995 = vmatmul.f32.gmra.mxu0 %v5965
    %v5996 = vpop.f32.mrf.mxu0
    %v5997 = vadd.f32 0.0, %v5996
    %5998 = vmatmul.f32.gmra.mxu0 %v5968
    %v5999 = vpop.f32.mrf.mxu0
    %v6000 = vadd.f32 0.0, %v5999
    %6001 = vdwg.mxu0
    %6006 = vrot.lane.b32.xlu0 %v5691, 119
    %v6007 = vpop.permute.xlu0 %6006
    %6008 = vrot.lane.b32.xlu0 %v5694, 119
    %v6009 = vpop.permute.xlu0 %6008
    %6010 = vrot.lane.b32.xlu0 %v5697, 119
    %v6011 = vpop.permute.xlu0 %6010
    %6012 = vrot.lane.b32.xlu0 %v5700, 119
    %v6013 = vpop.permute.xlu0 %6012
    %6018 = vrot.lane.b32.xlu0 %v5715, 9
    %v6019 = vpop.permute.xlu0 %6018
    %6020 = vrot.lane.b32.xlu0 %v5718, 9
    %v6021 = vpop.permute.xlu0 %6020
    %6022 = vrot.lane.b32.xlu0 %v5721, 9
    %v6023 = vpop.permute.xlu0 %6022
    %6024 = vrot.lane.b32.xlu0 %v5724, 9
    %v6025 = vpop.permute.xlu0 %6024
    %6030 = vrot.lane.b32.xlu0 %v5727, 18
    %v6031 = vpop.permute.xlu0 %6030
    %6032 = vrot.lane.b32.xlu0 %v5730, 18
    %v6033 = vpop.permute.xlu0 %6032
    %6034 = vrot.lane.b32.xlu0 %v5733, 18
    %v6035 = vpop.permute.xlu0 %6034
    %6036 = vrot.lane.b32.xlu0 %v5736, 18
    %v6037 = vpop.permute.xlu0 %6036
    %6042 = vrot.lane.b32.xlu0 %v5739, 27
    %v6043 = vpop.permute.xlu0 %6042
    %6044 = vrot.lane.b32.xlu0 %v5742, 27
    %v6045 = vpop.permute.xlu0 %6044
    %6046 = vrot.lane.b32.xlu0 %v5745, 27
    %v6047 = vpop.permute.xlu0 %6046
    %6048 = vrot.lane.b32.xlu0 %v5748, 27
    %v6049 = vpop.permute.xlu0 %6048
    %6054 = vrot.lane.b32.xlu0 %v5751, 36
    %v6055 = vpop.permute.xlu0 %6054
    %6056 = vrot.lane.b32.xlu0 %v5754, 36
    %v6057 = vpop.permute.xlu0 %6056
    %6058 = vrot.lane.b32.xlu0 %v5757, 36
    %v6059 = vpop.permute.xlu0 %6058
    %6060 = vrot.lane.b32.xlu0 %v5760, 36
    %v6061 = vpop.permute.xlu0 %6060
    %6066 = vrot.lane.b32.xlu0 %v5763, 45
    %v6067 = vpop.permute.xlu0 %6066
    %6068 = vrot.lane.b32.xlu0 %v5766, 45
    %v6069 = vpop.permute.xlu0 %6068
    %6070 = vrot.lane.b32.xlu0 %v5769, 45
    %v6071 = vpop.permute.xlu0 %6070
    %6072 = vrot.lane.b32.xlu0 %v5772, 45
    %v6073 = vpop.permute.xlu0 %6072
    %6078 = vrot.lane.b32.xlu0 %v5775, 54
    %v6079 = vpop.permute.xlu0 %6078
    %6080 = vrot.lane.b32.xlu0 %v5778, 54
    %v6081 = vpop.permute.xlu0 %6080
    %6082 = vrot.lane.b32.xlu0 %v5781, 54
    %v6083 = vpop.permute.xlu0 %6082
    %6084 = vrot.lane.b32.xlu0 %v5784, 54
    %v6085 = vpop.permute.xlu0 %6084
    %6090 = vrot.lane.b32.xlu0 %v5787, 63
    %v6091 = vpop.permute.xlu0 %6090
    %6092 = vrot.lane.b32.xlu0 %v5790, 63
    %v6093 = vpop.permute.xlu0 %6092
    %6094 = vrot.lane.b32.xlu0 %v5793, 63
    %v6095 = vpop.permute.xlu0 %6094
    %6096 = vrot.lane.b32.xlu0 %v5796, 63
    %v6097 = vpop.permute.xlu0 %6096
    %v6102 = vsel %vm3348, %v6007, %v5703
    %v6103 = vsel %vm3348, %v6009, %v5706
    %v6104 = vsel %vm3348, %v6011, %v5709
    %v6105 = vsel %vm3348, %v6013, %v5712
    %v6106 = vsel %vm3366, %v6102, %v6019
    %v6107 = vsel %vm3366, %v6103, %v6021
    %v6108 = vsel %vm3366, %v6104, %v6023
    %v6109 = vsel %vm3366, %v6105, %v6025
    %v6110 = vsel %vm4663, %v6106, %v6031
    %v6111 = vsel %vm4663, %v6107, %v6033
    %v6112 = vsel %vm4663, %v6108, %v6035
    %v6113 = vsel %vm4663, %v6109, %v6037
    %v6114 = vsel %vm4672, %v6110, %v6043
    %v6115 = vsel %vm4672, %v6111, %v6045
    %v6116 = vsel %vm4672, %v6112, %v6047
    %v6117 = vsel %vm4672, %v6113, %v6049
    %v6118 = vsel %vm4681, %v6114, %v6055
    %v6119 = vsel %vm4681, %v6115, %v6057
    %v6120 = vsel %vm4681, %v6116, %v6059
    %v6121 = vsel %vm4681, %v6117, %v6061
    %v6122 = vsel %vm4690, %v6118, %v6067
    %v6123 = vsel %vm4690, %v6119, %v6069
    %v6124 = vsel %vm4690, %v6120, %v6071
    %v6125 = vsel %vm4690, %v6121, %v6073
    %v6126 = vsel %vm4699, %v6122, %v6079
    %v6127 = vsel %vm4699, %v6123, %v6081
    %v6128 = vsel %vm4699, %v6124, %v6083
    %v6129 = vsel %vm4699, %v6125, %v6085
    %v6130 = vsel %vm4708, %v6126, %v6091
    %v6131 = vsel %vm4708, %v6127, %v6093
    %v6132 = vsel %vm4708, %v6128, %v6095
    %v6133 = vsel %vm4708, %v6129, %v6097
    %v6135 = vsel %vm4717, %v6130, 0
    %v6138 = vsel %vm4717, %v6131, 0
    %v6141 = vsel %vm4717, %v6132, 0
    %v6144 = vsel %vm4717, %v6133, 0
    %6146 = vmatpush.msra.mxu0 0.0
    %6147 = vmatpush.msra.mxu0 0.0
    %6148 = vmatpush.msra.mxu0 0.0
    %6149 = vmatpush.msra.mxu0 0.0
    %6150 = vmatpush.msra.mxu0 0.0
    %6151 = vmatpush.msra.mxu0 %v5971
    %6152 = vmatpush.msra.mxu0 %v5490
    %6153 = vmatpush.msra.mxu0 %v5489
    %6154 = vmatpush.msra.mxu0 %v5488
    %6155 = vmatpush.msra.mxu0 %v5487
    %6156 = vmatpush.msra.mxu0 %v5486
    %6157 = vmatpush.msra.mxu0 %v5485
    %6158 = vmatpush.msra.mxu0 %v5484
    %6159 = vmatpush.msra.mxu0 %v5483
    %6160 = vmatpush.msra.mxu0 %v5482
    %6161 = vmatpush.msra.mxu0 %v5481
    %6162 = vmatmul.f32.gmra.mxu0 %v6135
    %v6163 = vpop.f32.mrf.mxu0
    %v6164 = vadd.f32 0.0, %v6163
    %6165 = vmatmul.f32.gmra.mxu0 %v6138
    %v6166 = vpop.f32.mrf.mxu0
    %v6167 = vadd.f32 0.0, %v6166
    %6168 = vmatmul.f32.gmra.mxu0 %v6141
    %v6169 = vpop.f32.mrf.mxu0
    %v6170 = vadd.f32 0.0, %v6169
    %6171 = vmatmul.f32.gmra.mxu0 %v6144
    %v6172 = vpop.f32.mrf.mxu0
    %v6173 = vadd.f32 0.0, %v6172
    %6174 = vdwg.mxu0
    %6179 = vrot.lane.b32.xlu0 %v6164, 36
    %v6180 = vpop.permute.xlu0 %6179
    %6181 = vrot.lane.b32.xlu0 %v6167, 36
    %v6182 = vpop.permute.xlu0 %6181
    %6183 = vrot.lane.b32.xlu0 %v6170, 36
    %v6184 = vpop.permute.xlu0 %6183
    %6185 = vrot.lane.b32.xlu0 %v6173, 36
    %v6186 = vpop.permute.xlu0 %6185
    %v6191 = vsel %vm4672, %v5991, %v6180
    %v6192 = vsel %vm4672, %v5994, %v6182
    %v6193 = vsel %vm4672, %v5997, %v6184
    %v6194 = vsel %vm4672, %v6000, %v6186
    %s6195 = sld [smem:[#allocation5 + $0x3]]
    %v6196 = vsel %vm4708, %v6191, 0.0
    %6197 = vadd.xlane.f32.xlu0 %v6196
    %v6198 = vpop.xlane.xlu0 %6197
    %v6199 = vsel %vm4708, %v6192, 0.0
    %6200 = vadd.xlane.f32.xlu0 %v6199
    %v6201 = vpop.xlane.xlu0 %6200
    %v6202 = vsel %vm4708, %v6193, 0.0
    %6203 = vadd.xlane.f32.xlu0 %v6202
    %v6204 = vpop.xlane.xlu0 %6203
    %v6205 = vsel %vm4708, %v6194, 0.0
    %6206 = vadd.xlane.f32.xlu0 %v6205
    %v6207 = vpop.xlane.xlu0 %6206
    %v6208 = vmul.f32 %v6198, 0.013888889
    %v6209 = vmul.f32 %v6201, 0.013888889
    %v6210 = vmul.f32 %v6204, 0.013888889
    %v6211 = vmul.f32 %v6207, 0.013888889
    %v6212 = vsub.f32 %v6191, %v6208
    %v6213 = vsub.f32 %v6192, %v6209
    %v6214 = vsub.f32 %v6193, %v6210
    %v6215 = vsub.f32 %v6194, %v6211
    %v6216 = vmul.f32 %v6212, %v6212
    %v6217 = vmul.f32 %v6213, %v6213
    %v6218 = vmul.f32 %v6214, %v6214
    %v6219 = vmul.f32 %v6215, %v6215
    %v6220 = vsel %vm4708, %v6216, 0.0
    %6221 = vadd.xlane.f32.xlu0 %v6220
    %v6222 = vpop.xlane.xlu0 %6221
    %v6223 = vsel %vm4708, %v6217, 0.0
    %6224 = vadd.xlane.f32.xlu0 %v6223
    %v6225 = vpop.xlane.xlu0 %6224
    %v6226 = vsel %vm4708, %v6218, 0.0
    %6227 = vadd.xlane.f32.xlu0 %v6226
    %v6228 = vpop.xlane.xlu0 %6227
    %v6229 = vsel %vm4708, %v6219, 0.0
    %6230 = vadd.xlane.f32.xlu0 %v6229
    %v6231 = vpop.xlane.xlu0 %6230
    %v6232 = vmul.f32 %v6222, 0.013888889
    %v6233 = vmul.f32 %v6225, 0.013888889
    %v6234 = vmul.f32 %v6228, 0.013888889
    %v6235 = vmul.f32 %v6231, 0.013888889
    %v6236 = vadd.f32 %v6232, 1e-05
    %v6237 = vadd.f32 %v6233, 1e-05
    %v6238 = vadd.f32 %v6234, 1e-05
    %v6239 = vadd.f32 %v6235, 1e-05
    %v6240 = vrsqrt.pop %v6236
    %v6241 = vmul.f32 %v6240, %v6236
    %v6242 = vmul.f32 %v6241, %v6240
    %v6243 = vmul.f32 0.5, %v6242
    %v6244 = vsub.f32 1.5, %v6243
    %v6245 = vmul.f32 %v6240, %v6244
    %vm6246 = vweird.f32 %v6236
    %vm6247 = vweird.f32 %v6240
    %vm6248 = vmor %vm6246, %vm6247
    %v6249 = vsel %vm6248, %v6240, %v6245
    %v6250 = vrsqrt.pop %v6237
    %v6251 = vmul.f32 %v6250, %v6237
    %v6252 = vmul.f32 %v6251, %v6250
    %v6253 = vmul.f32 0.5, %v6252
    %v6254 = vsub.f32 1.5, %v6253
    %v6255 = vmul.f32 %v6250, %v6254
    %vm6256 = vweird.f32 %v6237
    %vm6257 = vweird.f32 %v6250
    %vm6258 = vmor %vm6256, %vm6257
    %v6259 = vsel %vm6258, %v6250, %v6255
    %v6260 = vrsqrt.pop %v6238
    %v6261 = vmul.f32 %v6260, %v6238
    %v6262 = vmul.f32 %v6261, %v6260
    %v6263 = vmul.f32 0.5, %v6262
    %v6264 = vsub.f32 1.5, %v6263
    %v6265 = vmul.f32 %v6260, %v6264
    %vm6266 = vweird.f32 %v6238
    %vm6267 = vweird.f32 %v6260
    %vm6268 = vmor %vm6266, %vm6267
    %v6269 = vsel %vm6268, %v6260, %v6265
    %v6270 = vrsqrt.pop %v6239
    %v6271 = vmul.f32 %v6270, %v6239
    %v6272 = vmul.f32 %v6271, %v6270
    %v6273 = vmul.f32 0.5, %v6272
    %v6274 = vsub.f32 1.5, %v6273
    %v6275 = vmul.f32 %v6270, %v6274
    %vm6276 = vweird.f32 %v6239
    %vm6277 = vweird.f32 %v6270
    %vm6278 = vmor %vm6276, %vm6277
    %v6279 = vsel %vm6278, %v6270, %v6275
    %v6280 = vmul.f32 %v6212, %v6249
    %v6281 = vmul.f32 %v6213, %v6259
    %v6282 = vmul.f32 %v6214, %v6269
    %v6283 = vmul.f32 %v6215, %v6279
    %v6284 = vld [vmem:[%s13] sm:$0xff]
    %v6285 = vld [vmem:[%s13 + $0x8] sm:$0xff]
    %v6286 = vld [vmem:[%s13 + $0x10] sm:$0xff]
    %v6287 = vld [vmem:[%s13 + $0x18] sm:$0xff]
    %6289 = vset.pattern.permute.xlu0 0
    %6290 = vperm.xlu0 %6289, %v6284
    %v6291 = vpop.permute.xlu0 %6290
    %6294 = vset.pattern.permute.xlu0 0
    %6295 = vperm.xlu0 %6294, %v6285
    %v6296 = vpop.permute.xlu0 %6295
    %6299 = vset.pattern.permute.xlu0 0
    %6300 = vperm.xlu0 %6299, %v6286
    %v6301 = vpop.permute.xlu0 %6300
    %6304 = vset.pattern.permute.xlu0 0
    %6305 = vperm.xlu0 %6304, %v6287
    %v6306 = vpop.permute.xlu0 %6305
    %v6308 = vmul.f32 %v6280, %v6291
    %v6309 = vmul.f32 %v6281, %v6296
    %v6310 = vmul.f32 %v6282, %v6301
    %v6311 = vmul.f32 %v6283, %v6306
    %v6312 = vld [vmem:[%s14] sm:$0xff]
    %v6313 = vld [vmem:[%s14 + $0x8] sm:$0xff]
    %v6314 = vld [vmem:[%s14 + $0x10] sm:$0xff]
    %v6315 = vld [vmem:[%s14 + $0x18] sm:$0xff]
    %6317 = vset.pattern.permute.xlu0 0
    %6318 = vperm.xlu0 %6317, %v6312
    %v6319 = vpop.permute.xlu0 %6318
    %6322 = vset.pattern.permute.xlu0 0
    %6323 = vperm.xlu0 %6322, %v6313
    %v6324 = vpop.permute.xlu0 %6323
    %6327 = vset.pattern.permute.xlu0 0
    %6328 = vperm.xlu0 %6327, %v6314
    %v6329 = vpop.permute.xlu0 %6328
    %6332 = vset.pattern.permute.xlu0 0
    %6333 = vperm.xlu0 %6332, %v6315
    %v6334 = vpop.permute.xlu0 %6333
    %v6336 = vadd.f32 %v6308, %v6319
    %v6337 = vadd.f32 %v6309, %v6324
    %v6338 = vadd.f32 %v6310, %v6329
    %v6339 = vadd.f32 %v6311, %v6334
    %vm6340 = vcmp.gt.f32.partialorder %v6336, 0.0
    %vm6341 = vcmp.gt.f32.partialorder %v6337, 0.0
    %vm6342 = vcmp.gt.f32.partialorder %v6338, 0.0
    %vm6343 = vcmp.gt.f32.partialorder %v6339, 0.0
    %v6344 = vstv %s6195
    %v6345 = vmul.f32 %v6344, %v6336
    %v6346 = vmul.f32 %v6344, %v6337
    %v6347 = vmul.f32 %v6344, %v6338
    %v6348 = vmul.f32 %v6344, %v6339
    %v6349 = vsel %vm6340, %v6336, %v6345
    %v6350 = vsel %vm6341, %v6337, %v6346
    %v6351 = vsel %vm6342, %v6338, %v6347
    %v6352 = vsel %vm6343, %v6339, %v6348
    %s6353 = smul.u32 4, 41
    %s6354 = smul.u32 %s6353, 2
    %s6355 = sshll.u32 %s6354, 4
    %6356 = dma.done [#allocation4], %s6355
    %v6357 = vld [vmem:[#allocation2] sm:$0xff]
    %v6358 = vld [vmem:[#allocation2 + $0x8] sm:$0xff]
    %v6359 = vld [vmem:[#allocation2 + $0x10] sm:$0xff]
    %v6360 = vld [vmem:[#allocation2 + $0x18] sm:$0xff]
    %v6361 = vld [vmem:[#allocation2 + $0x20] sm:$0xff]
    %v6362 = vld [vmem:[#allocation2 + $0x28] sm:$0xff]
    %v6363 = vld [vmem:[#allocation2 + $0x30] sm:$0xff]
    %v6364 = vld [vmem:[#allocation2 + $0x38] sm:$0xff]
    %v6365 = vld [vmem:[#allocation2 + $0x40] sm:$0xff]
    %v6366 = vld [vmem:[#allocation2 + $0x48] sm:$0xff]
    %v6367 = vld [vmem:[#allocation2 + $0x50] sm:$0xff]
    %v6368 = vld [vmem:[#allocation2 + $0x58] sm:$0xff]
    %v6369 = vld [vmem:[#allocation2 + $0x60] sm:$0xff]
    %v6370 = vld [vmem:[#allocation2 + $0x68] sm:$0xff]
    %v6371 = vld [vmem:[#allocation2 + $0x70] sm:$0xff]
    %v6372 = vld [vmem:[#allocation2 + $0x78] sm:$0xff]
    %v6373 = vld [vmem:[#allocation2 + $0x80] sm:$0xff]
    %v6374 = vld [vmem:[#allocation2 + $0x88] sm:$0xff]
    %v6375 = vld [vmem:[#allocation2 + $0x90] sm:$0xff]
    %v6376 = vld [vmem:[#allocation2 + $0x98] sm:$0xff]
    %v6377 = vld [vmem:[#allocation2 + $0xa0] sm:$0xff]
    %v6378 = vld [vmem:[#allocation2 + $0xa8] sm:$0xff]
    %v6379 = vld [vmem:[#allocation2 + $0xb0] sm:$0xff]
    %v6380 = vld [vmem:[#allocation2 + $0xb8] sm:$0xff]
    %v6381 = vld [vmem:[#allocation2 + $0xc0] sm:$0xff]
    %v6382 = vld [vmem:[#allocation2 + $0xc8] sm:$0xff]
    %v6383 = vld [vmem:[#allocation2 + $0xd0] sm:$0xff]
    %v6384 = vld [vmem:[#allocation2 + $0xd8] sm:$0xff]
    %v6385 = vld [vmem:[#allocation2 + $0xe0] sm:$0xff]
    %v6386 = vld [vmem:[#allocation2 + $0xe8] sm:$0xff]
    %v6387 = vld [vmem:[#allocation2 + $0xf0] sm:$0xff]
    %v6388 = vld [vmem:[#allocation2 + $0xf8] sm:$0xff]
    %v6389 = vld [vmem:[#allocation2 + $0x100] sm:$0xff]
    %v6390 = vld [vmem:[#allocation2 + $0x108] sm:$0xff]
    %v6391 = vld [vmem:[#allocation2 + $0x110] sm:$0xff]
    %v6392 = vld [vmem:[#allocation2 + $0x118] sm:$0xff]
    %v6393 = vld [vmem:[#allocation2 + $0x120] sm:$0xff]
    %v6394 = vld [vmem:[#allocation2 + $0x128] sm:$0xff]
    %v6395 = vld [vmem:[#allocation2 + $0x130] sm:$0xff]
    %v6396 = vld [vmem:[#allocation2 + $0x138] sm:$0xff]
    %v6397 = vld [vmem:[#allocation2 + $0x140] sm:$0x33]
    %v6398 = vunpack.c.l.bf16 %v6357
    %v6399 = vunpack.c.h.bf16 %v6357
    %v6400 = vunpack.c.l.bf16 %v6358
    %v6401 = vunpack.c.h.bf16 %v6358
    %v6402 = vunpack.c.l.bf16 %v6359
    %v6403 = vunpack.c.h.bf16 %v6359
    %v6404 = vunpack.c.l.bf16 %v6360
    %v6405 = vunpack.c.h.bf16 %v6360
    %v6406 = vunpack.c.l.bf16 %v6361
    %v6407 = vunpack.c.h.bf16 %v6361
    %v6408 = vunpack.c.l.bf16 %v6362
    %v6409 = vunpack.c.h.bf16 %v6362
    %v6410 = vunpack.c.l.bf16 %v6363
    %v6411 = vunpack.c.h.bf16 %v6363
    %v6412 = vunpack.c.l.bf16 %v6364
    %v6413 = vunpack.c.h.bf16 %v6364
    %v6414 = vunpack.c.l.bf16 %v6365
    %v6415 = vunpack.c.h.bf16 %v6365
    %v6416 = vunpack.c.l.bf16 %v6366
    %v6417 = vunpack.c.h.bf16 %v6366
    %v6418 = vunpack.c.l.bf16 %v6367
    %v6419 = vunpack.c.h.bf16 %v6367
    %v6420 = vunpack.c.l.bf16 %v6368
    %v6421 = vunpack.c.h.bf16 %v6368
    %v6422 = vunpack.c.l.bf16 %v6369
    %v6423 = vunpack.c.h.bf16 %v6369
    %v6424 = vunpack.c.l.bf16 %v6370
    %v6425 = vunpack.c.h.bf16 %v6370
    %v6426 = vunpack.c.l.bf16 %v6371
    %v6427 = vunpack.c.h.bf16 %v6371
    %v6428 = vunpack.c.l.bf16 %v6372
    %v6429 = vunpack.c.h.bf16 %v6372
    %v6430 = vunpack.c.l.bf16 %v6373
    %v6431 = vunpack.c.h.bf16 %v6373
    %v6432 = vunpack.c.l.bf16 %v6374
    %v6433 = vunpack.c.h.bf16 %v6374
    %v6434 = vunpack.c.l.bf16 %v6375
    %v6435 = vunpack.c.h.bf16 %v6375
    %v6436 = vunpack.c.l.bf16 %v6376
    %v6437 = vunpack.c.h.bf16 %v6376
    %v6438 = vunpack.c.l.bf16 %v6377
    %v6439 = vunpack.c.h.bf16 %v6377
    %v6440 = vunpack.c.l.bf16 %v6378
    %v6441 = vunpack.c.h.bf16 %v6378
    %v6442 = vunpack.c.l.bf16 %v6379
    %v6443 = vunpack.c.h.bf16 %v6379
    %v6444 = vunpack.c.l.bf16 %v6380
    %v6445 = vunpack.c.h.bf16 %v6380
    %v6446 = vunpack.c.l.bf16 %v6381
    %v6447 = vunpack.c.h.bf16 %v6381
    %v6448 = vunpack.c.l.bf16 %v6382
    %v6449 = vunpack.c.h.bf16 %v6382
    %v6450 = vunpack.c.l.bf16 %v6383
    %v6451 = vunpack.c.h.bf16 %v6383
    %v6452 = vunpack.c.l.bf16 %v6384
    %v6453 = vunpack.c.h.bf16 %v6384
    %v6454 = vunpack.c.l.bf16 %v6385
    %v6455 = vunpack.c.h.bf16 %v6385
    %v6456 = vunpack.c.l.bf16 %v6386
    %v6457 = vunpack.c.h.bf16 %v6386
    %v6458 = vunpack.c.l.bf16 %v6387
    %v6459 = vunpack.c.h.bf16 %v6387
    %v6460 = vunpack.c.l.bf16 %v6388
    %v6461 = vunpack.c.h.bf16 %v6388
    %v6462 = vunpack.c.l.bf16 %v6389
    %v6463 = vunpack.c.h.bf16 %v6389
    %v6464 = vunpack.c.l.bf16 %v6390
    %v6465 = vunpack.c.h.bf16 %v6390
    %v6466 = vunpack.c.l.bf16 %v6391
    %v6467 = vunpack.c.h.bf16 %v6391
    %v6468 = vunpack.c.l.bf16 %v6392
    %v6469 = vunpack.c.h.bf16 %v6392
    %v6470 = vunpack.c.l.bf16 %v6393
    %v6471 = vunpack.c.h.bf16 %v6393
    %v6472 = vunpack.c.l.bf16 %v6394
    %v6473 = vunpack.c.h.bf16 %v6394
    %v6474 = vunpack.c.l.bf16 %v6395
    %v6475 = vunpack.c.h.bf16 %v6395
    %v6476 = vunpack.c.l.bf16 %v6396
    %v6477 = vunpack.c.h.bf16 %v6396
    %v6478 = vunpack.c.l.bf16 %v6397
    %v6479 = vunpack.c.h.bf16 %v6397
    %v6480 = vld [vmem:[%s15] sm:$0xf]
    %v6481 = vld [vmem:[%s15 + $0x4] sm:$0xf]
    %v6482 = vld [vmem:[%s15 + $0x8] sm:$0xf]
    %v6483 = vld [vmem:[%s15 + $0xc] sm:$0x3]
    %v6484 = vunpack.c.l.bf16 %v6480
    %v6485 = vunpack.c.l.bf16 %v6481
    %v6486 = vunpack.c.l.bf16 %v6482
    %v6487 = vunpack.c.l.bf16 %v6483
    %vm6488 = vcmask 261120
    %v6490 = vsel %vm6488, %v6484, 0
    %v6493 = vsel %vm6488, %v6485, 0
    %v6496 = vsel %vm6488, %v6486, 0
    %v6499 = vsel %vm6488, %v6487, 0
    %6501 = vmatpush.msra.mxu0 0.0
    %6502 = vmatpush.msra.mxu0 0.0
    %6503 = vmatpush.msra.mxu0 0.0
    %6504 = vmatpush.msra.mxu0 0.0
    %6505 = vmatpush.msra.mxu0 0.0
    %6506 = vmatpush.msra.mxu0 0.0
    %6507 = vmatpush.msra.mxu0 0.0
    %6508 = vmatpush.msra.mxu0 0.0
    %6509 = vmatpush.msra.mxu0 0.0
    %6510 = vmatpush.msra.mxu0 0.0
    %6511 = vmatpush.msra.mxu0 0.0
    %6512 = vmatpush.msra.mxu0 0.0
    %6513 = vmatpush.msra.mxu0 %v6352
    %6514 = vmatpush.msra.mxu0 %v6351
    %6515 = vmatpush.msra.mxu0 %v6350
    %6516 = vmatpush.msra.mxu0 %v6349
    %6517 = vmatmul.f32.gmra.mxu0 %v6490
    %v6518 = vpop.f32.mrf.mxu0
    %v6519 = vadd.f32 0.0, %v6518
    %6520 = vmatmul.f32.gmra.mxu0 %v6493
    %v6521 = vpop.f32.mrf.mxu0
    %v6522 = vadd.f32 0.0, %v6521
    %6523 = vmatmul.f32.gmra.mxu0 %v6496
    %v6524 = vpop.f32.mrf.mxu0
    %v6525 = vadd.f32 0.0, %v6524
    %6526 = vmatmul.f32.gmra.mxu0 %v6499
    %v6527 = vpop.f32.mrf.mxu0
    %v6528 = vadd.f32 0.0, %v6527
    %6529 = vdwg.mxu0
    %v6531 = vrot.slane %v6519, 3
    %6532 = vrot.lane.b32.xlu0 %v6531, 36
    %v6533 = vpop.permute.xlu0 %6532
    %vm6536 = vcmask 1041408
    %v6537 = vrot.slane %v6519, 6
    %v6538 = vrot.slane %v6522, 6
    %v6539 = vsel %vm6536, %v6537, %v6538
    %6540 = vrot.lane.b32.xlu0 %v6539, 72
    %v6541 = vpop.permute.xlu0 %6540
    %v6543 = vrot.slane %v6522, 1
    %6544 = vrot.lane.b32.xlu0 %v6543, 108
    %v6545 = vpop.permute.xlu0 %6544
    %v6547 = vrot.slane %v6522, 4
    %6548 = vrot.lane.b32.xlu0 %v6547, 16
    %v6549 = vpop.permute.xlu0 %6548
    %v6552 = vrot.slane %v6522, 7
    %v6553 = vrot.slane %v6525, 7
    %v6554 = vsel %vm4742, %v6552, %v6553
    %6555 = vrot.lane.b32.xlu0 %v6554, 52
    %v6556 = vpop.permute.xlu0 %6555
    %v6558 = vrot.slane %v6525, 2
    %6559 = vrot.lane.b32.xlu0 %v6558, 88
    %v6560 = vpop.permute.xlu0 %6559
    %v6562 = vrot.slane %v6525, 5
    %6563 = vrot.lane.b32.xlu0 %v6562, 124
    %v6564 = vpop.permute.xlu0 %6563
    %6567 = vrot.lane.b32.xlu0 %v6528, 32
    %v6568 = vpop.permute.xlu0 %6567
    %v6570 = vsel %vm4672, %v6519, %v6533
    %v6571 = vsel %vm4708, %v6570, %v6541
    %vm6572 = vcmask 883712
    %v6573 = vsel %vm6572, %v6571, %v6545
    %vm6574 = vcmask 130048
    %v6575 = vsel %vm6574, %v6545, %v6549
    %vm6576 = vcmask 424960
    %v6577 = vsel %vm6576, %v6575, %v6556
    %vm6578 = vcmask 719872
    %v6579 = vsel %vm6578, %v6577, %v6560
    %vm6580 = vcmask 1014784
    %v6581 = vsel %vm6580, %v6579, %v6564
    %v6582 = vsel %vm6488, %v6564, %v6568
    %vm6583 = vcmask 556032
    %v6585 = vsel %vm6583, %v6582, 0
    %vm6587 = vcmask 1043456
    %v6589 = vsel %vm6587, %v6478, 0
    %v6592 = vsel %vm6587, %v6479, 0
    %6594 = vmatpush.msra.mxu0 %v6428
    %6595 = vmatpush.msra.mxu0 %v6426
    %6596 = vmatpush.msra.mxu0 %v6424
    %6597 = vmatpush.msra.mxu0 %v6422
    %6598 = vmatpush.msra.mxu0 %v6420
    %6599 = vmatpush.msra.mxu0 %v6418
    %6600 = vmatpush.msra.mxu0 %v6416
    %6601 = vmatpush.msra.mxu0 %v6414
    %6602 = vmatpush.msra.mxu0 %v6412
    %6603 = vmatpush.msra.mxu0 %v6410
    %6604 = vmatpush.msra.mxu0 %v6408
    %6605 = vmatpush.msra.mxu0 %v6406
    %6606 = vmatpush.msra.mxu0 %v6404
    %6607 = vmatpush.msra.mxu0 %v6402
    %6608 = vmatpush.msra.mxu0 %v6400
    %6609 = vmatpush.msra.mxu0 %v6398
    %6610 = vmatmul.f32.gmra.mxu0 %v6573
    %v6611 = vpop.f32.mrf.mxu0
    %v6612 = vadd.f32 0.0, %v6611
    %6613 = vdwg.mxu0
    %6614 = vmatpush.msra.mxu0 %v6460
    %6615 = vmatpush.msra.mxu0 %v6458
    %6616 = vmatpush.msra.mxu0 %v6456
    %6617 = vmatpush.msra.mxu0 %v6454
    %6618 = vmatpush.msra.mxu0 %v6452
    %6619 = vmatpush.msra.mxu0 %v6450
    %6620 = vmatpush.msra.mxu0 %v6448
    %6621 = vmatpush.msra.mxu0 %v6446
    %6622 = vmatpush.msra.mxu0 %v6444
    %6623 = vmatpush.msra.mxu0 %v6442
    %6624 = vmatpush.msra.mxu0 %v6440
    %6625 = vmatpush.msra.mxu0 %v6438
    %6626 = vmatpush.msra.mxu0 %v6436
    %6627 = vmatpush.msra.mxu0 %v6434
    %6628 = vmatpush.msra.mxu0 %v6432
    %6629 = vmatpush.msra.mxu0 %v6430
    %6630 = vmatmul.f32.gmra.mxu0 %v6581
    %v6631 = vpop.f32.mrf.mxu0
    %v6632 = vadd.f32 %v6612, %v6631
    %6633 = vdwg.mxu0
    %6634 = vmatpush.msra.mxu0 0.0
    %6635 = vmatpush.msra.mxu0 0.0
    %6636 = vmatpush.msra.mxu0 0.0
    %6637 = vmatpush.msra.mxu0 0.0
    %6638 = vmatpush.msra.mxu0 0.0
    %6639 = vmatpush.msra.mxu0 0.0
    %6640 = vmatpush.msra.mxu0 0.0
    %6641 = vmatpush.msra.mxu0 %v6589
    %6642 = vmatpush.msra.mxu0 %v6476
    %6643 = vmatpush.msra.mxu0 %v6474
    %6644 = vmatpush.msra.mxu0 %v6472
    %6645 = vmatpush.msra.mxu0 %v6470
    %6646 = vmatpush.msra.mxu0 %v6468
    %6647 = vmatpush.msra.mxu0 %v6466
    %6648 = vmatpush.msra.mxu0 %v6464
    %6649 = vmatpush.msra.mxu0 %v6462
    %6650 = vmatmul.f32.gmra.mxu0 %v6585
    %v6651 = vpop.f32.mrf.mxu0
    %v6652 = vadd.f32 %v6632, %v6651
    %6653 = vdwg.mxu0
    %6654 = vmatpush.msra.mxu0 %v6429
    %6655 = vmatpush.msra.mxu0 %v6427
    %6656 = vmatpush.msra.mxu0 %v6425
    %6657 = vmatpush.msra.mxu0 %v6423
    %6658 = vmatpush.msra.mxu0 %v6421
    %6659 = vmatpush.msra.mxu0 %v6419
    %6660 = vmatpush.msra.mxu0 %v6417
    %6661 = vmatpush.msra.mxu0 %v6415
    %6662 = vmatpush.msra.mxu0 %v6413
    %6663 = vmatpush.msra.mxu0 %v6411
    %6664 = vmatpush.msra.mxu0 %v6409
    %6665 = vmatpush.msra.mxu0 %v6407
    %6666 = vmatpush.msra.mxu0 %v6405
    %6667 = vmatpush.msra.mxu0 %v6403
    %6668 = vmatpush.msra.mxu0 %v6401
    %6669 = vmatpush.msra.mxu0 %v6399
    %6670 = vmatmul.f32.gmra.mxu0 %v6573
    %v6671 = vpop.f32.mrf.mxu0
    %v6672 = vadd.f32 0.0, %v6671
    %6673 = vdwg.mxu0
    %6674 = vmatpush.msra.mxu0 %v6461
    %6675 = vmatpush.msra.mxu0 %v6459
    %6676 = vmatpush.msra.mxu0 %v6457
    %6677 = vmatpush.msra.mxu0 %v6455
    %6678 = vmatpush.msra.mxu0 %v6453
    %6679 = vmatpush.msra.mxu0 %v6451
    %6680 = vmatpush.msra.mxu0 %v6449
    %6681 = vmatpush.msra.mxu0 %v6447
    %6682 = vmatpush.msra.mxu0 %v6445
    %6683 = vmatpush.msra.mxu0 %v6443
    %6684 = vmatpush.msra.mxu0 %v6441
    %6685 = vmatpush.msra.mxu0 %v6439
    %6686 = vmatpush.msra.mxu0 %v6437
    %6687 = vmatpush.msra.mxu0 %v6435
    %6688 = vmatpush.msra.mxu0 %v6433
    %6689 = vmatpush.msra.mxu0 %v6431
    %6690 = vmatmul.f32.gmra.mxu0 %v6581
    %v6691 = vpop.f32.mrf.mxu0
    %v6692 = vadd.f32 %v6672, %v6691
    %6693 = vdwg.mxu0
    %6694 = vmatpush.msra.mxu0 0.0
    %6695 = vmatpush.msra.mxu0 0.0
    %6696 = vmatpush.msra.mxu0 0.0
    %6697 = vmatpush.msra.mxu0 0.0
    %6698 = vmatpush.msra.mxu0 0.0
    %6699 = vmatpush.msra.mxu0 0.0
    %6700 = vmatpush.msra.mxu0 0.0
    %6701 = vmatpush.msra.mxu0 %v6592
    %6702 = vmatpush.msra.mxu0 %v6477
    %6703 = vmatpush.msra.mxu0 %v6475
    %6704 = vmatpush.msra.mxu0 %v6473
    %6705 = vmatpush.msra.mxu0 %v6471
    %6706 = vmatpush.msra.mxu0 %v6469
    %6707 = vmatpush.msra.mxu0 %v6467
    %6708 = vmatpush.msra.mxu0 %v6465
    %6709 = vmatpush.msra.mxu0 %v6463
    %6710 = vmatmul.f32.gmra.mxu0 %v6585
    %v6711 = vpop.f32.mrf.mxu0
    %v6712 = vadd.f32 %v6692, %v6711
    %6713 = vdwg.mxu0
    %6714 = vrot.lane.b32.xlu0 %v6519, 92
    %v6715 = vpop.permute.xlu0 %6714
    %6718 = vrot.lane.b32.xlu0 %v6539, 36
    %v6719 = vpop.permute.xlu0 %6718
    %6721 = vrot.lane.b32.xlu0 %v6543, 72
    %v6722 = vpop.permute.xlu0 %6721
    %6724 = vrot.lane.b32.xlu0 %v6547, 108
    %v6725 = vpop.permute.xlu0 %6724
    %6727 = vrot.lane.b32.xlu0 %v6554, 16
    %v6728 = vpop.permute.xlu0 %6727
    %6730 = vrot.lane.b32.xlu0 %v6558, 52
    %v6731 = vpop.permute.xlu0 %6730
    %6733 = vrot.lane.b32.xlu0 %v6562, 88
    %v6734 = vpop.permute.xlu0 %6733
    %6736 = vrot.lane.b32.xlu0 %v6528, 124
    %v6737 = vpop.permute.xlu0 %6736
    %v6739 = vsel %vm4672, %v6715, %v6531
    %v6740 = vsel %vm4708, %v6739, %v6719
    %v6741 = vsel %vm6572, %v6740, %v6722
    %v6742 = vsel %vm6574, %v6722, %v6725
    %v6743 = vsel %vm6576, %v6742, %v6728
    %v6744 = vsel %vm6578, %v6743, %v6731
    %v6745 = vsel %vm6580, %v6744, %v6734
    %v6746 = vsel %vm6488, %v6734, %v6737
    %v6748 = vsel %vm6583, %v6746, 0
    %6750 = vmatpush.msra.mxu0 %v6428
    %6751 = vmatpush.msra.mxu0 %v6426
    %6752 = vmatpush.msra.mxu0 %v6424
    %6753 = vmatpush.msra.mxu0 %v6422
    %6754 = vmatpush.msra.mxu0 %v6420
    %6755 = vmatpush.msra.mxu0 %v6418
    %6756 = vmatpush.msra.mxu0 %v6416
    %6757 = vmatpush.msra.mxu0 %v6414
    %6758 = vmatpush.msra.mxu0 %v6412
    %6759 = vmatpush.msra.mxu0 %v6410
    %6760 = vmatpush.msra.mxu0 %v6408
    %6761 = vmatpush.msra.mxu0 %v6406
    %6762 = vmatpush.msra.mxu0 %v6404
    %6763 = vmatpush.msra.mxu0 %v6402
    %6764 = vmatpush.msra.mxu0 %v6400
    %6765 = vmatpush.msra.mxu0 %v6398
    %6766 = vmatmul.f32.gmra.mxu0 %v6741
    %v6767 = vpop.f32.mrf.mxu0
    %v6768 = vadd.f32 0.0, %v6767
    %6769 = vdwg.mxu0
    %6770 = vmatpush.msra.mxu0 %v6460
    %6771 = vmatpush.msra.mxu0 %v6458
    %6772 = vmatpush.msra.mxu0 %v6456
    %6773 = vmatpush.msra.mxu0 %v6454
    %6774 = vmatpush.msra.mxu0 %v6452
    %6775 = vmatpush.msra.mxu0 %v6450
    %6776 = vmatpush.msra.mxu0 %v6448
    %6777 = vmatpush.msra.mxu0 %v6446
    %6778 = vmatpush.msra.mxu0 %v6444
    %6779 = vmatpush.msra.mxu0 %v6442
    %6780 = vmatpush.msra.mxu0 %v6440
    %6781 = vmatpush.msra.mxu0 %v6438
    %6782 = vmatpush.msra.mxu0 %v6436
    %6783 = vmatpush.msra.mxu0 %v6434
    %6784 = vmatpush.msra.mxu0 %v6432
    %6785 = vmatpush.msra.mxu0 %v6430
    %6786 = vmatmul.f32.gmra.mxu0 %v6745
    %v6787 = vpop.f32.mrf.mxu0
    %v6788 = vadd.f32 %v6768, %v6787
    %6789 = vdwg.mxu0
    %6790 = vmatpush.msra.mxu0 0.0
    %6791 = vmatpush.msra.mxu0 0.0
    %6792 = vmatpush.msra.mxu0 0.0
    %6793 = vmatpush.msra.mxu0 0.0
    %6794 = vmatpush.msra.mxu0 0.0
    %6795 = vmatpush.msra.mxu0 0.0
    %6796 = vmatpush.msra.mxu0 0.0
    %6797 = vmatpush.msra.mxu0 %v6589
    %6798 = vmatpush.msra.mxu0 %v6476
    %6799 = vmatpush.msra.mxu0 %v6474
    %6800 = vmatpush.msra.mxu0 %v6472
    %6801 = vmatpush.msra.mxu0 %v6470
    %6802 = vmatpush.msra.mxu0 %v6468
    %6803 = vmatpush.msra.mxu0 %v6466
    %6804 = vmatpush.msra.mxu0 %v6464
    %6805 = vmatpush.msra.mxu0 %v6462
    %6806 = vmatmul.f32.gmra.mxu0 %v6748
    %v6807 = vpop.f32.mrf.mxu0
    %v6808 = vadd.f32 %v6788, %v6807
    %6809 = vdwg.mxu0
    %6810 = vmatpush.msra.mxu0 %v6429
    %6811 = vmatpush.msra.mxu0 %v6427
    %6812 = vmatpush.msra.mxu0 %v6425
    %6813 = vmatpush.msra.mxu0 %v6423
    %6814 = vmatpush.msra.mxu0 %v6421
    %6815 = vmatpush.msra.mxu0 %v6419
    %6816 = vmatpush.msra.mxu0 %v6417
    %6817 = vmatpush.msra.mxu0 %v6415
    %6818 = vmatpush.msra.mxu0 %v6413
    %6819 = vmatpush.msra.mxu0 %v6411
    %6820 = vmatpush.msra.mxu0 %v6409
    %6821 = vmatpush.msra.mxu0 %v6407
    %6822 = vmatpush.msra.mxu0 %v6405
    %6823 = vmatpush.msra.mxu0 %v6403
    %6824 = vmatpush.msra.mxu0 %v6401
    %6825 = vmatpush.msra.mxu0 %v6399
    %6826 = vmatmul.f32.gmra.mxu0 %v6741
    %v6827 = vpop.f32.mrf.mxu0
    %v6828 = vadd.f32 0.0, %v6827
    %6829 = vdwg.mxu0
    %6830 = vmatpush.msra.mxu0 %v6461
    %6831 = vmatpush.msra.mxu0 %v6459
    %6832 = vmatpush.msra.mxu0 %v6457
    %6833 = vmatpush.msra.mxu0 %v6455
    %6834 = vmatpush.msra.mxu0 %v6453
    %6835 = vmatpush.msra.mxu0 %v6451
    %6836 = vmatpush.msra.mxu0 %v6449
    %6837 = vmatpush.msra.mxu0 %v6447
    %6838 = vmatpush.msra.mxu0 %v6445
    %6839 = vmatpush.msra.mxu0 %v6443
    %6840 = vmatpush.msra.mxu0 %v6441
    %6841 = vmatpush.msra.mxu0 %v6439
    %6842 = vmatpush.msra.mxu0 %v6437
    %6843 = vmatpush.msra.mxu0 %v6435
    %6844 = vmatpush.msra.mxu0 %v6433
    %6845 = vmatpush.msra.mxu0 %v6431
    %6846 = vmatmul.f32.gmra.mxu0 %v6745
    %v6847 = vpop.f32.mrf.mxu0
    %v6848 = vadd.f32 %v6828, %v6847
    %6849 = vdwg.mxu0
    %6850 = vmatpush.msra.mxu0 0.0
    %6851 = vmatpush.msra.mxu0 0.0
    %6852 = vmatpush.msra.mxu0 0.0
    %6853 = vmatpush.msra.mxu0 0.0
    %6854 = vmatpush.msra.mxu0 0.0
    %6855 = vmatpush.msra.mxu0 0.0
    %6856 = vmatpush.msra.mxu0 0.0
    %6857 = vmatpush.msra.mxu0 %v6592
    %6858 = vmatpush.msra.mxu0 %v6477
    %6859 = vmatpush.msra.mxu0 %v6475
    %6860 = vmatpush.msra.mxu0 %v6473
    %6861 = vmatpush.msra.mxu0 %v6471
    %6862 = vmatpush.msra.mxu0 %v6469
    %6863 = vmatpush.msra.mxu0 %v6467
    %6864 = vmatpush.msra.mxu0 %v6465
    %6865 = vmatpush.msra.mxu0 %v6463
    %6866 = vmatmul.f32.gmra.mxu0 %v6748
    %v6867 = vpop.f32.mrf.mxu0
    %v6868 = vadd.f32 %v6848, %v6867
    %6869 = vdwg.mxu0
    %6872 = vrot.lane.b32.xlu0 %v6808, 16
    %v6873 = vpop.permute.xlu0 %6872
    %6874 = vrot.lane.b32.xlu0 %v6868, 16
    %v6875 = vpop.permute.xlu0 %6874
    %v6876 = vsel %vm6574, %v6873, %v6875
    %v6879 = vsel %vm6574, %v6712, %v6873
    %s6880 = sld [smem:[#allocation5 + $0x4]]
    %vm6881 = vcmask 1042432
    %v6882 = vsel %vm6881, %v6652, 0.0
    %v6883 = vsel %vm6881, %v6879, 0.0
    %v6884 = vadd.f32 %v6882, %v6883
    %vm6885 = vcmask 256000
    %v6886 = vsel %vm6885, %v6876, 0.0
    %v6887 = vadd.f32 %v6884, %v6886
    %6888 = vadd.xlane.f32.xlu0 %v6887
    %v6889 = vpop.xlane.xlu0 %6888
    %v6890 = vmul.f32 %v6889, 0.0034722222
    %v6891 = vsub.f32 %v6652, %v6890
    %v6892 = vsub.f32 %v6879, %v6890
    %v6893 = vsub.f32 %v6876, %v6890
    %v6894 = vmul.f32 %v6891, %v6891
    %v6895 = vmul.f32 %v6892, %v6892
    %v6896 = vmul.f32 %v6893, %v6893
    %v6897 = vsel %vm6881, %v6894, 0.0
    %v6898 = vsel %vm6881, %v6895, 0.0
    %v6899 = vadd.f32 %v6897, %v6898
    %v6900 = vsel %vm6885, %v6896, 0.0
    %v6901 = vadd.f32 %v6899, %v6900
    %6902 = vadd.xlane.f32.xlu0 %v6901
    %v6903 = vpop.xlane.xlu0 %6902
    %v6904 = vmul.f32 %v6903, 0.0034722222
    %v6905 = vadd.f32 %v6904, 1e-05
    %v6906 = vrsqrt.pop %v6905
    %v6907 = vmul.f32 %v6906, %v6905
    %v6908 = vmul.f32 %v6907, %v6906
    %v6909 = vmul.f32 0.5, %v6908
    %v6910 = vsub.f32 1.5, %v6909
    %v6911 = vmul.f32 %v6906, %v6910
    %vm6912 = vweird.f32 %v6905
    %vm6913 = vweird.f32 %v6906
    %vm6914 = vmor %vm6912, %vm6913
    %v6915 = vsel %vm6914, %v6906, %v6911
    %v6916 = vmul.f32 %v6891, %v6915
    %v6917 = vmul.f32 %v6892, %v6915
    %v6918 = vmul.f32 %v6893, %v6915
    %v6919 = vld [vmem:[%s16] sm:$0x7]
    %6921 = vset.pattern.permute.xlu0 0
    %6922 = vperm.xlu0 %6921, %v6919
    %v6923 = vpop.permute.xlu0 %6922
    %v6925 = vmul.f32 %v6916, %v6923
    %v6926 = vmul.f32 %v6917, %v6923
    %v6927 = vmul.f32 %v6918, %v6923
    %v6928 = vld [vmem:[%s17] sm:$0x7]
    %6930 = vset.pattern.permute.xlu0 0
    %6931 = vperm.xlu0 %6930, %v6928
    %v6932 = vpop.permute.xlu0 %6931
    %v6934 = vadd.f32 %v6925, %v6932
    %v6935 = vadd.f32 %v6926, %v6932
    %v6936 = vadd.f32 %v6927, %v6932
    %vm6937 = vcmp.gt.f32.partialorder %v6934, 0.0
    %vm6938 = vcmp.gt.f32.partialorder %v6935, 0.0
    %vm6939 = vcmp.gt.f32.partialorder %v6936, 0.0
    %v6940 = vstv %s6880
    %v6941 = vmul.f32 %v6940, %v6934
    %v6942 = vmul.f32 %v6940, %v6935
    %v6943 = vmul.f32 %v6940, %v6936
    %v6944 = vsel %vm6937, %v6934, %v6941
    %v6945 = vsel %vm6938, %v6935, %v6942
    %v6946 = vsel %vm6939, %v6936, %v6943
    %s6947 = smul.u32 4, 18
    %s6948 = smul.u32 %s6947, 5
    %s6949 = sshll.u32 %s6948, 4
    %6950 = dma.done %s188, %s6949
    %v6951 = vld [vmem:[#allocation3] sm:$0xff]
    %v6952 = vld [vmem:[#allocation3 + $0x8] sm:$0xff]
    %v6953 = vld [vmem:[#allocation3 + $0x10] sm:$0xf]
    %v6954 = vld [vmem:[#allocation3 + $0x14] sm:$0xff]
    %v6955 = vld [vmem:[#allocation3 + $0x1c] sm:$0xff]
    %v6956 = vld [vmem:[#allocation3 + $0x24] sm:$0xf]
    %v6957 = vld [vmem:[#allocation3 + $0x28] sm:$0xff]
    %v6958 = vld [vmem:[#allocation3 + $0x30] sm:$0xff]
    %v6959 = vld [vmem:[#allocation3 + $0x38] sm:$0xf]
    %v6960 = vld [vmem:[#allocation3 + $0x3c] sm:$0xff]
    %v6961 = vld [vmem:[#allocation3 + $0x44] sm:$0xff]
    %v6962 = vld [vmem:[#allocation3 + $0x4c] sm:$0xf]
    %v6963 = vld [vmem:[#allocation3 + $0x50] sm:$0xff]
    %v6964 = vld [vmem:[#allocation3 + $0x58] sm:$0xff]
    %v6965 = vld [vmem:[#allocation3 + $0x60] sm:$0xf]
    %v6966 = vld [vmem:[#allocation3 + $0x64] sm:$0xff]
    %v6967 = vld [vmem:[#allocation3 + $0x6c] sm:$0xff]
    %v6968 = vld [vmem:[#allocation3 + $0x74] sm:$0xf]
    %v6969 = vld [vmem:[#allocation3 + $0x78] sm:$0xff]
    %v6970 = vld [vmem:[#allocation3 + $0x80] sm:$0xff]
    %v6971 = vld [vmem:[#allocation3 + $0x88] sm:$0xf]
    %v6972 = vld [vmem:[#allocation3 + $0x8c] sm:$0xff]
    %v6973 = vld [vmem:[#allocation3 + $0x94] sm:$0xff]
    %v6974 = vld [vmem:[#allocation3 + $0x9c] sm:$0xf]
    %v6975 = vld [vmem:[#allocation3 + $0xa0] sm:$0xff]
    %v6976 = vld [vmem:[#allocation3 + $0xa8] sm:$0xff]
    %v6977 = vld [vmem:[#allocation3 + $0xb0] sm:$0xf]
    %v6978 = vld [vmem:[#allocation3 + $0xb4] sm:$0xff]
    %v6979 = vld [vmem:[#allocation3 + $0xbc] sm:$0xff]
    %v6980 = vld [vmem:[#allocation3 + $0xc4] sm:$0xf]
    %v6981 = vld [vmem:[#allocation3 + $0xc8] sm:$0xff]
    %v6982 = vld [vmem:[#allocation3 + $0xd0] sm:$0xff]
    %v6983 = vld [vmem:[#allocation3 + $0xd8] sm:$0xf]
    %v6984 = vld [vmem:[#allocation3 + $0xdc] sm:$0xff]
    %v6985 = vld [vmem:[#allocation3 + $0xe4] sm:$0xff]
    %v6986 = vld [vmem:[#allocation3 + $0xec] sm:$0xf]
    %v6987 = vld [vmem:[#allocation3 + $0xf0] sm:$0xff]
    %v6988 = vld [vmem:[#allocation3 + $0xf8] sm:$0xff]
    %v6989 = vld [vmem:[#allocation3 + $0x100] sm:$0xf]
    %v6990 = vld [vmem:[#allocation3 + $0x104] sm:$0xff]
    %v6991 = vld [vmem:[#allocation3 + $0x10c] sm:$0xff]
    %v6992 = vld [vmem:[#allocation3 + $0x114] sm:$0xf]
    %v6993 = vld [vmem:[#allocation3 + $0x118] sm:$0xff]
    %v6994 = vld [vmem:[#allocation3 + $0x120] sm:$0xff]
    %v6995 = vld [vmem:[#allocation3 + $0x128] sm:$0xf]
    %v6996 = vld [vmem:[#allocation3 + $0x12c] sm:$0xff]
    %v6997 = vld [vmem:[#allocation3 + $0x134] sm:$0xff]
    %v6998 = vld [vmem:[#allocation3 + $0x13c] sm:$0xf]
    %v6999 = vld [vmem:[#allocation3 + $0x140] sm:$0xff]
    %v7000 = vld [vmem:[#allocation3 + $0x148] sm:$0xff]
    %v7001 = vld [vmem:[#allocation3 + $0x150] sm:$0xf]
    %v7002 = vld [vmem:[#allocation3 + $0x154] sm:$0xff]
    %v7003 = vld [vmem:[#allocation3 + $0x15c] sm:$0xff]
    %v7004 = vld [vmem:[#allocation3 + $0x164] sm:$0xf]
    %v7005 = vunpack.c.l.bf16 %v6951
    %v7006 = vunpack.c.h.bf16 %v6951
    %v7007 = vunpack.c.l.bf16 %v6952
    %v7008 = vunpack.c.h.bf16 %v6952
    %v7009 = vunpack.c.l.bf16 %v6953
    %v7010 = vunpack.c.l.bf16 %v6954
    %v7011 = vunpack.c.h.bf16 %v6954
    %v7012 = vunpack.c.l.bf16 %v6955
    %v7013 = vunpack.c.h.bf16 %v6955
    %v7014 = vunpack.c.l.bf16 %v6956
    %v7015 = vunpack.c.l.bf16 %v6957
    %v7016 = vunpack.c.h.bf16 %v6957
    %v7017 = vunpack.c.l.bf16 %v6958
    %v7018 = vunpack.c.h.bf16 %v6958
    %v7019 = vunpack.c.l.bf16 %v6959
    %v7020 = vunpack.c.l.bf16 %v6960
    %v7021 = vunpack.c.h.bf16 %v6960
    %v7022 = vunpack.c.l.bf16 %v6961
    %v7023 = vunpack.c.h.bf16 %v6961
    %v7024 = vunpack.c.l.bf16 %v6962
    %v7025 = vunpack.c.l.bf16 %v6963
    %v7026 = vunpack.c.h.bf16 %v6963
    %v7027 = vunpack.c.l.bf16 %v6964
    %v7028 = vunpack.c.h.bf16 %v6964
    %v7029 = vunpack.c.l.bf16 %v6965
    %v7030 = vunpack.c.l.bf16 %v6966
    %v7031 = vunpack.c.h.bf16 %v6966
    %v7032 = vunpack.c.l.bf16 %v6967
    %v7033 = vunpack.c.h.bf16 %v6967
    %v7034 = vunpack.c.l.bf16 %v6968
    %v7035 = vunpack.c.l.bf16 %v6969
    %v7036 = vunpack.c.h.bf16 %v6969
    %v7037 = vunpack.c.l.bf16 %v6970
    %v7038 = vunpack.c.h.bf16 %v6970
    %v7039 = vunpack.c.l.bf16 %v6971
    %v7040 = vunpack.c.l.bf16 %v6972
    %v7041 = vunpack.c.h.bf16 %v6972
    %v7042 = vunpack.c.l.bf16 %v6973
    %v7043 = vunpack.c.h.bf16 %v6973
    %v7044 = vunpack.c.l.bf16 %v6974
    %v7045 = vunpack.c.l.bf16 %v6975
    %v7046 = vunpack.c.h.bf16 %v6975
    %v7047 = vunpack.c.l.bf16 %v6976
    %v7048 = vunpack.c.h.bf16 %v6976
    %v7049 = vunpack.c.l.bf16 %v6977
    %v7050 = vunpack.c.l.bf16 %v6978
    %v7051 = vunpack.c.h.bf16 %v6978
    %v7052 = vunpack.c.l.bf16 %v6979
    %v7053 = vunpack.c.h.bf16 %v6979
    %v7054 = vunpack.c.l.bf16 %v6980
    %v7055 = vunpack.c.l.bf16 %v6981
    %v7056 = vunpack.c.h.bf16 %v6981
    %v7057 = vunpack.c.l.bf16 %v6982
    %v7058 = vunpack.c.h.bf16 %v6982
    %v7059 = vunpack.c.l.bf16 %v6983
    %v7060 = vunpack.c.l.bf16 %v6984
    %v7061 = vunpack.c.h.bf16 %v6984
    %v7062 = vunpack.c.l.bf16 %v6985
    %v7063 = vunpack.c.h.bf16 %v6985
    %v7064 = vunpack.c.l.bf16 %v6986
    %v7065 = vunpack.c.l.bf16 %v6987
    %v7066 = vunpack.c.h.bf16 %v6987
    %v7067 = vunpack.c.l.bf16 %v6988
    %v7068 = vunpack.c.h.bf16 %v6988
    %v7069 = vunpack.c.l.bf16 %v6989
    %v7070 = vunpack.c.l.bf16 %v6990
    %v7071 = vunpack.c.h.bf16 %v6990
    %v7072 = vunpack.c.l.bf16 %v6991
    %v7073 = vunpack.c.h.bf16 %v6991
    %v7074 = vunpack.c.l.bf16 %v6992
    %v7075 = vunpack.c.l.bf16 %v6993
    %v7076 = vunpack.c.h.bf16 %v6993
    %v7077 = vunpack.c.l.bf16 %v6994
    %v7078 = vunpack.c.h.bf16 %v6994
    %v7079 = vunpack.c.l.bf16 %v6995
    %v7080 = vunpack.c.l.bf16 %v6996
    %v7081 = vunpack.c.h.bf16 %v6996
    %v7082 = vunpack.c.l.bf16 %v6997
    %v7083 = vunpack.c.h.bf16 %v6997
    %v7084 = vunpack.c.l.bf16 %v6998
    %v7085 = vunpack.c.l.bf16 %v6999
    %v7086 = vunpack.c.h.bf16 %v6999
    %v7087 = vunpack.c.l.bf16 %v7000
    %v7088 = vunpack.c.h.bf16 %v7000
    %v7089 = vunpack.c.l.bf16 %v7001
    %v7090 = vunpack.c.l.bf16 %v7002
    %v7091 = vunpack.c.h.bf16 %v7002
    %v7092 = vunpack.c.l.bf16 %v7003
    %v7093 = vunpack.c.h.bf16 %v7003
    %v7094 = vunpack.c.l.bf16 %v7004
    %v7096 = vsel %vm6574, %v6945, 0
    %7098 = vmatpush.msra.mxu0 %v7080
    %7099 = vmatpush.msra.mxu0 %v7075
    %7100 = vmatpush.msra.mxu0 %v7070
    %7101 = vmatpush.msra.mxu0 %v7065
    %7102 = vmatpush.msra.mxu0 %v7060
    %7103 = vmatpush.msra.mxu0 %v7055
    %7104 = vmatpush.msra.mxu0 %v7050
    %7105 = vmatpush.msra.mxu0 %v7045
    %7106 = vmatpush.msra.mxu0 %v7040
    %7107 = vmatpush.msra.mxu0 %v7035
    %7108 = vmatpush.msra.mxu0 %v7030
    %7109 = vmatpush.msra.mxu0 %v7025
    %7110 = vmatpush.msra.mxu0 %v7020
    %7111 = vmatpush.msra.mxu0 %v7015
    %7112 = vmatpush.msra.mxu0 %v7010
    %7113 = vmatpush.msra.mxu0 %v7005
    %7114 = vmatmul.f32.gmra.mxu0 %v6944
    %v7115 = vpop.f32.mrf.mxu0
    %v7116 = vadd.f32 0.0, %v7115
    %7117 = vdwg.mxu0
    %7118 = vmatpush.msra.mxu0 0.0
    %7119 = vmatpush.msra.mxu0 0.0
    %7120 = vmatpush.msra.mxu0 0.0
    %7121 = vmatpush.msra.mxu0 0.0
    %7122 = vmatpush.msra.mxu0 0.0
    %7123 = vmatpush.msra.mxu0 0.0
    %7124 = vmatpush.msra.mxu0 0.0
    %7125 = vmatpush.msra.mxu0 0.0
    %7126 = vmatpush.msra.mxu0 0.0
    %7127 = vmatpush.msra.mxu0 0.0
    %7128 = vmatpush.msra.mxu0 0.0
    %7129 = vmatpush.msra.mxu0 0.0
    %7130 = vmatpush.msra.mxu0 0.0
    %7131 = vmatpush.msra.mxu0 0.0
    %7132 = vmatpush.msra.mxu0 %v7090
    %7133 = vmatpush.msra.mxu0 %v7085
    %7134 = vmatmul.f32.gmra.mxu0 %v7096
    %v7135 = vpop.f32.mrf.mxu0
    %v7136 = vadd.f32 %v7116, %v7135
    %7137 = vdwg.mxu0
    %7138 = vmatpush.msra.mxu0 %v7081
    %7139 = vmatpush.msra.mxu0 %v7076
    %7140 = vmatpush.msra.mxu0 %v7071
    %7141 = vmatpush.msra.mxu0 %v7066
    %7142 = vmatpush.msra.mxu0 %v7061
    %7143 = vmatpush.msra.mxu0 %v7056
    %7144 = vmatpush.msra.mxu0 %v7051
    %7145 = vmatpush.msra.mxu0 %v7046
    %7146 = vmatpush.msra.mxu0 %v7041
    %7147 = vmatpush.msra.mxu0 %v7036
    %7148 = vmatpush.msra.mxu0 %v7031
    %7149 = vmatpush.msra.mxu0 %v7026
    %7150 = vmatpush.msra.mxu0 %v7021
    %7151 = vmatpush.msra.mxu0 %v7016
    %7152 = vmatpush.msra.mxu0 %v7011
    %7153 = vmatpush.msra.mxu0 %v7006
    %7154 = vmatmul.f32.gmra.mxu0 %v6944
    %v7155 = vpop.f32.mrf.mxu0
    %v7156 = vadd.f32 0.0, %v7155
    %7157 = vdwg.mxu0
    %7158 = vmatpush.msra.mxu0 0.0
    %7159 = vmatpush.msra.mxu0 0.0
    %7160 = vmatpush.msra.mxu0 0.0
    %7161 = vmatpush.msra.mxu0 0.0
    %7162 = vmatpush.msra.mxu0 0.0
    %7163 = vmatpush.msra.mxu0 0.0
    %7164 = vmatpush.msra.mxu0 0.0
    %7165 = vmatpush.msra.mxu0 0.0
    %7166 = vmatpush.msra.mxu0 0.0
    %7167 = vmatpush.msra.mxu0 0.0
    %7168 = vmatpush.msra.mxu0 0.0
    %7169 = vmatpush.msra.mxu0 0.0
    %7170 = vmatpush.msra.mxu0 0.0
    %7171 = vmatpush.msra.mxu0 0.0
    %7172 = vmatpush.msra.mxu0 %v7091
    %7173 = vmatpush.msra.mxu0 %v7086
    %7174 = vmatmul.f32.gmra.mxu0 %v7096
    %v7175 = vpop.f32.mrf.mxu0
    %v7176 = vadd.f32 %v7156, %v7175
    %7177 = vdwg.mxu0
    %7178 = vmatpush.msra.mxu0 %v7082
    %7179 = vmatpush.msra.mxu0 %v7077
    %7180 = vmatpush.msra.mxu0 %v7072
    %7181 = vmatpush.msra.mxu0 %v7067
    %7182 = vmatpush.msra.mxu0 %v7062
    %7183 = vmatpush.msra.mxu0 %v7057
    %7184 = vmatpush.msra.mxu0 %v7052
    %7185 = vmatpush.msra.mxu0 %v7047
    %7186 = vmatpush.msra.mxu0 %v7042
    %7187 = vmatpush.msra.mxu0 %v7037
    %7188 = vmatpush.msra.mxu0 %v7032
    %7189 = vmatpush.msra.mxu0 %v7027
    %7190 = vmatpush.msra.mxu0 %v7022
    %7191 = vmatpush.msra.mxu0 %v7017
    %7192 = vmatpush.msra.mxu0 %v7012
    %7193 = vmatpush.msra.mxu0 %v7007
    %7194 = vmatmul.f32.gmra.mxu0 %v6944
    %v7195 = vpop.f32.mrf.mxu0
    %v7196 = vadd.f32 0.0, %v7195
    %7197 = vdwg.mxu0
    %7198 = vmatpush.msra.mxu0 0.0
    %7199 = vmatpush.msra.mxu0 0.0
    %7200 = vmatpush.msra.mxu0 0.0
    %7201 = vmatpush.msra.mxu0 0.0
    %7202 = vmatpush.msra.mxu0 0.0
    %7203 = vmatpush.msra.mxu0 0.0
    %7204 = vmatpush.msra.mxu0 0.0
    %7205 = vmatpush.msra.mxu0 0.0
    %7206 = vmatpush.msra.mxu0 0.0
    %7207 = vmatpush.msra.mxu0 0.0
    %7208 = vmatpush.msra.mxu0 0.0
    %7209 = vmatpush.msra.mxu0 0.0
    %7210 = vmatpush.msra.mxu0 0.0
    %7211 = vmatpush.msra.mxu0 0.0
    %7212 = vmatpush.msra.mxu0 %v7092
    %7213 = vmatpush.msra.mxu0 %v7087
    %7214 = vmatmul.f32.gmra.mxu0 %v7096
    %v7215 = vpop.f32.mrf.mxu0
    %v7216 = vadd.f32 %v7196, %v7215
    %7217 = vdwg.mxu0
    %7218 = vmatpush.msra.mxu0 %v7083
    %7219 = vmatpush.msra.mxu0 %v7078
    %7220 = vmatpush.msra.mxu0 %v7073
    %7221 = vmatpush.msra.mxu0 %v7068
    %7222 = vmatpush.msra.mxu0 %v7063
    %7223 = vmatpush.msra.mxu0 %v7058
    %7224 = vmatpush.msra.mxu0 %v7053
    %7225 = vmatpush.msra.mxu0 %v7048
    %7226 = vmatpush.msra.mxu0 %v7043
    %7227 = vmatpush.msra.mxu0 %v7038
    %7228 = vmatpush.msra.mxu0 %v7033
    %7229 = vmatpush.msra.mxu0 %v7028
    %7230 = vmatpush.msra.mxu0 %v7023
    %7231 = vmatpush.msra.mxu0 %v7018
    %7232 = vmatpush.msra.mxu0 %v7013
    %7233 = vmatpush.msra.mxu0 %v7008
    %7234 = vmatmul.f32.gmra.mxu0 %v6944
    %v7235 = vpop.f32.mrf.mxu0
    %v7236 = vadd.f32 0.0, %v7235
    %7237 = vdwg.mxu0
    %7238 = vmatpush.msra.mxu0 0.0
    %7239 = vmatpush.msra.mxu0 0.0
    %7240 = vmatpush.msra.mxu0 0.0
    %7241 = vmatpush.msra.mxu0 0.0
    %7242 = vmatpush.msra.mxu0 0.0
    %7243 = vmatpush.msra.mxu0 0.0
    %7244 = vmatpush.msra.mxu0 0.0
    %7245 = vmatpush.msra.mxu0 0.0
    %7246 = vmatpush.msra.mxu0 0.0
    %7247 = vmatpush.msra.mxu0 0.0
    %7248 = vmatpush.msra.mxu0 0.0
    %7249 = vmatpush.msra.mxu0 0.0
    %7250 = vmatpush.msra.mxu0 0.0
    %7251 = vmatpush.msra.mxu0 0.0
    %7252 = vmatpush.msra.mxu0 %v7093
    %7253 = vmatpush.msra.mxu0 %v7088
    %7254 = vmatmul.f32.gmra.mxu0 %v7096
    %v7255 = vpop.f32.mrf.mxu0
    %v7256 = vadd.f32 %v7236, %v7255
    %7257 = vdwg.mxu0
    %7258 = vmatpush.msra.mxu0 %v7084
    %7259 = vmatpush.msra.mxu0 %v7079
    %7260 = vmatpush.msra.mxu0 %v7074
    %7261 = vmatpush.msra.mxu0 %v7069
    %7262 = vmatpush.msra.mxu0 %v7064
    %7263 = vmatpush.msra.mxu0 %v7059
    %7264 = vmatpush.msra.mxu0 %v7054
    %7265 = vmatpush.msra.mxu0 %v7049
    %7266 = vmatpush.msra.mxu0 %v7044
    %7267 = vmatpush.msra.mxu0 %v7039
    %7268 = vmatpush.msra.mxu0 %v7034
    %7269 = vmatpush.msra.mxu0 %v7029
    %7270 = vmatpush.msra.mxu0 %v7024
    %7271 = vmatpush.msra.mxu0 %v7019
    %7272 = vmatpush.msra.mxu0 %v7014
    %7273 = vmatpush.msra.mxu0 %v7009
    %7274 = vmatmul.f32.gmra.mxu0 %v6944
    %v7275 = vpop.f32.mrf.mxu0
    %v7276 = vadd.f32 0.0, %v7275
    %7277 = vdwg.mxu0
    %7278 = vmatpush.msra.mxu0 0.0
    %7279 = vmatpush.msra.mxu0 0.0
    %7280 = vmatpush.msra.mxu0 0.0
    %7281 = vmatpush.msra.mxu0 0.0
    %7282 = vmatpush.msra.mxu0 0.0
    %7283 = vmatpush.msra.mxu0 0.0
    %7284 = vmatpush.msra.mxu0 0.0
    %7285 = vmatpush.msra.mxu0 0.0
    %7286 = vmatpush.msra.mxu0 0.0
    %7287 = vmatpush.msra.mxu0 0.0
    %7288 = vmatpush.msra.mxu0 0.0
    %7289 = vmatpush.msra.mxu0 0.0
    %7290 = vmatpush.msra.mxu0 0.0
    %7291 = vmatpush.msra.mxu0 0.0
    %7292 = vmatpush.msra.mxu0 %v7094
    %7293 = vmatpush.msra.mxu0 %v7089
    %7294 = vmatmul.f32.gmra.mxu0 %v7096
    %v7295 = vpop.f32.mrf.mxu0
    %v7296 = vadd.f32 %v7276, %v7295
    %7297 = vdwg.mxu0
    %v7302 = vrot.slane %v7176, 4
    %v7303 = vrot.slane %v7256, 4
    %v7304 = vsel %vm6587, %v7136, %v7302
    %v7305 = vsel %vm6587, %v7216, %v7303
    %7308 = vst [vmem:[%s20] sm:$0x77] %v7304
    %7309 = vst [vmem:[%s20 + $0x8] sm:$0x77] %v7305
    %vm7310 = vcmask 518144
    %7311 = vst.msk [vmem:[%s20 + $0x10] sm:$0x7] %vm7310, %v7296
    %7313 = vrot.lane.b32.xlu0 %v6945, 112
    %v7314 = vpop.permute.xlu0 %7313
    %7315 = vrot.lane.b32.xlu0 %v6946, 112
    %v7316 = vpop.permute.xlu0 %7315
    %vm7317 = vcmask 916480
    %v7318 = vsel %vm7317, %v7314, %v7316
    %v7320 = vsel %vm6574, %v7316, 0
    %7322 = vmatpush.msra.mxu0 %v7080
    %7323 = vmatpush.msra.mxu0 %v7075
    %7324 = vmatpush.msra.mxu0 %v7070
    %7325 = vmatpush.msra.mxu0 %v7065
    %7326 = vmatpush.msra.mxu0 %v7060
    %7327 = vmatpush.msra.mxu0 %v7055
    %7328 = vmatpush.msra.mxu0 %v7050
    %7329 = vmatpush.msra.mxu0 %v7045
    %7330 = vmatpush.msra.mxu0 %v7040
    %7331 = vmatpush.msra.mxu0 %v7035
    %7332 = vmatpush.msra.mxu0 %v7030
    %7333 = vmatpush.msra.mxu0 %v7025
    %7334 = vmatpush.msra.mxu0 %v7020
    %7335 = vmatpush.msra.mxu0 %v7015
    %7336 = vmatpush.msra.mxu0 %v7010
    %7337 = vmatpush.msra.mxu0 %v7005
    %7338 = vmatmul.f32.gmra.mxu0 %v7318
    %v7339 = vpop.f32.mrf.mxu0
    %v7340 = vadd.f32 0.0, %v7339
    %7341 = vdwg.mxu0
    %7342 = vmatpush.msra.mxu0 0.0
    %7343 = vmatpush.msra.mxu0 0.0
    %7344 = vmatpush.msra.mxu0 0.0
    %7345 = vmatpush.msra.mxu0 0.0
    %7346 = vmatpush.msra.mxu0 0.0
    %7347 = vmatpush.msra.mxu0 0.0
    %7348 = vmatpush.msra.mxu0 0.0
    %7349 = vmatpush.msra.mxu0 0.0
    %7350 = vmatpush.msra.mxu0 0.0
    %7351 = vmatpush.msra.mxu0 0.0
    %7352 = vmatpush.msra.mxu0 0.0
    %7353 = vmatpush.msra.mxu0 0.0
    %7354 = vmatpush.msra.mxu0 0.0
    %7355 = vmatpush.msra.mxu0 0.0
    %7356 = vmatpush.msra.mxu0 %v7090
    %7357 = vmatpush.msra.mxu0 %v7085
    %7358 = vmatmul.f32.gmra.mxu0 %v7320
    %v7359 = vpop.f32.mrf.mxu0
    %v7360 = vadd.f32 %v7340, %v7359
    %7361 = vdwg.mxu0
    %7362 = vmatpush.msra.mxu0 %v7081
    %7363 = vmatpush.msra.mxu0 %v7076
    %7364 = vmatpush.msra.mxu0 %v7071
    %7365 = vmatpush.msra.mxu0 %v7066
    %7366 = vmatpush.msra.mxu0 %v7061
    %7367 = vmatpush.msra.mxu0 %v7056
    %7368 = vmatpush.msra.mxu0 %v7051
    %7369 = vmatpush.msra.mxu0 %v7046
    %7370 = vmatpush.msra.mxu0 %v7041
    %7371 = vmatpush.msra.mxu0 %v7036
    %7372 = vmatpush.msra.mxu0 %v7031
    %7373 = vmatpush.msra.mxu0 %v7026
    %7374 = vmatpush.msra.mxu0 %v7021
    %7375 = vmatpush.msra.mxu0 %v7016
    %7376 = vmatpush.msra.mxu0 %v7011
    %7377 = vmatpush.msra.mxu0 %v7006
    %7378 = vmatmul.f32.gmra.mxu0 %v7318
    %v7379 = vpop.f32.mrf.mxu0
    %v7380 = vadd.f32 0.0, %v7379
    %7381 = vdwg.mxu0
    %7382 = vmatpush.msra.mxu0 0.0
    %7383 = vmatpush.msra.mxu0 0.0
    %7384 = vmatpush.msra.mxu0 0.0
    %7385 = vmatpush.msra.mxu0 0.0
    %7386 = vmatpush.msra.mxu0 0.0
    %7387 = vmatpush.msra.mxu0 0.0
    %7388 = vmatpush.msra.mxu0 0.0
    %7389 = vmatpush.msra.mxu0 0.0
    %7390 = vmatpush.msra.mxu0 0.0
    %7391 = vmatpush.msra.mxu0 0.0
    %7392 = vmatpush.msra.mxu0 0.0
    %7393 = vmatpush.msra.mxu0 0.0
    %7394 = vmatpush.msra.mxu0 0.0
    %7395 = vmatpush.msra.mxu0 0.0
    %7396 = vmatpush.msra.mxu0 %v7091
    %7397 = vmatpush.msra.mxu0 %v7086
    %7398 = vmatmul.f32.gmra.mxu0 %v7320
    %v7399 = vpop.f32.mrf.mxu0
    %v7400 = vadd.f32 %v7380, %v7399
    %7401 = vdwg.mxu0
    %7402 = vmatpush.msra.mxu0 %v7082
    %7403 = vmatpush.msra.mxu0 %v7077
    %7404 = vmatpush.msra.mxu0 %v7072
    %7405 = vmatpush.msra.mxu0 %v7067
    %7406 = vmatpush.msra.mxu0 %v7062
    %7407 = vmatpush.msra.mxu0 %v7057
    %7408 = vmatpush.msra.mxu0 %v7052
    %7409 = vmatpush.msra.mxu0 %v7047
    %7410 = vmatpush.msra.mxu0 %v7042
    %7411 = vmatpush.msra.mxu0 %v7037
    %7412 = vmatpush.msra.mxu0 %v7032
    %7413 = vmatpush.msra.mxu0 %v7027
    %7414 = vmatpush.msra.mxu0 %v7022
    %7415 = vmatpush.msra.mxu0 %v7017
    %7416 = vmatpush.msra.mxu0 %v7012
    %7417 = vmatpush.msra.mxu0 %v7007
    %7418 = vmatmul.f32.gmra.mxu0 %v7318
    %v7419 = vpop.f32.mrf.mxu0
    %v7420 = vadd.f32 0.0, %v7419
    %7421 = vdwg.mxu0
    %7422 = vmatpush.msra.mxu0 0.0
    %7423 = vmatpush.msra.mxu0 0.0
    %7424 = vmatpush.msra.mxu0 0.0
    %7425 = vmatpush.msra.mxu0 0.0
    %7426 = vmatpush.msra.mxu0 0.0
    %7427 = vmatpush.msra.mxu0 0.0
    %7428 = vmatpush.msra.mxu0 0.0
    %7429 = vmatpush.msra.mxu0 0.0
    %7430 = vmatpush.msra.mxu0 0.0
    %7431 = vmatpush.msra.mxu0 0.0
    %7432 = vmatpush.msra.mxu0 0.0
    %7433 = vmatpush.msra.mxu0 0.0
    %7434 = vmatpush.msra.mxu0 0.0
    %7435 = vmatpush.msra.mxu0 0.0
    %7436 = vmatpush.msra.mxu0 %v7092
    %7437 = vmatpush.msra.mxu0 %v7087
    %7438 = vmatmul.f32.gmra.mxu0 %v7320
    %v7439 = vpop.f32.mrf.mxu0
    %v7440 = vadd.f32 %v7420, %v7439
    %7441 = vdwg.mxu0
    %7442 = vmatpush.msra.mxu0 %v7083
    %7443 = vmatpush.msra.mxu0 %v7078
    %7444 = vmatpush.msra.mxu0 %v7073
    %7445 = vmatpush.msra.mxu0 %v7068
    %7446 = vmatpush.msra.mxu0 %v7063
    %7447 = vmatpush.msra.mxu0 %v7058
    %7448 = vmatpush.msra.mxu0 %v7053
    %7449 = vmatpush.msra.mxu0 %v7048
    %7450 = vmatpush.msra.mxu0 %v7043
    %7451 = vmatpush.msra.mxu0 %v7038
    %7452 = vmatpush.msra.mxu0 %v7033
    %7453 = vmatpush.msra.mxu0 %v7028
    %7454 = vmatpush.msra.mxu0 %v7023
    %7455 = vmatpush.msra.mxu0 %v7018
    %7456 = vmatpush.msra.mxu0 %v7013
    %7457 = vmatpush.msra.mxu0 %v7008
    %7458 = vmatmul.f32.gmra.mxu0 %v7318
    %v7459 = vpop.f32.mrf.mxu0
    %v7460 = vadd.f32 0.0, %v7459
    %7461 = vdwg.mxu0
    %7462 = vmatpush.msra.mxu0 0.0
    %7463 = vmatpush.msra.mxu0 0.0
    %7464 = vmatpush.msra.mxu0 0.0
    %7465 = vmatpush.msra.mxu0 0.0
    %7466 = vmatpush.msra.mxu0 0.0
    %7467 = vmatpush.msra.mxu0 0.0
    %7468 = vmatpush.msra.mxu0 0.0
    %7469 = vmatpush.msra.mxu0 0.0
    %7470 = vmatpush.msra.mxu0 0.0
    %7471 = vmatpush.msra.mxu0 0.0
    %7472 = vmatpush.msra.mxu0 0.0
    %7473 = vmatpush.msra.mxu0 0.0
    %7474 = vmatpush.msra.mxu0 0.0
    %7475 = vmatpush.msra.mxu0 0.0
    %7476 = vmatpush.msra.mxu0 %v7093
    %7477 = vmatpush.msra.mxu0 %v7088
    %7478 = vmatmul.f32.gmra.mxu0 %v7320
    %v7479 = vpop.f32.mrf.mxu0
    %v7480 = vadd.f32 %v7460, %v7479
    %7481 = vdwg.mxu0
    %7482 = vmatpush.msra.mxu0 %v7084
    %7483 = vmatpush.msra.mxu0 %v7079
    %7484 = vmatpush.msra.mxu0 %v7074
    %7485 = vmatpush.msra.mxu0 %v7069
    %7486 = vmatpush.msra.mxu0 %v7064
    %7487 = vmatpush.msra.mxu0 %v7059
    %7488 = vmatpush.msra.mxu0 %v7054
    %7489 = vmatpush.msra.mxu0 %v7049
    %7490 = vmatpush.msra.mxu0 %v7044
    %7491 = vmatpush.msra.mxu0 %v7039
    %7492 = vmatpush.msra.mxu0 %v7034
    %7493 = vmatpush.msra.mxu0 %v7029
    %7494 = vmatpush.msra.mxu0 %v7024
    %7495 = vmatpush.msra.mxu0 %v7019
    %7496 = vmatpush.msra.mxu0 %v7014
    %7497 = vmatpush.msra.mxu0 %v7009
    %7498 = vmatmul.f32.gmra.mxu0 %v7318
    %v7499 = vpop.f32.mrf.mxu0
    %v7500 = vadd.f32 0.0, %v7499
    %7501 = vdwg.mxu0
    %7502 = vmatpush.msra.mxu0 0.0
    %7503 = vmatpush.msra.mxu0 0.0
    %7504 = vmatpush.msra.mxu0 0.0
    %7505 = vmatpush.msra.mxu0 0.0
    %7506 = vmatpush.msra.mxu0 0.0
    %7507 = vmatpush.msra.mxu0 0.0
    %7508 = vmatpush.msra.mxu0 0.0
    %7509 = vmatpush.msra.mxu0 0.0
    %7510 = vmatpush.msra.mxu0 0.0
    %7511 = vmatpush.msra.mxu0 0.0
    %7512 = vmatpush.msra.mxu0 0.0
    %7513 = vmatpush.msra.mxu0 0.0
    %7514 = vmatpush.msra.mxu0 0.0
    %7515 = vmatpush.msra.mxu0 0.0
    %7516 = vmatpush.msra.mxu0 %v7094
    %7517 = vmatpush.msra.mxu0 %v7089
    %7518 = vmatmul.f32.gmra.mxu0 %v7320
    %v7519 = vpop.f32.mrf.mxu0
    %v7520 = vadd.f32 %v7500, %v7519
    %7521 = vdwg.mxu0
    %v7526 = vrot.slane %v7400, 4
    %v7527 = vrot.slane %v7480, 4
    %v7528 = vsel %vm6587, %v7360, %v7526
    %v7529 = vsel %vm6587, %v7440, %v7527
    %s7532 = scalar_lea.vmem %s20, 20
    %7533 = vst [vmem:[%s7532] sm:$0x77] %v7528
    %7534 = vst [vmem:[%s7532 + $0x8] sm:$0x77] %v7529
    %7535 = vst.msk [vmem:[%s7532 + $0x10] sm:$0x7] %vm7310, %v7520
    // Predicated region
    $region120: #{decoder_forward.1} parent=1 // pred_check
      _
    $region121: #{decoder_forward.1} parent=1 // pred_check_branch
      %7537 = sbr.rel (0) target = $region123
    $region122: #{decoder_forward.1} parent=1 // pred_region
      _
    $region123: #{decoder_forward.1} parent=1 // pred_fallthru
      _
    // Predicated region
    $region124: #{decoder_forward.1} parent=1 // pred_check
      _
    $region125: #{decoder_forward.1} parent=1 // pred_check_branch
      %7539 = sbr.rel (0) target = $region127
    $region126: #{decoder_forward.1} parent=1 // pred_region
      _
    $region127: #{decoder_forward.1} parent=1 // pred_fallthru
      _
    %7540 = vsyncpa [#allocation6], 1
    %7541 = vsyncpa [#allocation7], 1
  %7542 = vsyncmov [#allocation4]
  %s7543 = vpop.sfrf %7542
  %p7544 = scmp.eq.s32.totalorder %s7543, 0
  %p7545 = pneg %p7544
  %7547 = shalt.err (%p7545)
  %s7548 = scalar_lea.sflag [#allocation4], 1
  %7549 = vsyncmov %s7548
  %s7550 = vpop.sfrf %7549
  %p7551 = scmp.eq.s32.totalorder %s7550, 0
  %p7552 = pneg %p7551
  %7554 = shalt.err (%p7552)

</llo_original>
